<compile_context>
chip_gen: v7x
topology: tpu7x:2x2x1
jax: 0.10.0
libtpu: 0.0.40
codegen_flags: <defaults>
</compile_context>

<pallas_src>
import functools

import jax
import jax.numpy as jnp
import numpy as np
from jax.experimental import pallas as pl
from jax.experimental.pallas import tpu as pltpu


# --------------------------------------------------------------------------------------
# Kernel 1: upconv + interleave + skip + t + LeakyReLU + 3x3 conv + res + LeakyReLU + BN sums
# --------------------------------------------------------------------------------------

def _fused_up_res_kernel(x_ref, skip_ref, t_ref, wu_ref, bu_ref, wc_ref, bc_ref,
                         ml_ref, mr_ref,
                         x2_ref, psum_ref, pssq_ref,
                         h_scr, *, H, W):
    # x_ref    : (1, P, Cin)        coarse image, channels-last, P = H*W
    # skip_ref : (1, 4, P, C)       skip in sub-pixel block layout
    # t_ref    : (1, 1, C)
    # wu_ref   : (4, Cin, C)        ConvTranspose2d weight, per sub-pixel plane
    # wc_ref   : (9, C, C)          Conv2d 3x3 weight, per tap (ky*3+kx)
    # ml/mr_ref: (P, 1)             column-validity masks for coarse shifts -1 / +1
    # x2_ref   : (1, 4, P, C)       pre-BN activation (block layout)
    # psum/pssq: (1, 1, C)          per-batch-element BN partial sums
    # h_scr    : (4, P + 2*(W+1), C) zero-padded LeakyReLU(up+skip+t) planes
    P = H * W
    pad = W + 1

    xf = x_ref[0]                        # (P, Cin)
    tvec = t_ref[0]                      # (1, C)
    bu = bu_ref[...]                     # (1, C)
    bc = bc_ref[...]                     # (1, C)
    m_left = ml_ref[...]                 # (P, 1) : valid when w-1 >= 0
    m_right = mr_ref[...]                # (P, 1) : valid when w+1 <  W

    # zero the halo rows (interior is fully overwritten below); safe under megacore
    h_scr[...] = jnp.zeros_like(h_scr)

    # ---- Stage 1: ConvTranspose2d(2,2,stride=2) + skip + t + LeakyReLU, per plane ----
    for q in range(4):                   # q = 2*dh + dw
        up = jnp.dot(xf, wu_ref[q], preferred_element_type=jnp.float32) + bu
        res = up + skip_ref[0, q] + tvec
        h_scr[q, pl.ds(pad, P), :] = jnp.where(res > 0, res, 0.2 * res)

    s_acc = jnp.zeros_like(bu)
    sq_acc = jnp.zeros_like(bu)

    # ---- Stage 2: 3x3 conv (fine grid) == 9 shifted coarse matmuls per output plane ----
    for qo in range(4):
        dh_o, dw_o = qo // 2, qo % 2
        conv = None
        for ky in range(3):
            sh = dh_o + ky - 1
            dh_i, off_h = sh % 2, sh // 2          # input sub-pixel row / coarse row shift
            for kx in range(3):
                sw = dw_o + kx - 1
                dw_i, off_w = sw % 2, sw // 2      # input sub-pixel col / coarse col shift
                qi = 2 * dh_i + dw_i
                win = h_scr[qi, pl.ds(pad + off_h * W + off_w, P), :]
                if off_w == -1:
                    win = win * m_left             # zero column-wrap contributions
                elif off_w == 1:
                    win = win * m_right
                contrib = jnp.dot(win, wc_ref[3 * ky + kx],
                                  preferred_element_type=jnp.float32)
                conv = contrib if conv is None else conv + contrib

        # residual = up + skip + t, recovered by inverting LeakyReLU(0.2)
        h_q = h_scr[qo, pl.ds(pad, P), :]
        res_q = jnp.where(h_q > 0, h_q, 5.0 * h_q)
        x2 = conv + bc + res_q
        x2 = jnp.where(x2 > 0, x2, 0.2 * x2)
        x2_ref[0, qo] = x2

        s_acc = s_acc + jnp.sum(x2, axis=0, keepdims=True)
        sq_acc = sq_acc + jnp.sum(x2 * x2, axis=0, keepdims=True)

    psum_ref[0] = s_acc
    pssq_ref[0] = sq_acc


# --------------------------------------------------------------------------------------
# Kernel 2: apply batch-norm affine (in place via input/output aliasing)
# --------------------------------------------------------------------------------------

def _bn_apply_kernel(x_ref, scale_ref, shift_ref, o_ref):
    o_ref[0, 0] = x_ref[0, 0] * scale_ref[...] + shift_ref[...]


# --------------------------------------------------------------------------------------
# Wrapper
# --------------------------------------------------------------------------------------

def up_res_block_forward(x, t, skip, Wu, bu, Wc, bc, gamma, beta, eps=1e-5):
    N, Cin, H, W = x.shape
    Cout = Wu.shape[1]
    HH, WW = 2 * H, 2 * W
    P = H * W
    f32 = jnp.float32

    # ---- layout glue: NCHW -> channels-last / sub-pixel block layout (one pass each) ----
    x_f = jnp.transpose(x, (0, 2, 3, 1)).reshape(N, P, Cin).astype(f32)
    # skip[n, c, 2h+dh, 2w+dw] -> skip_b[n, 2*dh+dw, h*W+w, c]
    skip_b = jnp.transpose(skip.reshape(N, Cout, H, 2, W, 2),
                           (0, 3, 5, 2, 4, 1)).reshape(N, 4, P, Cout).astype(f32)
    t_f = t.reshape(N, 1, Cout).astype(f32)

    # ConvTranspose2d weight (Cin, Cout, 2, 2) -> (4, Cin, Cout), plane q = 2*dh+dw
    Wu_r = jnp.transpose(Wu, (2, 3, 0, 1)).reshape(4, Cin, Cout).astype(f32)
    bu_r = bu.reshape(1, Cout).astype(f32)
    # Conv2d weight (Cout, Cin=Cout, 3, 3) -> (9, Cin, Cout), tap j = 3*ky+kx
    Wc_r = jnp.transpose(Wc, (2, 3, 1, 0)).reshape(9, Cout, Cout).astype(f32)
    bc_r = bc.reshape(1, Cout).astype(f32)

    # static column-edge masks for the +-1 coarse column shifts (hoisted out of the kernel)
    col = np.arange(P, dtype=np.int32) % W
    m_left = jnp.asarray((col >= 1).astype(np.float32).reshape(P, 1))
    m_right = jnp.asarray((col <= W - 2).astype(np.float32).reshape(P, 1))

    kernel1 = functools.partial(_fused_up_res_kernel, H=H, W=W)
    x2_b, psum, pssq = pl.pallas_call(
        kernel1,
        out_shape=(jax.ShapeDtypeStruct((N, 4, P, Cout), f32),
                   jax.ShapeDtypeStruct((N, 1, Cout), f32),
                   jax.ShapeDtypeStruct((N, 1, Cout), f32)),
        grid=(N,),
        in_specs=[
            pl.BlockSpec((1, P, Cin), lambda n: (n, 0, 0)),
            pl.BlockSpec((1, 4, P, Cout), lambda n: (n, 0, 0, 0)),
            pl.BlockSpec((1, 1, Cout), lambda n: (n, 0, 0)),
            pl.BlockSpec((4, Cin, Cout), lambda n: (0, 0, 0)),
            pl.BlockSpec((1, Cout), lambda n: (0, 0)),
            pl.BlockSpec((9, Cout, Cout), lambda n: (0, 0, 0)),
            pl.BlockSpec((1, Cout), lambda n: (0, 0)),
            pl.BlockSpec((P, 1), lambda n: (0, 0)),
            pl.BlockSpec((P, 1), lambda n: (0, 0)),
        ],
        out_specs=(
            pl.BlockSpec((1, 4, P, Cout), lambda n: (n, 0, 0, 0)),
            pl.BlockSpec((1, 1, Cout), lambda n: (n, 0, 0)),
            pl.BlockSpec((1, 1, Cout), lambda n: (n, 0, 0)),
        ),
        scratch_shapes=[pltpu.VMEM((4, P + 2 * (W + 1), Cout), f32)],
        compiler_params=pltpu.CompilerParams(
            dimension_semantics=("parallel",),
            vmem_limit_bytes=32 * 1024 * 1024),
    )(x_f, skip_b, t_f, Wu_r, bu_r, Wc_r, bc_r, m_left, m_right)

    # ---- BN finalize (tiny per-channel math; biased variance, training-mode BN) ----
    count = float(N * 4 * P)                    # = N * HH * WW
    s = jnp.sum(psum, axis=0)                   # (1, Cout)
    sq = jnp.sum(pssq, axis=0)                  # (1, Cout)
    mean = s / count
    var = jnp.maximum(sq / count - mean * mean, 0.0)   # guard E[x^2]-E[x]^2 cancellation
    scale = gamma.reshape(1, Cout).astype(f32) * jax.lax.rsqrt(var + eps)
    shift = beta.reshape(1, Cout).astype(f32) - mean * scale

    # ---- Kernel 2: BN affine, applied in place ----
    out_b = pl.pallas_call(
        _bn_apply_kernel,
        out_shape=jax.ShapeDtypeStruct((N, 4, P, Cout), f32),
        grid=(N, 4),
        in_specs=[
            pl.BlockSpec((1, 1, P, Cout), lambda n, q: (n, q, 0, 0)),
            pl.BlockSpec((1, Cout), lambda n, q: (0, 0)),
            pl.BlockSpec((1, Cout), lambda n, q: (0, 0)),
        ],
        out_specs=pl.BlockSpec((1, 1, P, Cout), lambda n, q: (n, q, 0, 0)),
        input_output_aliases={0: 0},
        compiler_params=pltpu.CompilerParams(
            dimension_semantics=("parallel", "parallel"),
            vmem_limit_bytes=32 * 1024 * 1024),
    )(x2_b, scale, shift)

    # block layout -> NCHW: out[n, c, 2h+dh, 2w+dw] = out_b[n, 2*dh+dw, h*W+w, c]
    out = jnp.transpose(out_b.reshape(N, 2, 2, H, W, Cout),
                        (0, 5, 3, 1, 4, 2)).reshape(N, Cout, HH, WW)
    return out


# --------------------------------------------------------------------------------------
# Pure-JAX reference (NCHW, mirrors the PyTorch forward exactly)
# --------------------------------------------------------------------------------------

def reference_forward(x, t, skip, Wu, bu, Wc, bc, gamma, beta, eps=1e-5):
    N, Cin, H, W = x.shape
    Cout = Wu.shape[1]
    up = jnp.zeros((N, Cout, 2 * H, 2 * W), jnp.float32)
    for dh in range(2):
        for dw in range(2):
            v = jnp.einsum('nihw,io->nohw', x, Wu[:, :, dh, dw])
            up = up.at[:, :, dh::2, dw::2].set(v)
    up = up + bu[None, :, None, None]
    res = up + skip + t                       # in-place aliasing: res == up + skip + t
    h = jnp.where(res > 0, res, 0.2 * res)
    c = jax.lax.conv_general_dilated(h, Wc, window_strides=(1, 1), padding='SAME',
                                     dimension_numbers=('NCHW', 'OIHW', 'NCHW'))
    c = c + bc[None, :, None, None]
    x2 = c + res
    x2 = jnp.where(x2 > 0, x2, 0.2 * x2)
    mean = jnp.mean(x2, axis=(0, 2, 3), keepdims=True)
    var = jnp.var(x2, axis=(0, 2, 3), keepdims=True)
    xhat = (x2 - mean) / jnp.sqrt(var + eps)
    return xhat * gamma[None, :, None, None] + beta[None, :, None, None]


# --------------------------------------------------------------------------------------

if __name__ == "__main__":
    N, Cin, Cout, H, W = 2, 8, 8, 8, 8        # upsampled / skip spatial = 16x16
    key = jax.random.PRNGKey(0)
    ks = jax.random.split(key, 7)

    # deterministic synthetic parameters (shapes from UpResBlock.__init__)
    Wu = 0.1 * jax.random.normal(ks[0], (Cin, Cout, 2, 2), jnp.float32)   # ConvTranspose2d
    bu = 0.1 * jax.random.normal(ks[1], (Cout,), jnp.float32)
    Wc = 0.1 * jax.random.normal(ks[2], (Cout, Cout, 3, 3), jnp.float32)  # Conv2d 3x3
    bc = 0.1 * jax.random.normal(ks[3], (Cout,), jnp.float32)
    gamma = jnp.ones((Cout,), jnp.float32)                                # BatchNorm2d init
    beta = jnp.zeros((Cout,), jnp.float32)

    x = jax.random.normal(ks[4], (N, Cin, H, W), jnp.float32)
    t = jax.random.normal(ks[5], (N, Cout, 1, 1), jnp.float32)
    skip = jax.random.normal(ks[6], (N, Cout, 2 * H, 2 * W), jnp.float32)

    out = up_res_block_forward(x, t, skip, Wu, bu, Wc, bc, gamma, beta)
    out = jax.block_until_ready(out)
    assert out.shape == (N, Cout, 2 * H, 2 * W)

    ref = reference_forward(x, t, skip, Wu, bu, Wc, bc, gamma, beta)
    np.testing.assert_allclose(np.asarray(out), np.asarray(ref), rtol=2e-2, atol=2e-2)
    print("KERNEL_OK")
</pallas_src>

<mosaic_0001>
module attributes {stable_mosaic.version = 11 : i64} {
  func.func @_fused_up_res_kernel(%arg0: i32, %arg1: memref<1x64x8xf32, #tpu.memory_space<vmem>>, %arg2: memref<1x4x64x8xf32, #tpu.memory_space<vmem>>, %arg3: memref<1x1x8xf32, #tpu.memory_space<vmem>>, %arg4: memref<4x8x8xf32, #tpu.memory_space<vmem>>, %arg5: memref<1x8xf32, #tpu.memory_space<vmem>>, %arg6: memref<9x8x8xf32, #tpu.memory_space<vmem>>, %arg7: memref<1x8xf32, #tpu.memory_space<vmem>>, %arg8: memref<64x1xf32, #tpu.memory_space<vmem>>, %arg9: memref<64x1xf32, #tpu.memory_space<vmem>>, %arg10: memref<1x4x64x8xf32, #tpu.memory_space<vmem>>, %arg11: memref<1x1x8xf32, #tpu.memory_space<vmem>>, %arg12: memref<1x1x8xf32, #tpu.memory_space<vmem>>, %arg13: memref<4x82x8xf32, #tpu.memory_space<vmem>>) attributes {dimension_semantics = [#tpu.dimension_semantics<parallel>], iteration_bounds = array<i64: 2>, scalar_prefetch = 0 : i64, scratch_operands = 1 : i64, tpu.core_type = #tpu.core_type<tc>, window_params = [{transform_indices = @transform_0, window_bounds = array<i64: 1, 64, 8>}, {transform_indices = @transform_1, window_bounds = array<i64: 1, 4, 64, 8>}, {transform_indices = @transform_2, window_bounds = array<i64: 1, 1, 8>}, {pipeline_mode = #tpu.pipeline_mode<synchronous>, transform_indices = @transform_3, window_bounds = array<i64: 4, 8, 8>}, {pipeline_mode = #tpu.pipeline_mode<synchronous>, transform_indices = @transform_4, window_bounds = array<i64: 1, 8>}, {pipeline_mode = #tpu.pipeline_mode<synchronous>, transform_indices = @transform_5, window_bounds = array<i64: 9, 8, 8>}, {pipeline_mode = #tpu.pipeline_mode<synchronous>, transform_indices = @transform_6, window_bounds = array<i64: 1, 8>}, {pipeline_mode = #tpu.pipeline_mode<synchronous>, transform_indices = @transform_7, window_bounds = array<i64: 64, 1>}, {pipeline_mode = #tpu.pipeline_mode<synchronous>, transform_indices = @transform_8, window_bounds = array<i64: 64, 1>}, {transform_indices = @transform_9, window_bounds = array<i64: 1, 4, 64, 8>}, {transform_indices = @transform_10, window_bounds = array<i64: 1, 1, 8>}, {transform_indices = @transform_11, window_bounds = array<i64: 1, 1, 8>}]} {
    %c0 = arith.constant 0 : index
    %c0_0 = arith.constant 0 : index
    %c0_1 = arith.constant 0 : index
    %0 = vector.load %arg1[%c0, %c0_0, %c0_1] : memref<1x64x8xf32, #tpu.memory_space<vmem>>, vector<1x64x8xf32>
    %1 = vector.shape_cast %0 : vector<1x64x8xf32> to vector<64x8xf32>
    %c0_2 = arith.constant 0 : index
    %c0_3 = arith.constant 0 : index
    %c0_4 = arith.constant 0 : index
    %2 = vector.load %arg3[%c0_2, %c0_3, %c0_4] : memref<1x1x8xf32, #tpu.memory_space<vmem>>, vector<1x1x8xf32>
    %3 = vector.shape_cast %2 : vector<1x1x8xf32> to vector<1x8xf32>
    %c0_5 = arith.constant 0 : index
    %c0_6 = arith.constant 0 : index
    %4 = vector.load %arg5[%c0_5, %c0_6] : memref<1x8xf32, #tpu.memory_space<vmem>>, vector<1x8xf32>
    %c0_7 = arith.constant 0 : index
    %c0_8 = arith.constant 0 : index
    %5 = vector.load %arg7[%c0_7, %c0_8] : memref<1x8xf32, #tpu.memory_space<vmem>>, vector<1x8xf32>
    %c0_9 = arith.constant 0 : index
    %c0_10 = arith.constant 0 : index
    %6 = vector.load %arg8[%c0_9, %c0_10] : memref<64x1xf32, #tpu.memory_space<vmem>>, vector<64x1xf32>
    %c0_11 = arith.constant 0 : index
    %c0_12 = arith.constant 0 : index
    %7 = vector.load %arg9[%c0_11, %c0_12] : memref<64x1xf32, #tpu.memory_space<vmem>>, vector<64x1xf32>
    %cst = arith.constant 0.000000e+00 : f32
    %8 = vector.broadcast %cst : f32 to vector<4x82x8xf32>
    %c0_13 = arith.constant 0 : index
    %c0_14 = arith.constant 0 : index
    %c0_15 = arith.constant 0 : index
    %9 = vector.load %arg13[%c0_13, %c0_14, %c0_15] : memref<4x82x8xf32, #tpu.memory_space<vmem>>, vector<4x82x8xf32>
    tpu.vector_store %arg13[%c0_13, %c0_14, %c0_15], %8 {strides = array<i32>} : memref<4x82x8xf32, #tpu.memory_space<vmem>>, vector<4x82x8xf32>,
    %c0_16 = arith.constant 0 : index
    %c0_17 = arith.constant 0 : index
    %c0_18 = arith.constant 0 : index
    %10 = vector.load %arg4[%c0_16, %c0_17, %c0_18] : memref<4x8x8xf32, #tpu.memory_space<vmem>>, vector<1x8x8xf32>
    %11 = vector.shape_cast %10 : vector<1x8x8xf32> to vector<8x8xf32>
    %cst_19 = arith.constant dense<0.000000e+00> : vector<64x8xf32>
    %12 = tpu.matmul %1, %11, %cst_19 {dimension_numbers = #tpu.dot_dimension_numbers<[1], [0], [0], [1], [0, 0, 1, 1], [], []>} : vector<64x8xf32>, vector<8x8xf32>, vector<64x8xf32> -> vector<64x8xf32>
    %13 = vector.broadcast %4 : vector<1x8xf32> to vector<64x8xf32>
    %14 = arith.addf %12, %13 : vector<64x8xf32>
    %c0_20 = arith.constant 0 : index
    %c0_21 = arith.constant 0 : index
    %c0_22 = arith.constant 0 : index
    %c0_23 = arith.constant 0 : index
    %15 = vector.load %arg2[%c0_20, %c0_21, %c0_22, %c0_23] : memref<1x4x64x8xf32, #tpu.memory_space<vmem>>, vector<1x1x64x8xf32>
    %16 = vector.shape_cast %15 : vector<1x1x64x8xf32> to vector<64x8xf32>
    %17 = arith.addf %14, %16 : vector<64x8xf32>
    %18 = vector.broadcast %3 : vector<1x8xf32> to vector<64x8xf32>
    %19 = arith.addf %17, %18 : vector<64x8xf32>
    %cst_24 = arith.constant 0.000000e+00 : f32
    %20 = vector.broadcast %cst_24 : f32 to vector<64x8xf32>
    %21 = arith.cmpf ogt, %19, %20 : vector<64x8xf32>
    %cst_25 = arith.constant 2.000000e-01 : f32
    %22 = vector.broadcast %cst_25 : f32 to vector<64x8xf32>
    %23 = arith.mulf %22, %19 : vector<64x8xf32>
    %24 = arith.select %21, %19, %23 : vector<64x8xi1>, vector<64x8xf32>
    %c0_26 = arith.constant 0 : index
    %c9 = arith.constant 9 : index
    %c0_27 = arith.constant 0 : index
    %25 = vector.load %arg13[%c0_26, %c9, %c0_27] : memref<4x82x8xf32, #tpu.memory_space<vmem>>, vector<1x64x8xf32>
    %26 = vector.shape_cast %25 : vector<1x64x8xf32> to vector<64x8xf32>
    %27 = vector.shape_cast %24 : vector<64x8xf32> to vector<1x64x8xf32>
    tpu.vector_store %arg13[%c0_26, %c9, %c0_27], %27 {strides = array<i32>} : memref<4x82x8xf32, #tpu.memory_space<vmem>>, vector<1x64x8xf32>,
    %c1 = arith.constant 1 : index
    %c0_28 = arith.constant 0 : index
    %c0_29 = arith.constant 0 : index
    %28 = vector.load %arg4[%c1, %c0_28, %c0_29] : memref<4x8x8xf32, #tpu.memory_space<vmem>>, vector<1x8x8xf32>
    %29 = vector.shape_cast %28 : vector<1x8x8xf32> to vector<8x8xf32>
    %cst_30 = arith.constant dense<0.000000e+00> : vector<64x8xf32>
    %30 = tpu.matmul %1, %29, %cst_30 {dimension_numbers = #tpu.dot_dimension_numbers<[1], [0], [0], [1], [0, 0, 1, 1], [], []>} : vector<64x8xf32>, vector<8x8xf32>, vector<64x8xf32> -> vector<64x8xf32>
    %31 = vector.broadcast %4 : vector<1x8xf32> to vector<64x8xf32>
    %32 = arith.addf %30, %31 : vector<64x8xf32>
    %c0_31 = arith.constant 0 : index
    %c1_32 = arith.constant 1 : index
    %c0_33 = arith.constant 0 : index
    %c0_34 = arith.constant 0 : index
    %33 = vector.load %arg2[%c0_31, %c1_32, %c0_33, %c0_34] : memref<1x4x64x8xf32, #tpu.memory_space<vmem>>, vector<1x1x64x8xf32>
    %34 = vector.shape_cast %33 : vector<1x1x64x8xf32> to vector<64x8xf32>
    %35 = arith.addf %32, %34 : vector<64x8xf32>
    %36 = vector.broadcast %3 : vector<1x8xf32> to vector<64x8xf32>
    %37 = arith.addf %35, %36 : vector<64x8xf32>
    %cst_35 = arith.constant 0.000000e+00 : f32
    %38 = vector.broadcast %cst_35 : f32 to vector<64x8xf32>
    %39 = arith.cmpf ogt, %37, %38 : vector<64x8xf32>
    %cst_36 = arith.constant 2.000000e-01 : f32
    %40 = vector.broadcast %cst_36 : f32 to vector<64x8xf32>
    %41 = arith.mulf %40, %37 : vector<64x8xf32>
    %42 = arith.select %39, %37, %41 : vector<64x8xi1>, vector<64x8xf32>
    %c1_37 = arith.constant 1 : index
    %c9_38 = arith.constant 9 : index
    %c0_39 = arith.constant 0 : index
    %43 = vector.load %arg13[%c1_37, %c9_38, %c0_39] : memref<4x82x8xf32, #tpu.memory_space<vmem>>, vector<1x64x8xf32>
    %44 = vector.shape_cast %43 : vector<1x64x8xf32> to vector<64x8xf32>
    %45 = vector.shape_cast %42 : vector<64x8xf32> to vector<1x64x8xf32>
    tpu.vector_store %arg13[%c1_37, %c9_38, %c0_39], %45 {strides = array<i32>} : memref<4x82x8xf32, #tpu.memory_space<vmem>>, vector<1x64x8xf32>,
    %c2 = arith.constant 2 : index
    %c0_40 = arith.constant 0 : index
    %c0_41 = arith.constant 0 : index
    %46 = vector.load %arg4[%c2, %c0_40, %c0_41] : memref<4x8x8xf32, #tpu.memory_space<vmem>>, vector<1x8x8xf32>
    %47 = vector.shape_cast %46 : vector<1x8x8xf32> to vector<8x8xf32>
    %cst_42 = arith.constant dense<0.000000e+00> : vector<64x8xf32>
    %48 = tpu.matmul %1, %47, %cst_42 {dimension_numbers = #tpu.dot_dimension_numbers<[1], [0], [0], [1], [0, 0, 1, 1], [], []>} : vector<64x8xf32>, vector<8x8xf32>, vector<64x8xf32> -> vector<64x8xf32>
    %49 = vector.broadcast %4 : vector<1x8xf32> to vector<64x8xf32>
    %50 = arith.addf %48, %49 : vector<64x8xf32>
    %c0_43 = arith.constant 0 : index
    %c2_44 = arith.constant 2 : index
    %c0_45 = arith.constant 0 : index
    %c0_46 = arith.constant 0 : index
    %51 = vector.load %arg2[%c0_43, %c2_44, %c0_45, %c0_46] : memref<1x4x64x8xf32, #tpu.memory_space<vmem>>, vector<1x1x64x8xf32>
    %52 = vector.shape_cast %51 : vector<1x1x64x8xf32> to vector<64x8xf32>
    %53 = arith.addf %50, %52 : vector<64x8xf32>
    %54 = vector.broadcast %3 : vector<1x8xf32> to vector<64x8xf32>
    %55 = arith.addf %53, %54 : vector<64x8xf32>
    %cst_47 = arith.constant 0.000000e+00 : f32
    %56 = vector.broadcast %cst_47 : f32 to vector<64x8xf32>
    %57 = arith.cmpf ogt, %55, %56 : vector<64x8xf32>
    %cst_48 = arith.constant 2.000000e-01 : f32
    %58 = vector.broadcast %cst_48 : f32 to vector<64x8xf32>
    %59 = arith.mulf %58, %55 : vector<64x8xf32>
    %60 = arith.select %57, %55, %59 : vector<64x8xi1>, vector<64x8xf32>
    %c2_49 = arith.constant 2 : index
    %c9_50 = arith.constant 9 : index
    %c0_51 = arith.constant 0 : index
    %61 = vector.load %arg13[%c2_49, %c9_50, %c0_51] : memref<4x82x8xf32, #tpu.memory_space<vmem>>, vector<1x64x8xf32>
    %62 = vector.shape_cast %61 : vector<1x64x8xf32> to vector<64x8xf32>
    %63 = vector.shape_cast %60 : vector<64x8xf32> to vector<1x64x8xf32>
    tpu.vector_store %arg13[%c2_49, %c9_50, %c0_51], %63 {strides = array<i32>} : memref<4x82x8xf32, #tpu.memory_space<vmem>>, vector<1x64x8xf32>,
    %c3 = arith.constant 3 : index
    %c0_52 = arith.constant 0 : index
    %c0_53 = arith.constant 0 : index
    %64 = vector.load %arg4[%c3, %c0_52, %c0_53] : memref<4x8x8xf32, #tpu.memory_space<vmem>>, vector<1x8x8xf32>
    %65 = vector.shape_cast %64 : vector<1x8x8xf32> to vector<8x8xf32>
    %cst_54 = arith.constant dense<0.000000e+00> : vector<64x8xf32>
    %66 = tpu.matmul %1, %65, %cst_54 {dimension_numbers = #tpu.dot_dimension_numbers<[1], [0], [0], [1], [0, 0, 1, 1], [], []>} : vector<64x8xf32>, vector<8x8xf32>, vector<64x8xf32> -> vector<64x8xf32>
    %67 = vector.broadcast %4 : vector<1x8xf32> to vector<64x8xf32>
    %68 = arith.addf %66, %67 : vector<64x8xf32>
    %c0_55 = arith.constant 0 : index
    %c3_56 = arith.constant 3 : index
    %c0_57 = arith.constant 0 : index
    %c0_58 = arith.constant 0 : index
    %69 = vector.load %arg2[%c0_55, %c3_56, %c0_57, %c0_58] : memref<1x4x64x8xf32, #tpu.memory_space<vmem>>, vector<1x1x64x8xf32>
    %70 = vector.shape_cast %69 : vector<1x1x64x8xf32> to vector<64x8xf32>
    %71 = arith.addf %68, %70 : vector<64x8xf32>
    %72 = vector.broadcast %3 : vector<1x8xf32> to vector<64x8xf32>
    %73 = arith.addf %71, %72 : vector<64x8xf32>
    %cst_59 = arith.constant 0.000000e+00 : f32
    %74 = vector.broadcast %cst_59 : f32 to vector<64x8xf32>
    %75 = arith.cmpf ogt, %73, %74 : vector<64x8xf32>
    %cst_60 = arith.constant 2.000000e-01 : f32
    %76 = vector.broadcast %cst_60 : f32 to vector<64x8xf32>
    %77 = arith.mulf %76, %73 : vector<64x8xf32>
    %78 = arith.select %75, %73, %77 : vector<64x8xi1>, vector<64x8xf32>
    %c3_61 = arith.constant 3 : index
    %c9_62 = arith.constant 9 : index
    %c0_63 = arith.constant 0 : index
    %79 = vector.load %arg13[%c3_61, %c9_62, %c0_63] : memref<4x82x8xf32, #tpu.memory_space<vmem>>, vector<1x64x8xf32>
    %80 = vector.shape_cast %79 : vector<1x64x8xf32> to vector<64x8xf32>
    %81 = vector.shape_cast %78 : vector<64x8xf32> to vector<1x64x8xf32>
    tpu.vector_store %arg13[%c3_61, %c9_62, %c0_63], %81 {strides = array<i32>} : memref<4x82x8xf32, #tpu.memory_space<vmem>>, vector<1x64x8xf32>,
    %cst_64 = arith.constant 0.000000e+00 : f32
    %82 = vector.broadcast %cst_64 : f32 to vector<1x8xf32>
    %cst_65 = arith.constant 0.000000e+00 : f32
    %83 = vector.broadcast %cst_65 : f32 to vector<1x8xf32>
    %c3_66 = arith.constant 3 : index
    %c0_67 = arith.constant 0 : index
    %c0_68 = arith.constant 0 : index
    %84 = vector.load %arg13[%c3_66, %c0_67, %c0_68] : memref<4x82x8xf32, #tpu.memory_space<vmem>>, vector<1x64x8xf32>
    %85 = vector.shape_cast %84 : vector<1x64x8xf32> to vector<64x8xf32>
    %86 = vector.broadcast %6 : vector<64x1xf32> to vector<64x8xf32>
    %87 = arith.mulf %85, %86 : vector<64x8xf32>
    %c0_69 = arith.constant 0 : index
    %c0_70 = arith.constant 0 : index
    %c0_71 = arith.constant 0 : index
    %88 = vector.load %arg6[%c0_69, %c0_70, %c0_71] : memref<9x8x8xf32, #tpu.memory_space<vmem>>, vector<1x8x8xf32>
    %89 = vector.shape_cast %88 : vector<1x8x8xf32> to vector<8x8xf32>
    %cst_72 = arith.constant dense<0.000000e+00> : vector<64x8xf32>
    %90 = tpu.matmul %87, %89, %cst_72 {dimension_numbers = #tpu.dot_dimension_numbers<[1], [0], [0], [1], [0, 0, 1, 1], [], []>} : vector<64x8xf32>, vector<8x8xf32>, vector<64x8xf32> -> vector<64x8xf32>
    %c2_73 = arith.constant 2 : index
    %c1_74 = arith.constant 1 : index
    %c0_75 = arith.constant 0 : index
    %91 = vector.load %arg13[%c2_73, %c1_74, %c0_75] : memref<4x82x8xf32, #tpu.memory_space<vmem>>, vector<1x64x8xf32>
    %92 = vector.shape_cast %91 : vector<1x64x8xf32> to vector<64x8xf32>
    %c1_76 = arith.constant 1 : index
    %c0_77 = arith.constant 0 : index
    %c0_78 = arith.constant 0 : index
    %93 = vector.load %arg6[%c1_76, %c0_77, %c0_78] : memref<9x8x8xf32, #tpu.memory_space<vmem>>, vector<1x8x8xf32>
    %94 = vector.shape_cast %93 : vector<1x8x8xf32> to vector<8x8xf32>
    %cst_79 = arith.constant dense<0.000000e+00> : vector<64x8xf32>
    %95 = tpu.matmul %92, %94, %cst_79 {dimension_numbers = #tpu.dot_dimension_numbers<[1], [0], [0], [1], [0, 0, 1, 1], [], []>} : vector<64x8xf32>, vector<8x8xf32>, vector<64x8xf32> -> vector<64x8xf32>
    %96 = arith.addf %90, %95 : vector<64x8xf32>
    %c3_80 = arith.constant 3 : index
    %c1_81 = arith.constant 1 : index
    %c0_82 = arith.constant 0 : index
    %97 = vector.load %arg13[%c3_80, %c1_81, %c0_82] : memref<4x82x8xf32, #tpu.memory_space<vmem>>, vector<1x64x8xf32>
    %98 = vector.shape_cast %97 : vector<1x64x8xf32> to vector<64x8xf32>
    %c2_83 = arith.constant 2 : index
    %c0_84 = arith.constant 0 : index
    %c0_85 = arith.constant 0 : index
    %99 = vector.load %arg6[%c2_83, %c0_84, %c0_85] : memref<9x8x8xf32, #tpu.memory_space<vmem>>, vector<1x8x8xf32>
    %100 = vector.shape_cast %99 : vector<1x8x8xf32> to vector<8x8xf32>
    %cst_86 = arith.constant dense<0.000000e+00> : vector<64x8xf32>
    %101 = tpu.matmul %98, %100, %cst_86 {dimension_numbers = #tpu.dot_dimension_numbers<[1], [0], [0], [1], [0, 0, 1, 1], [], []>} : vector<64x8xf32>, vector<8x8xf32>, vector<64x8xf32> -> vector<64x8xf32>
    %102 = arith.addf %96, %101 : vector<64x8xf32>
    %c1_87 = arith.constant 1 : index
    %c8 = arith.constant 8 : index
    %c0_88 = arith.constant 0 : index
    %103 = vector.load %arg13[%c1_87, %c8, %c0_88] : memref<4x82x8xf32, #tpu.memory_space<vmem>>, vector<1x64x8xf32>
    %104 = vector.shape_cast %103 : vector<1x64x8xf32> to vector<64x8xf32>
    %105 = vector.broadcast %6 : vector<64x1xf32> to vector<64x8xf32>
    %106 = arith.mulf %104, %105 : vector<64x8xf32>
    %c3_89 = arith.constant 3 : index
    %c0_90 = arith.constant 0 : index
    %c0_91 = arith.constant 0 : index
    %107 = vector.load %arg6[%c3_89, %c0_90, %c0_91] : memref<9x8x8xf32, #tpu.memory_space<vmem>>, vector<1x8x8xf32>
    %108 = vector.shape_cast %107 : vector<1x8x8xf32> to vector<8x8xf32>
    %cst_92 = arith.constant dense<0.000000e+00> : vector<64x8xf32>
    %109 = tpu.matmul %106, %108, %cst_92 {dimension_numbers = #tpu.dot_dimension_numbers<[1], [0], [0], [1], [0, 0, 1, 1], [], []>} : vector<64x8xf32>, vector<8x8xf32>, vector<64x8xf32> -> vector<64x8xf32>
    %110 = arith.addf %102, %109 : vector<64x8xf32>
    %c0_93 = arith.constant 0 : index
    %c9_94 = arith.constant 9 : index
    %c0_95 = arith.constant 0 : index
    %111 = vector.load %arg13[%c0_93, %c9_94, %c0_95] : memref<4x82x8xf32, #tpu.memory_space<vmem>>, vector<1x64x8xf32>
    %112 = vector.shape_cast %111 : vector<1x64x8xf32> to vector<64x8xf32>
    %c4 = arith.constant 4 : index
    %c0_96 = arith.constant 0 : index
    %c0_97 = arith.constant 0 : index
    %113 = vector.load %arg6[%c4, %c0_96, %c0_97] : memref<9x8x8xf32, #tpu.memory_space<vmem>>, vector<1x8x8xf32>
    %114 = vector.shape_cast %113 : vector<1x8x8xf32> to vector<8x8xf32>
    %cst_98 = arith.constant dense<0.000000e+00> : vector<64x8xf32>
    %115 = tpu.matmul %112, %114, %cst_98 {dimension_numbers = #tpu.dot_dimension_numbers<[1], [0], [0], [1], [0, 0, 1, 1], [], []>} : vector<64x8xf32>, vector<8x8xf32>, vector<64x8xf32> -> vector<64x8xf32>
    %116 = arith.addf %110, %115 : vector<64x8xf32>
    %c1_99 = arith.constant 1 : index
    %c9_100 = arith.constant 9 : index
    %c0_101 = arith.constant 0 : index
    %117 = vector.load %arg13[%c1_99, %c9_100, %c0_101] : memref<4x82x8xf32, #tpu.memory_space<vmem>>, vector<1x64x8xf32>
    %118 = vector.shape_cast %117 : vector<1x64x8xf32> to vector<64x8xf32>
    %c5 = arith.constant 5 : index
    %c0_102 = arith.constant 0 : index
    %c0_103 = arith.constant 0 : index
    %119 = vector.load %arg6[%c5, %c0_102, %c0_103] : memref<9x8x8xf32, #tpu.memory_space<vmem>>, vector<1x8x8xf32>
    %120 = vector.shape_cast %119 : vector<1x8x8xf32> to vector<8x8xf32>
    %cst_104 = arith.constant dense<0.000000e+00> : vector<64x8xf32>
    %121 = tpu.matmul %118, %120, %cst_104 {dimension_numbers = #tpu.dot_dimension_numbers<[1], [0], [0], [1], [0, 0, 1, 1], [], []>} : vector<64x8xf32>, vector<8x8xf32>, vector<64x8xf32> -> vector<64x8xf32>
    %122 = arith.addf %116, %121 : vector<64x8xf32>
    %c3_105 = arith.constant 3 : index
    %c8_106 = arith.constant 8 : index
    %c0_107 = arith.constant 0 : index
    %123 = vector.load %arg13[%c3_105, %c8_106, %c0_107] : memref<4x82x8xf32, #tpu.memory_space<vmem>>, vector<1x64x8xf32>
    %124 = vector.shape_cast %123 : vector<1x64x8xf32> to vector<64x8xf32>
    %125 = vector.broadcast %6 : vector<64x1xf32> to vector<64x8xf32>
    %126 = arith.mulf %124, %125 : vector<64x8xf32>
    %c6 = arith.constant 6 : index
    %c0_108 = arith.constant 0 : index
    %c0_109 = arith.constant 0 : index
    %127 = vector.load %arg6[%c6, %c0_108, %c0_109] : memref<9x8x8xf32, #tpu.memory_space<vmem>>, vector<1x8x8xf32>
    %128 = vector.shape_cast %127 : vector<1x8x8xf32> to vector<8x8xf32>
    %cst_110 = arith.constant dense<0.000000e+00> : vector<64x8xf32>
    %129 = tpu.matmul %126, %128, %cst_110 {dimension_numbers = #tpu.dot_dimension_numbers<[1], [0], [0], [1], [0, 0, 1, 1], [], []>} : vector<64x8xf32>, vector<8x8xf32>, vector<64x8xf32> -> vector<64x8xf32>
    %130 = arith.addf %122, %129 : vector<64x8xf32>
    %c2_111 = arith.constant 2 : index
    %c9_112 = arith.constant 9 : index
    %c0_113 = arith.constant 0 : index
    %131 = vector.load %arg13[%c2_111, %c9_112, %c0_113] : memref<4x82x8xf32, #tpu.memory_space<vmem>>, vector<1x64x8xf32>
    %132 = vector.shape_cast %131 : vector<1x64x8xf32> to vector<64x8xf32>
    %c7 = arith.constant 7 : index
    %c0_114 = arith.constant 0 : index
    %c0_115 = arith.constant 0 : index
    %133 = vector.load %arg6[%c7, %c0_114, %c0_115] : memref<9x8x8xf32, #tpu.memory_space<vmem>>, vector<1x8x8xf32>
    %134 = vector.shape_cast %133 : vector<1x8x8xf32> to vector<8x8xf32>
    %cst_116 = arith.constant dense<0.000000e+00> : vector<64x8xf32>
    %135 = tpu.matmul %132, %134, %cst_116 {dimension_numbers = #tpu.dot_dimension_numbers<[1], [0], [0], [1], [0, 0, 1, 1], [], []>} : vector<64x8xf32>, vector<8x8xf32>, vector<64x8xf32> -> vector<64x8xf32>
    %136 = arith.addf %130, %135 : vector<64x8xf32>
    %c3_117 = arith.constant 3 : index
    %c9_118 = arith.constant 9 : index
    %c0_119 = arith.constant 0 : index
    %137 = vector.load %arg13[%c3_117, %c9_118, %c0_119] : memref<4x82x8xf32, #tpu.memory_space<vmem>>, vector<1x64x8xf32>
    %138 = vector.shape_cast %137 : vector<1x64x8xf32> to vector<64x8xf32>
    %c8_120 = arith.constant 8 : index
    %c0_121 = arith.constant 0 : index
    %c0_122 = arith.constant 0 : index
    %139 = vector.load %arg6[%c8_120, %c0_121, %c0_122] : memref<9x8x8xf32, #tpu.memory_space<vmem>>, vector<1x8x8xf32>
    %140 = vector.shape_cast %139 : vector<1x8x8xf32> to vector<8x8xf32>
    %cst_123 = arith.constant dense<0.000000e+00> : vector<64x8xf32>
    %141 = tpu.matmul %138, %140, %cst_123 {dimension_numbers = #tpu.dot_dimension_numbers<[1], [0], [0], [1], [0, 0, 1, 1], [], []>} : vector<64x8xf32>, vector<8x8xf32>, vector<64x8xf32> -> vector<64x8xf32>
    %142 = arith.addf %136, %141 : vector<64x8xf32>
    %c0_124 = arith.constant 0 : index
    %c9_125 = arith.constant 9 : index
    %c0_126 = arith.constant 0 : index
    %143 = vector.load %arg13[%c0_124, %c9_125, %c0_126] : memref<4x82x8xf32, #tpu.memory_space<vmem>>, vector<1x64x8xf32>
    %144 = vector.shape_cast %143 : vector<1x64x8xf32> to vector<64x8xf32>
    %cst_127 = arith.constant 0.000000e+00 : f32
    %145 = vector.broadcast %cst_127 : f32 to vector<64x8xf32>
    %146 = arith.cmpf ogt, %144, %145 : vector<64x8xf32>
    %cst_128 = arith.constant 5.000000e+00 : f32
    %147 = vector.broadcast %cst_128 : f32 to vector<64x8xf32>
    %148 = arith.mulf %147, %144 : vector<64x8xf32>
    %149 = arith.select %146, %144, %148 : vector<64x8xi1>, vector<64x8xf32>
    %150 = vector.broadcast %5 : vector<1x8xf32> to vector<64x8xf32>
    %151 = arith.addf %142, %150 : vector<64x8xf32>
    %152 = arith.addf %151, %149 : vector<64x8xf32>
    %cst_129 = arith.constant 0.000000e+00 : f32
    %153 = vector.broadcast %cst_129 : f32 to vector<64x8xf32>
    %154 = arith.cmpf ogt, %152, %153 : vector<64x8xf32>
    %cst_130 = arith.constant 2.000000e-01 : f32
    %155 = vector.broadcast %cst_130 : f32 to vector<64x8xf32>
    %156 = arith.mulf %155, %152 : vector<64x8xf32>
    %157 = arith.select %154, %152, %156 : vector<64x8xi1>, vector<64x8xf32>
    %c0_131 = arith.constant 0 : index
    %c0_132 = arith.constant 0 : index
    %c0_133 = arith.constant 0 : index
    %c0_134 = arith.constant 0 : index
    %158 = vector.load %arg10[%c0_131, %c0_132, %c0_133, %c0_134] : memref<1x4x64x8xf32, #tpu.memory_space<vmem>>, vector<1x1x64x8xf32>
    %159 = vector.shape_cast %158 : vector<1x1x64x8xf32> to vector<64x8xf32>
    %160 = vector.shape_cast %157 : vector<64x8xf32> to vector<1x1x64x8xf32>
    tpu.vector_store %arg10[%c0_131, %c0_132, %c0_133, %c0_134], %160 {strides = array<i32>} : memref<1x4x64x8xf32, #tpu.memory_space<vmem>>, vector<1x1x64x8xf32>,
    %cst_135 = arith.constant dense<0.000000e+00> : vector<8xf32>
    %161 = vector.multi_reduction <add>, %157, %cst_135 [0] : vector<64x8xf32> to vector<8xf32>
    %162 = vector.shape_cast %161 : vector<8xf32> to vector<1x8xf32>
    %163 = arith.addf %82, %162 : vector<1x8xf32>
    %164 = arith.mulf %157, %157 : vector<64x8xf32>
    %cst_136 = arith.constant dense<0.000000e+00> : vector<8xf32>
    %165 = vector.multi_reduction <add>, %164, %cst_136 [0] : vector<64x8xf32> to vector<8xf32>
    %166 = vector.shape_cast %165 : vector<8xf32> to vector<1x8xf32>
    %167 = arith.addf %83, %166 : vector<1x8xf32>
    %c2_137 = arith.constant 2 : index
    %c1_138 = arith.constant 1 : index
    %c0_139 = arith.constant 0 : index
    %168 = vector.load %arg13[%c2_137, %c1_138, %c0_139] : memref<4x82x8xf32, #tpu.memory_space<vmem>>, vector<1x64x8xf32>
    %169 = vector.shape_cast %168 : vector<1x64x8xf32> to vector<64x8xf32>
    %c0_140 = arith.constant 0 : index
    %c0_141 = arith.constant 0 : index
    %c0_142 = arith.constant 0 : index
    %170 = vector.load %arg6[%c0_140, %c0_141, %c0_142] : memref<9x8x8xf32, #tpu.memory_space<vmem>>, vector<1x8x8xf32>
    %171 = vector.shape_cast %170 : vector<1x8x8xf32> to vector<8x8xf32>
    %cst_143 = arith.constant dense<0.000000e+00> : vector<64x8xf32>
    %172 = tpu.matmul %169, %171, %cst_143 {dimension_numbers = #tpu.dot_dimension_numbers<[1], [0], [0], [1], [0, 0, 1, 1], [], []>} : vector<64x8xf32>, vector<8x8xf32>, vector<64x8xf32> -> vector<64x8xf32>
    %c3_144 = arith.constant 3 : index
    %c1_145 = arith.constant 1 : index
    %c0_146 = arith.constant 0 : index
    %173 = vector.load %arg13[%c3_144, %c1_145, %c0_146] : memref<4x82x8xf32, #tpu.memory_space<vmem>>, vector<1x64x8xf32>
    %174 = vector.shape_cast %173 : vector<1x64x8xf32> to vector<64x8xf32>
    %c1_147 = arith.constant 1 : index
    %c0_148 = arith.constant 0 : index
    %c0_149 = arith.constant 0 : index
    %175 = vector.load %arg6[%c1_147, %c0_148, %c0_149] : memref<9x8x8xf32, #tpu.memory_space<vmem>>, vector<1x8x8xf32>
    %176 = vector.shape_cast %175 : vector<1x8x8xf32> to vector<8x8xf32>
    %cst_150 = arith.constant dense<0.000000e+00> : vector<64x8xf32>
    %177 = tpu.matmul %174, %176, %cst_150 {dimension_numbers = #tpu.dot_dimension_numbers<[1], [0], [0], [1], [0, 0, 1, 1], [], []>} : vector<64x8xf32>, vector<8x8xf32>, vector<64x8xf32> -> vector<64x8xf32>
    %178 = arith.addf %172, %177 : vector<64x8xf32>
    %c2_151 = arith.constant 2 : index
    %c2_152 = arith.constant 2 : index
    %c0_153 = arith.constant 0 : index
    %179 = vector.load %arg13[%c2_151, %c2_152, %c0_153] : memref<4x82x8xf32, #tpu.memory_space<vmem>>, vector<1x64x8xf32>
    %180 = vector.shape_cast %179 : vector<1x64x8xf32> to vector<64x8xf32>
    %181 = vector.broadcast %7 : vector<64x1xf32> to vector<64x8xf32>
    %182 = arith.mulf %180, %181 : vector<64x8xf32>
    %c2_154 = arith.constant 2 : index
    %c0_155 = arith.constant 0 : index
    %c0_156 = arith.constant 0 : index
    %183 = vector.load %arg6[%c2_154, %c0_155, %c0_156] : memref<9x8x8xf32, #tpu.memory_space<vmem>>, vector<1x8x8xf32>
    %184 = vector.shape_cast %183 : vector<1x8x8xf32> to vector<8x8xf32>
    %cst_157 = arith.constant dense<0.000000e+00> : vector<64x8xf32>
    %185 = tpu.matmul %182, %184, %cst_157 {dimension_numbers = #tpu.dot_dimension_numbers<[1], [0], [0], [1], [0, 0, 1, 1], [], []>} : vector<64x8xf32>, vector<8x8xf32>, vector<64x8xf32> -> vector<64x8xf32>
    %186 = arith.addf %178, %185 : vector<64x8xf32>
    %c0_158 = arith.constant 0 : index
    %c9_159 = arith.constant 9 : index
    %c0_160 = arith.constant 0 : index
    %187 = vector.load %arg13[%c0_158, %c9_159, %c0_160] : memref<4x82x8xf32, #tpu.memory_space<vmem>>, vector<1x64x8xf32>
    %188 = vector.shape_cast %187 : vector<1x64x8xf32> to vector<64x8xf32>
    %c3_161 = arith.constant 3 : index
    %c0_162 = arith.constant 0 : index
    %c0_163 = arith.constant 0 : index
    %189 = vector.load %arg6[%c3_161, %c0_162, %c0_163] : memref<9x8x8xf32, #tpu.memory_space<vmem>>, vector<1x8x8xf32>
    %190 = vector.shape_cast %189 : vector<1x8x8xf32> to vector<8x8xf32>
    %cst_164 = arith.constant dense<0.000000e+00> : vector<64x8xf32>
    %191 = tpu.matmul %188, %190, %cst_164 {dimension_numbers = #tpu.dot_dimension_numbers<[1], [0], [0], [1], [0, 0, 1, 1], [], []>} : vector<64x8xf32>, vector<8x8xf32>, vector<64x8xf32> -> vector<64x8xf32>
    %192 = arith.addf %186, %191 : vector<64x8xf32>
    %c1_165 = arith.constant 1 : index
    %c9_166 = arith.constant 9 : index
    %c0_167 = arith.constant 0 : index
    %193 = vector.load %arg13[%c1_165, %c9_166, %c0_167] : memref<4x82x8xf32, #tpu.memory_space<vmem>>, vector<1x64x8xf32>
    %194 = vector.shape_cast %193 : vector<1x64x8xf32> to vector<64x8xf32>
    %c4_168 = arith.constant 4 : index
    %c0_169 = arith.constant 0 : index
    %c0_170 = arith.constant 0 : index
    %195 = vector.load %arg6[%c4_168, %c0_169, %c0_170] : memref<9x8x8xf32, #tpu.memory_space<vmem>>, vector<1x8x8xf32>
    %196 = vector.shape_cast %195 : vector<1x8x8xf32> to vector<8x8xf32>
    %cst_171 = arith.constant dense<0.000000e+00> : vector<64x8xf32>
    %197 = tpu.matmul %194, %196, %cst_171 {dimension_numbers = #tpu.dot_dimension_numbers<[1], [0], [0], [1], [0, 0, 1, 1], [], []>} : vector<64x8xf32>, vector<8x8xf32>, vector<64x8xf32> -> vector<64x8xf32>
    %198 = arith.addf %192, %197 : vector<64x8xf32>
    %c0_172 = arith.constant 0 : index
    %c10 = arith.constant 10 : index
    %c0_173 = arith.constant 0 : index
    %199 = vector.load %arg13[%c0_172, %c10, %c0_173] : memref<4x82x8xf32, #tpu.memory_space<vmem>>, vector<1x64x8xf32>
    %200 = vector.shape_cast %199 : vector<1x64x8xf32> to vector<64x8xf32>
    %201 = vector.broadcast %7 : vector<64x1xf32> to vector<64x8xf32>
    %202 = arith.mulf %200, %201 : vector<64x8xf32>
    %c5_174 = arith.constant 5 : index
    %c0_175 = arith.constant 0 : index
    %c0_176 = arith.constant 0 : index
    %203 = vector.load %arg6[%c5_174, %c0_175, %c0_176] : memref<9x8x8xf32, #tpu.memory_space<vmem>>, vector<1x8x8xf32>
    %204 = vector.shape_cast %203 : vector<1x8x8xf32> to vector<8x8xf32>
    %cst_177 = arith.constant dense<0.000000e+00> : vector<64x8xf32>
    %205 = tpu.matmul %202, %204, %cst_177 {dimension_numbers = #tpu.dot_dimension_numbers<[1], [0], [0], [1], [0, 0, 1, 1], [], []>} : vector<64x8xf32>, vector<8x8xf32>, vector<64x8xf32> -> vector<64x8xf32>
    %206 = arith.addf %198, %205 : vector<64x8xf32>
    %c2_178 = arith.constant 2 : index
    %c9_179 = arith.constant 9 : index
    %c0_180 = arith.constant 0 : index
    %207 = vector.load %arg13[%c2_178, %c9_179, %c0_180] : memref<4x82x8xf32, #tpu.memory_space<vmem>>, vector<1x64x8xf32>
    %208 = vector.shape_cast %207 : vector<1x64x8xf32> to vector<64x8xf32>
    %c6_181 = arith.constant 6 : index
    %c0_182 = arith.constant 0 : index
    %c0_183 = arith.constant 0 : index
    %209 = vector.load %arg6[%c6_181, %c0_182, %c0_183] : memref<9x8x8xf32, #tpu.memory_space<vmem>>, vector<1x8x8xf32>
    %210 = vector.shape_cast %209 : vector<1x8x8xf32> to vector<8x8xf32>
    %cst_184 = arith.constant dense<0.000000e+00> : vector<64x8xf32>
    %211 = tpu.matmul %208, %210, %cst_184 {dimension_numbers = #tpu.dot_dimension_numbers<[1], [0], [0], [1], [0, 0, 1, 1], [], []>} : vector<64x8xf32>, vector<8x8xf32>, vector<64x8xf32> -> vector<64x8xf32>
    %212 = arith.addf %206, %211 : vector<64x8xf32>
    %c3_185 = arith.constant 3 : index
    %c9_186 = arith.constant 9 : index
    %c0_187 = arith.constant 0 : index
    %213 = vector.load %arg13[%c3_185, %c9_186, %c0_187] : memref<4x82x8xf32, #tpu.memory_space<vmem>>, vector<1x64x8xf32>
    %214 = vector.shape_cast %213 : vector<1x64x8xf32> to vector<64x8xf32>
    %c7_188 = arith.constant 7 : index
    %c0_189 = arith.constant 0 : index
    %c0_190 = arith.constant 0 : index
    %215 = vector.load %arg6[%c7_188, %c0_189, %c0_190] : memref<9x8x8xf32, #tpu.memory_space<vmem>>, vector<1x8x8xf32>
    %216 = vector.shape_cast %215 : vector<1x8x8xf32> to vector<8x8xf32>
    %cst_191 = arith.constant dense<0.000000e+00> : vector<64x8xf32>
    %217 = tpu.matmul %214, %216, %cst_191 {dimension_numbers = #tpu.dot_dimension_numbers<[1], [0], [0], [1], [0, 0, 1, 1], [], []>} : vector<64x8xf32>, vector<8x8xf32>, vector<64x8xf32> -> vector<64x8xf32>
    %218 = arith.addf %212, %217 : vector<64x8xf32>
    %c2_192 = arith.constant 2 : index
    %c10_193 = arith.constant 10 : index
    %c0_194 = arith.constant 0 : index
    %219 = vector.load %arg13[%c2_192, %c10_193, %c0_194] : memref<4x82x8xf32, #tpu.memory_space<vmem>>, vector<1x64x8xf32>
    %220 = vector.shape_cast %219 : vector<1x64x8xf32> to vector<64x8xf32>
    %221 = vector.broadcast %7 : vector<64x1xf32> to vector<64x8xf32>
    %222 = arith.mulf %220, %221 : vector<64x8xf32>
    %c8_195 = arith.constant 8 : index
    %c0_196 = arith.constant 0 : index
    %c0_197 = arith.constant 0 : index
    %223 = vector.load %arg6[%c8_195, %c0_196, %c0_197] : memref<9x8x8xf32, #tpu.memory_space<vmem>>, vector<1x8x8xf32>
    %224 = vector.shape_cast %223 : vector<1x8x8xf32> to vector<8x8xf32>
    %cst_198 = arith.constant dense<0.000000e+00> : vector<64x8xf32>
    %225 = tpu.matmul %222, %224, %cst_198 {dimension_numbers = #tpu.dot_dimension_numbers<[1], [0], [0], [1], [0, 0, 1, 1], [], []>} : vector<64x8xf32>, vector<8x8xf32>, vector<64x8xf32> -> vector<64x8xf32>
    %226 = arith.addf %218, %225 : vector<64x8xf32>
    %c1_199 = arith.constant 1 : index
    %c9_200 = arith.constant 9 : index
    %c0_201 = arith.constant 0 : index
    %227 = vector.load %arg13[%c1_199, %c9_200, %c0_201] : memref<4x82x8xf32, #tpu.memory_space<vmem>>, vector<1x64x8xf32>
    %228 = vector.shape_cast %227 : vector<1x64x8xf32> to vector<64x8xf32>
    %cst_202 = arith.constant 0.000000e+00 : f32
    %229 = vector.broadcast %cst_202 : f32 to vector<64x8xf32>
    %230 = arith.cmpf ogt, %228, %229 : vector<64x8xf32>
    %cst_203 = arith.constant 5.000000e+00 : f32
    %231 = vector.broadcast %cst_203 : f32 to vector<64x8xf32>
    %232 = arith.mulf %231, %228 : vector<64x8xf32>
    %233 = arith.select %230, %228, %232 : vector<64x8xi1>, vector<64x8xf32>
    %234 = vector.broadcast %5 : vector<1x8xf32> to vector<64x8xf32>
    %235 = arith.addf %226, %234 : vector<64x8xf32>
    %236 = arith.addf %235, %233 : vector<64x8xf32>
    %cst_204 = arith.constant 0.000000e+00 : f32
    %237 = vector.broadcast %cst_204 : f32 to vector<64x8xf32>
    %238 = arith.cmpf ogt, %236, %237 : vector<64x8xf32>
    %cst_205 = arith.constant 2.000000e-01 : f32
    %239 = vector.broadcast %cst_205 : f32 to vector<64x8xf32>
    %240 = arith.mulf %239, %236 : vector<64x8xf32>
    %241 = arith.select %238, %236, %240 : vector<64x8xi1>, vector<64x8xf32>
    %c0_206 = arith.constant 0 : index
    %c1_207 = arith.constant 1 : index
    %c0_208 = arith.constant 0 : index
    %c0_209 = arith.constant 0 : index
    %242 = vector.load %arg10[%c0_206, %c1_207, %c0_208, %c0_209] : memref<1x4x64x8xf32, #tpu.memory_space<vmem>>, vector<1x1x64x8xf32>
    %243 = vector.shape_cast %242 : vector<1x1x64x8xf32> to vector<64x8xf32>
    %244 = vector.shape_cast %241 : vector<64x8xf32> to vector<1x1x64x8xf32>
    tpu.vector_store %arg10[%c0_206, %c1_207, %c0_208, %c0_209], %244 {strides = array<i32>} : memref<1x4x64x8xf32, #tpu.memory_space<vmem>>, vector<1x1x64x8xf32>,
    %cst_210 = arith.constant dense<0.000000e+00> : vector<8xf32>
    %245 = vector.multi_reduction <add>, %241, %cst_210 [0] : vector<64x8xf32> to vector<8xf32>
    %246 = vector.shape_cast %245 : vector<8xf32> to vector<1x8xf32>
    %247 = arith.addf %163, %246 : vector<1x8xf32>
    %248 = arith.mulf %241, %241 : vector<64x8xf32>
    %cst_211 = arith.constant dense<0.000000e+00> : vector<8xf32>
    %249 = vector.multi_reduction <add>, %248, %cst_211 [0] : vector<64x8xf32> to vector<8xf32>
    %250 = vector.shape_cast %249 : vector<8xf32> to vector<1x8xf32>
    %251 = arith.addf %167, %250 : vector<1x8xf32>
    %c1_212 = arith.constant 1 : index
    %c8_213 = arith.constant 8 : index
    %c0_214 = arith.constant 0 : index
    %252 = vector.load %arg13[%c1_212, %c8_213, %c0_214] : memref<4x82x8xf32, #tpu.memory_space<vmem>>, vector<1x64x8xf32>
    %253 = vector.shape_cast %252 : vector<1x64x8xf32> to vector<64x8xf32>
    %254 = vector.broadcast %6 : vector<64x1xf32> to vector<64x8xf32>
    %255 = arith.mulf %253, %254 : vector<64x8xf32>
    %c0_215 = arith.constant 0 : index
    %c0_216 = arith.constant 0 : index
    %c0_217 = arith.constant 0 : index
    %256 = vector.load %arg6[%c0_215, %c0_216, %c0_217] : memref<9x8x8xf32, #tpu.memory_space<vmem>>, vector<1x8x8xf32>
    %257 = vector.shape_cast %256 : vector<1x8x8xf32> to vector<8x8xf32>
    %cst_218 = arith.constant dense<0.000000e+00> : vector<64x8xf32>
    %258 = tpu.matmul %255, %257, %cst_218 {dimension_numbers = #tpu.dot_dimension_numbers<[1], [0], [0], [1], [0, 0, 1, 1], [], []>} : vector<64x8xf32>, vector<8x8xf32>, vector<64x8xf32> -> vector<64x8xf32>
    %c0_219 = arith.constant 0 : index
    %c9_220 = arith.constant 9 : index
    %c0_221 = arith.constant 0 : index
    %259 = vector.load %arg13[%c0_219, %c9_220, %c0_221] : memref<4x82x8xf32, #tpu.memory_space<vmem>>, vector<1x64x8xf32>
    %260 = vector.shape_cast %259 : vector<1x64x8xf32> to vector<64x8xf32>
    %c1_222 = arith.constant 1 : index
    %c0_223 = arith.constant 0 : index
    %c0_224 = arith.constant 0 : index
    %261 = vector.load %arg6[%c1_222, %c0_223, %c0_224] : memref<9x8x8xf32, #tpu.memory_space<vmem>>, vector<1x8x8xf32>
    %262 = vector.shape_cast %261 : vector<1x8x8xf32> to vector<8x8xf32>
    %cst_225 = arith.constant dense<0.000000e+00> : vector<64x8xf32>
    %263 = tpu.matmul %260, %262, %cst_225 {dimension_numbers = #tpu.dot_dimension_numbers<[1], [0], [0], [1], [0, 0, 1, 1], [], []>} : vector<64x8xf32>, vector<8x8xf32>, vector<64x8xf32> -> vector<64x8xf32>
    %264 = arith.addf %258, %263 : vector<64x8xf32>
    %c1_226 = arith.constant 1 : index
    %c9_227 = arith.constant 9 : index
    %c0_228 = arith.constant 0 : index
    %265 = vector.load %arg13[%c1_226, %c9_227, %c0_228] : memref<4x82x8xf32, #tpu.memory_space<vmem>>, vector<1x64x8xf32>
    %266 = vector.shape_cast %265 : vector<1x64x8xf32> to vector<64x8xf32>
    %c2_229 = arith.constant 2 : index
    %c0_230 = arith.constant 0 : index
    %c0_231 = arith.constant 0 : index
    %267 = vector.load %arg6[%c2_229, %c0_230, %c0_231] : memref<9x8x8xf32, #tpu.memory_space<vmem>>, vector<1x8x8xf32>
    %268 = vector.shape_cast %267 : vector<1x8x8xf32> to vector<8x8xf32>
    %cst_232 = arith.constant dense<0.000000e+00> : vector<64x8xf32>
    %269 = tpu.matmul %266, %268, %cst_232 {dimension_numbers = #tpu.dot_dimension_numbers<[1], [0], [0], [1], [0, 0, 1, 1], [], []>} : vector<64x8xf32>, vector<8x8xf32>, vector<64x8xf32> -> vector<64x8xf32>
    %270 = arith.addf %264, %269 : vector<64x8xf32>
    %c3_233 = arith.constant 3 : index
    %c8_234 = arith.constant 8 : index
    %c0_235 = arith.constant 0 : index
    %271 = vector.load %arg13[%c3_233, %c8_234, %c0_235] : memref<4x82x8xf32, #tpu.memory_space<vmem>>, vector<1x64x8xf32>
    %272 = vector.shape_cast %271 : vector<1x64x8xf32> to vector<64x8xf32>
    %273 = vector.broadcast %6 : vector<64x1xf32> to vector<64x8xf32>
    %274 = arith.mulf %272, %273 : vector<64x8xf32>
    %c3_236 = arith.constant 3 : index
    %c0_237 = arith.constant 0 : index
    %c0_238 = arith.constant 0 : index
    %275 = vector.load %arg6[%c3_236, %c0_237, %c0_238] : memref<9x8x8xf32, #tpu.memory_space<vmem>>, vector<1x8x8xf32>
    %276 = vector.shape_cast %275 : vector<1x8x8xf32> to vector<8x8xf32>
    %cst_239 = arith.constant dense<0.000000e+00> : vector<64x8xf32>
    %277 = tpu.matmul %274, %276, %cst_239 {dimension_numbers = #tpu.dot_dimension_numbers<[1], [0], [0], [1], [0, 0, 1, 1], [], []>} : vector<64x8xf32>, vector<8x8xf32>, vector<64x8xf32> -> vector<64x8xf32>
    %278 = arith.addf %270, %277 : vector<64x8xf32>
    %c2_240 = arith.constant 2 : index
    %c9_241 = arith.constant 9 : index
    %c0_242 = arith.constant 0 : index
    %279 = vector.load %arg13[%c2_240, %c9_241, %c0_242] : memref<4x82x8xf32, #tpu.memory_space<vmem>>, vector<1x64x8xf32>
    %280 = vector.shape_cast %279 : vector<1x64x8xf32> to vector<64x8xf32>
    %c4_243 = arith.constant 4 : index
    %c0_244 = arith.constant 0 : index
    %c0_245 = arith.constant 0 : index
    %281 = vector.load %arg6[%c4_243, %c0_244, %c0_245] : memref<9x8x8xf32, #tpu.memory_space<vmem>>, vector<1x8x8xf32>
    %282 = vector.shape_cast %281 : vector<1x8x8xf32> to vector<8x8xf32>
    %cst_246 = arith.constant dense<0.000000e+00> : vector<64x8xf32>
    %283 = tpu.matmul %280, %282, %cst_246 {dimension_numbers = #tpu.dot_dimension_numbers<[1], [0], [0], [1], [0, 0, 1, 1], [], []>} : vector<64x8xf32>, vector<8x8xf32>, vector<64x8xf32> -> vector<64x8xf32>
    %284 = arith.addf %278, %283 : vector<64x8xf32>
    %c3_247 = arith.constant 3 : index
    %c9_248 = arith.constant 9 : index
    %c0_249 = arith.constant 0 : index
    %285 = vector.load %arg13[%c3_247, %c9_248, %c0_249] : memref<4x82x8xf32, #tpu.memory_space<vmem>>, vector<1x64x8xf32>
    %286 = vector.shape_cast %285 : vector<1x64x8xf32> to vector<64x8xf32>
    %c5_250 = arith.constant 5 : index
    %c0_251 = arith.constant 0 : index
    %c0_252 = arith.constant 0 : index
    %287 = vector.load %arg6[%c5_250, %c0_251, %c0_252] : memref<9x8x8xf32, #tpu.memory_space<vmem>>, vector<1x8x8xf32>
    %288 = vector.shape_cast %287 : vector<1x8x8xf32> to vector<8x8xf32>
    %cst_253 = arith.constant dense<0.000000e+00> : vector<64x8xf32>
    %289 = tpu.matmul %286, %288, %cst_253 {dimension_numbers = #tpu.dot_dimension_numbers<[1], [0], [0], [1], [0, 0, 1, 1], [], []>} : vector<64x8xf32>, vector<8x8xf32>, vector<64x8xf32> -> vector<64x8xf32>
    %290 = arith.addf %284, %289 : vector<64x8xf32>
    %c1_254 = arith.constant 1 : index
    %c16 = arith.constant 16 : index
    %c0_255 = arith.constant 0 : index
    %291 = vector.load %arg13[%c1_254, %c16, %c0_255] : memref<4x82x8xf32, #tpu.memory_space<vmem>>, vector<1x64x8xf32>
    %292 = vector.shape_cast %291 : vector<1x64x8xf32> to vector<64x8xf32>
    %293 = vector.broadcast %6 : vector<64x1xf32> to vector<64x8xf32>
    %294 = arith.mulf %292, %293 : vector<64x8xf32>
    %c6_256 = arith.constant 6 : index
    %c0_257 = arith.constant 0 : index
    %c0_258 = arith.constant 0 : index
    %295 = vector.load %arg6[%c6_256, %c0_257, %c0_258] : memref<9x8x8xf32, #tpu.memory_space<vmem>>, vector<1x8x8xf32>
    %296 = vector.shape_cast %295 : vector<1x8x8xf32> to vector<8x8xf32>
    %cst_259 = arith.constant dense<0.000000e+00> : vector<64x8xf32>
    %297 = tpu.matmul %294, %296, %cst_259 {dimension_numbers = #tpu.dot_dimension_numbers<[1], [0], [0], [1], [0, 0, 1, 1], [], []>} : vector<64x8xf32>, vector<8x8xf32>, vector<64x8xf32> -> vector<64x8xf32>
    %298 = arith.addf %290, %297 : vector<64x8xf32>
    %c0_260 = arith.constant 0 : index
    %c17 = arith.constant 17 : index
    %c0_261 = arith.constant 0 : index
    %299 = vector.load %arg13[%c0_260, %c17, %c0_261] : memref<4x82x8xf32, #tpu.memory_space<vmem>>, vector<1x64x8xf32>
    %300 = vector.shape_cast %299 : vector<1x64x8xf32> to vector<64x8xf32>
    %c7_262 = arith.constant 7 : index
    %c0_263 = arith.constant 0 : index
    %c0_264 = arith.constant 0 : index
    %301 = vector.load %arg6[%c7_262, %c0_263, %c0_264] : memref<9x8x8xf32, #tpu.memory_space<vmem>>, vector<1x8x8xf32>
    %302 = vector.shape_cast %301 : vector<1x8x8xf32> to vector<8x8xf32>
    %cst_265 = arith.constant dense<0.000000e+00> : vector<64x8xf32>
    %303 = tpu.matmul %300, %302, %cst_265 {dimension_numbers = #tpu.dot_dimension_numbers<[1], [0], [0], [1], [0, 0, 1, 1], [], []>} : vector<64x8xf32>, vector<8x8xf32>, vector<64x8xf32> -> vector<64x8xf32>
    %304 = arith.addf %298, %303 : vector<64x8xf32>
    %c1_266 = arith.constant 1 : index
    %c17_267 = arith.constant 17 : index
    %c0_268 = arith.constant 0 : index
    %305 = vector.load %arg13[%c1_266, %c17_267, %c0_268] : memref<4x82x8xf32, #tpu.memory_space<vmem>>, vector<1x64x8xf32>
    %306 = vector.shape_cast %305 : vector<1x64x8xf32> to vector<64x8xf32>
    %c8_269 = arith.constant 8 : index
    %c0_270 = arith.constant 0 : index
    %c0_271 = arith.constant 0 : index
    %307 = vector.load %arg6[%c8_269, %c0_270, %c0_271] : memref<9x8x8xf32, #tpu.memory_space<vmem>>, vector<1x8x8xf32>
    %308 = vector.shape_cast %307 : vector<1x8x8xf32> to vector<8x8xf32>
    %cst_272 = arith.constant dense<0.000000e+00> : vector<64x8xf32>
    %309 = tpu.matmul %306, %308, %cst_272 {dimension_numbers = #tpu.dot_dimension_numbers<[1], [0], [0], [1], [0, 0, 1, 1], [], []>} : vector<64x8xf32>, vector<8x8xf32>, vector<64x8xf32> -> vector<64x8xf32>
    %310 = arith.addf %304, %309 : vector<64x8xf32>
    %c2_273 = arith.constant 2 : index
    %c9_274 = arith.constant 9 : index
    %c0_275 = arith.constant 0 : index
    %311 = vector.load %arg13[%c2_273, %c9_274, %c0_275] : memref<4x82x8xf32, #tpu.memory_space<vmem>>, vector<1x64x8xf32>
    %312 = vector.shape_cast %311 : vector<1x64x8xf32> to vector<64x8xf32>
    %cst_276 = arith.constant 0.000000e+00 : f32
    %313 = vector.broadcast %cst_276 : f32 to vector<64x8xf32>
    %314 = arith.cmpf ogt, %312, %313 : vector<64x8xf32>
    %cst_277 = arith.constant 5.000000e+00 : f32
    %315 = vector.broadcast %cst_277 : f32 to vector<64x8xf32>
    %316 = arith.mulf %315, %312 : vector<64x8xf32>
    %317 = arith.select %314, %312, %316 : vector<64x8xi1>, vector<64x8xf32>
    %318 = vector.broadcast %5 : vector<1x8xf32> to vector<64x8xf32>
    %319 = arith.addf %310, %318 : vector<64x8xf32>
    %320 = arith.addf %319, %317 : vector<64x8xf32>
    %cst_278 = arith.constant 0.000000e+00 : f32
    %321 = vector.broadcast %cst_278 : f32 to vector<64x8xf32>
    %322 = arith.cmpf ogt, %320, %321 : vector<64x8xf32>
    %cst_279 = arith.constant 2.000000e-01 : f32
    %323 = vector.broadcast %cst_279 : f32 to vector<64x8xf32>
    %324 = arith.mulf %323, %320 : vector<64x8xf32>
    %325 = arith.select %322, %320, %324 : vector<64x8xi1>, vector<64x8xf32>
    %c0_280 = arith.constant 0 : index
    %c2_281 = arith.constant 2 : index
    %c0_282 = arith.constant 0 : index
    %c0_283 = arith.constant 0 : index
    %326 = vector.load %arg10[%c0_280, %c2_281, %c0_282, %c0_283] : memref<1x4x64x8xf32, #tpu.memory_space<vmem>>, vector<1x1x64x8xf32>
    %327 = vector.shape_cast %326 : vector<1x1x64x8xf32> to vector<64x8xf32>
    %328 = vector.shape_cast %325 : vector<64x8xf32> to vector<1x1x64x8xf32>
    tpu.vector_store %arg10[%c0_280, %c2_281, %c0_282, %c0_283], %328 {strides = array<i32>} : memref<1x4x64x8xf32, #tpu.memory_space<vmem>>, vector<1x1x64x8xf32>,
    %cst_284 = arith.constant dense<0.000000e+00> : vector<8xf32>
    %329 = vector.multi_reduction <add>, %325, %cst_284 [0] : vector<64x8xf32> to vector<8xf32>
    %330 = vector.shape_cast %329 : vector<8xf32> to vector<1x8xf32>
    %331 = arith.addf %247, %330 : vector<1x8xf32>
    %332 = arith.mulf %325, %325 : vector<64x8xf32>
    %cst_285 = arith.constant dense<0.000000e+00> : vector<8xf32>
    %333 = vector.multi_reduction <add>, %332, %cst_285 [0] : vector<64x8xf32> to vector<8xf32>
    %334 = vector.shape_cast %333 : vector<8xf32> to vector<1x8xf32>
    %335 = arith.addf %251, %334 : vector<1x8xf32>
    %c0_286 = arith.constant 0 : index
    %c9_287 = arith.constant 9 : index
    %c0_288 = arith.constant 0 : index
    %336 = vector.load %arg13[%c0_286, %c9_287, %c0_288] : memref<4x82x8xf32, #tpu.memory_space<vmem>>, vector<1x64x8xf32>
    %337 = vector.shape_cast %336 : vector<1x64x8xf32> to vector<64x8xf32>
    %c0_289 = arith.constant 0 : index
    %c0_290 = arith.constant 0 : index
    %c0_291 = arith.constant 0 : index
    %338 = vector.load %arg6[%c0_289, %c0_290, %c0_291] : memref<9x8x8xf32, #tpu.memory_space<vmem>>, vector<1x8x8xf32>
    %339 = vector.shape_cast %338 : vector<1x8x8xf32> to vector<8x8xf32>
    %cst_292 = arith.constant dense<0.000000e+00> : vector<64x8xf32>
    %340 = tpu.matmul %337, %339, %cst_292 {dimension_numbers = #tpu.dot_dimension_numbers<[1], [0], [0], [1], [0, 0, 1, 1], [], []>} : vector<64x8xf32>, vector<8x8xf32>, vector<64x8xf32> -> vector<64x8xf32>
    %c1_293 = arith.constant 1 : index
    %c9_294 = arith.constant 9 : index
    %c0_295 = arith.constant 0 : index
    %341 = vector.load %arg13[%c1_293, %c9_294, %c0_295] : memref<4x82x8xf32, #tpu.memory_space<vmem>>, vector<1x64x8xf32>
    %342 = vector.shape_cast %341 : vector<1x64x8xf32> to vector<64x8xf32>
    %c1_296 = arith.constant 1 : index
    %c0_297 = arith.constant 0 : index
    %c0_298 = arith.constant 0 : index
    %343 = vector.load %arg6[%c1_296, %c0_297, %c0_298] : memref<9x8x8xf32, #tpu.memory_space<vmem>>, vector<1x8x8xf32>
    %344 = vector.shape_cast %343 : vector<1x8x8xf32> to vector<8x8xf32>
    %cst_299 = arith.constant dense<0.000000e+00> : vector<64x8xf32>
    %345 = tpu.matmul %342, %344, %cst_299 {dimension_numbers = #tpu.dot_dimension_numbers<[1], [0], [0], [1], [0, 0, 1, 1], [], []>} : vector<64x8xf32>, vector<8x8xf32>, vector<64x8xf32> -> vector<64x8xf32>
    %346 = arith.addf %340, %345 : vector<64x8xf32>
    %c0_300 = arith.constant 0 : index
    %c10_301 = arith.constant 10 : index
    %c0_302 = arith.constant 0 : index
    %347 = vector.load %arg13[%c0_300, %c10_301, %c0_302] : memref<4x82x8xf32, #tpu.memory_space<vmem>>, vector<1x64x8xf32>
    %348 = vector.shape_cast %347 : vector<1x64x8xf32> to vector<64x8xf32>
    %349 = vector.broadcast %7 : vector<64x1xf32> to vector<64x8xf32>
    %350 = arith.mulf %348, %349 : vector<64x8xf32>
    %c2_303 = arith.constant 2 : index
    %c0_304 = arith.constant 0 : index
    %c0_305 = arith.constant 0 : index
    %351 = vector.load %arg6[%c2_303, %c0_304, %c0_305] : memref<9x8x8xf32, #tpu.memory_space<vmem>>, vector<1x8x8xf32>
    %352 = vector.shape_cast %351 : vector<1x8x8xf32> to vector<8x8xf32>
    %cst_306 = arith.constant dense<0.000000e+00> : vector<64x8xf32>
    %353 = tpu.matmul %350, %352, %cst_306 {dimension_numbers = #tpu.dot_dimension_numbers<[1], [0], [0], [1], [0, 0, 1, 1], [], []>} : vector<64x8xf32>, vector<8x8xf32>, vector<64x8xf32> -> vector<64x8xf32>
    %354 = arith.addf %346, %353 : vector<64x8xf32>
    %c2_307 = arith.constant 2 : index
    %c9_308 = arith.constant 9 : index
    %c0_309 = arith.constant 0 : index
    %355 = vector.load %arg13[%c2_307, %c9_308, %c0_309] : memref<4x82x8xf32, #tpu.memory_space<vmem>>, vector<1x64x8xf32>
    %356 = vector.shape_cast %355 : vector<1x64x8xf32> to vector<64x8xf32>
    %c3_310 = arith.constant 3 : index
    %c0_311 = arith.constant 0 : index
    %c0_312 = arith.constant 0 : index
    %357 = vector.load %arg6[%c3_310, %c0_311, %c0_312] : memref<9x8x8xf32, #tpu.memory_space<vmem>>, vector<1x8x8xf32>
    %358 = vector.shape_cast %357 : vector<1x8x8xf32> to vector<8x8xf32>
    %cst_313 = arith.constant dense<0.000000e+00> : vector<64x8xf32>
    %359 = tpu.matmul %356, %358, %cst_313 {dimension_numbers = #tpu.dot_dimension_numbers<[1], [0], [0], [1], [0, 0, 1, 1], [], []>} : vector<64x8xf32>, vector<8x8xf32>, vector<64x8xf32> -> vector<64x8xf32>
    %360 = arith.addf %354, %359 : vector<64x8xf32>
    %c3_314 = arith.constant 3 : index
    %c9_315 = arith.constant 9 : index
    %c0_316 = arith.constant 0 : index
    %361 = vector.load %arg13[%c3_314, %c9_315, %c0_316] : memref<4x82x8xf32, #tpu.memory_space<vmem>>, vector<1x64x8xf32>
    %362 = vector.shape_cast %361 : vector<1x64x8xf32> to vector<64x8xf32>
    %c4_317 = arith.constant 4 : index
    %c0_318 = arith.constant 0 : index
    %c0_319 = arith.constant 0 : index
    %363 = vector.load %arg6[%c4_317, %c0_318, %c0_319] : memref<9x8x8xf32, #tpu.memory_space<vmem>>, vector<1x8x8xf32>
    %364 = vector.shape_cast %363 : vector<1x8x8xf32> to vector<8x8xf32>
    %cst_320 = arith.constant dense<0.000000e+00> : vector<64x8xf32>
    %365 = tpu.matmul %362, %364, %cst_320 {dimension_numbers = #tpu.dot_dimension_numbers<[1], [0], [0], [1], [0, 0, 1, 1], [], []>} : vector<64x8xf32>, vector<8x8xf32>, vector<64x8xf32> -> vector<64x8xf32>
    %366 = arith.addf %360, %365 : vector<64x8xf32>
    %c2_321 = arith.constant 2 : index
    %c10_322 = arith.constant 10 : index
    %c0_323 = arith.constant 0 : index
    %367 = vector.load %arg13[%c2_321, %c10_322, %c0_323] : memref<4x82x8xf32, #tpu.memory_space<vmem>>, vector<1x64x8xf32>
    %368 = vector.shape_cast %367 : vector<1x64x8xf32> to vector<64x8xf32>
    %369 = vector.broadcast %7 : vector<64x1xf32> to vector<64x8xf32>
    %370 = arith.mulf %368, %369 : vector<64x8xf32>
    %c5_324 = arith.constant 5 : index
    %c0_325 = arith.constant 0 : index
    %c0_326 = arith.constant 0 : index
    %371 = vector.load %arg6[%c5_324, %c0_325, %c0_326] : memref<9x8x8xf32, #tpu.memory_space<vmem>>, vector<1x8x8xf32>
    %372 = vector.shape_cast %371 : vector<1x8x8xf32> to vector<8x8xf32>
    %cst_327 = arith.constant dense<0.000000e+00> : vector<64x8xf32>
    %373 = tpu.matmul %370, %372, %cst_327 {dimension_numbers = #tpu.dot_dimension_numbers<[1], [0], [0], [1], [0, 0, 1, 1], [], []>} : vector<64x8xf32>, vector<8x8xf32>, vector<64x8xf32> -> vector<64x8xf32>
    %374 = arith.addf %366, %373 : vector<64x8xf32>
    %c0_328 = arith.constant 0 : index
    %c17_329 = arith.constant 17 : index
    %c0_330 = arith.constant 0 : index
    %375 = vector.load %arg13[%c0_328, %c17_329, %c0_330] : memref<4x82x8xf32, #tpu.memory_space<vmem>>, vector<1x64x8xf32>
    %376 = vector.shape_cast %375 : vector<1x64x8xf32> to vector<64x8xf32>
    %c6_331 = arith.constant 6 : index
    %c0_332 = arith.constant 0 : index
    %c0_333 = arith.constant 0 : index
    %377 = vector.load %arg6[%c6_331, %c0_332, %c0_333] : memref<9x8x8xf32, #tpu.memory_space<vmem>>, vector<1x8x8xf32>
    %378 = vector.shape_cast %377 : vector<1x8x8xf32> to vector<8x8xf32>
    %cst_334 = arith.constant dense<0.000000e+00> : vector<64x8xf32>
    %379 = tpu.matmul %376, %378, %cst_334 {dimension_numbers = #tpu.dot_dimension_numbers<[1], [0], [0], [1], [0, 0, 1, 1], [], []>} : vector<64x8xf32>, vector<8x8xf32>, vector<64x8xf32> -> vector<64x8xf32>
    %380 = arith.addf %374, %379 : vector<64x8xf32>
    %c1_335 = arith.constant 1 : index
    %c17_336 = arith.constant 17 : index
    %c0_337 = arith.constant 0 : index
    %381 = vector.load %arg13[%c1_335, %c17_336, %c0_337] : memref<4x82x8xf32, #tpu.memory_space<vmem>>, vector<1x64x8xf32>
    %382 = vector.shape_cast %381 : vector<1x64x8xf32> to vector<64x8xf32>
    %c7_338 = arith.constant 7 : index
    %c0_339 = arith.constant 0 : index
    %c0_340 = arith.constant 0 : index
    %383 = vector.load %arg6[%c7_338, %c0_339, %c0_340] : memref<9x8x8xf32, #tpu.memory_space<vmem>>, vector<1x8x8xf32>
    %384 = vector.shape_cast %383 : vector<1x8x8xf32> to vector<8x8xf32>
    %cst_341 = arith.constant dense<0.000000e+00> : vector<64x8xf32>
    %385 = tpu.matmul %382, %384, %cst_341 {dimension_numbers = #tpu.dot_dimension_numbers<[1], [0], [0], [1], [0, 0, 1, 1], [], []>} : vector<64x8xf32>, vector<8x8xf32>, vector<64x8xf32> -> vector<64x8xf32>
    %386 = arith.addf %380, %385 : vector<64x8xf32>
    %c0_342 = arith.constant 0 : index
    %c18 = arith.constant 18 : index
    %c0_343 = arith.constant 0 : index
    %387 = vector.load %arg13[%c0_342, %c18, %c0_343] : memref<4x82x8xf32, #tpu.memory_space<vmem>>, vector<1x64x8xf32>
    %388 = vector.shape_cast %387 : vector<1x64x8xf32> to vector<64x8xf32>
    %389 = vector.broadcast %7 : vector<64x1xf32> to vector<64x8xf32>
    %390 = arith.mulf %388, %389 : vector<64x8xf32>
    %c8_344 = arith.constant 8 : index
    %c0_345 = arith.constant 0 : index
    %c0_346 = arith.constant 0 : index
    %391 = vector.load %arg6[%c8_344, %c0_345, %c0_346] : memref<9x8x8xf32, #tpu.memory_space<vmem>>, vector<1x8x8xf32>
    %392 = vector.shape_cast %391 : vector<1x8x8xf32> to vector<8x8xf32>
    %cst_347 = arith.constant dense<0.000000e+00> : vector<64x8xf32>
    %393 = tpu.matmul %390, %392, %cst_347 {dimension_numbers = #tpu.dot_dimension_numbers<[1], [0], [0], [1], [0, 0, 1, 1], [], []>} : vector<64x8xf32>, vector<8x8xf32>, vector<64x8xf32> -> vector<64x8xf32>
    %394 = arith.addf %386, %393 : vector<64x8xf32>
    %c3_348 = arith.constant 3 : index
    %c9_349 = arith.constant 9 : index
    %c0_350 = arith.constant 0 : index
    %395 = vector.load %arg13[%c3_348, %c9_349, %c0_350] : memref<4x82x8xf32, #tpu.memory_space<vmem>>, vector<1x64x8xf32>
    %396 = vector.shape_cast %395 : vector<1x64x8xf32> to vector<64x8xf32>
    %cst_351 = arith.constant 0.000000e+00 : f32
    %397 = vector.broadcast %cst_351 : f32 to vector<64x8xf32>
    %398 = arith.cmpf ogt, %396, %397 : vector<64x8xf32>
    %cst_352 = arith.constant 5.000000e+00 : f32
    %399 = vector.broadcast %cst_352 : f32 to vector<64x8xf32>
    %400 = arith.mulf %399, %396 : vector<64x8xf32>
    %401 = arith.select %398, %396, %400 : vector<64x8xi1>, vector<64x8xf32>
    %402 = vector.broadcast %5 : vector<1x8xf32> to vector<64x8xf32>
    %403 = arith.addf %394, %402 : vector<64x8xf32>
    %404 = arith.addf %403, %401 : vector<64x8xf32>
    %cst_353 = arith.constant 0.000000e+00 : f32
    %405 = vector.broadcast %cst_353 : f32 to vector<64x8xf32>
    %406 = arith.cmpf ogt, %404, %405 : vector<64x8xf32>
    %cst_354 = arith.constant 2.000000e-01 : f32
    %407 = vector.broadcast %cst_354 : f32 to vector<64x8xf32>
    %408 = arith.mulf %407, %404 : vector<64x8xf32>
    %409 = arith.select %406, %404, %408 : vector<64x8xi1>, vector<64x8xf32>
    %c0_355 = arith.constant 0 : index
    %c3_356 = arith.constant 3 : index
    %c0_357 = arith.constant 0 : index
    %c0_358 = arith.constant 0 : index
    %410 = vector.load %arg10[%c0_355, %c3_356, %c0_357, %c0_358] : memref<1x4x64x8xf32, #tpu.memory_space<vmem>>, vector<1x1x64x8xf32>
    %411 = vector.shape_cast %410 : vector<1x1x64x8xf32> to vector<64x8xf32>
    %412 = vector.shape_cast %409 : vector<64x8xf32> to vector<1x1x64x8xf32>
    tpu.vector_store %arg10[%c0_355, %c3_356, %c0_357, %c0_358], %412 {strides = array<i32>} : memref<1x4x64x8xf32, #tpu.memory_space<vmem>>, vector<1x1x64x8xf32>,
    %cst_359 = arith.constant dense<0.000000e+00> : vector<8xf32>
    %413 = vector.multi_reduction <add>, %409, %cst_359 [0] : vector<64x8xf32> to vector<8xf32>
    %414 = vector.shape_cast %413 : vector<8xf32> to vector<1x8xf32>
    %415 = arith.addf %331, %414 : vector<1x8xf32>
    %416 = arith.mulf %409, %409 : vector<64x8xf32>
    %cst_360 = arith.constant dense<0.000000e+00> : vector<8xf32>
    %417 = vector.multi_reduction <add>, %416, %cst_360 [0] : vector<64x8xf32> to vector<8xf32>
    %418 = vector.shape_cast %417 : vector<8xf32> to vector<1x8xf32>
    %419 = arith.addf %335, %418 : vector<1x8xf32>
    %c0_361 = arith.constant 0 : index
    %c0_362 = arith.constant 0 : index
    %c0_363 = arith.constant 0 : index
    %420 = vector.load %arg11[%c0_361, %c0_362, %c0_363] : memref<1x1x8xf32, #tpu.memory_space<vmem>>, vector<1x1x8xf32>
    %421 = vector.shape_cast %420 : vector<1x1x8xf32> to vector<1x8xf32>
    %422 = vector.shape_cast %415 : vector<1x8xf32> to vector<1x1x8xf32>
    tpu.vector_store %arg11[%c0_361, %c0_362, %c0_363], %422 {strides = array<i32>} : memref<1x1x8xf32, #tpu.memory_space<vmem>>, vector<1x1x8xf32>,
    %c0_364 = arith.constant 0 : index
    %c0_365 = arith.constant 0 : index
    %c0_366 = arith.constant 0 : index
    %423 = vector.load %arg12[%c0_364, %c0_365, %c0_366] : memref<1x1x8xf32, #tpu.memory_space<vmem>>, vector<1x1x8xf32>
    %424 = vector.shape_cast %423 : vector<1x1x8xf32> to vector<1x8xf32>
    %425 = vector.shape_cast %419 : vector<1x8xf32> to vector<1x1x8xf32>
    tpu.vector_store %arg12[%c0_364, %c0_365, %c0_366], %425 {strides = array<i32>} : memref<1x1x8xf32, #tpu.memory_space<vmem>>, vector<1x1x8xf32>,
    return
  }
  func.func @transform_0(%arg0: i32) -> (i32, i32, i32) {
    %c0_i32 = arith.constant 0 : i32
    %c0_i32_0 = arith.constant 0 : i32
    %c0_i32_1 = arith.constant 0 : i32
    return %arg0, %c0_i32, %c0_i32_0 : i32, i32, i32
  }
  func.func @transform_1(%arg0: i32) -> (i32, i32, i32, i32) {
    %c0_i32 = arith.constant 0 : i32
    %c0_i32_0 = arith.constant 0 : i32
    %c0_i32_1 = arith.constant 0 : i32
    %c0_i32_2 = arith.constant 0 : i32
    return %arg0, %c0_i32, %c0_i32_0, %c0_i32_1 : i32, i32, i32, i32
  }
  func.func @transform_2(%arg0: i32) -> (i32, i32, i32) {
    %c0_i32 = arith.constant 0 : i32
    %c0_i32_0 = arith.constant 0 : i32
    %c0_i32_1 = arith.constant 0 : i32
    return %arg0, %c0_i32, %c0_i32_0 : i32, i32, i32
  }
  func.func @transform_3(%arg0: i32) -> (i32, i32, i32) {
    %c0_i32 = arith.constant 0 : i32
    %c0_i32_0 = arith.constant 0 : i32
    %c0_i32_1 = arith.constant 0 : i32
    %c0_i32_2 = arith.constant 0 : i32
    return %c0_i32, %c0_i32_0, %c0_i32_1 : i32, i32, i32
  }
  func.func @transform_4(%arg0: i32) -> (i32, i32) {
    %c0_i32 = arith.constant 0 : i32
    %c0_i32_0 = arith.constant 0 : i32
    %c0_i32_1 = arith.constant 0 : i32
    return %c0_i32, %c0_i32_0 : i32, i32
  }
  func.func @transform_5(%arg0: i32) -> (i32, i32, i32) {
    %c0_i32 = arith.constant 0 : i32
    %c0_i32_0 = arith.constant 0 : i32
    %c0_i32_1 = arith.constant 0 : i32
    %c0_i32_2 = arith.constant 0 : i32
    return %c0_i32, %c0_i32_0, %c0_i32_1 : i32, i32, i32
  }
  func.func @transform_6(%arg0: i32) -> (i32, i32) {
    %c0_i32 = arith.constant 0 : i32
    %c0_i32_0 = arith.constant 0 : i32
    %c0_i32_1 = arith.constant 0 : i32
    return %c0_i32, %c0_i32_0 : i32, i32
  }
  func.func @transform_7(%arg0: i32) -> (i32, i32) {
    %c0_i32 = arith.constant 0 : i32
    %c0_i32_0 = arith.constant 0 : i32
    %c0_i32_1 = arith.constant 0 : i32
    return %c0_i32, %c0_i32_0 : i32, i32
  }
  func.func @transform_8(%arg0: i32) -> (i32, i32) {
    %c0_i32 = arith.constant 0 : i32
    %c0_i32_0 = arith.constant 0 : i32
    %c0_i32_1 = arith.constant 0 : i32
    return %c0_i32, %c0_i32_0 : i32, i32
  }
  func.func @transform_9(%arg0: i32) -> (i32, i32, i32, i32) {
    %c0_i32 = arith.constant 0 : i32
    %c0_i32_0 = arith.constant 0 : i32
    %c0_i32_1 = arith.constant 0 : i32
    %c0_i32_2 = arith.constant 0 : i32
    return %arg0, %c0_i32, %c0_i32_0, %c0_i32_1 : i32, i32, i32, i32
  }
  func.func @transform_10(%arg0: i32) -> (i32, i32, i32) {
    %c0_i32 = arith.constant 0 : i32
    %c0_i32_0 = arith.constant 0 : i32
    %c0_i32_1 = arith.constant 0 : i32
    return %arg0, %c0_i32, %c0_i32_0 : i32, i32, i32
  }
  func.func @transform_11(%arg0: i32) -> (i32, i32, i32) {
    %c0_i32 = arith.constant 0 : i32
    %c0_i32_0 = arith.constant 0 : i32
    %c0_i32_1 = arith.constant 0 : i32
    return %arg0, %c0_i32, %c0_i32_0 : i32, i32, i32
  }
}

</mosaic_0001>

<llo_original>
// kernel: tpu_custom_call.1
$region0: #{tpu_custom_call.1}
  #allocation0 [shape = 'u32[]', space=smem, size = 0x4, offset = 0x4, fixed_abs, tag = 'smem constant byte address 0x4 - core index']
  #allocation1 [shape = 'u32[144,128]{1,0:T(1,128)}', space=vmem, size = 0x12000, scoped, tag = 'internal scratch']
  #allocation2 [shape = 'f32[4,82,8]{2,1,0:T(8,128)}', space=vmem, size = 0x2c000, scoped, tag = 'scratch operand']
  %s0 = inlined_call_operand.vmem [shape: f32[2,64,8], index: 0, kind: input, shape index: {}]
  %s1 = inlined_call_operand.vmem [shape: f32[2,4,64,8], index: 1, kind: input, shape index: {}]
  %s2 = inlined_call_operand.vmem [shape: f32[2,1,8], index: 2, kind: input, shape index: {}]
  %s3 = inlined_call_operand.vmem [shape: f32[4,8,8], index: 3, kind: input, shape index: {}]
  %s4 = inlined_call_operand.vmem [shape: f32[1,8], index: 4, kind: input, shape index: {}]
  %s5 = inlined_call_operand.vmem [shape: f32[9,8,8], index: 5, kind: input, shape index: {}]
  %s6 = inlined_call_operand.vmem [shape: f32[1,8], index: 6, kind: input, shape index: {}]
  %s7 = inlined_call_operand.vmem [shape: f32[64,1], index: 7, kind: input, shape index: {}]
  %s8 = inlined_call_operand.vmem [shape: f32[64,1], index: 8, kind: input, shape index: {}]
  %s9 = inlined_call_operand.vmem [shape: f32[2,4,64,8], index: 9, kind: output, shape index: {0}]
  %s10 = inlined_call_operand.hbm [shape: f32[2,1,8], index: 10, kind: output, shape index: {1}]
  %s11 = inlined_call_operand.hbm [shape: f32[2,1,8], index: 11, kind: output, shape index: {2}]
  %12 = xla_tuple %s9, %s10, %s11
  %s13 = sld [smem:[#allocation0]]
  $region85: #{tpu_custom_call.1} parent=0
    _
  %s15 = ssub.s32 1, %s13
  %s16 = scalar_select 0, %s15, %s13
  $region1: #{tpu_custom_call.1} parent=0
    #allocation3 [shape = 'u8[1024]{0}', space=vmem, size = 0x400, scoped, tag = 'output window, operand 1']
    #allocation4 [shape = 's32[2]{0}', space=sflag, size = 0x8, scoped, tag = 'scoped memory for tpu_custom_call.1']
    #allocation5 [shape = 'u8[1024]{0}', space=vmem, size = 0x400, scoped, tag = 'output window, operand 2']
    #allocation6 [shape = 's32[2]{0}', space=sflag, size = 0x8, scoped, tag = 'scoped memory for tpu_custom_call.1']
    %17 = vsyncpa [#allocation4], 0
    %s18 = scalar_lea.sflag [#allocation4], 1
    %19 = vsyncpa %s18, 0
    %20 = vsyncpa [#allocation6], 0
    %s21 = scalar_lea.sflag [#allocation6], 1
    %22 = vsyncpa %s21, 0
    loop: start=0, step=1, limit=4
    $region2: #{tpu_custom_call.1} parent=1 // loop_pre_header
      _
    $region3: #{tpu_custom_call.1} parent=1 // loop_header
      %s24 = sphi 0, %s28
      %p25 = scmp.ge.s32.totalorder %s24, 4
      %s34 = sphi 0, %s36
      %s37 = sphi 0, %s34
      %s38 = sphi 0, %s37
      %s54 = sphi 0, %s38
      %s60 = sphi 0, %s62
      %s63 = sphi 0, %s60
      %s64 = sphi 0, %s63
      %s80 = sphi 0, %s64
      %s86 = sphi 0, %s88
      %s89 = sphi 0, %s86
      %s90 = sphi 0, %s89
      %s106 = sphi 0, %s90
      %s110 = sphi 0, %s110
      %s112 = sphi 0, %s110
      %s113 = sphi 0, %s112
      %s127 = sphi 0, %s113
      %s131 = sphi 0, %s131
      %s133 = sphi 0, %s131
      %s134 = sphi 0, %s133
      %s148 = sphi 0, %s134
      %s152 = sphi 0, %s152
      %s154 = sphi 0, %s152
      %s155 = sphi 0, %s154
      %s169 = sphi 0, %s155
      %s173 = sphi 0, %s173
      %s175 = sphi 0, %s173
      %s176 = sphi 0, %s175
      %s190 = sphi 0, %s176
      %s194 = sphi 0, %s194
      %s196 = sphi 0, %s194
      %s197 = sphi 0, %s196
      %s211 = sphi 0, %s197
      %s215 = sphi 0, %s215
      %s217 = sphi 0, %s215
      %s218 = sphi 0, %s217
      %s232 = sphi 0, %s218
      %s238 = sphi 0, %s240
      %s241 = sphi 0, %s238
      %s242 = sphi 0, %s241
      %s258 = sphi 0, %s242
      %s264 = sphi 0, %s266
      %s267 = sphi 0, %s264
      %s268 = sphi 0, %s267
      %s284 = sphi 0, %s268
      %s290 = sphi 0, %s292
      %s293 = sphi 0, %s290
      %s294 = sphi 0, %s293
      %s310 = sphi 0, %s294
    $region4: #{tpu_custom_call.1} parent=1 // loop_header_branch
      %27 = sbr.rel (%p25) target = $region8
    $region5: #{tpu_custom_call.1} parent=1 // loop_body
      %s29 = ssub.s32 %s24, 1
      %s30 = ssub.s32 %s24, 2
      %s31 = sadd.s32 %s24, 1
      %s32 = ssub.s32 %s24, %s31
      %p33 = scmp.eq.s32.totalorder %s32, 0
      %s35 = sadd.s32 %s34, 1
      %s36 = scalar_select %p33, %s34, %s35
      %p39 = pneg %p33
      %p40 = scmp.eq.s32.totalorder %s24, 1
      %p41 = por %p39, %p40
      %p42 = scmp.ne.s32.totalorder %s34, %s37
      %p43 = scmp.eq.s32.totalorder %s24, 0
      %p44 = por %p42, %p43
      %p45 = scmp.ne.s32.totalorder %s34, %s37
      %p46 = scmp.eq.s32.totalorder %s29, 1
      %p47 = por %p45, %p46
      %p48 = scmp.ne.s32.totalorder %s37, %s38
      %p49 = scmp.eq.s32.totalorder %s29, 0
      %p50 = por %p48, %p49
      %p51 = scmp.ne.s32.totalorder %s37, %s38
      %p52 = scmp.eq.s32.totalorder %s30, 1
      %p53 = por %p51, %p52
      %p55 = scmp.ne.s32.totalorder %s38, %s54
      %p56 = scmp.eq.s32.totalorder %s30, 0
      %p57 = por %p55, %p56
      %s58 = ssub.s32 %s24, %s31
      %p59 = scmp.eq.s32.totalorder %s58, 0
      %s61 = sadd.s32 %s60, 1
      %s62 = scalar_select %p59, %s60, %s61
      %p65 = pneg %p59
      %p66 = scmp.eq.s32.totalorder %s24, 1
      %p67 = por %p65, %p66
      %p68 = scmp.ne.s32.totalorder %s60, %s63
      %p69 = scmp.eq.s32.totalorder %s24, 0
      %p70 = por %p68, %p69
      %p71 = scmp.ne.s32.totalorder %s60, %s63
      %p72 = scmp.eq.s32.totalorder %s29, 1
      %p73 = por %p71, %p72
      %p74 = scmp.ne.s32.totalorder %s63, %s64
      %p75 = scmp.eq.s32.totalorder %s29, 0
      %p76 = por %p74, %p75
      %p77 = scmp.ne.s32.totalorder %s63, %s64
      %p78 = scmp.eq.s32.totalorder %s30, 1
      %p79 = por %p77, %p78
      %p81 = scmp.ne.s32.totalorder %s64, %s80
      %p82 = scmp.eq.s32.totalorder %s30, 0
      %p83 = por %p81, %p82
      %s84 = ssub.s32 %s24, %s31
      %p85 = scmp.eq.s32.totalorder %s84, 0
      %s87 = sadd.s32 %s86, 1
      %s88 = scalar_select %p85, %s86, %s87
      %p91 = pneg %p85
      %p92 = scmp.eq.s32.totalorder %s24, 1
      %p93 = por %p91, %p92
      %p94 = scmp.ne.s32.totalorder %s86, %s89
      %p95 = scmp.eq.s32.totalorder %s24, 0
      %p96 = por %p94, %p95
      %p97 = scmp.ne.s32.totalorder %s86, %s89
      %p98 = scmp.eq.s32.totalorder %s29, 1
      %p99 = por %p97, %p98
      %p100 = scmp.ne.s32.totalorder %s89, %s90
      %p101 = scmp.eq.s32.totalorder %s29, 0
      %p102 = por %p100, %p101
      %p103 = scmp.ne.s32.totalorder %s89, %s90
      %p104 = scmp.eq.s32.totalorder %s30, 1
      %p105 = por %p103, %p104
      %p107 = scmp.ne.s32.totalorder %s90, %s106
      %p108 = scmp.eq.s32.totalorder %s30, 0
      %p109 = por %p107, %p108
      %s111 = sadd.s32 %s110, 1
      %p114 = scmp.eq.s32.totalorder %s24, 1
      %p115 = scmp.ne.s32.totalorder %s110, %s112
      %p116 = scmp.eq.s32.totalorder %s24, 0
      %p117 = por %p115, %p116
      %p118 = scmp.ne.s32.totalorder %s110, %s112
      %p119 = scmp.eq.s32.totalorder %s29, 1
      %p120 = por %p118, %p119
      %p121 = scmp.ne.s32.totalorder %s112, %s113
      %p122 = scmp.eq.s32.totalorder %s29, 0
      %p123 = por %p121, %p122
      %p124 = scmp.ne.s32.totalorder %s112, %s113
      %p125 = scmp.eq.s32.totalorder %s30, 1
      %p126 = por %p124, %p125
      %p128 = scmp.ne.s32.totalorder %s113, %s127
      %p129 = scmp.eq.s32.totalorder %s30, 0
      %p130 = por %p128, %p129
      %s132 = sadd.s32 %s131, 1
      %p135 = scmp.eq.s32.totalorder %s24, 1
      %p136 = scmp.ne.s32.totalorder %s131, %s133
      %p137 = scmp.eq.s32.totalorder %s24, 0
      %p138 = por %p136, %p137
      %p139 = scmp.ne.s32.totalorder %s131, %s133
      %p140 = scmp.eq.s32.totalorder %s29, 1
      %p141 = por %p139, %p140
      %p142 = scmp.ne.s32.totalorder %s133, %s134
      %p143 = scmp.eq.s32.totalorder %s29, 0
      %p144 = por %p142, %p143
      %p145 = scmp.ne.s32.totalorder %s133, %s134
      %p146 = scmp.eq.s32.totalorder %s30, 1
      %p147 = por %p145, %p146
      %p149 = scmp.ne.s32.totalorder %s134, %s148
      %p150 = scmp.eq.s32.totalorder %s30, 0
      %p151 = por %p149, %p150
      %s153 = sadd.s32 %s152, 1
      %p156 = scmp.eq.s32.totalorder %s24, 1
      %p157 = scmp.ne.s32.totalorder %s152, %s154
      %p158 = scmp.eq.s32.totalorder %s24, 0
      %p159 = por %p157, %p158
      %p160 = scmp.ne.s32.totalorder %s152, %s154
      %p161 = scmp.eq.s32.totalorder %s29, 1
      %p162 = por %p160, %p161
      %p163 = scmp.ne.s32.totalorder %s154, %s155
      %p164 = scmp.eq.s32.totalorder %s29, 0
      %p165 = por %p163, %p164
      %p166 = scmp.ne.s32.totalorder %s154, %s155
      %p167 = scmp.eq.s32.totalorder %s30, 1
      %p168 = por %p166, %p167
      %p170 = scmp.ne.s32.totalorder %s155, %s169
      %p171 = scmp.eq.s32.totalorder %s30, 0
      %p172 = por %p170, %p171
      %s174 = sadd.s32 %s173, 1
      %p177 = scmp.eq.s32.totalorder %s24, 1
      %p178 = scmp.ne.s32.totalorder %s173, %s175
      %p179 = scmp.eq.s32.totalorder %s24, 0
      %p180 = por %p178, %p179
      %p181 = scmp.ne.s32.totalorder %s173, %s175
      %p182 = scmp.eq.s32.totalorder %s29, 1
      %p183 = por %p181, %p182
      %p184 = scmp.ne.s32.totalorder %s175, %s176
      %p185 = scmp.eq.s32.totalorder %s29, 0
      %p186 = por %p184, %p185
      %p187 = scmp.ne.s32.totalorder %s175, %s176
      %p188 = scmp.eq.s32.totalorder %s30, 1
      %p189 = por %p187, %p188
      %p191 = scmp.ne.s32.totalorder %s176, %s190
      %p192 = scmp.eq.s32.totalorder %s30, 0
      %p193 = por %p191, %p192
      %s195 = sadd.s32 %s194, 1
      %p198 = scmp.eq.s32.totalorder %s24, 1
      %p199 = scmp.ne.s32.totalorder %s194, %s196
      %p200 = scmp.eq.s32.totalorder %s24, 0
      %p201 = por %p199, %p200
      %p202 = scmp.ne.s32.totalorder %s194, %s196
      %p203 = scmp.eq.s32.totalorder %s29, 1
      %p204 = por %p202, %p203
      %p205 = scmp.ne.s32.totalorder %s196, %s197
      %p206 = scmp.eq.s32.totalorder %s29, 0
      %p207 = por %p205, %p206
      %p208 = scmp.ne.s32.totalorder %s196, %s197
      %p209 = scmp.eq.s32.totalorder %s30, 1
      %p210 = por %p208, %p209
      %p212 = scmp.ne.s32.totalorder %s197, %s211
      %p213 = scmp.eq.s32.totalorder %s30, 0
      %p214 = por %p212, %p213
      %s216 = sadd.s32 %s215, 1
      %p219 = scmp.eq.s32.totalorder %s24, 1
      %p220 = scmp.ne.s32.totalorder %s215, %s217
      %p221 = scmp.eq.s32.totalorder %s24, 0
      %p222 = por %p220, %p221
      %p223 = scmp.ne.s32.totalorder %s215, %s217
      %p224 = scmp.eq.s32.totalorder %s29, 1
      %p225 = por %p223, %p224
      %p226 = scmp.ne.s32.totalorder %s217, %s218
      %p227 = scmp.eq.s32.totalorder %s29, 0
      %p228 = por %p226, %p227
      %p229 = scmp.ne.s32.totalorder %s217, %s218
      %p230 = scmp.eq.s32.totalorder %s30, 1
      %p231 = por %p229, %p230
      %p233 = scmp.ne.s32.totalorder %s218, %s232
      %p234 = scmp.eq.s32.totalorder %s30, 0
      %p235 = por %p233, %p234
      %s236 = ssub.s32 %s24, %s31
      %p237 = scmp.eq.s32.totalorder %s236, 0
      %s239 = sadd.s32 %s238, 1
      %s240 = scalar_select %p237, %s238, %s239
      %p243 = pneg %p237
      %p244 = scmp.eq.s32.totalorder %s24, 1
      %p245 = por %p243, %p244
      %p246 = scmp.ne.s32.totalorder %s238, %s241
      %p247 = scmp.eq.s32.totalorder %s24, 0
      %p248 = por %p246, %p247
      %p249 = scmp.ne.s32.totalorder %s238, %s241
      %p250 = scmp.eq.s32.totalorder %s29, 1
      %p251 = por %p249, %p250
      %p252 = scmp.ne.s32.totalorder %s241, %s242
      %p253 = scmp.eq.s32.totalorder %s29, 0
      %p254 = por %p252, %p253
      %p255 = scmp.ne.s32.totalorder %s241, %s242
      %p256 = scmp.eq.s32.totalorder %s30, 1
      %p257 = por %p255, %p256
      %p259 = scmp.ne.s32.totalorder %s242, %s258
      %p260 = scmp.eq.s32.totalorder %s30, 0
      %p261 = por %p259, %p260
      %s262 = ssub.s32 %s24, %s31
      %p263 = scmp.eq.s32.totalorder %s262, 0
      %s265 = sadd.s32 %s264, 1
      %s266 = scalar_select %p263, %s264, %s265
      %p269 = pneg %p263
      %p270 = scmp.eq.s32.totalorder %s24, 1
      %p271 = por %p269, %p270
      %p272 = scmp.ne.s32.totalorder %s264, %s267
      %p273 = scmp.eq.s32.totalorder %s24, 0
      %p274 = por %p272, %p273
      %p275 = scmp.ne.s32.totalorder %s264, %s267
      %p276 = scmp.eq.s32.totalorder %s29, 1
      %p277 = por %p275, %p276
      %p278 = scmp.ne.s32.totalorder %s267, %s268
      %p279 = scmp.eq.s32.totalorder %s29, 0
      %p280 = por %p278, %p279
      %p281 = scmp.ne.s32.totalorder %s267, %s268
      %p282 = scmp.eq.s32.totalorder %s30, 1
      %p283 = por %p281, %p282
      %p285 = scmp.ne.s32.totalorder %s268, %s284
      %p286 = scmp.eq.s32.totalorder %s30, 0
      %p287 = por %p285, %p286
      %s288 = ssub.s32 %s24, %s31
      %p289 = scmp.eq.s32.totalorder %s288, 0
      %s291 = sadd.s32 %s290, 1
      %s292 = scalar_select %p289, %s290, %s291
      %p295 = pneg %p289
      %p296 = scmp.eq.s32.totalorder %s24, 1
      %p297 = por %p295, %p296
      %p298 = scmp.ne.s32.totalorder %s290, %s293
      %p299 = scmp.eq.s32.totalorder %s24, 0
      %p300 = por %p298, %p299
      %p301 = scmp.ne.s32.totalorder %s290, %s293
      %p302 = scmp.eq.s32.totalorder %s29, 1
      %p303 = por %p301, %p302
      %p304 = scmp.ne.s32.totalorder %s293, %s294
      %p305 = scmp.eq.s32.totalorder %s29, 0
      %p306 = por %p304, %p305
      %p307 = scmp.ne.s32.totalorder %s293, %s294
      %p308 = scmp.eq.s32.totalorder %s30, 1
      %p309 = por %p307, %p308
      %p311 = scmp.ne.s32.totalorder %s294, %s310
      %p312 = scmp.eq.s32.totalorder %s30, 0
      %p313 = por %p311, %p312
      %p314 = scmp.le.s32.totalorder 1, %s24
      %p315 = scmp.lt.s32.totalorder %s24, 3
      %p316 = pnand %p314, %p315
      %p317 = pneg %p316
      // Predicated region
      $region9: #{tpu_custom_call.1} parent=5 // pred_check
        _
      $region10: #{tpu_custom_call.1} parent=5 // pred_check_branch
        %319 = sbr.rel (%p316) target = $region12
      $region11: #{tpu_custom_call.1} parent=5 // pred_region
        %s320 = ssub.s32 %s24, 1
        // Predicated region
        $region13: #{tpu_custom_call.1} parent=11 // pred_check
          %p321 = pneg %p123
        $region14: #{tpu_custom_call.1} parent=11 // pred_check_branch
          %323 = sbr.rel (%p321) target = $region16
        $region15: #{tpu_custom_call.1} parent=11 // pred_region
          _
        $region16: #{tpu_custom_call.1} parent=11 // pred_fallthru
          _
        // Predicated region
        $region17: #{tpu_custom_call.1} parent=11 // pred_check
          %p324 = pneg %p144
        $region18: #{tpu_custom_call.1} parent=11 // pred_check_branch
          %326 = sbr.rel (%p324) target = $region20
        $region19: #{tpu_custom_call.1} parent=11 // pred_region
          _
        $region20: #{tpu_custom_call.1} parent=11 // pred_fallthru
          _
        // Predicated region
        $region21: #{tpu_custom_call.1} parent=11 // pred_check
          %p327 = pneg %p165
        $region22: #{tpu_custom_call.1} parent=11 // pred_check_branch
          %329 = sbr.rel (%p327) target = $region24
        $region23: #{tpu_custom_call.1} parent=11 // pred_region
          _
        $region24: #{tpu_custom_call.1} parent=11 // pred_fallthru
          _
        // Predicated region
        $region25: #{tpu_custom_call.1} parent=11 // pred_check
          %p330 = pneg %p186
        $region26: #{tpu_custom_call.1} parent=11 // pred_check_branch
          %332 = sbr.rel (%p330) target = $region28
        $region27: #{tpu_custom_call.1} parent=11 // pred_region
          _
        $region28: #{tpu_custom_call.1} parent=11 // pred_fallthru
          _
        // Predicated region
        $region29: #{tpu_custom_call.1} parent=11 // pred_check
          %p333 = pneg %p207
        $region30: #{tpu_custom_call.1} parent=11 // pred_check_branch
          %335 = sbr.rel (%p333) target = $region32
        $region31: #{tpu_custom_call.1} parent=11 // pred_region
          _
        $region32: #{tpu_custom_call.1} parent=11 // pred_fallthru
          _
        // Predicated region
        $region33: #{tpu_custom_call.1} parent=11 // pred_check
          %p336 = pneg %p228
        $region34: #{tpu_custom_call.1} parent=11 // pred_check_branch
          %338 = sbr.rel (%p336) target = $region36
        $region35: #{tpu_custom_call.1} parent=11 // pred_region
          _
        $region36: #{tpu_custom_call.1} parent=11 // pred_fallthru
          _
      $region12: #{tpu_custom_call.1} parent=5 // pred_fallthru
        _
      %p339 = scmp.lt.s32.totalorder %s24, 2
      // Predicated region
      $region37: #{tpu_custom_call.1} parent=5 // pred_check
        %p340 = pneg %p339
      $region38: #{tpu_custom_call.1} parent=5 // pred_check_branch
        %342 = sbr.rel (%p340) target = $region40
      $region39: #{tpu_custom_call.1} parent=5 // pred_region
        // Predicated region
        $region41: #{tpu_custom_call.1} parent=39 // pred_check
          %p343 = pneg %p44
        $region42: #{tpu_custom_call.1} parent=39 // pred_check_branch
          %345 = sbr.rel (%p343) target = $region44
        $region43: #{tpu_custom_call.1} parent=39 // pred_region
          %p346 = scmp.lt.s32.totalorder %s24, 1
          %s347 = scalar_select %p346, %s24, 1
          %s348 = smul.addr %s347, 8
          %s349 = smul.addr %s348, 8
          %s350 = scalar_lea.vmem %s0, %s349
        $region44: #{tpu_custom_call.1} parent=39 // pred_fallthru
          _
        // Predicated region
        $region45: #{tpu_custom_call.1} parent=39 // pred_check
          %p351 = pneg %p70
        $region46: #{tpu_custom_call.1} parent=39 // pred_check_branch
          %353 = sbr.rel (%p351) target = $region48
        $region47: #{tpu_custom_call.1} parent=39 // pred_region
          %p354 = scmp.lt.s32.totalorder %s24, 1
          %s355 = scalar_select %p354, %s24, 1
          %s356 = smul.addr %s355, 32
          %s357 = smul.addr %s356, 8
          %s358 = scalar_lea.vmem %s1, %s357
        $region48: #{tpu_custom_call.1} parent=39 // pred_fallthru
          _
        // Predicated region
        $region49: #{tpu_custom_call.1} parent=39 // pred_check
          %p359 = pneg %p96
        $region50: #{tpu_custom_call.1} parent=39 // pred_check_branch
          %361 = sbr.rel (%p359) target = $region52
        $region51: #{tpu_custom_call.1} parent=39 // pred_region
          %p362 = scmp.lt.s32.totalorder %s24, 1
          %s363 = scalar_select %p362, %s24, 1
          %s364 = scalar_lea.vmem %s2, %s363
        $region52: #{tpu_custom_call.1} parent=39 // pred_fallthru
          _
      $region40: #{tpu_custom_call.1} parent=5 // pred_fallthru
        _
      %p365 = scmp.le.s32.totalorder 1, %s24
      %p366 = scmp.lt.s32.totalorder %s24, 3
      %p367 = pnand %p365, %p366
      %p368 = pneg %p367
      // Predicated region
      $region53: #{tpu_custom_call.1} parent=5 // pred_check
        _
      $region54: #{tpu_custom_call.1} parent=5 // pred_check_branch
        %370 = sbr.rel (%p367) target = $region56
      $region55: #{tpu_custom_call.1} parent=5 // pred_region
        %s371 = ssub.s32 %s24, 1
        %p372 = scmp.lt.s32.totalorder %s29, 1
        %s373 = scalar_select %p372, %s29, 1
        %s374 = smul.addr %s373, 8
        %s375 = smul.addr %s374, 8
        %s376 = scalar_lea.vmem %s0, %s375
        %p377 = pneg %p50
        %p378 = pneg %p47
        %p379 = scmp.lt.s32.totalorder %s29, 1
        %s380 = scalar_select %p379, %s29, 1
        %s381 = smul.addr %s380, 32
        %s382 = smul.addr %s381, 8
        %s383 = scalar_lea.vmem %s1, %s382
        %p384 = pneg %p76
        %p385 = pneg %p73
        %p386 = scmp.lt.s32.totalorder %s29, 1
        %s387 = scalar_select %p386, %s29, 1
        %s388 = scalar_lea.vmem %s2, %s387
        %p389 = pneg %p102
        %p390 = pneg %p99
        %p391 = pneg %p123
        %p392 = pneg %p120
        %p393 = pneg %p144
        %p394 = pneg %p141
        %p395 = pneg %p165
        %p396 = pneg %p162
        %p397 = pneg %p186
        %p398 = pneg %p183
        %p399 = pneg %p207
        %p400 = pneg %p204
        %p401 = pneg %p228
        %p402 = pneg %p225
        %p403 = pneg %p254
        %p404 = pneg %p251
        %p405 = scmp.lt.s32.totalorder %s29, 1
        %s406 = scalar_select %p405, %s29, 1
        %s407 = smul.addr %s406, 32
        %s408 = smul.addr %s407, 8
        %s409 = scalar_lea.vmem %s9, %s408
        %p410 = pneg %p280
        %p411 = pneg %p277
        %s412 = sand.u32 %s267, 1
        %s413 = scalar_lea.sflag [#allocation4], %s412
        %s414 = sand.u32 %s267, 1
        %s415 = scalar_lea.vmem [#allocation3], %s414
        %p416 = pneg %p306
        %p417 = pneg %p303
        %s418 = sand.u32 %s293, 1
        %s419 = scalar_lea.sflag [#allocation6], %s418
        %s420 = sand.u32 %s293, 1
        %s421 = scalar_lea.vmem [#allocation5], %s420
        %p422 = scmp.lt.s32.totalorder %s29, 1
        %s423 = scalar_select %p422, %s29, 1
        %s424 = smul.addr %s423, 8
        %s425 = smul.addr %s424, 8
        %s426 = scalar_lea.vmem %s0, %s425
        %p427 = scmp.lt.s32.totalorder %s29, 1
        %s428 = scalar_select %p427, %s29, 1
        %s429 = smul.addr %s428, 32
        %s430 = smul.addr %s429, 8
        %s431 = scalar_lea.vmem %s1, %s430
        %p432 = scmp.lt.s32.totalorder %s29, 1
        %s433 = scalar_select %p432, %s29, 1
        %s434 = scalar_lea.vmem %s2, %s433
        %p435 = scmp.lt.s32.totalorder %s29, 1
        %s436 = scalar_select %p435, %s29, 1
        %s437 = smul.addr %s436, 32
        %s438 = smul.addr %s437, 8
        %s439 = scalar_lea.vmem %s9, %s438
        %v440 = vld [vmem:[%s426] sm:$0xff]
        %v441 = vld [vmem:[%s426 + $0x8] sm:$0xff]
        %v442 = vld [vmem:[%s426 + $0x10] sm:$0xff]
        %v443 = vld [vmem:[%s426 + $0x18] sm:$0xff]
        %v444 = vld [vmem:[%s426 + $0x20] sm:$0xff]
        %v445 = vld [vmem:[%s426 + $0x28] sm:$0xff]
        %v446 = vld [vmem:[%s426 + $0x30] sm:$0xff]
        %v447 = vld [vmem:[%s426 + $0x38] sm:$0xff]
        %v448 = vld [vmem:[%s434] sm:$0x1]
        %v449 = vld [vmem:[%s4] sm:$0x1]
        %v450 = vld [vmem:[%s6] sm:$0x1]
        %v451 = vld [vmem:[%s7] sm:$0xff]
        %v452 = vld [vmem:[%s7 + $0x8] sm:$0xff]
        %v453 = vld [vmem:[%s7 + $0x10] sm:$0xff]
        %v454 = vld [vmem:[%s7 + $0x18] sm:$0xff]
        %v455 = vld [vmem:[%s7 + $0x20] sm:$0xff]
        %v456 = vld [vmem:[%s7 + $0x28] sm:$0xff]
        %v457 = vld [vmem:[%s7 + $0x30] sm:$0xff]
        %v458 = vld [vmem:[%s7 + $0x38] sm:$0xff]
        %v459 = vld [vmem:[%s8] sm:$0xff]
        %v460 = vld [vmem:[%s8 + $0x8] sm:$0xff]
        %v461 = vld [vmem:[%s8 + $0x10] sm:$0xff]
        %v462 = vld [vmem:[%s8 + $0x18] sm:$0xff]
        %v463 = vld [vmem:[%s8 + $0x20] sm:$0xff]
        %v464 = vld [vmem:[%s8 + $0x28] sm:$0xff]
        %v465 = vld [vmem:[%s8 + $0x30] sm:$0xff]
        %v466 = vld [vmem:[%s8 + $0x38] sm:$0xff]
        %vm467 = vcmask 64512
        %468 = vst.msk [vmem:[#allocation2] sm:$0xff] %vm467, 0.0
        %469 = vst.msk [vmem:[#allocation2 + $0x8] sm:$0xff] %vm467, 0.0
        %470 = vst.msk [vmem:[#allocation2 + $0x10] sm:$0xff] %vm467, 0.0
        %471 = vst.msk [vmem:[#allocation2 + $0x18] sm:$0xff] %vm467, 0.0
        %472 = vst.msk [vmem:[#allocation2 + $0x20] sm:$0xff] %vm467, 0.0
        %473 = vst.msk [vmem:[#allocation2 + $0x28] sm:$0xff] %vm467, 0.0
        %474 = vst.msk [vmem:[#allocation2 + $0x30] sm:$0xff] %vm467, 0.0
        %475 = vst.msk [vmem:[#allocation2 + $0x38] sm:$0xff] %vm467, 0.0
        %476 = vst.msk [vmem:[#allocation2 + $0x40] sm:$0xff] %vm467, 0.0
        %477 = vst.msk [vmem:[#allocation2 + $0x48] sm:$0xff] %vm467, 0.0
        %vm478 = vcmask 58368
        %479 = vst.msk [vmem:[#allocation2 + $0x50] sm:$0x3] %vm478, 0.0
        %480 = vst.msk [vmem:[#allocation2 + $0x58] sm:$0xff] %vm467, 0.0
        %481 = vst.msk [vmem:[#allocation2 + $0x60] sm:$0xff] %vm467, 0.0
        %482 = vst.msk [vmem:[#allocation2 + $0x68] sm:$0xff] %vm467, 0.0
        %483 = vst.msk [vmem:[#allocation2 + $0x70] sm:$0xff] %vm467, 0.0
        %484 = vst.msk [vmem:[#allocation2 + $0x78] sm:$0xff] %vm467, 0.0
        %485 = vst.msk [vmem:[#allocation2 + $0x80] sm:$0xff] %vm467, 0.0
        %486 = vst.msk [vmem:[#allocation2 + $0x88] sm:$0xff] %vm467, 0.0
        %487 = vst.msk [vmem:[#allocation2 + $0x90] sm:$0xff] %vm467, 0.0
        %488 = vst.msk [vmem:[#allocation2 + $0x98] sm:$0xff] %vm467, 0.0
        %489 = vst.msk [vmem:[#allocation2 + $0xa0] sm:$0xff] %vm467, 0.0
        %490 = vst.msk [vmem:[#allocation2 + $0xa8] sm:$0x3] %vm478, 0.0
        %491 = vst.msk [vmem:[#allocation2 + $0xb0] sm:$0xff] %vm467, 0.0
        %492 = vst.msk [vmem:[#allocation2 + $0xb8] sm:$0xff] %vm467, 0.0
        %493 = vst.msk [vmem:[#allocation2 + $0xc0] sm:$0xff] %vm467, 0.0
        %494 = vst.msk [vmem:[#allocation2 + $0xc8] sm:$0xff] %vm467, 0.0
        %495 = vst.msk [vmem:[#allocation2 + $0xd0] sm:$0xff] %vm467, 0.0
        %496 = vst.msk [vmem:[#allocation2 + $0xd8] sm:$0xff] %vm467, 0.0
        %497 = vst.msk [vmem:[#allocation2 + $0xe0] sm:$0xff] %vm467, 0.0
        %498 = vst.msk [vmem:[#allocation2 + $0xe8] sm:$0xff] %vm467, 0.0
        %499 = vst.msk [vmem:[#allocation2 + $0xf0] sm:$0xff] %vm467, 0.0
        %500 = vst.msk [vmem:[#allocation2 + $0xf8] sm:$0xff] %vm467, 0.0
        %501 = vst.msk [vmem:[#allocation2 + $0x100] sm:$0x3] %vm478, 0.0
        %502 = vst.msk [vmem:[#allocation2 + $0x108] sm:$0xff] %vm467, 0.0
        %503 = vst.msk [vmem:[#allocation2 + $0x110] sm:$0xff] %vm467, 0.0
        %504 = vst.msk [vmem:[#allocation2 + $0x118] sm:$0xff] %vm467, 0.0
        %505 = vst.msk [vmem:[#allocation2 + $0x120] sm:$0xff] %vm467, 0.0
        %506 = vst.msk [vmem:[#allocation2 + $0x128] sm:$0xff] %vm467, 0.0
        %507 = vst.msk [vmem:[#allocation2 + $0x130] sm:$0xff] %vm467, 0.0
        %508 = vst.msk [vmem:[#allocation2 + $0x138] sm:$0xff] %vm467, 0.0
        %509 = vst.msk [vmem:[#allocation2 + $0x140] sm:$0xff] %vm467, 0.0
        %510 = vst.msk [vmem:[#allocation2 + $0x148] sm:$0xff] %vm467, 0.0
        %511 = vst.msk [vmem:[#allocation2 + $0x150] sm:$0xff] %vm467, 0.0
        %512 = vst.msk [vmem:[#allocation2 + $0x158] sm:$0x3] %vm478, 0.0
        %v513 = vld [vmem:[%s3] sm:$0xff]
        %v515 = vlaneseq
        %v516 = vshrl.u32 %v515, 7
        %v517 = vsub.s32 0, %v516
        %v518 = vrot.slane %v449, %v517
        %v521 = vsel %vm467, %v440, 0
        %v524 = vsel %vm467, %v441, 0
        %v527 = vsel %vm467, %v442, 0
        %v530 = vsel %vm467, %v443, 0
        %v533 = vsel %vm467, %v444, 0
        %v536 = vsel %vm467, %v445, 0
        %v539 = vsel %vm467, %v446, 0
        %v542 = vsel %vm467, %v447, 0
        %544 = vmatprep.subr.mxu0 0.0
        %545 = vmatpush1.msra.mxu0 %v513
        %546 = vmatprep.subr.mxu0 0.0
        %547 = vmatpush1.msra.mxu0 0.0
        %548 = vmatprep.subr.mxu0 0.0
        %549 = vmatpush1.msra.mxu0 0.0
        %550 = vmatprep.subr.mxu0 0.0
        %551 = vmatpush1.msra.mxu0 0.0
        %552 = vmatprep.subr.mxu0 0.0
        %553 = vmatpush1.msra.mxu0 0.0
        %554 = vmatprep.subr.mxu0 0.0
        %555 = vmatpush1.msra.mxu0 0.0
        %556 = vmatprep.subr.mxu0 0.0
        %557 = vmatpush1.msra.mxu0 0.0
        %558 = vmatprep.subr.mxu0 0.0
        %559 = vmatpush1.msra.mxu0 0.0
        %560 = vmatprep.subr.mxu0 0.0
        %561 = vmatpush1.msra.mxu0 0.0
        %562 = vmatprep.subr.mxu0 0.0
        %563 = vmatpush1.msra.mxu0 0.0
        %564 = vmatprep.subr.mxu0 0.0
        %565 = vmatpush1.msra.mxu0 0.0
        %566 = vmatprep.subr.mxu0 0.0
        %567 = vmatpush1.msra.mxu0 0.0
        %568 = vmatprep.subr.mxu0 0.0
        %569 = vmatpush1.msra.mxu0 0.0
        %570 = vmatprep.subr.mxu0 0.0
        %571 = vmatpush1.msra.mxu0 0.0
        %572 = vmatprep.subr.mxu0 0.0
        %573 = vmatpush1.msra.mxu0 0.0
        %574 = vmatprep.subr.mxu0 0.0
        %575 = vmatpush1.msra.mxu0 0.0
        %576 = vmatprep.subr.mxu0 0.0
        %577 = vmatpush1.msra.mxu0 0.0
        %578 = vmatprep.subr.mxu0 0.0
        %579 = vmatpush1.msra.mxu0 0.0
        %580 = vmatprep.subr.mxu0 0.0
        %581 = vmatpush1.msra.mxu0 0.0
        %582 = vmatprep.subr.mxu0 0.0
        %583 = vmatpush1.msra.mxu0 0.0
        %584 = vmatprep.subr.mxu0 0.0
        %585 = vmatpush1.msra.mxu0 0.0
        %586 = vmatprep.subr.mxu0 0.0
        %587 = vmatpush1.msra.mxu0 0.0
        %588 = vmatprep.subr.mxu0 0.0
        %589 = vmatpush1.msra.mxu0 0.0
        %590 = vmatprep.subr.mxu0 0.0
        %591 = vmatpush1.msra.mxu0 0.0
        %592 = vmatprep.subr.mxu0 0.0
        %593 = vmatpush1.msra.mxu0 0.0
        %594 = vmatprep.subr.mxu0 0.0
        %595 = vmatpush1.msra.mxu0 0.0
        %596 = vmatprep.subr.mxu0 0.0
        %597 = vmatpush1.msra.mxu0 0.0
        %598 = vmatprep.subr.mxu0 0.0
        %599 = vmatpush1.msra.mxu0 0.0
        %600 = vmatprep.subr.mxu0 0.0
        %601 = vmatpush1.msra.mxu0 0.0
        %602 = vmatprep.subr.mxu0 0.0
        %603 = vmatpush1.msra.mxu0 0.0
        %604 = vmatprep.subr.mxu0 0.0
        %605 = vmatpush1.msra.mxu0 0.0
        %606 = vmatprep.subr.mxu0 0.0
        %607 = vmatpush1.msra.mxu0 0.0
        %608 = vmatprep.mubr.f32.mxu0 0.0
        %609 = vmatmul.mubr.f32.gmra.mrb[0].mxu0 %v521
        %v610 = vpop.f32.mrb[0].mxu0
        %v611 = vadd.f32 %v518, %v610
        %v612 = vpop.f32.mrb[0].mxu0
        %613 = vmatprep.mubr.f32.mxu0 0.0
        %614 = vmatmul.mubr.f32.gmra.mrb[0].mxu0 %v524
        %v615 = vpop.f32.mrb[0].mxu0
        %v616 = vadd.f32 %v518, %v615
        %v617 = vpop.f32.mrb[0].mxu0
        %618 = vmatprep.mubr.f32.mxu0 0.0
        %619 = vmatmul.mubr.f32.gmra.mrb[0].mxu0 %v527
        %v620 = vpop.f32.mrb[0].mxu0
        %v621 = vadd.f32 %v518, %v620
        %v622 = vpop.f32.mrb[0].mxu0
        %623 = vmatprep.mubr.f32.mxu0 0.0
        %624 = vmatmul.mubr.f32.gmra.mrb[0].mxu0 %v530
        %v625 = vpop.f32.mrb[0].mxu0
        %v626 = vadd.f32 %v518, %v625
        %v627 = vpop.f32.mrb[0].mxu0
        %628 = vmatprep.mubr.f32.mxu0 0.0
        %629 = vmatmul.mubr.f32.gmra.mrb[0].mxu0 %v533
        %v630 = vpop.f32.mrb[0].mxu0
        %v631 = vadd.f32 %v518, %v630
        %v632 = vpop.f32.mrb[0].mxu0
        %633 = vmatprep.mubr.f32.mxu0 0.0
        %634 = vmatmul.mubr.f32.gmra.mrb[0].mxu0 %v536
        %v635 = vpop.f32.mrb[0].mxu0
        %v636 = vadd.f32 %v518, %v635
        %v637 = vpop.f32.mrb[0].mxu0
        %638 = vmatprep.mubr.f32.mxu0 0.0
        %639 = vmatmul.mubr.f32.gmra.mrb[0].mxu0 %v539
        %v640 = vpop.f32.mrb[0].mxu0
        %v641 = vadd.f32 %v518, %v640
        %v642 = vpop.f32.mrb[0].mxu0
        %643 = vmatprep.mubr.f32.mxu0 0.0
        %644 = vmatmul.mubr.f32.gmra.mrb[0].mxu0 %v542
        %v645 = vpop.f32.mrb[0].mxu0
        %v646 = vadd.f32 %v518, %v645
        %v647 = vpop.f32.mrb[0].mxu0
        %648 = vdwg.mxu0
        %v649 = vld [vmem:[%s431] sm:$0xff]
        %v650 = vld [vmem:[%s431 + $0x8] sm:$0xff]
        %v651 = vld [vmem:[%s431 + $0x10] sm:$0xff]
        %v652 = vld [vmem:[%s431 + $0x18] sm:$0xff]
        %v653 = vld [vmem:[%s431 + $0x20] sm:$0xff]
        %v654 = vld [vmem:[%s431 + $0x28] sm:$0xff]
        %v655 = vld [vmem:[%s431 + $0x30] sm:$0xff]
        %v656 = vld [vmem:[%s431 + $0x38] sm:$0xff]
        %v657 = vadd.f32 %v611, %v649
        %v658 = vadd.f32 %v616, %v650
        %v659 = vadd.f32 %v621, %v651
        %v660 = vadd.f32 %v626, %v652
        %v661 = vadd.f32 %v631, %v653
        %v662 = vadd.f32 %v636, %v654
        %v663 = vadd.f32 %v641, %v655
        %v664 = vadd.f32 %v646, %v656
        %v666 = vlaneseq
        %v667 = vshrl.u32 %v666, 7
        %v668 = vsub.s32 0, %v667
        %v669 = vrot.slane %v448, %v668
        %v671 = vadd.f32 %v657, %v669
        %v672 = vadd.f32 %v658, %v669
        %v673 = vadd.f32 %v659, %v669
        %v674 = vadd.f32 %v660, %v669
        %v675 = vadd.f32 %v661, %v669
        %v676 = vadd.f32 %v662, %v669
        %v677 = vadd.f32 %v663, %v669
        %v678 = vadd.f32 %v664, %v669
        %vm679 = vcmp.gt.f32.partialorder %v671, 0.0
        %vm680 = vcmp.gt.f32.partialorder %v672, 0.0
        %vm681 = vcmp.gt.f32.partialorder %v673, 0.0
        %vm682 = vcmp.gt.f32.partialorder %v674, 0.0
        %vm683 = vcmp.gt.f32.partialorder %v675, 0.0
        %vm684 = vcmp.gt.f32.partialorder %v676, 0.0
        %vm685 = vcmp.gt.f32.partialorder %v677, 0.0
        %vm686 = vcmp.gt.f32.partialorder %v678, 0.0
        %v687 = vmul.f32 %v671, 0.2
        %v688 = vmul.f32 %v672, 0.2
        %v689 = vmul.f32 %v673, 0.2
        %v690 = vmul.f32 %v674, 0.2
        %v691 = vmul.f32 %v675, 0.2
        %v692 = vmul.f32 %v676, 0.2
        %v693 = vmul.f32 %v677, 0.2
        %v694 = vmul.f32 %v678, 0.2
        %v695 = vsel %vm679, %v671, %v687
        %v696 = vsel %vm680, %v672, %v688
        %v697 = vsel %vm681, %v673, %v689
        %v698 = vsel %vm682, %v674, %v690
        %v699 = vsel %vm683, %v675, %v691
        %v700 = vsel %vm684, %v676, %v692
        %v701 = vsel %vm685, %v677, %v693
        %v702 = vsel %vm686, %v678, %v694
        %703 = vst.msk [vmem:[#allocation2 + $0x9] sm:$0xff] %vm467, %v695
        %704 = vst.msk [vmem:[#allocation2 + $0x11] sm:$0xff] %vm467, %v696
        %705 = vst.msk [vmem:[#allocation2 + $0x19] sm:$0xff] %vm467, %v697
        %706 = vst.msk [vmem:[#allocation2 + $0x21] sm:$0xff] %vm467, %v698
        %707 = vst.msk [vmem:[#allocation2 + $0x29] sm:$0xff] %vm467, %v699
        %708 = vst.msk [vmem:[#allocation2 + $0x31] sm:$0xff] %vm467, %v700
        %709 = vst.msk [vmem:[#allocation2 + $0x39] sm:$0xff] %vm467, %v701
        %710 = vst.msk [vmem:[#allocation2 + $0x41] sm:$0xff] %vm467, %v702
        %s711 = scalar_lea.vmem %s3, 8
        %v712 = vld [vmem:[%s711] sm:$0xff]
        %713 = vmatprep.subr.mxu0 0.0
        %714 = vmatpush1.msra.mxu0 %v712
        %715 = vmatprep.subr.mxu0 0.0
        %716 = vmatpush1.msra.mxu0 0.0
        %717 = vmatprep.subr.mxu0 0.0
        %718 = vmatpush1.msra.mxu0 0.0
        %719 = vmatprep.subr.mxu0 0.0
        %720 = vmatpush1.msra.mxu0 0.0
        %721 = vmatprep.subr.mxu0 0.0
        %722 = vmatpush1.msra.mxu0 0.0
        %723 = vmatprep.subr.mxu0 0.0
        %724 = vmatpush1.msra.mxu0 0.0
        %725 = vmatprep.subr.mxu0 0.0
        %726 = vmatpush1.msra.mxu0 0.0
        %727 = vmatprep.subr.mxu0 0.0
        %728 = vmatpush1.msra.mxu0 0.0
        %729 = vmatprep.subr.mxu0 0.0
        %730 = vmatpush1.msra.mxu0 0.0
        %731 = vmatprep.subr.mxu0 0.0
        %732 = vmatpush1.msra.mxu0 0.0
        %733 = vmatprep.subr.mxu0 0.0
        %734 = vmatpush1.msra.mxu0 0.0
        %735 = vmatprep.subr.mxu0 0.0
        %736 = vmatpush1.msra.mxu0 0.0
        %737 = vmatprep.subr.mxu0 0.0
        %738 = vmatpush1.msra.mxu0 0.0
        %739 = vmatprep.subr.mxu0 0.0
        %740 = vmatpush1.msra.mxu0 0.0
        %741 = vmatprep.subr.mxu0 0.0
        %742 = vmatpush1.msra.mxu0 0.0
        %743 = vmatprep.subr.mxu0 0.0
        %744 = vmatpush1.msra.mxu0 0.0
        %745 = vmatprep.subr.mxu0 0.0
        %746 = vmatpush1.msra.mxu0 0.0
        %747 = vmatprep.subr.mxu0 0.0
        %748 = vmatpush1.msra.mxu0 0.0
        %749 = vmatprep.subr.mxu0 0.0
        %750 = vmatpush1.msra.mxu0 0.0
        %751 = vmatprep.subr.mxu0 0.0
        %752 = vmatpush1.msra.mxu0 0.0
        %753 = vmatprep.subr.mxu0 0.0
        %754 = vmatpush1.msra.mxu0 0.0
        %755 = vmatprep.subr.mxu0 0.0
        %756 = vmatpush1.msra.mxu0 0.0
        %757 = vmatprep.subr.mxu0 0.0
        %758 = vmatpush1.msra.mxu0 0.0
        %759 = vmatprep.subr.mxu0 0.0
        %760 = vmatpush1.msra.mxu0 0.0
        %761 = vmatprep.subr.mxu0 0.0
        %762 = vmatpush1.msra.mxu0 0.0
        %763 = vmatprep.subr.mxu0 0.0
        %764 = vmatpush1.msra.mxu0 0.0
        %765 = vmatprep.subr.mxu0 0.0
        %766 = vmatpush1.msra.mxu0 0.0
        %767 = vmatprep.subr.mxu0 0.0
        %768 = vmatpush1.msra.mxu0 0.0
        %769 = vmatprep.subr.mxu0 0.0
        %770 = vmatpush1.msra.mxu0 0.0
        %771 = vmatprep.subr.mxu0 0.0
        %772 = vmatpush1.msra.mxu0 0.0
        %773 = vmatprep.subr.mxu0 0.0
        %774 = vmatpush1.msra.mxu0 0.0
        %775 = vmatprep.subr.mxu0 0.0
        %776 = vmatpush1.msra.mxu0 0.0
        %777 = vmatprep.mubr.f32.mxu0 0.0
        %778 = vmatmul.mubr.f32.gmra.mrb[0].mxu0 %v521
        %v779 = vpop.f32.mrb[0].mxu0
        %v780 = vadd.f32 %v518, %v779
        %v781 = vpop.f32.mrb[0].mxu0
        %782 = vmatprep.mubr.f32.mxu0 0.0
        %783 = vmatmul.mubr.f32.gmra.mrb[0].mxu0 %v524
        %v784 = vpop.f32.mrb[0].mxu0
        %v785 = vadd.f32 %v518, %v784
        %v786 = vpop.f32.mrb[0].mxu0
        %787 = vmatprep.mubr.f32.mxu0 0.0
        %788 = vmatmul.mubr.f32.gmra.mrb[0].mxu0 %v527
        %v789 = vpop.f32.mrb[0].mxu0
        %v790 = vadd.f32 %v518, %v789
        %v791 = vpop.f32.mrb[0].mxu0
        %792 = vmatprep.mubr.f32.mxu0 0.0
        %793 = vmatmul.mubr.f32.gmra.mrb[0].mxu0 %v530
        %v794 = vpop.f32.mrb[0].mxu0
        %v795 = vadd.f32 %v518, %v794
        %v796 = vpop.f32.mrb[0].mxu0
        %797 = vmatprep.mubr.f32.mxu0 0.0
        %798 = vmatmul.mubr.f32.gmra.mrb[0].mxu0 %v533
        %v799 = vpop.f32.mrb[0].mxu0
        %v800 = vadd.f32 %v518, %v799
        %v801 = vpop.f32.mrb[0].mxu0
        %802 = vmatprep.mubr.f32.mxu0 0.0
        %803 = vmatmul.mubr.f32.gmra.mrb[0].mxu0 %v536
        %v804 = vpop.f32.mrb[0].mxu0
        %v805 = vadd.f32 %v518, %v804
        %v806 = vpop.f32.mrb[0].mxu0
        %807 = vmatprep.mubr.f32.mxu0 0.0
        %808 = vmatmul.mubr.f32.gmra.mrb[0].mxu0 %v539
        %v809 = vpop.f32.mrb[0].mxu0
        %v810 = vadd.f32 %v518, %v809
        %v811 = vpop.f32.mrb[0].mxu0
        %812 = vmatprep.mubr.f32.mxu0 0.0
        %813 = vmatmul.mubr.f32.gmra.mrb[0].mxu0 %v542
        %v814 = vpop.f32.mrb[0].mxu0
        %v815 = vadd.f32 %v518, %v814
        %v816 = vpop.f32.mrb[0].mxu0
        %817 = vdwg.mxu0
        %s818 = scalar_lea.vmem %s431, 64
        %v819 = vld [vmem:[%s818] sm:$0xff]
        %v820 = vld [vmem:[%s818 + $0x8] sm:$0xff]
        %v821 = vld [vmem:[%s818 + $0x10] sm:$0xff]
        %v822 = vld [vmem:[%s818 + $0x18] sm:$0xff]
        %v823 = vld [vmem:[%s818 + $0x20] sm:$0xff]
        %v824 = vld [vmem:[%s818 + $0x28] sm:$0xff]
        %v825 = vld [vmem:[%s818 + $0x30] sm:$0xff]
        %v826 = vld [vmem:[%s818 + $0x38] sm:$0xff]
        %v827 = vadd.f32 %v780, %v819
        %v828 = vadd.f32 %v785, %v820
        %v829 = vadd.f32 %v790, %v821
        %v830 = vadd.f32 %v795, %v822
        %v831 = vadd.f32 %v800, %v823
        %v832 = vadd.f32 %v805, %v824
        %v833 = vadd.f32 %v810, %v825
        %v834 = vadd.f32 %v815, %v826
        %v835 = vadd.f32 %v827, %v669
        %v836 = vadd.f32 %v828, %v669
        %v837 = vadd.f32 %v829, %v669
        %v838 = vadd.f32 %v830, %v669
        %v839 = vadd.f32 %v831, %v669
        %v840 = vadd.f32 %v832, %v669
        %v841 = vadd.f32 %v833, %v669
        %v842 = vadd.f32 %v834, %v669
        %vm843 = vcmp.gt.f32.partialorder %v835, 0.0
        %vm844 = vcmp.gt.f32.partialorder %v836, 0.0
        %vm845 = vcmp.gt.f32.partialorder %v837, 0.0
        %vm846 = vcmp.gt.f32.partialorder %v838, 0.0
        %vm847 = vcmp.gt.f32.partialorder %v839, 0.0
        %vm848 = vcmp.gt.f32.partialorder %v840, 0.0
        %vm849 = vcmp.gt.f32.partialorder %v841, 0.0
        %vm850 = vcmp.gt.f32.partialorder %v842, 0.0
        %v851 = vmul.f32 %v835, 0.2
        %v852 = vmul.f32 %v836, 0.2
        %v853 = vmul.f32 %v837, 0.2
        %v854 = vmul.f32 %v838, 0.2
        %v855 = vmul.f32 %v839, 0.2
        %v856 = vmul.f32 %v840, 0.2
        %v857 = vmul.f32 %v841, 0.2
        %v858 = vmul.f32 %v842, 0.2
        %v859 = vsel %vm843, %v835, %v851
        %v860 = vsel %vm844, %v836, %v852
        %v861 = vsel %vm845, %v837, %v853
        %v862 = vsel %vm846, %v838, %v854
        %v863 = vsel %vm847, %v839, %v855
        %v864 = vsel %vm848, %v840, %v856
        %v865 = vsel %vm849, %v841, %v857
        %v866 = vsel %vm850, %v842, %v858
        %s867 = scalar_lea.vmem [#allocation2], 88
        %868 = vst.msk [vmem:[%s867 + $0x9] sm:$0xff] %vm467, %v859
        %869 = vst.msk [vmem:[%s867 + $0x11] sm:$0xff] %vm467, %v860
        %870 = vst.msk [vmem:[%s867 + $0x19] sm:$0xff] %vm467, %v861
        %871 = vst.msk [vmem:[%s867 + $0x21] sm:$0xff] %vm467, %v862
        %872 = vst.msk [vmem:[%s867 + $0x29] sm:$0xff] %vm467, %v863
        %873 = vst.msk [vmem:[%s867 + $0x31] sm:$0xff] %vm467, %v864
        %874 = vst.msk [vmem:[%s867 + $0x39] sm:$0xff] %vm467, %v865
        %875 = vst.msk [vmem:[%s867 + $0x41] sm:$0xff] %vm467, %v866
        %s876 = scalar_lea.vmem %s3, 16
        %v877 = vld [vmem:[%s876] sm:$0xff]
        %878 = vmatprep.subr.mxu0 0.0
        %879 = vmatpush1.msra.mxu0 %v877
        %880 = vmatprep.subr.mxu0 0.0
        %881 = vmatpush1.msra.mxu0 0.0
        %882 = vmatprep.subr.mxu0 0.0
        %883 = vmatpush1.msra.mxu0 0.0
        %884 = vmatprep.subr.mxu0 0.0
        %885 = vmatpush1.msra.mxu0 0.0
        %886 = vmatprep.subr.mxu0 0.0
        %887 = vmatpush1.msra.mxu0 0.0
        %888 = vmatprep.subr.mxu0 0.0
        %889 = vmatpush1.msra.mxu0 0.0
        %890 = vmatprep.subr.mxu0 0.0
        %891 = vmatpush1.msra.mxu0 0.0
        %892 = vmatprep.subr.mxu0 0.0
        %893 = vmatpush1.msra.mxu0 0.0
        %894 = vmatprep.subr.mxu0 0.0
        %895 = vmatpush1.msra.mxu0 0.0
        %896 = vmatprep.subr.mxu0 0.0
        %897 = vmatpush1.msra.mxu0 0.0
        %898 = vmatprep.subr.mxu0 0.0
        %899 = vmatpush1.msra.mxu0 0.0
        %900 = vmatprep.subr.mxu0 0.0
        %901 = vmatpush1.msra.mxu0 0.0
        %902 = vmatprep.subr.mxu0 0.0
        %903 = vmatpush1.msra.mxu0 0.0
        %904 = vmatprep.subr.mxu0 0.0
        %905 = vmatpush1.msra.mxu0 0.0
        %906 = vmatprep.subr.mxu0 0.0
        %907 = vmatpush1.msra.mxu0 0.0
        %908 = vmatprep.subr.mxu0 0.0
        %909 = vmatpush1.msra.mxu0 0.0
        %910 = vmatprep.subr.mxu0 0.0
        %911 = vmatpush1.msra.mxu0 0.0
        %912 = vmatprep.subr.mxu0 0.0
        %913 = vmatpush1.msra.mxu0 0.0
        %914 = vmatprep.subr.mxu0 0.0
        %915 = vmatpush1.msra.mxu0 0.0
        %916 = vmatprep.subr.mxu0 0.0
        %917 = vmatpush1.msra.mxu0 0.0
        %918 = vmatprep.subr.mxu0 0.0
        %919 = vmatpush1.msra.mxu0 0.0
        %920 = vmatprep.subr.mxu0 0.0
        %921 = vmatpush1.msra.mxu0 0.0
        %922 = vmatprep.subr.mxu0 0.0
        %923 = vmatpush1.msra.mxu0 0.0
        %924 = vmatprep.subr.mxu0 0.0
        %925 = vmatpush1.msra.mxu0 0.0
        %926 = vmatprep.subr.mxu0 0.0
        %927 = vmatpush1.msra.mxu0 0.0
        %928 = vmatprep.subr.mxu0 0.0
        %929 = vmatpush1.msra.mxu0 0.0
        %930 = vmatprep.subr.mxu0 0.0
        %931 = vmatpush1.msra.mxu0 0.0
        %932 = vmatprep.subr.mxu0 0.0
        %933 = vmatpush1.msra.mxu0 0.0
        %934 = vmatprep.subr.mxu0 0.0
        %935 = vmatpush1.msra.mxu0 0.0
        %936 = vmatprep.subr.mxu0 0.0
        %937 = vmatpush1.msra.mxu0 0.0
        %938 = vmatprep.subr.mxu0 0.0
        %939 = vmatpush1.msra.mxu0 0.0
        %940 = vmatprep.subr.mxu0 0.0
        %941 = vmatpush1.msra.mxu0 0.0
        %942 = vmatprep.mubr.f32.mxu0 0.0
        %943 = vmatmul.mubr.f32.gmra.mrb[0].mxu0 %v521
        %v944 = vpop.f32.mrb[0].mxu0
        %v945 = vadd.f32 %v518, %v944
        %v946 = vpop.f32.mrb[0].mxu0
        %947 = vmatprep.mubr.f32.mxu0 0.0
        %948 = vmatmul.mubr.f32.gmra.mrb[0].mxu0 %v524
        %v949 = vpop.f32.mrb[0].mxu0
        %v950 = vadd.f32 %v518, %v949
        %v951 = vpop.f32.mrb[0].mxu0
        %952 = vmatprep.mubr.f32.mxu0 0.0
        %953 = vmatmul.mubr.f32.gmra.mrb[0].mxu0 %v527
        %v954 = vpop.f32.mrb[0].mxu0
        %v955 = vadd.f32 %v518, %v954
        %v956 = vpop.f32.mrb[0].mxu0
        %957 = vmatprep.mubr.f32.mxu0 0.0
        %958 = vmatmul.mubr.f32.gmra.mrb[0].mxu0 %v530
        %v959 = vpop.f32.mrb[0].mxu0
        %v960 = vadd.f32 %v518, %v959
        %v961 = vpop.f32.mrb[0].mxu0
        %962 = vmatprep.mubr.f32.mxu0 0.0
        %963 = vmatmul.mubr.f32.gmra.mrb[0].mxu0 %v533
        %v964 = vpop.f32.mrb[0].mxu0
        %v965 = vadd.f32 %v518, %v964
        %v966 = vpop.f32.mrb[0].mxu0
        %967 = vmatprep.mubr.f32.mxu0 0.0
        %968 = vmatmul.mubr.f32.gmra.mrb[0].mxu0 %v536
        %v969 = vpop.f32.mrb[0].mxu0
        %v970 = vadd.f32 %v518, %v969
        %v971 = vpop.f32.mrb[0].mxu0
        %972 = vmatprep.mubr.f32.mxu0 0.0
        %973 = vmatmul.mubr.f32.gmra.mrb[0].mxu0 %v539
        %v974 = vpop.f32.mrb[0].mxu0
        %v975 = vadd.f32 %v518, %v974
        %v976 = vpop.f32.mrb[0].mxu0
        %977 = vmatprep.mubr.f32.mxu0 0.0
        %978 = vmatmul.mubr.f32.gmra.mrb[0].mxu0 %v542
        %v979 = vpop.f32.mrb[0].mxu0
        %v980 = vadd.f32 %v518, %v979
        %v981 = vpop.f32.mrb[0].mxu0
        %982 = vdwg.mxu0
        %s983 = scalar_lea.vmem %s431, 128
        %v984 = vld [vmem:[%s983] sm:$0xff]
        %v985 = vld [vmem:[%s983 + $0x8] sm:$0xff]
        %v986 = vld [vmem:[%s983 + $0x10] sm:$0xff]
        %v987 = vld [vmem:[%s983 + $0x18] sm:$0xff]
        %v988 = vld [vmem:[%s983 + $0x20] sm:$0xff]
        %v989 = vld [vmem:[%s983 + $0x28] sm:$0xff]
        %v990 = vld [vmem:[%s983 + $0x30] sm:$0xff]
        %v991 = vld [vmem:[%s983 + $0x38] sm:$0xff]
        %v992 = vadd.f32 %v945, %v984
        %v993 = vadd.f32 %v950, %v985
        %v994 = vadd.f32 %v955, %v986
        %v995 = vadd.f32 %v960, %v987
        %v996 = vadd.f32 %v965, %v988
        %v997 = vadd.f32 %v970, %v989
        %v998 = vadd.f32 %v975, %v990
        %v999 = vadd.f32 %v980, %v991
        %v1000 = vadd.f32 %v992, %v669
        %v1001 = vadd.f32 %v993, %v669
        %v1002 = vadd.f32 %v994, %v669
        %v1003 = vadd.f32 %v995, %v669
        %v1004 = vadd.f32 %v996, %v669
        %v1005 = vadd.f32 %v997, %v669
        %v1006 = vadd.f32 %v998, %v669
        %v1007 = vadd.f32 %v999, %v669
        %vm1008 = vcmp.gt.f32.partialorder %v1000, 0.0
        %vm1009 = vcmp.gt.f32.partialorder %v1001, 0.0
        %vm1010 = vcmp.gt.f32.partialorder %v1002, 0.0
        %vm1011 = vcmp.gt.f32.partialorder %v1003, 0.0
        %vm1012 = vcmp.gt.f32.partialorder %v1004, 0.0
        %vm1013 = vcmp.gt.f32.partialorder %v1005, 0.0
        %vm1014 = vcmp.gt.f32.partialorder %v1006, 0.0
        %vm1015 = vcmp.gt.f32.partialorder %v1007, 0.0
        %v1016 = vmul.f32 %v1000, 0.2
        %v1017 = vmul.f32 %v1001, 0.2
        %v1018 = vmul.f32 %v1002, 0.2
        %v1019 = vmul.f32 %v1003, 0.2
        %v1020 = vmul.f32 %v1004, 0.2
        %v1021 = vmul.f32 %v1005, 0.2
        %v1022 = vmul.f32 %v1006, 0.2
        %v1023 = vmul.f32 %v1007, 0.2
        %v1024 = vsel %vm1008, %v1000, %v1016
        %v1025 = vsel %vm1009, %v1001, %v1017
        %v1026 = vsel %vm1010, %v1002, %v1018
        %v1027 = vsel %vm1011, %v1003, %v1019
        %v1028 = vsel %vm1012, %v1004, %v1020
        %v1029 = vsel %vm1013, %v1005, %v1021
        %v1030 = vsel %vm1014, %v1006, %v1022
        %v1031 = vsel %vm1015, %v1007, %v1023
        %s1032 = scalar_lea.vmem [#allocation2], 176
        %1033 = vst.msk [vmem:[%s1032 + $0x9] sm:$0xff] %vm467, %v1024
        %1034 = vst.msk [vmem:[%s1032 + $0x11] sm:$0xff] %vm467, %v1025
        %1035 = vst.msk [vmem:[%s1032 + $0x19] sm:$0xff] %vm467, %v1026
        %1036 = vst.msk [vmem:[%s1032 + $0x21] sm:$0xff] %vm467, %v1027
        %1037 = vst.msk [vmem:[%s1032 + $0x29] sm:$0xff] %vm467, %v1028
        %1038 = vst.msk [vmem:[%s1032 + $0x31] sm:$0xff] %vm467, %v1029
        %1039 = vst.msk [vmem:[%s1032 + $0x39] sm:$0xff] %vm467, %v1030
        %1040 = vst.msk [vmem:[%s1032 + $0x41] sm:$0xff] %vm467, %v1031
        %s1041 = scalar_lea.vmem %s3, 24
        %v1042 = vld [vmem:[%s1041] sm:$0xff]
        %1043 = vmatprep.subr.mxu0 0.0
        %1044 = vmatpush1.msra.mxu0 %v1042
        %1045 = vmatprep.subr.mxu0 0.0
        %1046 = vmatpush1.msra.mxu0 0.0
        %1047 = vmatprep.subr.mxu0 0.0
        %1048 = vmatpush1.msra.mxu0 0.0
        %1049 = vmatprep.subr.mxu0 0.0
        %1050 = vmatpush1.msra.mxu0 0.0
        %1051 = vmatprep.subr.mxu0 0.0
        %1052 = vmatpush1.msra.mxu0 0.0
        %1053 = vmatprep.subr.mxu0 0.0
        %1054 = vmatpush1.msra.mxu0 0.0
        %1055 = vmatprep.subr.mxu0 0.0
        %1056 = vmatpush1.msra.mxu0 0.0
        %1057 = vmatprep.subr.mxu0 0.0
        %1058 = vmatpush1.msra.mxu0 0.0
        %1059 = vmatprep.subr.mxu0 0.0
        %1060 = vmatpush1.msra.mxu0 0.0
        %1061 = vmatprep.subr.mxu0 0.0
        %1062 = vmatpush1.msra.mxu0 0.0
        %1063 = vmatprep.subr.mxu0 0.0
        %1064 = vmatpush1.msra.mxu0 0.0
        %1065 = vmatprep.subr.mxu0 0.0
        %1066 = vmatpush1.msra.mxu0 0.0
        %1067 = vmatprep.subr.mxu0 0.0
        %1068 = vmatpush1.msra.mxu0 0.0
        %1069 = vmatprep.subr.mxu0 0.0
        %1070 = vmatpush1.msra.mxu0 0.0
        %1071 = vmatprep.subr.mxu0 0.0
        %1072 = vmatpush1.msra.mxu0 0.0
        %1073 = vmatprep.subr.mxu0 0.0
        %1074 = vmatpush1.msra.mxu0 0.0
        %1075 = vmatprep.subr.mxu0 0.0
        %1076 = vmatpush1.msra.mxu0 0.0
        %1077 = vmatprep.subr.mxu0 0.0
        %1078 = vmatpush1.msra.mxu0 0.0
        %1079 = vmatprep.subr.mxu0 0.0
        %1080 = vmatpush1.msra.mxu0 0.0
        %1081 = vmatprep.subr.mxu0 0.0
        %1082 = vmatpush1.msra.mxu0 0.0
        %1083 = vmatprep.subr.mxu0 0.0
        %1084 = vmatpush1.msra.mxu0 0.0
        %1085 = vmatprep.subr.mxu0 0.0
        %1086 = vmatpush1.msra.mxu0 0.0
        %1087 = vmatprep.subr.mxu0 0.0
        %1088 = vmatpush1.msra.mxu0 0.0
        %1089 = vmatprep.subr.mxu0 0.0
        %1090 = vmatpush1.msra.mxu0 0.0
        %1091 = vmatprep.subr.mxu0 0.0
        %1092 = vmatpush1.msra.mxu0 0.0
        %1093 = vmatprep.subr.mxu0 0.0
        %1094 = vmatpush1.msra.mxu0 0.0
        %1095 = vmatprep.subr.mxu0 0.0
        %1096 = vmatpush1.msra.mxu0 0.0
        %1097 = vmatprep.subr.mxu0 0.0
        %1098 = vmatpush1.msra.mxu0 0.0
        %1099 = vmatprep.subr.mxu0 0.0
        %1100 = vmatpush1.msra.mxu0 0.0
        %1101 = vmatprep.subr.mxu0 0.0
        %1102 = vmatpush1.msra.mxu0 0.0
        %1103 = vmatprep.subr.mxu0 0.0
        %1104 = vmatpush1.msra.mxu0 0.0
        %1105 = vmatprep.subr.mxu0 0.0
        %1106 = vmatpush1.msra.mxu0 0.0
        %1107 = vmatprep.mubr.f32.mxu0 0.0
        %1108 = vmatmul.mubr.f32.gmra.mrb[0].mxu0 %v521
        %v1109 = vpop.f32.mrb[0].mxu0
        %v1110 = vadd.f32 %v518, %v1109
        %v1111 = vpop.f32.mrb[0].mxu0
        %1112 = vmatprep.mubr.f32.mxu0 0.0
        %1113 = vmatmul.mubr.f32.gmra.mrb[0].mxu0 %v524
        %v1114 = vpop.f32.mrb[0].mxu0
        %v1115 = vadd.f32 %v518, %v1114
        %v1116 = vpop.f32.mrb[0].mxu0
        %1117 = vmatprep.mubr.f32.mxu0 0.0
        %1118 = vmatmul.mubr.f32.gmra.mrb[0].mxu0 %v527
        %v1119 = vpop.f32.mrb[0].mxu0
        %v1120 = vadd.f32 %v518, %v1119
        %v1121 = vpop.f32.mrb[0].mxu0
        %1122 = vmatprep.mubr.f32.mxu0 0.0
        %1123 = vmatmul.mubr.f32.gmra.mrb[0].mxu0 %v530
        %v1124 = vpop.f32.mrb[0].mxu0
        %v1125 = vadd.f32 %v518, %v1124
        %v1126 = vpop.f32.mrb[0].mxu0
        %1127 = vmatprep.mubr.f32.mxu0 0.0
        %1128 = vmatmul.mubr.f32.gmra.mrb[0].mxu0 %v533
        %v1129 = vpop.f32.mrb[0].mxu0
        %v1130 = vadd.f32 %v518, %v1129
        %v1131 = vpop.f32.mrb[0].mxu0
        %1132 = vmatprep.mubr.f32.mxu0 0.0
        %1133 = vmatmul.mubr.f32.gmra.mrb[0].mxu0 %v536
        %v1134 = vpop.f32.mrb[0].mxu0
        %v1135 = vadd.f32 %v518, %v1134
        %v1136 = vpop.f32.mrb[0].mxu0
        %1137 = vmatprep.mubr.f32.mxu0 0.0
        %1138 = vmatmul.mubr.f32.gmra.mrb[0].mxu0 %v539
        %v1139 = vpop.f32.mrb[0].mxu0
        %v1140 = vadd.f32 %v518, %v1139
        %v1141 = vpop.f32.mrb[0].mxu0
        %1142 = vmatprep.mubr.f32.mxu0 0.0
        %1143 = vmatmul.mubr.f32.gmra.mrb[0].mxu0 %v542
        %v1144 = vpop.f32.mrb[0].mxu0
        %v1145 = vadd.f32 %v518, %v1144
        %v1146 = vpop.f32.mrb[0].mxu0
        %1147 = vdwg.mxu0
        %s1148 = scalar_lea.vmem %s431, 192
        %v1149 = vld [vmem:[%s1148] sm:$0xff]
        %v1150 = vld [vmem:[%s1148 + $0x8] sm:$0xff]
        %v1151 = vld [vmem:[%s1148 + $0x10] sm:$0xff]
        %v1152 = vld [vmem:[%s1148 + $0x18] sm:$0xff]
        %v1153 = vld [vmem:[%s1148 + $0x20] sm:$0xff]
        %v1154 = vld [vmem:[%s1148 + $0x28] sm:$0xff]
        %v1155 = vld [vmem:[%s1148 + $0x30] sm:$0xff]
        %v1156 = vld [vmem:[%s1148 + $0x38] sm:$0xff]
        %v1157 = vadd.f32 %v1110, %v1149
        %v1158 = vadd.f32 %v1115, %v1150
        %v1159 = vadd.f32 %v1120, %v1151
        %v1160 = vadd.f32 %v1125, %v1152
        %v1161 = vadd.f32 %v1130, %v1153
        %v1162 = vadd.f32 %v1135, %v1154
        %v1163 = vadd.f32 %v1140, %v1155
        %v1164 = vadd.f32 %v1145, %v1156
        %v1165 = vadd.f32 %v1157, %v669
        %v1166 = vadd.f32 %v1158, %v669
        %v1167 = vadd.f32 %v1159, %v669
        %v1168 = vadd.f32 %v1160, %v669
        %v1169 = vadd.f32 %v1161, %v669
        %v1170 = vadd.f32 %v1162, %v669
        %v1171 = vadd.f32 %v1163, %v669
        %v1172 = vadd.f32 %v1164, %v669
        %vm1173 = vcmp.gt.f32.partialorder %v1165, 0.0
        %vm1174 = vcmp.gt.f32.partialorder %v1166, 0.0
        %vm1175 = vcmp.gt.f32.partialorder %v1167, 0.0
        %vm1176 = vcmp.gt.f32.partialorder %v1168, 0.0
        %vm1177 = vcmp.gt.f32.partialorder %v1169, 0.0
        %vm1178 = vcmp.gt.f32.partialorder %v1170, 0.0
        %vm1179 = vcmp.gt.f32.partialorder %v1171, 0.0
        %vm1180 = vcmp.gt.f32.partialorder %v1172, 0.0
        %v1181 = vmul.f32 %v1165, 0.2
        %v1182 = vmul.f32 %v1166, 0.2
        %v1183 = vmul.f32 %v1167, 0.2
        %v1184 = vmul.f32 %v1168, 0.2
        %v1185 = vmul.f32 %v1169, 0.2
        %v1186 = vmul.f32 %v1170, 0.2
        %v1187 = vmul.f32 %v1171, 0.2
        %v1188 = vmul.f32 %v1172, 0.2
        %v1189 = vsel %vm1173, %v1165, %v1181
        %v1190 = vsel %vm1174, %v1166, %v1182
        %v1191 = vsel %vm1175, %v1167, %v1183
        %v1192 = vsel %vm1176, %v1168, %v1184
        %v1193 = vsel %vm1177, %v1169, %v1185
        %v1194 = vsel %vm1178, %v1170, %v1186
        %v1195 = vsel %vm1179, %v1171, %v1187
        %v1196 = vsel %vm1180, %v1172, %v1188
        %s1197 = scalar_lea.vmem [#allocation2], 264
        %1198 = vst.msk [vmem:[%s1197 + $0x9] sm:$0xff] %vm467, %v1189
        %1199 = vst.msk [vmem:[%s1197 + $0x11] sm:$0xff] %vm467, %v1190
        %1200 = vst.msk [vmem:[%s1197 + $0x19] sm:$0xff] %vm467, %v1191
        %1201 = vst.msk [vmem:[%s1197 + $0x21] sm:$0xff] %vm467, %v1192
        %1202 = vst.msk [vmem:[%s1197 + $0x29] sm:$0xff] %vm467, %v1193
        %1203 = vst.msk [vmem:[%s1197 + $0x31] sm:$0xff] %vm467, %v1194
        %1204 = vst.msk [vmem:[%s1197 + $0x39] sm:$0xff] %vm467, %v1195
        %1205 = vst.msk [vmem:[%s1197 + $0x41] sm:$0xff] %vm467, %v1196
        %v1206 = vld [vmem:[%s1197] sm:$0xff]
        %v1207 = vld [vmem:[%s1197 + $0x8] sm:$0xff]
        %v1208 = vld [vmem:[%s1197 + $0x10] sm:$0xff]
        %v1209 = vld [vmem:[%s1197 + $0x18] sm:$0xff]
        %v1210 = vld [vmem:[%s1197 + $0x20] sm:$0xff]
        %v1211 = vld [vmem:[%s1197 + $0x28] sm:$0xff]
        %v1212 = vld [vmem:[%s1197 + $0x30] sm:$0xff]
        %v1213 = vld [vmem:[%s1197 + $0x38] sm:$0xff]
        %1215 = vset.pattern.permute.xlu0 0
        %1216 = vperm.xlu0 %1215, %v451
        %v1217 = vpop.permute.xlu0 %1216
        %1220 = vset.pattern.permute.xlu0 0
        %1221 = vperm.xlu0 %1220, %v452
        %v1222 = vpop.permute.xlu0 %1221
        %1225 = vset.pattern.permute.xlu0 0
        %1226 = vperm.xlu0 %1225, %v453
        %v1227 = vpop.permute.xlu0 %1226
        %1230 = vset.pattern.permute.xlu0 0
        %1231 = vperm.xlu0 %1230, %v454
        %v1232 = vpop.permute.xlu0 %1231
        %1235 = vset.pattern.permute.xlu0 0
        %1236 = vperm.xlu0 %1235, %v455
        %v1237 = vpop.permute.xlu0 %1236
        %1240 = vset.pattern.permute.xlu0 0
        %1241 = vperm.xlu0 %1240, %v456
        %v1242 = vpop.permute.xlu0 %1241
        %1245 = vset.pattern.permute.xlu0 0
        %1246 = vperm.xlu0 %1245, %v457
        %v1247 = vpop.permute.xlu0 %1246
        %1250 = vset.pattern.permute.xlu0 0
        %1251 = vperm.xlu0 %1250, %v458
        %v1252 = vpop.permute.xlu0 %1251
        %v1254 = vmul.f32 %v1206, %v1217
        %v1255 = vmul.f32 %v1207, %v1222
        %v1256 = vmul.f32 %v1208, %v1227
        %v1257 = vmul.f32 %v1209, %v1232
        %v1258 = vmul.f32 %v1210, %v1237
        %v1259 = vmul.f32 %v1211, %v1242
        %v1260 = vmul.f32 %v1212, %v1247
        %v1261 = vmul.f32 %v1213, %v1252
        %v1262 = vld [vmem:[%s5] sm:$0xff]
        %v1263 = vld [vmem:[%s1032 + $0x1] sm:$0xff]
        %v1264 = vld [vmem:[%s1032 + $0x9] sm:$0xff]
        %v1265 = vld [vmem:[%s1032 + $0x11] sm:$0xff]
        %v1266 = vld [vmem:[%s1032 + $0x19] sm:$0xff]
        %v1267 = vld [vmem:[%s1032 + $0x21] sm:$0xff]
        %v1268 = vld [vmem:[%s1032 + $0x29] sm:$0xff]
        %v1269 = vld [vmem:[%s1032 + $0x31] sm:$0xff]
        %v1270 = vld [vmem:[%s1032 + $0x39] sm:$0xff]
        %s1271 = scalar_lea.vmem %s5, 8
        %v1272 = vld [vmem:[%s1271] sm:$0xff]
        %v1274 = vsel %vm467, %v1263, 0
        %v1277 = vsel %vm467, %v1264, 0
        %v1280 = vsel %vm467, %v1265, 0
        %v1283 = vsel %vm467, %v1266, 0
        %v1286 = vsel %vm467, %v1267, 0
        %v1289 = vsel %vm467, %v1268, 0
        %v1292 = vsel %vm467, %v1269, 0
        %v1295 = vsel %vm467, %v1270, 0
        %1297 = vmatprep.subr.mxu0 0.0
        %1298 = vmatpush1.msra.mxu0 %v1272
        %1299 = vmatprep.subr.mxu0 0.0
        %1300 = vmatpush1.msra.mxu0 0.0
        %1301 = vmatprep.subr.mxu0 0.0
        %1302 = vmatpush1.msra.mxu0 0.0
        %1303 = vmatprep.subr.mxu0 0.0
        %1304 = vmatpush1.msra.mxu0 0.0
        %1305 = vmatprep.subr.mxu0 0.0
        %1306 = vmatpush1.msra.mxu0 0.0
        %1307 = vmatprep.subr.mxu0 0.0
        %1308 = vmatpush1.msra.mxu0 0.0
        %1309 = vmatprep.subr.mxu0 0.0
        %1310 = vmatpush1.msra.mxu0 0.0
        %1311 = vmatprep.subr.mxu0 0.0
        %1312 = vmatpush1.msra.mxu0 0.0
        %1313 = vmatprep.subr.mxu0 0.0
        %1314 = vmatpush1.msra.mxu0 0.0
        %1315 = vmatprep.subr.mxu0 0.0
        %1316 = vmatpush1.msra.mxu0 0.0
        %1317 = vmatprep.subr.mxu0 0.0
        %1318 = vmatpush1.msra.mxu0 0.0
        %1319 = vmatprep.subr.mxu0 0.0
        %1320 = vmatpush1.msra.mxu0 0.0
        %1321 = vmatprep.subr.mxu0 0.0
        %1322 = vmatpush1.msra.mxu0 0.0
        %1323 = vmatprep.subr.mxu0 0.0
        %1324 = vmatpush1.msra.mxu0 0.0
        %1325 = vmatprep.subr.mxu0 0.0
        %1326 = vmatpush1.msra.mxu0 0.0
        %1327 = vmatprep.subr.mxu0 0.0
        %1328 = vmatpush1.msra.mxu0 0.0
        %1329 = vmatprep.subr.mxu0 0.0
        %1330 = vmatpush1.msra.mxu0 0.0
        %1331 = vmatprep.subr.mxu0 0.0
        %1332 = vmatpush1.msra.mxu0 0.0
        %1333 = vmatprep.subr.mxu0 0.0
        %1334 = vmatpush1.msra.mxu0 0.0
        %1335 = vmatprep.subr.mxu0 0.0
        %1336 = vmatpush1.msra.mxu0 0.0
        %1337 = vmatprep.subr.mxu0 0.0
        %1338 = vmatpush1.msra.mxu0 0.0
        %1339 = vmatprep.subr.mxu0 0.0
        %1340 = vmatpush1.msra.mxu0 0.0
        %1341 = vmatprep.subr.mxu0 0.0
        %1342 = vmatpush1.msra.mxu0 0.0
        %1343 = vmatprep.subr.mxu0 0.0
        %1344 = vmatpush1.msra.mxu0 0.0
        %1345 = vmatprep.subr.mxu0 0.0
        %1346 = vmatpush1.msra.mxu0 0.0
        %1347 = vmatprep.subr.mxu0 0.0
        %1348 = vmatpush1.msra.mxu0 0.0
        %1349 = vmatprep.subr.mxu0 0.0
        %1350 = vmatpush1.msra.mxu0 0.0
        %1351 = vmatprep.subr.mxu0 0.0
        %1352 = vmatpush1.msra.mxu0 0.0
        %1353 = vmatprep.subr.mxu0 0.0
        %1354 = vmatpush1.msra.mxu0 0.0
        %1355 = vmatprep.subr.mxu0 0.0
        %1356 = vmatpush1.msra.mxu0 0.0
        %1357 = vmatprep.subr.mxu0 0.0
        %1358 = vmatpush1.msra.mxu0 0.0
        %1359 = vmatprep.subr.mxu0 0.0
        %1360 = vmatpush1.msra.mxu0 0.0
        %1361 = vmatprep.mubr.f32.mxu0 0.0
        %1362 = vmatmul.mubr.f32.gmra.mrb[0].mxu0 %v1274
        %v1363 = vpop.f32.mrb[0].mxu0
        %v1364 = vadd.f32 0.0, %v1363
        %v1365 = vpop.f32.mrb[0].mxu0
        %1366 = vmatprep.mubr.f32.mxu0 0.0
        %1367 = vmatmul.mubr.f32.gmra.mrb[0].mxu0 %v1277
        %v1368 = vpop.f32.mrb[0].mxu0
        %v1369 = vadd.f32 0.0, %v1368
        %v1370 = vpop.f32.mrb[0].mxu0
        %1371 = vmatprep.mubr.f32.mxu0 0.0
        %1372 = vmatmul.mubr.f32.gmra.mrb[0].mxu0 %v1280
        %v1373 = vpop.f32.mrb[0].mxu0
        %v1374 = vadd.f32 0.0, %v1373
        %v1375 = vpop.f32.mrb[0].mxu0
        %1376 = vmatprep.mubr.f32.mxu0 0.0
        %1377 = vmatmul.mubr.f32.gmra.mrb[0].mxu0 %v1283
        %v1378 = vpop.f32.mrb[0].mxu0
        %v1379 = vadd.f32 0.0, %v1378
        %v1380 = vpop.f32.mrb[0].mxu0
        %1381 = vmatprep.mubr.f32.mxu0 0.0
        %1382 = vmatmul.mubr.f32.gmra.mrb[0].mxu0 %v1286
        %v1383 = vpop.f32.mrb[0].mxu0
        %v1384 = vadd.f32 0.0, %v1383
        %v1385 = vpop.f32.mrb[0].mxu0
        %1386 = vmatprep.mubr.f32.mxu0 0.0
        %1387 = vmatmul.mubr.f32.gmra.mrb[0].mxu0 %v1289
        %v1388 = vpop.f32.mrb[0].mxu0
        %v1389 = vadd.f32 0.0, %v1388
        %v1390 = vpop.f32.mrb[0].mxu0
        %1391 = vmatprep.mubr.f32.mxu0 0.0
        %1392 = vmatmul.mubr.f32.gmra.mrb[0].mxu0 %v1292
        %v1393 = vpop.f32.mrb[0].mxu0
        %v1394 = vadd.f32 0.0, %v1393
        %v1395 = vpop.f32.mrb[0].mxu0
        %1396 = vmatprep.mubr.f32.mxu0 0.0
        %1397 = vmatmul.mubr.f32.gmra.mrb[0].mxu0 %v1295
        %v1398 = vpop.f32.mrb[0].mxu0
        %v1399 = vadd.f32 0.0, %v1398
        %v1400 = vpop.f32.mrb[0].mxu0
        %1401 = vdwg.mxu0
        %v1403 = vsel %vm467, %v1254, 0
        %v1406 = vsel %vm467, %v1255, 0
        %v1409 = vsel %vm467, %v1256, 0
        %v1412 = vsel %vm467, %v1257, 0
        %v1415 = vsel %vm467, %v1258, 0
        %v1418 = vsel %vm467, %v1259, 0
        %v1421 = vsel %vm467, %v1260, 0
        %v1424 = vsel %vm467, %v1261, 0
        %1426 = vmatprep.subr.mxu0 0.0
        %1427 = vmatpush1.msra.mxu0 %v1262
        %1428 = vmatprep.subr.mxu0 0.0
        %1429 = vmatpush1.msra.mxu0 0.0
        %1430 = vmatprep.subr.mxu0 0.0
        %1431 = vmatpush1.msra.mxu0 0.0
        %1432 = vmatprep.subr.mxu0 0.0
        %1433 = vmatpush1.msra.mxu0 0.0
        %1434 = vmatprep.subr.mxu0 0.0
        %1435 = vmatpush1.msra.mxu0 0.0
        %1436 = vmatprep.subr.mxu0 0.0
        %1437 = vmatpush1.msra.mxu0 0.0
        %1438 = vmatprep.subr.mxu0 0.0
        %1439 = vmatpush1.msra.mxu0 0.0
        %1440 = vmatprep.subr.mxu0 0.0
        %1441 = vmatpush1.msra.mxu0 0.0
        %1442 = vmatprep.subr.mxu0 0.0
        %1443 = vmatpush1.msra.mxu0 0.0
        %1444 = vmatprep.subr.mxu0 0.0
        %1445 = vmatpush1.msra.mxu0 0.0
        %1446 = vmatprep.subr.mxu0 0.0
        %1447 = vmatpush1.msra.mxu0 0.0
        %1448 = vmatprep.subr.mxu0 0.0
        %1449 = vmatpush1.msra.mxu0 0.0
        %1450 = vmatprep.subr.mxu0 0.0
        %1451 = vmatpush1.msra.mxu0 0.0
        %1452 = vmatprep.subr.mxu0 0.0
        %1453 = vmatpush1.msra.mxu0 0.0
        %1454 = vmatprep.subr.mxu0 0.0
        %1455 = vmatpush1.msra.mxu0 0.0
        %1456 = vmatprep.subr.mxu0 0.0
        %1457 = vmatpush1.msra.mxu0 0.0
        %1458 = vmatprep.subr.mxu0 0.0
        %1459 = vmatpush1.msra.mxu0 0.0
        %1460 = vmatprep.subr.mxu0 0.0
        %1461 = vmatpush1.msra.mxu0 0.0
        %1462 = vmatprep.subr.mxu0 0.0
        %1463 = vmatpush1.msra.mxu0 0.0
        %1464 = vmatprep.subr.mxu0 0.0
        %1465 = vmatpush1.msra.mxu0 0.0
        %1466 = vmatprep.subr.mxu0 0.0
        %1467 = vmatpush1.msra.mxu0 0.0
        %1468 = vmatprep.subr.mxu0 0.0
        %1469 = vmatpush1.msra.mxu0 0.0
        %1470 = vmatprep.subr.mxu0 0.0
        %1471 = vmatpush1.msra.mxu0 0.0
        %1472 = vmatprep.subr.mxu0 0.0
        %1473 = vmatpush1.msra.mxu0 0.0
        %1474 = vmatprep.subr.mxu0 0.0
        %1475 = vmatpush1.msra.mxu0 0.0
        %1476 = vmatprep.subr.mxu0 0.0
        %1477 = vmatpush1.msra.mxu0 0.0
        %1478 = vmatprep.subr.mxu0 0.0
        %1479 = vmatpush1.msra.mxu0 0.0
        %1480 = vmatprep.subr.mxu0 0.0
        %1481 = vmatpush1.msra.mxu0 0.0
        %1482 = vmatprep.subr.mxu0 0.0
        %1483 = vmatpush1.msra.mxu0 0.0
        %1484 = vmatprep.subr.mxu0 0.0
        %1485 = vmatpush1.msra.mxu0 0.0
        %1486 = vmatprep.subr.mxu0 0.0
        %1487 = vmatpush1.msra.mxu0 0.0
        %1488 = vmatprep.subr.mxu0 0.0
        %1489 = vmatpush1.msra.mxu0 0.0
        %1490 = vmatprep.mubr.f32.mxu0 0.0
        %1491 = vmatmul.mubr.f32.gmra.mrb[0].mxu0 %v1403
        %v1492 = vpop.f32.mrb[0].mxu0
        %v1493 = vadd.f32 %v1364, %v1492
        %v1494 = vpop.f32.mrb[0].mxu0
        %1495 = vmatprep.mubr.f32.mxu0 0.0
        %1496 = vmatmul.mubr.f32.gmra.mrb[0].mxu0 %v1406
        %v1497 = vpop.f32.mrb[0].mxu0
        %v1498 = vadd.f32 %v1369, %v1497
        %v1499 = vpop.f32.mrb[0].mxu0
        %1500 = vmatprep.mubr.f32.mxu0 0.0
        %1501 = vmatmul.mubr.f32.gmra.mrb[0].mxu0 %v1409
        %v1502 = vpop.f32.mrb[0].mxu0
        %v1503 = vadd.f32 %v1374, %v1502
        %v1504 = vpop.f32.mrb[0].mxu0
        %1505 = vmatprep.mubr.f32.mxu0 0.0
        %1506 = vmatmul.mubr.f32.gmra.mrb[0].mxu0 %v1412
        %v1507 = vpop.f32.mrb[0].mxu0
        %v1508 = vadd.f32 %v1379, %v1507
        %v1509 = vpop.f32.mrb[0].mxu0
        %1510 = vmatprep.mubr.f32.mxu0 0.0
        %1511 = vmatmul.mubr.f32.gmra.mrb[0].mxu0 %v1415
        %v1512 = vpop.f32.mrb[0].mxu0
        %v1513 = vadd.f32 %v1384, %v1512
        %v1514 = vpop.f32.mrb[0].mxu0
        %1515 = vmatprep.mubr.f32.mxu0 0.0
        %1516 = vmatmul.mubr.f32.gmra.mrb[0].mxu0 %v1418
        %v1517 = vpop.f32.mrb[0].mxu0
        %v1518 = vadd.f32 %v1389, %v1517
        %v1519 = vpop.f32.mrb[0].mxu0
        %1520 = vmatprep.mubr.f32.mxu0 0.0
        %1521 = vmatmul.mubr.f32.gmra.mrb[0].mxu0 %v1421
        %v1522 = vpop.f32.mrb[0].mxu0
        %v1523 = vadd.f32 %v1394, %v1522
        %v1524 = vpop.f32.mrb[0].mxu0
        %1525 = vmatprep.mubr.f32.mxu0 0.0
        %1526 = vmatmul.mubr.f32.gmra.mrb[0].mxu0 %v1424
        %v1527 = vpop.f32.mrb[0].mxu0
        %v1528 = vadd.f32 %v1399, %v1527
        %v1529 = vpop.f32.mrb[0].mxu0
        %1530 = vdwg.mxu0
        %v1531 = vld [vmem:[%s1197 + $0x1] sm:$0xff]
        %v1532 = vld [vmem:[%s1197 + $0x9] sm:$0xff]
        %v1533 = vld [vmem:[%s1197 + $0x11] sm:$0xff]
        %v1534 = vld [vmem:[%s1197 + $0x19] sm:$0xff]
        %v1535 = vld [vmem:[%s1197 + $0x21] sm:$0xff]
        %v1536 = vld [vmem:[%s1197 + $0x29] sm:$0xff]
        %v1537 = vld [vmem:[%s1197 + $0x31] sm:$0xff]
        %v1538 = vld [vmem:[%s1197 + $0x39] sm:$0xff]
        %s1539 = scalar_lea.vmem %s5, 16
        %v1540 = vld [vmem:[%s1539] sm:$0xff]
        %v1542 = vsel %vm467, %v1531, 0
        %v1545 = vsel %vm467, %v1532, 0
        %v1548 = vsel %vm467, %v1533, 0
        %v1551 = vsel %vm467, %v1534, 0
        %v1554 = vsel %vm467, %v1535, 0
        %v1557 = vsel %vm467, %v1536, 0
        %v1560 = vsel %vm467, %v1537, 0
        %v1563 = vsel %vm467, %v1538, 0
        %1565 = vmatprep.subr.mxu0 0.0
        %1566 = vmatpush1.msra.mxu0 %v1540
        %1567 = vmatprep.subr.mxu0 0.0
        %1568 = vmatpush1.msra.mxu0 0.0
        %1569 = vmatprep.subr.mxu0 0.0
        %1570 = vmatpush1.msra.mxu0 0.0
        %1571 = vmatprep.subr.mxu0 0.0
        %1572 = vmatpush1.msra.mxu0 0.0
        %1573 = vmatprep.subr.mxu0 0.0
        %1574 = vmatpush1.msra.mxu0 0.0
        %1575 = vmatprep.subr.mxu0 0.0
        %1576 = vmatpush1.msra.mxu0 0.0
        %1577 = vmatprep.subr.mxu0 0.0
        %1578 = vmatpush1.msra.mxu0 0.0
        %1579 = vmatprep.subr.mxu0 0.0
        %1580 = vmatpush1.msra.mxu0 0.0
        %1581 = vmatprep.subr.mxu0 0.0
        %1582 = vmatpush1.msra.mxu0 0.0
        %1583 = vmatprep.subr.mxu0 0.0
        %1584 = vmatpush1.msra.mxu0 0.0
        %1585 = vmatprep.subr.mxu0 0.0
        %1586 = vmatpush1.msra.mxu0 0.0
        %1587 = vmatprep.subr.mxu0 0.0
        %1588 = vmatpush1.msra.mxu0 0.0
        %1589 = vmatprep.subr.mxu0 0.0
        %1590 = vmatpush1.msra.mxu0 0.0
        %1591 = vmatprep.subr.mxu0 0.0
        %1592 = vmatpush1.msra.mxu0 0.0
        %1593 = vmatprep.subr.mxu0 0.0
        %1594 = vmatpush1.msra.mxu0 0.0
        %1595 = vmatprep.subr.mxu0 0.0
        %1596 = vmatpush1.msra.mxu0 0.0
        %1597 = vmatprep.subr.mxu0 0.0
        %1598 = vmatpush1.msra.mxu0 0.0
        %1599 = vmatprep.subr.mxu0 0.0
        %1600 = vmatpush1.msra.mxu0 0.0
        %1601 = vmatprep.subr.mxu0 0.0
        %1602 = vmatpush1.msra.mxu0 0.0
        %1603 = vmatprep.subr.mxu0 0.0
        %1604 = vmatpush1.msra.mxu0 0.0
        %1605 = vmatprep.subr.mxu0 0.0
        %1606 = vmatpush1.msra.mxu0 0.0
        %1607 = vmatprep.subr.mxu0 0.0
        %1608 = vmatpush1.msra.mxu0 0.0
        %1609 = vmatprep.subr.mxu0 0.0
        %1610 = vmatpush1.msra.mxu0 0.0
        %1611 = vmatprep.subr.mxu0 0.0
        %1612 = vmatpush1.msra.mxu0 0.0
        %1613 = vmatprep.subr.mxu0 0.0
        %1614 = vmatpush1.msra.mxu0 0.0
        %1615 = vmatprep.subr.mxu0 0.0
        %1616 = vmatpush1.msra.mxu0 0.0
        %1617 = vmatprep.subr.mxu0 0.0
        %1618 = vmatpush1.msra.mxu0 0.0
        %1619 = vmatprep.subr.mxu0 0.0
        %1620 = vmatpush1.msra.mxu0 0.0
        %1621 = vmatprep.subr.mxu0 0.0
        %1622 = vmatpush1.msra.mxu0 0.0
        %1623 = vmatprep.subr.mxu0 0.0
        %1624 = vmatpush1.msra.mxu0 0.0
        %1625 = vmatprep.subr.mxu0 0.0
        %1626 = vmatpush1.msra.mxu0 0.0
        %1627 = vmatprep.subr.mxu0 0.0
        %1628 = vmatpush1.msra.mxu0 0.0
        %1629 = vmatprep.mubr.f32.mxu0 0.0
        %1630 = vmatmul.mubr.f32.gmra.mrb[0].mxu0 %v1542
        %v1631 = vpop.f32.mrb[0].mxu0
        %v1632 = vadd.f32 0.0, %v1631
        %v1633 = vpop.f32.mrb[0].mxu0
        %1634 = vmatprep.mubr.f32.mxu0 0.0
        %1635 = vmatmul.mubr.f32.gmra.mrb[0].mxu0 %v1545
        %v1636 = vpop.f32.mrb[0].mxu0
        %v1637 = vadd.f32 0.0, %v1636
        %v1638 = vpop.f32.mrb[0].mxu0
        %1639 = vmatprep.mubr.f32.mxu0 0.0
        %1640 = vmatmul.mubr.f32.gmra.mrb[0].mxu0 %v1548
        %v1641 = vpop.f32.mrb[0].mxu0
        %v1642 = vadd.f32 0.0, %v1641
        %v1643 = vpop.f32.mrb[0].mxu0
        %1644 = vmatprep.mubr.f32.mxu0 0.0
        %1645 = vmatmul.mubr.f32.gmra.mrb[0].mxu0 %v1551
        %v1646 = vpop.f32.mrb[0].mxu0
        %v1647 = vadd.f32 0.0, %v1646
        %v1648 = vpop.f32.mrb[0].mxu0
        %1649 = vmatprep.mubr.f32.mxu0 0.0
        %1650 = vmatmul.mubr.f32.gmra.mrb[0].mxu0 %v1554
        %v1651 = vpop.f32.mrb[0].mxu0
        %v1652 = vadd.f32 0.0, %v1651
        %v1653 = vpop.f32.mrb[0].mxu0
        %1654 = vmatprep.mubr.f32.mxu0 0.0
        %1655 = vmatmul.mubr.f32.gmra.mrb[0].mxu0 %v1557
        %v1656 = vpop.f32.mrb[0].mxu0
        %v1657 = vadd.f32 0.0, %v1656
        %v1658 = vpop.f32.mrb[0].mxu0
        %1659 = vmatprep.mubr.f32.mxu0 0.0
        %1660 = vmatmul.mubr.f32.gmra.mrb[0].mxu0 %v1560
        %v1661 = vpop.f32.mrb[0].mxu0
        %v1662 = vadd.f32 0.0, %v1661
        %v1663 = vpop.f32.mrb[0].mxu0
        %1664 = vmatprep.mubr.f32.mxu0 0.0
        %1665 = vmatmul.mubr.f32.gmra.mrb[0].mxu0 %v1563
        %v1666 = vpop.f32.mrb[0].mxu0
        %v1667 = vadd.f32 0.0, %v1666
        %v1668 = vpop.f32.mrb[0].mxu0
        %1669 = vdwg.mxu0
        %v1670 = vadd.f32 %v1493, %v1632
        %v1671 = vadd.f32 %v1498, %v1637
        %v1672 = vadd.f32 %v1503, %v1642
        %v1673 = vadd.f32 %v1508, %v1647
        %v1674 = vadd.f32 %v1513, %v1652
        %v1675 = vadd.f32 %v1518, %v1657
        %v1676 = vadd.f32 %v1523, %v1662
        %v1677 = vadd.f32 %v1528, %v1667
        %v1678 = vld [vmem:[%s867 + $0x8] sm:$0xff]
        %v1679 = vld [vmem:[%s867 + $0x10] sm:$0xff]
        %v1680 = vld [vmem:[%s867 + $0x18] sm:$0xff]
        %v1681 = vld [vmem:[%s867 + $0x20] sm:$0xff]
        %v1682 = vld [vmem:[%s867 + $0x28] sm:$0xff]
        %v1683 = vld [vmem:[%s867 + $0x30] sm:$0xff]
        %v1684 = vld [vmem:[%s867 + $0x38] sm:$0xff]
        %v1685 = vld [vmem:[%s867 + $0x40] sm:$0xff]
        %v1686 = vmul.f32 %v1678, %v1217
        %v1687 = vmul.f32 %v1679, %v1222
        %v1688 = vmul.f32 %v1680, %v1227
        %v1689 = vmul.f32 %v1681, %v1232
        %v1690 = vmul.f32 %v1682, %v1237
        %v1691 = vmul.f32 %v1683, %v1242
        %v1692 = vmul.f32 %v1684, %v1247
        %v1693 = vmul.f32 %v1685, %v1252
        %s1694 = scalar_lea.vmem %s5, 24
        %v1695 = vld [vmem:[%s1694] sm:$0xff]
        %v1697 = vsel %vm467, %v1686, 0
        %v1700 = vsel %vm467, %v1687, 0
        %v1703 = vsel %vm467, %v1688, 0
        %v1706 = vsel %vm467, %v1689, 0
        %v1709 = vsel %vm467, %v1690, 0
        %v1712 = vsel %vm467, %v1691, 0
        %v1715 = vsel %vm467, %v1692, 0
        %v1718 = vsel %vm467, %v1693, 0
        %1720 = vmatprep.subr.mxu0 0.0
        %1721 = vmatpush1.msra.mxu0 %v1695
        %1722 = vmatprep.subr.mxu0 0.0
        %1723 = vmatpush1.msra.mxu0 0.0
        %1724 = vmatprep.subr.mxu0 0.0
        %1725 = vmatpush1.msra.mxu0 0.0
        %1726 = vmatprep.subr.mxu0 0.0
        %1727 = vmatpush1.msra.mxu0 0.0
        %1728 = vmatprep.subr.mxu0 0.0
        %1729 = vmatpush1.msra.mxu0 0.0
        %1730 = vmatprep.subr.mxu0 0.0
        %1731 = vmatpush1.msra.mxu0 0.0
        %1732 = vmatprep.subr.mxu0 0.0
        %1733 = vmatpush1.msra.mxu0 0.0
        %1734 = vmatprep.subr.mxu0 0.0
        %1735 = vmatpush1.msra.mxu0 0.0
        %1736 = vmatprep.subr.mxu0 0.0
        %1737 = vmatpush1.msra.mxu0 0.0
        %1738 = vmatprep.subr.mxu0 0.0
        %1739 = vmatpush1.msra.mxu0 0.0
        %1740 = vmatprep.subr.mxu0 0.0
        %1741 = vmatpush1.msra.mxu0 0.0
        %1742 = vmatprep.subr.mxu0 0.0
        %1743 = vmatpush1.msra.mxu0 0.0
        %1744 = vmatprep.subr.mxu0 0.0
        %1745 = vmatpush1.msra.mxu0 0.0
        %1746 = vmatprep.subr.mxu0 0.0
        %1747 = vmatpush1.msra.mxu0 0.0
        %1748 = vmatprep.subr.mxu0 0.0
        %1749 = vmatpush1.msra.mxu0 0.0
        %1750 = vmatprep.subr.mxu0 0.0
        %1751 = vmatpush1.msra.mxu0 0.0
        %1752 = vmatprep.subr.mxu0 0.0
        %1753 = vmatpush1.msra.mxu0 0.0
        %1754 = vmatprep.subr.mxu0 0.0
        %1755 = vmatpush1.msra.mxu0 0.0
        %1756 = vmatprep.subr.mxu0 0.0
        %1757 = vmatpush1.msra.mxu0 0.0
        %1758 = vmatprep.subr.mxu0 0.0
        %1759 = vmatpush1.msra.mxu0 0.0
        %1760 = vmatprep.subr.mxu0 0.0
        %1761 = vmatpush1.msra.mxu0 0.0
        %1762 = vmatprep.subr.mxu0 0.0
        %1763 = vmatpush1.msra.mxu0 0.0
        %1764 = vmatprep.subr.mxu0 0.0
        %1765 = vmatpush1.msra.mxu0 0.0
        %1766 = vmatprep.subr.mxu0 0.0
        %1767 = vmatpush1.msra.mxu0 0.0
        %1768 = vmatprep.subr.mxu0 0.0
        %1769 = vmatpush1.msra.mxu0 0.0
        %1770 = vmatprep.subr.mxu0 0.0
        %1771 = vmatpush1.msra.mxu0 0.0
        %1772 = vmatprep.subr.mxu0 0.0
        %1773 = vmatpush1.msra.mxu0 0.0
        %1774 = vmatprep.subr.mxu0 0.0
        %1775 = vmatpush1.msra.mxu0 0.0
        %1776 = vmatprep.subr.mxu0 0.0
        %1777 = vmatpush1.msra.mxu0 0.0
        %1778 = vmatprep.subr.mxu0 0.0
        %1779 = vmatpush1.msra.mxu0 0.0
        %1780 = vmatprep.subr.mxu0 0.0
        %1781 = vmatpush1.msra.mxu0 0.0
        %1782 = vmatprep.subr.mxu0 0.0
        %1783 = vmatpush1.msra.mxu0 0.0
        %1784 = vmatprep.mubr.f32.mxu0 0.0
        %1785 = vmatmul.mubr.f32.gmra.mrb[0].mxu0 %v1697
        %v1786 = vpop.f32.mrb[0].mxu0
        %v1787 = vadd.f32 0.0, %v1786
        %v1788 = vpop.f32.mrb[0].mxu0
        %1789 = vmatprep.mubr.f32.mxu0 0.0
        %1790 = vmatmul.mubr.f32.gmra.mrb[0].mxu0 %v1700
        %v1791 = vpop.f32.mrb[0].mxu0
        %v1792 = vadd.f32 0.0, %v1791
        %v1793 = vpop.f32.mrb[0].mxu0
        %1794 = vmatprep.mubr.f32.mxu0 0.0
        %1795 = vmatmul.mubr.f32.gmra.mrb[0].mxu0 %v1703
        %v1796 = vpop.f32.mrb[0].mxu0
        %v1797 = vadd.f32 0.0, %v1796
        %v1798 = vpop.f32.mrb[0].mxu0
        %1799 = vmatprep.mubr.f32.mxu0 0.0
        %1800 = vmatmul.mubr.f32.gmra.mrb[0].mxu0 %v1706
        %v1801 = vpop.f32.mrb[0].mxu0
        %v1802 = vadd.f32 0.0, %v1801
        %v1803 = vpop.f32.mrb[0].mxu0
        %1804 = vmatprep.mubr.f32.mxu0 0.0
        %1805 = vmatmul.mubr.f32.gmra.mrb[0].mxu0 %v1709
        %v1806 = vpop.f32.mrb[0].mxu0
        %v1807 = vadd.f32 0.0, %v1806
        %v1808 = vpop.f32.mrb[0].mxu0
        %1809 = vmatprep.mubr.f32.mxu0 0.0
        %1810 = vmatmul.mubr.f32.gmra.mrb[0].mxu0 %v1712
        %v1811 = vpop.f32.mrb[0].mxu0
        %v1812 = vadd.f32 0.0, %v1811
        %v1813 = vpop.f32.mrb[0].mxu0
        %1814 = vmatprep.mubr.f32.mxu0 0.0
        %1815 = vmatmul.mubr.f32.gmra.mrb[0].mxu0 %v1715
        %v1816 = vpop.f32.mrb[0].mxu0
        %v1817 = vadd.f32 0.0, %v1816
        %v1818 = vpop.f32.mrb[0].mxu0
        %1819 = vmatprep.mubr.f32.mxu0 0.0
        %1820 = vmatmul.mubr.f32.gmra.mrb[0].mxu0 %v1718
        %v1821 = vpop.f32.mrb[0].mxu0
        %v1822 = vadd.f32 0.0, %v1821
        %v1823 = vpop.f32.mrb[0].mxu0
        %1824 = vdwg.mxu0
        %v1825 = vadd.f32 %v1670, %v1787
        %v1826 = vadd.f32 %v1671, %v1792
        %v1827 = vadd.f32 %v1672, %v1797
        %v1828 = vadd.f32 %v1673, %v1802
        %v1829 = vadd.f32 %v1674, %v1807
        %v1830 = vadd.f32 %v1675, %v1812
        %v1831 = vadd.f32 %v1676, %v1817
        %v1832 = vadd.f32 %v1677, %v1822
        %v1833 = vld [vmem:[#allocation2 + $0x9] sm:$0xff]
        %v1834 = vld [vmem:[#allocation2 + $0x11] sm:$0xff]
        %v1835 = vld [vmem:[#allocation2 + $0x19] sm:$0xff]
        %v1836 = vld [vmem:[#allocation2 + $0x21] sm:$0xff]
        %v1837 = vld [vmem:[#allocation2 + $0x29] sm:$0xff]
        %v1838 = vld [vmem:[#allocation2 + $0x31] sm:$0xff]
        %v1839 = vld [vmem:[#allocation2 + $0x39] sm:$0xff]
        %v1840 = vld [vmem:[#allocation2 + $0x41] sm:$0xff]
        %s1841 = scalar_lea.vmem %s5, 32
        %v1842 = vld [vmem:[%s1841] sm:$0xff]
        %v1844 = vsel %vm467, %v1833, 0
        %v1847 = vsel %vm467, %v1834, 0
        %v1850 = vsel %vm467, %v1835, 0
        %v1853 = vsel %vm467, %v1836, 0
        %v1856 = vsel %vm467, %v1837, 0
        %v1859 = vsel %vm467, %v1838, 0
        %v1862 = vsel %vm467, %v1839, 0
        %v1865 = vsel %vm467, %v1840, 0
        %1867 = vmatprep.subr.mxu0 0.0
        %1868 = vmatpush1.msra.mxu0 %v1842
        %1869 = vmatprep.subr.mxu0 0.0
        %1870 = vmatpush1.msra.mxu0 0.0
        %1871 = vmatprep.subr.mxu0 0.0
        %1872 = vmatpush1.msra.mxu0 0.0
        %1873 = vmatprep.subr.mxu0 0.0
        %1874 = vmatpush1.msra.mxu0 0.0
        %1875 = vmatprep.subr.mxu0 0.0
        %1876 = vmatpush1.msra.mxu0 0.0
        %1877 = vmatprep.subr.mxu0 0.0
        %1878 = vmatpush1.msra.mxu0 0.0
        %1879 = vmatprep.subr.mxu0 0.0
        %1880 = vmatpush1.msra.mxu0 0.0
        %1881 = vmatprep.subr.mxu0 0.0
        %1882 = vmatpush1.msra.mxu0 0.0
        %1883 = vmatprep.subr.mxu0 0.0
        %1884 = vmatpush1.msra.mxu0 0.0
        %1885 = vmatprep.subr.mxu0 0.0
        %1886 = vmatpush1.msra.mxu0 0.0
        %1887 = vmatprep.subr.mxu0 0.0
        %1888 = vmatpush1.msra.mxu0 0.0
        %1889 = vmatprep.subr.mxu0 0.0
        %1890 = vmatpush1.msra.mxu0 0.0
        %1891 = vmatprep.subr.mxu0 0.0
        %1892 = vmatpush1.msra.mxu0 0.0
        %1893 = vmatprep.subr.mxu0 0.0
        %1894 = vmatpush1.msra.mxu0 0.0
        %1895 = vmatprep.subr.mxu0 0.0
        %1896 = vmatpush1.msra.mxu0 0.0
        %1897 = vmatprep.subr.mxu0 0.0
        %1898 = vmatpush1.msra.mxu0 0.0
        %1899 = vmatprep.subr.mxu0 0.0
        %1900 = vmatpush1.msra.mxu0 0.0
        %1901 = vmatprep.subr.mxu0 0.0
        %1902 = vmatpush1.msra.mxu0 0.0
        %1903 = vmatprep.subr.mxu0 0.0
        %1904 = vmatpush1.msra.mxu0 0.0
        %1905 = vmatprep.subr.mxu0 0.0
        %1906 = vmatpush1.msra.mxu0 0.0
        %1907 = vmatprep.subr.mxu0 0.0
        %1908 = vmatpush1.msra.mxu0 0.0
        %1909 = vmatprep.subr.mxu0 0.0
        %1910 = vmatpush1.msra.mxu0 0.0
        %1911 = vmatprep.subr.mxu0 0.0
        %1912 = vmatpush1.msra.mxu0 0.0
        %1913 = vmatprep.subr.mxu0 0.0
        %1914 = vmatpush1.msra.mxu0 0.0
        %1915 = vmatprep.subr.mxu0 0.0
        %1916 = vmatpush1.msra.mxu0 0.0
        %1917 = vmatprep.subr.mxu0 0.0
        %1918 = vmatpush1.msra.mxu0 0.0
        %1919 = vmatprep.subr.mxu0 0.0
        %1920 = vmatpush1.msra.mxu0 0.0
        %1921 = vmatprep.subr.mxu0 0.0
        %1922 = vmatpush1.msra.mxu0 0.0
        %1923 = vmatprep.subr.mxu0 0.0
        %1924 = vmatpush1.msra.mxu0 0.0
        %1925 = vmatprep.subr.mxu0 0.0
        %1926 = vmatpush1.msra.mxu0 0.0
        %1927 = vmatprep.subr.mxu0 0.0
        %1928 = vmatpush1.msra.mxu0 0.0
        %1929 = vmatprep.subr.mxu0 0.0
        %1930 = vmatpush1.msra.mxu0 0.0
        %1931 = vmatprep.mubr.f32.mxu0 0.0
        %1932 = vmatmul.mubr.f32.gmra.mrb[0].mxu0 %v1844
        %v1933 = vpop.f32.mrb[0].mxu0
        %v1934 = vadd.f32 0.0, %v1933
        %v1935 = vpop.f32.mrb[0].mxu0
        %1936 = vmatprep.mubr.f32.mxu0 0.0
        %1937 = vmatmul.mubr.f32.gmra.mrb[0].mxu0 %v1847
        %v1938 = vpop.f32.mrb[0].mxu0
        %v1939 = vadd.f32 0.0, %v1938
        %v1940 = vpop.f32.mrb[0].mxu0
        %1941 = vmatprep.mubr.f32.mxu0 0.0
        %1942 = vmatmul.mubr.f32.gmra.mrb[0].mxu0 %v1850
        %v1943 = vpop.f32.mrb[0].mxu0
        %v1944 = vadd.f32 0.0, %v1943
        %v1945 = vpop.f32.mrb[0].mxu0
        %1946 = vmatprep.mubr.f32.mxu0 0.0
        %1947 = vmatmul.mubr.f32.gmra.mrb[0].mxu0 %v1853
        %v1948 = vpop.f32.mrb[0].mxu0
        %v1949 = vadd.f32 0.0, %v1948
        %v1950 = vpop.f32.mrb[0].mxu0
        %1951 = vmatprep.mubr.f32.mxu0 0.0
        %1952 = vmatmul.mubr.f32.gmra.mrb[0].mxu0 %v1856
        %v1953 = vpop.f32.mrb[0].mxu0
        %v1954 = vadd.f32 0.0, %v1953
        %v1955 = vpop.f32.mrb[0].mxu0
        %1956 = vmatprep.mubr.f32.mxu0 0.0
        %1957 = vmatmul.mubr.f32.gmra.mrb[0].mxu0 %v1859
        %v1958 = vpop.f32.mrb[0].mxu0
        %v1959 = vadd.f32 0.0, %v1958
        %v1960 = vpop.f32.mrb[0].mxu0
        %1961 = vmatprep.mubr.f32.mxu0 0.0
        %1962 = vmatmul.mubr.f32.gmra.mrb[0].mxu0 %v1862
        %v1963 = vpop.f32.mrb[0].mxu0
        %v1964 = vadd.f32 0.0, %v1963
        %v1965 = vpop.f32.mrb[0].mxu0
        %1966 = vmatprep.mubr.f32.mxu0 0.0
        %1967 = vmatmul.mubr.f32.gmra.mrb[0].mxu0 %v1865
        %v1968 = vpop.f32.mrb[0].mxu0
        %v1969 = vadd.f32 0.0, %v1968
        %v1970 = vpop.f32.mrb[0].mxu0
        %1971 = vdwg.mxu0
        %v1972 = vadd.f32 %v1825, %v1934
        %v1973 = vadd.f32 %v1826, %v1939
        %v1974 = vadd.f32 %v1827, %v1944
        %v1975 = vadd.f32 %v1828, %v1949
        %v1976 = vadd.f32 %v1829, %v1954
        %v1977 = vadd.f32 %v1830, %v1959
        %v1978 = vadd.f32 %v1831, %v1964
        %v1979 = vadd.f32 %v1832, %v1969
        %v1980 = vld [vmem:[%s867 + $0x9] sm:$0xff]
        %v1981 = vld [vmem:[%s867 + $0x11] sm:$0xff]
        %v1982 = vld [vmem:[%s867 + $0x19] sm:$0xff]
        %v1983 = vld [vmem:[%s867 + $0x21] sm:$0xff]
        %v1984 = vld [vmem:[%s867 + $0x29] sm:$0xff]
        %v1985 = vld [vmem:[%s867 + $0x31] sm:$0xff]
        %v1986 = vld [vmem:[%s867 + $0x39] sm:$0xff]
        %v1987 = vld [vmem:[%s867 + $0x41] sm:$0xff]
        %s1988 = scalar_lea.vmem %s5, 40
        %v1989 = vld [vmem:[%s1988] sm:$0xff]
        %v1991 = vsel %vm467, %v1980, 0
        %v1994 = vsel %vm467, %v1981, 0
        %v1997 = vsel %vm467, %v1982, 0
        %v2000 = vsel %vm467, %v1983, 0
        %v2003 = vsel %vm467, %v1984, 0
        %v2006 = vsel %vm467, %v1985, 0
        %v2009 = vsel %vm467, %v1986, 0
        %v2012 = vsel %vm467, %v1987, 0
        %2014 = vmatprep.subr.mxu0 0.0
        %2015 = vmatpush1.msra.mxu0 %v1989
        %2016 = vmatprep.subr.mxu0 0.0
        %2017 = vmatpush1.msra.mxu0 0.0
        %2018 = vmatprep.subr.mxu0 0.0
        %2019 = vmatpush1.msra.mxu0 0.0
        %2020 = vmatprep.subr.mxu0 0.0
        %2021 = vmatpush1.msra.mxu0 0.0
        %2022 = vmatprep.subr.mxu0 0.0
        %2023 = vmatpush1.msra.mxu0 0.0
        %2024 = vmatprep.subr.mxu0 0.0
        %2025 = vmatpush1.msra.mxu0 0.0
        %2026 = vmatprep.subr.mxu0 0.0
        %2027 = vmatpush1.msra.mxu0 0.0
        %2028 = vmatprep.subr.mxu0 0.0
        %2029 = vmatpush1.msra.mxu0 0.0
        %2030 = vmatprep.subr.mxu0 0.0
        %2031 = vmatpush1.msra.mxu0 0.0
        %2032 = vmatprep.subr.mxu0 0.0
        %2033 = vmatpush1.msra.mxu0 0.0
        %2034 = vmatprep.subr.mxu0 0.0
        %2035 = vmatpush1.msra.mxu0 0.0
        %2036 = vmatprep.subr.mxu0 0.0
        %2037 = vmatpush1.msra.mxu0 0.0
        %2038 = vmatprep.subr.mxu0 0.0
        %2039 = vmatpush1.msra.mxu0 0.0
        %2040 = vmatprep.subr.mxu0 0.0
        %2041 = vmatpush1.msra.mxu0 0.0
        %2042 = vmatprep.subr.mxu0 0.0
        %2043 = vmatpush1.msra.mxu0 0.0
        %2044 = vmatprep.subr.mxu0 0.0
        %2045 = vmatpush1.msra.mxu0 0.0
        %2046 = vmatprep.subr.mxu0 0.0
        %2047 = vmatpush1.msra.mxu0 0.0
        %2048 = vmatprep.subr.mxu0 0.0
        %2049 = vmatpush1.msra.mxu0 0.0
        %2050 = vmatprep.subr.mxu0 0.0
        %2051 = vmatpush1.msra.mxu0 0.0
        %2052 = vmatprep.subr.mxu0 0.0
        %2053 = vmatpush1.msra.mxu0 0.0
        %2054 = vmatprep.subr.mxu0 0.0
        %2055 = vmatpush1.msra.mxu0 0.0
        %2056 = vmatprep.subr.mxu0 0.0
        %2057 = vmatpush1.msra.mxu0 0.0
        %2058 = vmatprep.subr.mxu0 0.0
        %2059 = vmatpush1.msra.mxu0 0.0
        %2060 = vmatprep.subr.mxu0 0.0
        %2061 = vmatpush1.msra.mxu0 0.0
        %2062 = vmatprep.subr.mxu0 0.0
        %2063 = vmatpush1.msra.mxu0 0.0
        %2064 = vmatprep.subr.mxu0 0.0
        %2065 = vmatpush1.msra.mxu0 0.0
        %2066 = vmatprep.subr.mxu0 0.0
        %2067 = vmatpush1.msra.mxu0 0.0
        %2068 = vmatprep.subr.mxu0 0.0
        %2069 = vmatpush1.msra.mxu0 0.0
        %2070 = vmatprep.subr.mxu0 0.0
        %2071 = vmatpush1.msra.mxu0 0.0
        %2072 = vmatprep.subr.mxu0 0.0
        %2073 = vmatpush1.msra.mxu0 0.0
        %2074 = vmatprep.subr.mxu0 0.0
        %2075 = vmatpush1.msra.mxu0 0.0
        %2076 = vmatprep.subr.mxu0 0.0
        %2077 = vmatpush1.msra.mxu0 0.0
        %2078 = vmatprep.mubr.f32.mxu0 0.0
        %2079 = vmatmul.mubr.f32.gmra.mrb[0].mxu0 %v1991
        %v2080 = vpop.f32.mrb[0].mxu0
        %v2081 = vadd.f32 0.0, %v2080
        %v2082 = vpop.f32.mrb[0].mxu0
        %2083 = vmatprep.mubr.f32.mxu0 0.0
        %2084 = vmatmul.mubr.f32.gmra.mrb[0].mxu0 %v1994
        %v2085 = vpop.f32.mrb[0].mxu0
        %v2086 = vadd.f32 0.0, %v2085
        %v2087 = vpop.f32.mrb[0].mxu0
        %2088 = vmatprep.mubr.f32.mxu0 0.0
        %2089 = vmatmul.mubr.f32.gmra.mrb[0].mxu0 %v1997
        %v2090 = vpop.f32.mrb[0].mxu0
        %v2091 = vadd.f32 0.0, %v2090
        %v2092 = vpop.f32.mrb[0].mxu0
        %2093 = vmatprep.mubr.f32.mxu0 0.0
        %2094 = vmatmul.mubr.f32.gmra.mrb[0].mxu0 %v2000
        %v2095 = vpop.f32.mrb[0].mxu0
        %v2096 = vadd.f32 0.0, %v2095
        %v2097 = vpop.f32.mrb[0].mxu0
        %2098 = vmatprep.mubr.f32.mxu0 0.0
        %2099 = vmatmul.mubr.f32.gmra.mrb[0].mxu0 %v2003
        %v2100 = vpop.f32.mrb[0].mxu0
        %v2101 = vadd.f32 0.0, %v2100
        %v2102 = vpop.f32.mrb[0].mxu0
        %2103 = vmatprep.mubr.f32.mxu0 0.0
        %2104 = vmatmul.mubr.f32.gmra.mrb[0].mxu0 %v2006
        %v2105 = vpop.f32.mrb[0].mxu0
        %v2106 = vadd.f32 0.0, %v2105
        %v2107 = vpop.f32.mrb[0].mxu0
        %2108 = vmatprep.mubr.f32.mxu0 0.0
        %2109 = vmatmul.mubr.f32.gmra.mrb[0].mxu0 %v2009
        %v2110 = vpop.f32.mrb[0].mxu0
        %v2111 = vadd.f32 0.0, %v2110
        %v2112 = vpop.f32.mrb[0].mxu0
        %2113 = vmatprep.mubr.f32.mxu0 0.0
        %2114 = vmatmul.mubr.f32.gmra.mrb[0].mxu0 %v2012
        %v2115 = vpop.f32.mrb[0].mxu0
        %v2116 = vadd.f32 0.0, %v2115
        %v2117 = vpop.f32.mrb[0].mxu0
        %2118 = vdwg.mxu0
        %v2119 = vadd.f32 %v1972, %v2081
        %v2120 = vadd.f32 %v1973, %v2086
        %v2121 = vadd.f32 %v1974, %v2091
        %v2122 = vadd.f32 %v1975, %v2096
        %v2123 = vadd.f32 %v1976, %v2101
        %v2124 = vadd.f32 %v1977, %v2106
        %v2125 = vadd.f32 %v1978, %v2111
        %v2126 = vadd.f32 %v1979, %v2116
        %v2127 = vld [vmem:[%s1197 + $0x8] sm:$0xff]
        %v2128 = vld [vmem:[%s1197 + $0x10] sm:$0xff]
        %v2129 = vld [vmem:[%s1197 + $0x18] sm:$0xff]
        %v2130 = vld [vmem:[%s1197 + $0x20] sm:$0xff]
        %v2131 = vld [vmem:[%s1197 + $0x28] sm:$0xff]
        %v2132 = vld [vmem:[%s1197 + $0x30] sm:$0xff]
        %v2133 = vld [vmem:[%s1197 + $0x38] sm:$0xff]
        %v2134 = vld [vmem:[%s1197 + $0x40] sm:$0xff]
        %v2135 = vmul.f32 %v2127, %v1217
        %v2136 = vmul.f32 %v2128, %v1222
        %v2137 = vmul.f32 %v2129, %v1227
        %v2138 = vmul.f32 %v2130, %v1232
        %v2139 = vmul.f32 %v2131, %v1237
        %v2140 = vmul.f32 %v2132, %v1242
        %v2141 = vmul.f32 %v2133, %v1247
        %v2142 = vmul.f32 %v2134, %v1252
        %s2143 = scalar_lea.vmem %s5, 48
        %v2144 = vld [vmem:[%s2143] sm:$0xff]
        %v2146 = vsel %vm467, %v2135, 0
        %v2149 = vsel %vm467, %v2136, 0
        %v2152 = vsel %vm467, %v2137, 0
        %v2155 = vsel %vm467, %v2138, 0
        %v2158 = vsel %vm467, %v2139, 0
        %v2161 = vsel %vm467, %v2140, 0
        %v2164 = vsel %vm467, %v2141, 0
        %v2167 = vsel %vm467, %v2142, 0
        %2169 = vmatprep.subr.mxu0 0.0
        %2170 = vmatpush1.msra.mxu0 %v2144
        %2171 = vmatprep.subr.mxu0 0.0
        %2172 = vmatpush1.msra.mxu0 0.0
        %2173 = vmatprep.subr.mxu0 0.0
        %2174 = vmatpush1.msra.mxu0 0.0
        %2175 = vmatprep.subr.mxu0 0.0
        %2176 = vmatpush1.msra.mxu0 0.0
        %2177 = vmatprep.subr.mxu0 0.0
        %2178 = vmatpush1.msra.mxu0 0.0
        %2179 = vmatprep.subr.mxu0 0.0
        %2180 = vmatpush1.msra.mxu0 0.0
        %2181 = vmatprep.subr.mxu0 0.0
        %2182 = vmatpush1.msra.mxu0 0.0
        %2183 = vmatprep.subr.mxu0 0.0
        %2184 = vmatpush1.msra.mxu0 0.0
        %2185 = vmatprep.subr.mxu0 0.0
        %2186 = vmatpush1.msra.mxu0 0.0
        %2187 = vmatprep.subr.mxu0 0.0
        %2188 = vmatpush1.msra.mxu0 0.0
        %2189 = vmatprep.subr.mxu0 0.0
        %2190 = vmatpush1.msra.mxu0 0.0
        %2191 = vmatprep.subr.mxu0 0.0
        %2192 = vmatpush1.msra.mxu0 0.0
        %2193 = vmatprep.subr.mxu0 0.0
        %2194 = vmatpush1.msra.mxu0 0.0
        %2195 = vmatprep.subr.mxu0 0.0
        %2196 = vmatpush1.msra.mxu0 0.0
        %2197 = vmatprep.subr.mxu0 0.0
        %2198 = vmatpush1.msra.mxu0 0.0
        %2199 = vmatprep.subr.mxu0 0.0
        %2200 = vmatpush1.msra.mxu0 0.0
        %2201 = vmatprep.subr.mxu0 0.0
        %2202 = vmatpush1.msra.mxu0 0.0
        %2203 = vmatprep.subr.mxu0 0.0
        %2204 = vmatpush1.msra.mxu0 0.0
        %2205 = vmatprep.subr.mxu0 0.0
        %2206 = vmatpush1.msra.mxu0 0.0
        %2207 = vmatprep.subr.mxu0 0.0
        %2208 = vmatpush1.msra.mxu0 0.0
        %2209 = vmatprep.subr.mxu0 0.0
        %2210 = vmatpush1.msra.mxu0 0.0
        %2211 = vmatprep.subr.mxu0 0.0
        %2212 = vmatpush1.msra.mxu0 0.0
        %2213 = vmatprep.subr.mxu0 0.0
        %2214 = vmatpush1.msra.mxu0 0.0
        %2215 = vmatprep.subr.mxu0 0.0
        %2216 = vmatpush1.msra.mxu0 0.0
        %2217 = vmatprep.subr.mxu0 0.0
        %2218 = vmatpush1.msra.mxu0 0.0
        %2219 = vmatprep.subr.mxu0 0.0
        %2220 = vmatpush1.msra.mxu0 0.0
        %2221 = vmatprep.subr.mxu0 0.0
        %2222 = vmatpush1.msra.mxu0 0.0
        %2223 = vmatprep.subr.mxu0 0.0
        %2224 = vmatpush1.msra.mxu0 0.0
        %2225 = vmatprep.subr.mxu0 0.0
        %2226 = vmatpush1.msra.mxu0 0.0
        %2227 = vmatprep.subr.mxu0 0.0
        %2228 = vmatpush1.msra.mxu0 0.0
        %2229 = vmatprep.subr.mxu0 0.0
        %2230 = vmatpush1.msra.mxu0 0.0
        %2231 = vmatprep.subr.mxu0 0.0
        %2232 = vmatpush1.msra.mxu0 0.0
        %2233 = vmatprep.mubr.f32.mxu0 0.0
        %2234 = vmatmul.mubr.f32.gmra.mrb[0].mxu0 %v2146
        %v2235 = vpop.f32.mrb[0].mxu0
        %v2236 = vadd.f32 0.0, %v2235
        %v2237 = vpop.f32.mrb[0].mxu0
        %2238 = vmatprep.mubr.f32.mxu0 0.0
        %2239 = vmatmul.mubr.f32.gmra.mrb[0].mxu0 %v2149
        %v2240 = vpop.f32.mrb[0].mxu0
        %v2241 = vadd.f32 0.0, %v2240
        %v2242 = vpop.f32.mrb[0].mxu0
        %2243 = vmatprep.mubr.f32.mxu0 0.0
        %2244 = vmatmul.mubr.f32.gmra.mrb[0].mxu0 %v2152
        %v2245 = vpop.f32.mrb[0].mxu0
        %v2246 = vadd.f32 0.0, %v2245
        %v2247 = vpop.f32.mrb[0].mxu0
        %2248 = vmatprep.mubr.f32.mxu0 0.0
        %2249 = vmatmul.mubr.f32.gmra.mrb[0].mxu0 %v2155
        %v2250 = vpop.f32.mrb[0].mxu0
        %v2251 = vadd.f32 0.0, %v2250
        %v2252 = vpop.f32.mrb[0].mxu0
        %2253 = vmatprep.mubr.f32.mxu0 0.0
        %2254 = vmatmul.mubr.f32.gmra.mrb[0].mxu0 %v2158
        %v2255 = vpop.f32.mrb[0].mxu0
        %v2256 = vadd.f32 0.0, %v2255
        %v2257 = vpop.f32.mrb[0].mxu0
        %2258 = vmatprep.mubr.f32.mxu0 0.0
        %2259 = vmatmul.mubr.f32.gmra.mrb[0].mxu0 %v2161
        %v2260 = vpop.f32.mrb[0].mxu0
        %v2261 = vadd.f32 0.0, %v2260
        %v2262 = vpop.f32.mrb[0].mxu0
        %2263 = vmatprep.mubr.f32.mxu0 0.0
        %2264 = vmatmul.mubr.f32.gmra.mrb[0].mxu0 %v2164
        %v2265 = vpop.f32.mrb[0].mxu0
        %v2266 = vadd.f32 0.0, %v2265
        %v2267 = vpop.f32.mrb[0].mxu0
        %2268 = vmatprep.mubr.f32.mxu0 0.0
        %2269 = vmatmul.mubr.f32.gmra.mrb[0].mxu0 %v2167
        %v2270 = vpop.f32.mrb[0].mxu0
        %v2271 = vadd.f32 0.0, %v2270
        %v2272 = vpop.f32.mrb[0].mxu0
        %2273 = vdwg.mxu0
        %v2274 = vadd.f32 %v2119, %v2236
        %v2275 = vadd.f32 %v2120, %v2241
        %v2276 = vadd.f32 %v2121, %v2246
        %v2277 = vadd.f32 %v2122, %v2251
        %v2278 = vadd.f32 %v2123, %v2256
        %v2279 = vadd.f32 %v2124, %v2261
        %v2280 = vadd.f32 %v2125, %v2266
        %v2281 = vadd.f32 %v2126, %v2271
        %v2282 = vld [vmem:[%s1032 + $0x9] sm:$0xff]
        %v2283 = vld [vmem:[%s1032 + $0x11] sm:$0xff]
        %v2284 = vld [vmem:[%s1032 + $0x19] sm:$0xff]
        %v2285 = vld [vmem:[%s1032 + $0x21] sm:$0xff]
        %v2286 = vld [vmem:[%s1032 + $0x29] sm:$0xff]
        %v2287 = vld [vmem:[%s1032 + $0x31] sm:$0xff]
        %v2288 = vld [vmem:[%s1032 + $0x39] sm:$0xff]
        %v2289 = vld [vmem:[%s1032 + $0x41] sm:$0xff]
        %s2290 = scalar_lea.vmem %s5, 56
        %v2291 = vld [vmem:[%s2290] sm:$0xff]
        %v2293 = vsel %vm467, %v2282, 0
        %v2296 = vsel %vm467, %v2283, 0
        %v2299 = vsel %vm467, %v2284, 0
        %v2302 = vsel %vm467, %v2285, 0
        %v2305 = vsel %vm467, %v2286, 0
        %v2308 = vsel %vm467, %v2287, 0
        %v2311 = vsel %vm467, %v2288, 0
        %v2314 = vsel %vm467, %v2289, 0
        %2316 = vmatprep.subr.mxu0 0.0
        %2317 = vmatpush1.msra.mxu0 %v2291
        %2318 = vmatprep.subr.mxu0 0.0
        %2319 = vmatpush1.msra.mxu0 0.0
        %2320 = vmatprep.subr.mxu0 0.0
        %2321 = vmatpush1.msra.mxu0 0.0
        %2322 = vmatprep.subr.mxu0 0.0
        %2323 = vmatpush1.msra.mxu0 0.0
        %2324 = vmatprep.subr.mxu0 0.0
        %2325 = vmatpush1.msra.mxu0 0.0
        %2326 = vmatprep.subr.mxu0 0.0
        %2327 = vmatpush1.msra.mxu0 0.0
        %2328 = vmatprep.subr.mxu0 0.0
        %2329 = vmatpush1.msra.mxu0 0.0
        %2330 = vmatprep.subr.mxu0 0.0
        %2331 = vmatpush1.msra.mxu0 0.0
        %2332 = vmatprep.subr.mxu0 0.0
        %2333 = vmatpush1.msra.mxu0 0.0
        %2334 = vmatprep.subr.mxu0 0.0
        %2335 = vmatpush1.msra.mxu0 0.0
        %2336 = vmatprep.subr.mxu0 0.0
        %2337 = vmatpush1.msra.mxu0 0.0
        %2338 = vmatprep.subr.mxu0 0.0
        %2339 = vmatpush1.msra.mxu0 0.0
        %2340 = vmatprep.subr.mxu0 0.0
        %2341 = vmatpush1.msra.mxu0 0.0
        %2342 = vmatprep.subr.mxu0 0.0
        %2343 = vmatpush1.msra.mxu0 0.0
        %2344 = vmatprep.subr.mxu0 0.0
        %2345 = vmatpush1.msra.mxu0 0.0
        %2346 = vmatprep.subr.mxu0 0.0
        %2347 = vmatpush1.msra.mxu0 0.0
        %2348 = vmatprep.subr.mxu0 0.0
        %2349 = vmatpush1.msra.mxu0 0.0
        %2350 = vmatprep.subr.mxu0 0.0
        %2351 = vmatpush1.msra.mxu0 0.0
        %2352 = vmatprep.subr.mxu0 0.0
        %2353 = vmatpush1.msra.mxu0 0.0
        %2354 = vmatprep.subr.mxu0 0.0
        %2355 = vmatpush1.msra.mxu0 0.0
        %2356 = vmatprep.subr.mxu0 0.0
        %2357 = vmatpush1.msra.mxu0 0.0
        %2358 = vmatprep.subr.mxu0 0.0
        %2359 = vmatpush1.msra.mxu0 0.0
        %2360 = vmatprep.subr.mxu0 0.0
        %2361 = vmatpush1.msra.mxu0 0.0
        %2362 = vmatprep.subr.mxu0 0.0
        %2363 = vmatpush1.msra.mxu0 0.0
        %2364 = vmatprep.subr.mxu0 0.0
        %2365 = vmatpush1.msra.mxu0 0.0
        %2366 = vmatprep.subr.mxu0 0.0
        %2367 = vmatpush1.msra.mxu0 0.0
        %2368 = vmatprep.subr.mxu0 0.0
        %2369 = vmatpush1.msra.mxu0 0.0
        %2370 = vmatprep.subr.mxu0 0.0
        %2371 = vmatpush1.msra.mxu0 0.0
        %2372 = vmatprep.subr.mxu0 0.0
        %2373 = vmatpush1.msra.mxu0 0.0
        %2374 = vmatprep.subr.mxu0 0.0
        %2375 = vmatpush1.msra.mxu0 0.0
        %2376 = vmatprep.subr.mxu0 0.0
        %2377 = vmatpush1.msra.mxu0 0.0
        %2378 = vmatprep.subr.mxu0 0.0
        %2379 = vmatpush1.msra.mxu0 0.0
        %2380 = vmatprep.mubr.f32.mxu0 0.0
        %2381 = vmatmul.mubr.f32.gmra.mrb[0].mxu0 %v2293
        %v2382 = vpop.f32.mrb[0].mxu0
        %v2383 = vadd.f32 0.0, %v2382
        %v2384 = vpop.f32.mrb[0].mxu0
        %2385 = vmatprep.mubr.f32.mxu0 0.0
        %2386 = vmatmul.mubr.f32.gmra.mrb[0].mxu0 %v2296
        %v2387 = vpop.f32.mrb[0].mxu0
        %v2388 = vadd.f32 0.0, %v2387
        %v2389 = vpop.f32.mrb[0].mxu0
        %2390 = vmatprep.mubr.f32.mxu0 0.0
        %2391 = vmatmul.mubr.f32.gmra.mrb[0].mxu0 %v2299
        %v2392 = vpop.f32.mrb[0].mxu0
        %v2393 = vadd.f32 0.0, %v2392
        %v2394 = vpop.f32.mrb[0].mxu0
        %2395 = vmatprep.mubr.f32.mxu0 0.0
        %2396 = vmatmul.mubr.f32.gmra.mrb[0].mxu0 %v2302
        %v2397 = vpop.f32.mrb[0].mxu0
        %v2398 = vadd.f32 0.0, %v2397
        %v2399 = vpop.f32.mrb[0].mxu0
        %2400 = vmatprep.mubr.f32.mxu0 0.0
        %2401 = vmatmul.mubr.f32.gmra.mrb[0].mxu0 %v2305
        %v2402 = vpop.f32.mrb[0].mxu0
        %v2403 = vadd.f32 0.0, %v2402
        %v2404 = vpop.f32.mrb[0].mxu0
        %2405 = vmatprep.mubr.f32.mxu0 0.0
        %2406 = vmatmul.mubr.f32.gmra.mrb[0].mxu0 %v2308
        %v2407 = vpop.f32.mrb[0].mxu0
        %v2408 = vadd.f32 0.0, %v2407
        %v2409 = vpop.f32.mrb[0].mxu0
        %2410 = vmatprep.mubr.f32.mxu0 0.0
        %2411 = vmatmul.mubr.f32.gmra.mrb[0].mxu0 %v2311
        %v2412 = vpop.f32.mrb[0].mxu0
        %v2413 = vadd.f32 0.0, %v2412
        %v2414 = vpop.f32.mrb[0].mxu0
        %2415 = vmatprep.mubr.f32.mxu0 0.0
        %2416 = vmatmul.mubr.f32.gmra.mrb[0].mxu0 %v2314
        %v2417 = vpop.f32.mrb[0].mxu0
        %v2418 = vadd.f32 0.0, %v2417
        %v2419 = vpop.f32.mrb[0].mxu0
        %2420 = vdwg.mxu0
        %v2421 = vadd.f32 %v2274, %v2383
        %v2422 = vadd.f32 %v2275, %v2388
        %v2423 = vadd.f32 %v2276, %v2393
        %v2424 = vadd.f32 %v2277, %v2398
        %v2425 = vadd.f32 %v2278, %v2403
        %v2426 = vadd.f32 %v2279, %v2408
        %v2427 = vadd.f32 %v2280, %v2413
        %v2428 = vadd.f32 %v2281, %v2418
        %v2429 = vld [vmem:[%s1197 + $0x9] sm:$0xff]
        %v2430 = vld [vmem:[%s1197 + $0x11] sm:$0xff]
        %v2431 = vld [vmem:[%s1197 + $0x19] sm:$0xff]
        %v2432 = vld [vmem:[%s1197 + $0x21] sm:$0xff]
        %v2433 = vld [vmem:[%s1197 + $0x29] sm:$0xff]
        %v2434 = vld [vmem:[%s1197 + $0x31] sm:$0xff]
        %v2435 = vld [vmem:[%s1197 + $0x39] sm:$0xff]
        %v2436 = vld [vmem:[%s1197 + $0x41] sm:$0xff]
        %s2437 = scalar_lea.vmem %s5, 64
        %v2438 = vld [vmem:[%s2437] sm:$0xff]
        %v2440 = vsel %vm467, %v2429, 0
        %v2443 = vsel %vm467, %v2430, 0
        %v2446 = vsel %vm467, %v2431, 0
        %v2449 = vsel %vm467, %v2432, 0
        %v2452 = vsel %vm467, %v2433, 0
        %v2455 = vsel %vm467, %v2434, 0
        %v2458 = vsel %vm467, %v2435, 0
        %v2461 = vsel %vm467, %v2436, 0
        %2463 = vmatprep.subr.mxu0 0.0
        %2464 = vmatpush1.msra.mxu0 %v2438
        %2465 = vmatprep.subr.mxu0 0.0
        %2466 = vmatpush1.msra.mxu0 0.0
        %2467 = vmatprep.subr.mxu0 0.0
        %2468 = vmatpush1.msra.mxu0 0.0
        %2469 = vmatprep.subr.mxu0 0.0
        %2470 = vmatpush1.msra.mxu0 0.0
        %2471 = vmatprep.subr.mxu0 0.0
        %2472 = vmatpush1.msra.mxu0 0.0
        %2473 = vmatprep.subr.mxu0 0.0
        %2474 = vmatpush1.msra.mxu0 0.0
        %2475 = vmatprep.subr.mxu0 0.0
        %2476 = vmatpush1.msra.mxu0 0.0
        %2477 = vmatprep.subr.mxu0 0.0
        %2478 = vmatpush1.msra.mxu0 0.0
        %2479 = vmatprep.subr.mxu0 0.0
        %2480 = vmatpush1.msra.mxu0 0.0
        %2481 = vmatprep.subr.mxu0 0.0
        %2482 = vmatpush1.msra.mxu0 0.0
        %2483 = vmatprep.subr.mxu0 0.0
        %2484 = vmatpush1.msra.mxu0 0.0
        %2485 = vmatprep.subr.mxu0 0.0
        %2486 = vmatpush1.msra.mxu0 0.0
        %2487 = vmatprep.subr.mxu0 0.0
        %2488 = vmatpush1.msra.mxu0 0.0
        %2489 = vmatprep.subr.mxu0 0.0
        %2490 = vmatpush1.msra.mxu0 0.0
        %2491 = vmatprep.subr.mxu0 0.0
        %2492 = vmatpush1.msra.mxu0 0.0
        %2493 = vmatprep.subr.mxu0 0.0
        %2494 = vmatpush1.msra.mxu0 0.0
        %2495 = vmatprep.subr.mxu0 0.0
        %2496 = vmatpush1.msra.mxu0 0.0
        %2497 = vmatprep.subr.mxu0 0.0
        %2498 = vmatpush1.msra.mxu0 0.0
        %2499 = vmatprep.subr.mxu0 0.0
        %2500 = vmatpush1.msra.mxu0 0.0
        %2501 = vmatprep.subr.mxu0 0.0
        %2502 = vmatpush1.msra.mxu0 0.0
        %2503 = vmatprep.subr.mxu0 0.0
        %2504 = vmatpush1.msra.mxu0 0.0
        %2505 = vmatprep.subr.mxu0 0.0
        %2506 = vmatpush1.msra.mxu0 0.0
        %2507 = vmatprep.subr.mxu0 0.0
        %2508 = vmatpush1.msra.mxu0 0.0
        %2509 = vmatprep.subr.mxu0 0.0
        %2510 = vmatpush1.msra.mxu0 0.0
        %2511 = vmatprep.subr.mxu0 0.0
        %2512 = vmatpush1.msra.mxu0 0.0
        %2513 = vmatprep.subr.mxu0 0.0
        %2514 = vmatpush1.msra.mxu0 0.0
        %2515 = vmatprep.subr.mxu0 0.0
        %2516 = vmatpush1.msra.mxu0 0.0
        %2517 = vmatprep.subr.mxu0 0.0
        %2518 = vmatpush1.msra.mxu0 0.0
        %2519 = vmatprep.subr.mxu0 0.0
        %2520 = vmatpush1.msra.mxu0 0.0
        %2521 = vmatprep.subr.mxu0 0.0
        %2522 = vmatpush1.msra.mxu0 0.0
        %2523 = vmatprep.subr.mxu0 0.0
        %2524 = vmatpush1.msra.mxu0 0.0
        %2525 = vmatprep.subr.mxu0 0.0
        %2526 = vmatpush1.msra.mxu0 0.0
        %2527 = vmatprep.mubr.f32.mxu0 0.0
        %2528 = vmatmul.mubr.f32.gmra.mrb[0].mxu0 %v2440
        %v2529 = vpop.f32.mrb[0].mxu0
        %v2530 = vadd.f32 0.0, %v2529
        %v2531 = vpop.f32.mrb[0].mxu0
        %2532 = vmatprep.mubr.f32.mxu0 0.0
        %2533 = vmatmul.mubr.f32.gmra.mrb[0].mxu0 %v2443
        %v2534 = vpop.f32.mrb[0].mxu0
        %v2535 = vadd.f32 0.0, %v2534
        %v2536 = vpop.f32.mrb[0].mxu0
        %2537 = vmatprep.mubr.f32.mxu0 0.0
        %2538 = vmatmul.mubr.f32.gmra.mrb[0].mxu0 %v2446
        %v2539 = vpop.f32.mrb[0].mxu0
        %v2540 = vadd.f32 0.0, %v2539
        %v2541 = vpop.f32.mrb[0].mxu0
        %2542 = vmatprep.mubr.f32.mxu0 0.0
        %2543 = vmatmul.mubr.f32.gmra.mrb[0].mxu0 %v2449
        %v2544 = vpop.f32.mrb[0].mxu0
        %v2545 = vadd.f32 0.0, %v2544
        %v2546 = vpop.f32.mrb[0].mxu0
        %2547 = vmatprep.mubr.f32.mxu0 0.0
        %2548 = vmatmul.mubr.f32.gmra.mrb[0].mxu0 %v2452
        %v2549 = vpop.f32.mrb[0].mxu0
        %v2550 = vadd.f32 0.0, %v2549
        %v2551 = vpop.f32.mrb[0].mxu0
        %2552 = vmatprep.mubr.f32.mxu0 0.0
        %2553 = vmatmul.mubr.f32.gmra.mrb[0].mxu0 %v2455
        %v2554 = vpop.f32.mrb[0].mxu0
        %v2555 = vadd.f32 0.0, %v2554
        %v2556 = vpop.f32.mrb[0].mxu0
        %2557 = vmatprep.mubr.f32.mxu0 0.0
        %2558 = vmatmul.mubr.f32.gmra.mrb[0].mxu0 %v2458
        %v2559 = vpop.f32.mrb[0].mxu0
        %v2560 = vadd.f32 0.0, %v2559
        %v2561 = vpop.f32.mrb[0].mxu0
        %2562 = vmatprep.mubr.f32.mxu0 0.0
        %2563 = vmatmul.mubr.f32.gmra.mrb[0].mxu0 %v2461
        %v2564 = vpop.f32.mrb[0].mxu0
        %v2565 = vadd.f32 0.0, %v2564
        %v2566 = vpop.f32.mrb[0].mxu0
        %2567 = vdwg.mxu0
        %v2568 = vadd.f32 %v2421, %v2530
        %v2569 = vadd.f32 %v2422, %v2535
        %v2570 = vadd.f32 %v2423, %v2540
        %v2571 = vadd.f32 %v2424, %v2545
        %v2572 = vadd.f32 %v2425, %v2550
        %v2573 = vadd.f32 %v2426, %v2555
        %v2574 = vadd.f32 %v2427, %v2560
        %v2575 = vadd.f32 %v2428, %v2565
        %vm2576 = vcmp.gt.f32.partialorder %v1833, 0.0
        %vm2577 = vcmp.gt.f32.partialorder %v1834, 0.0
        %vm2578 = vcmp.gt.f32.partialorder %v1835, 0.0
        %vm2579 = vcmp.gt.f32.partialorder %v1836, 0.0
        %vm2580 = vcmp.gt.f32.partialorder %v1837, 0.0
        %vm2581 = vcmp.gt.f32.partialorder %v1838, 0.0
        %vm2582 = vcmp.gt.f32.partialorder %v1839, 0.0
        %vm2583 = vcmp.gt.f32.partialorder %v1840, 0.0
        %v2584 = vmul.f32 %v1833, 5.0
        %v2585 = vmul.f32 %v1834, 5.0
        %v2586 = vmul.f32 %v1835, 5.0
        %v2587 = vmul.f32 %v1836, 5.0
        %v2588 = vmul.f32 %v1837, 5.0
        %v2589 = vmul.f32 %v1838, 5.0
        %v2590 = vmul.f32 %v1839, 5.0
        %v2591 = vmul.f32 %v1840, 5.0
        %v2592 = vsel %vm2576, %v1833, %v2584
        %v2593 = vsel %vm2577, %v1834, %v2585
        %v2594 = vsel %vm2578, %v1835, %v2586
        %v2595 = vsel %vm2579, %v1836, %v2587
        %v2596 = vsel %vm2580, %v1837, %v2588
        %v2597 = vsel %vm2581, %v1838, %v2589
        %v2598 = vsel %vm2582, %v1839, %v2590
        %v2599 = vsel %vm2583, %v1840, %v2591
        %v2601 = vlaneseq
        %v2602 = vshrl.u32 %v2601, 7
        %v2603 = vsub.s32 0, %v2602
        %v2604 = vrot.slane %v450, %v2603
        %v2606 = vadd.f32 %v2568, %v2604
        %v2607 = vadd.f32 %v2569, %v2604
        %v2608 = vadd.f32 %v2570, %v2604
        %v2609 = vadd.f32 %v2571, %v2604
        %v2610 = vadd.f32 %v2572, %v2604
        %v2611 = vadd.f32 %v2573, %v2604
        %v2612 = vadd.f32 %v2574, %v2604
        %v2613 = vadd.f32 %v2575, %v2604
        %v2614 = vadd.f32 %v2606, %v2592
        %v2615 = vadd.f32 %v2607, %v2593
        %v2616 = vadd.f32 %v2608, %v2594
        %v2617 = vadd.f32 %v2609, %v2595
        %v2618 = vadd.f32 %v2610, %v2596
        %v2619 = vadd.f32 %v2611, %v2597
        %v2620 = vadd.f32 %v2612, %v2598
        %v2621 = vadd.f32 %v2613, %v2599
        %vm2622 = vcmp.gt.f32.partialorder %v2614, 0.0
        %vm2623 = vcmp.gt.f32.partialorder %v2615, 0.0
        %vm2624 = vcmp.gt.f32.partialorder %v2616, 0.0
        %vm2625 = vcmp.gt.f32.partialorder %v2617, 0.0
        %vm2626 = vcmp.gt.f32.partialorder %v2618, 0.0
        %vm2627 = vcmp.gt.f32.partialorder %v2619, 0.0
        %vm2628 = vcmp.gt.f32.partialorder %v2620, 0.0
        %vm2629 = vcmp.gt.f32.partialorder %v2621, 0.0
        %v2630 = vmul.f32 %v2614, 0.2
        %v2631 = vmul.f32 %v2615, 0.2
        %v2632 = vmul.f32 %v2616, 0.2
        %v2633 = vmul.f32 %v2617, 0.2
        %v2634 = vmul.f32 %v2618, 0.2
        %v2635 = vmul.f32 %v2619, 0.2
        %v2636 = vmul.f32 %v2620, 0.2
        %v2637 = vmul.f32 %v2621, 0.2
        %v2638 = vsel %vm2622, %v2614, %v2630
        %v2639 = vsel %vm2623, %v2615, %v2631
        %v2640 = vsel %vm2624, %v2616, %v2632
        %v2641 = vsel %vm2625, %v2617, %v2633
        %v2642 = vsel %vm2626, %v2618, %v2634
        %v2643 = vsel %vm2627, %v2619, %v2635
        %v2644 = vsel %vm2628, %v2620, %v2636
        %v2645 = vsel %vm2629, %v2621, %v2637
        %2646 = vst.msk [vmem:[%s439] sm:$0xff] %vm467, %v2638
        %2647 = vst.msk [vmem:[%s439 + $0x8] sm:$0xff] %vm467, %v2639
        %2648 = vst.msk [vmem:[%s439 + $0x10] sm:$0xff] %vm467, %v2640
        %2649 = vst.msk [vmem:[%s439 + $0x18] sm:$0xff] %vm467, %v2641
        %2650 = vst.msk [vmem:[%s439 + $0x20] sm:$0xff] %vm467, %v2642
        %2651 = vst.msk [vmem:[%s439 + $0x28] sm:$0xff] %vm467, %v2643
        %2652 = vst.msk [vmem:[%s439 + $0x30] sm:$0xff] %vm467, %v2644
        %2653 = vst.msk [vmem:[%s439 + $0x38] sm:$0xff] %vm467, %v2645
        %v2654 = vsel %vm467, %v2638, 0.0
        %v2655 = vsel %vm467, %v2639, 0.0
        %v2656 = vadd.f32 %v2654, %v2655
        %v2657 = vsel %vm467, %v2640, 0.0
        %v2658 = vadd.f32 %v2656, %v2657
        %v2659 = vsel %vm467, %v2641, 0.0
        %v2660 = vadd.f32 %v2658, %v2659
        %v2661 = vsel %vm467, %v2642, 0.0
        %v2662 = vadd.f32 %v2660, %v2661
        %v2663 = vsel %vm467, %v2643, 0.0
        %v2664 = vadd.f32 %v2662, %v2663
        %v2665 = vsel %vm467, %v2644, 0.0
        %v2666 = vadd.f32 %v2664, %v2665
        %v2667 = vsel %vm467, %v2645, 0.0
        %v2668 = vadd.f32 %v2666, %v2667
        %v2669 = vrot.slane %v2668, 4
        %v2670 = vadd.f32 %v2668, %v2669
        %v2671 = vrot.slane %v2670, 2
        %v2672 = vadd.f32 %v2670, %v2671
        %v2673 = vrot.slane %v2672, 1
        %v2674 = vadd.f32 %v2672, %v2673
        %v2675 = vadd.f32 %v2674, 0.0
        %v2676 = vmul.f32 %v2638, %v2638
        %v2677 = vmul.f32 %v2639, %v2639
        %v2678 = vmul.f32 %v2640, %v2640
        %v2679 = vmul.f32 %v2641, %v2641
        %v2680 = vmul.f32 %v2642, %v2642
        %v2681 = vmul.f32 %v2643, %v2643
        %v2682 = vmul.f32 %v2644, %v2644
        %v2683 = vmul.f32 %v2645, %v2645
        %v2684 = vsel %vm467, %v2676, 0.0
        %v2685 = vsel %vm467, %v2677, 0.0
        %v2686 = vadd.f32 %v2684, %v2685
        %v2687 = vsel %vm467, %v2678, 0.0
        %v2688 = vadd.f32 %v2686, %v2687
        %v2689 = vsel %vm467, %v2679, 0.0
        %v2690 = vadd.f32 %v2688, %v2689
        %v2691 = vsel %vm467, %v2680, 0.0
        %v2692 = vadd.f32 %v2690, %v2691
        %v2693 = vsel %vm467, %v2681, 0.0
        %v2694 = vadd.f32 %v2692, %v2693
        %v2695 = vsel %vm467, %v2682, 0.0
        %v2696 = vadd.f32 %v2694, %v2695
        %v2697 = vsel %vm467, %v2683, 0.0
        %v2698 = vadd.f32 %v2696, %v2697
        %v2699 = vrot.slane %v2698, 4
        %v2700 = vadd.f32 %v2698, %v2699
        %v2701 = vrot.slane %v2700, 2
        %v2702 = vadd.f32 %v2700, %v2701
        %v2703 = vrot.slane %v2702, 1
        %v2704 = vadd.f32 %v2702, %v2703
        %v2705 = vadd.f32 %v2704, 0.0
        %v2706 = vld [vmem:[%s1032 + $0x1] sm:$0xff]
        %v2707 = vld [vmem:[%s1032 + $0x9] sm:$0xff]
        %v2708 = vld [vmem:[%s1032 + $0x11] sm:$0xff]
        %v2709 = vld [vmem:[%s1032 + $0x19] sm:$0xff]
        %v2710 = vld [vmem:[%s1032 + $0x21] sm:$0xff]
        %v2711 = vld [vmem:[%s1032 + $0x29] sm:$0xff]
        %v2712 = vld [vmem:[%s1032 + $0x31] sm:$0xff]
        %v2713 = vld [vmem:[%s1032 + $0x39] sm:$0xff]
        %v2714 = vld [vmem:[%s5] sm:$0xff]
        %v2715 = vld [vmem:[%s1197 + $0x1] sm:$0xff]
        %v2716 = vld [vmem:[%s1197 + $0x9] sm:$0xff]
        %v2717 = vld [vmem:[%s1197 + $0x11] sm:$0xff]
        %v2718 = vld [vmem:[%s1197 + $0x19] sm:$0xff]
        %v2719 = vld [vmem:[%s1197 + $0x21] sm:$0xff]
        %v2720 = vld [vmem:[%s1197 + $0x29] sm:$0xff]
        %v2721 = vld [vmem:[%s1197 + $0x31] sm:$0xff]
        %v2722 = vld [vmem:[%s1197 + $0x39] sm:$0xff]
        %v2723 = vld [vmem:[%s1271] sm:$0xff]
        %v2725 = vsel %vm467, %v2715, 0
        %v2728 = vsel %vm467, %v2716, 0
        %v2731 = vsel %vm467, %v2717, 0
        %v2734 = vsel %vm467, %v2718, 0
        %v2737 = vsel %vm467, %v2719, 0
        %v2740 = vsel %vm467, %v2720, 0
        %v2743 = vsel %vm467, %v2721, 0
        %v2746 = vsel %vm467, %v2722, 0
        %2748 = vmatprep.subr.mxu0 0.0
        %2749 = vmatpush1.msra.mxu0 %v2723
        %2750 = vmatprep.subr.mxu0 0.0
        %2751 = vmatpush1.msra.mxu0 0.0
        %2752 = vmatprep.subr.mxu0 0.0
        %2753 = vmatpush1.msra.mxu0 0.0
        %2754 = vmatprep.subr.mxu0 0.0
        %2755 = vmatpush1.msra.mxu0 0.0
        %2756 = vmatprep.subr.mxu0 0.0
        %2757 = vmatpush1.msra.mxu0 0.0
        %2758 = vmatprep.subr.mxu0 0.0
        %2759 = vmatpush1.msra.mxu0 0.0
        %2760 = vmatprep.subr.mxu0 0.0
        %2761 = vmatpush1.msra.mxu0 0.0
        %2762 = vmatprep.subr.mxu0 0.0
        %2763 = vmatpush1.msra.mxu0 0.0
        %2764 = vmatprep.subr.mxu0 0.0
        %2765 = vmatpush1.msra.mxu0 0.0
        %2766 = vmatprep.subr.mxu0 0.0
        %2767 = vmatpush1.msra.mxu0 0.0
        %2768 = vmatprep.subr.mxu0 0.0
        %2769 = vmatpush1.msra.mxu0 0.0
        %2770 = vmatprep.subr.mxu0 0.0
        %2771 = vmatpush1.msra.mxu0 0.0
        %2772 = vmatprep.subr.mxu0 0.0
        %2773 = vmatpush1.msra.mxu0 0.0
        %2774 = vmatprep.subr.mxu0 0.0
        %2775 = vmatpush1.msra.mxu0 0.0
        %2776 = vmatprep.subr.mxu0 0.0
        %2777 = vmatpush1.msra.mxu0 0.0
        %2778 = vmatprep.subr.mxu0 0.0
        %2779 = vmatpush1.msra.mxu0 0.0
        %2780 = vmatprep.subr.mxu0 0.0
        %2781 = vmatpush1.msra.mxu0 0.0
        %2782 = vmatprep.subr.mxu0 0.0
        %2783 = vmatpush1.msra.mxu0 0.0
        %2784 = vmatprep.subr.mxu0 0.0
        %2785 = vmatpush1.msra.mxu0 0.0
        %2786 = vmatprep.subr.mxu0 0.0
        %2787 = vmatpush1.msra.mxu0 0.0
        %2788 = vmatprep.subr.mxu0 0.0
        %2789 = vmatpush1.msra.mxu0 0.0
        %2790 = vmatprep.subr.mxu0 0.0
        %2791 = vmatpush1.msra.mxu0 0.0
        %2792 = vmatprep.subr.mxu0 0.0
        %2793 = vmatpush1.msra.mxu0 0.0
        %2794 = vmatprep.subr.mxu0 0.0
        %2795 = vmatpush1.msra.mxu0 0.0
        %2796 = vmatprep.subr.mxu0 0.0
        %2797 = vmatpush1.msra.mxu0 0.0
        %2798 = vmatprep.subr.mxu0 0.0
        %2799 = vmatpush1.msra.mxu0 0.0
        %2800 = vmatprep.subr.mxu0 0.0
        %2801 = vmatpush1.msra.mxu0 0.0
        %2802 = vmatprep.subr.mxu0 0.0
        %2803 = vmatpush1.msra.mxu0 0.0
        %2804 = vmatprep.subr.mxu0 0.0
        %2805 = vmatpush1.msra.mxu0 0.0
        %2806 = vmatprep.subr.mxu0 0.0
        %2807 = vmatpush1.msra.mxu0 0.0
        %2808 = vmatprep.subr.mxu0 0.0
        %2809 = vmatpush1.msra.mxu0 0.0
        %2810 = vmatprep.subr.mxu0 0.0
        %2811 = vmatpush1.msra.mxu0 0.0
        %2812 = vmatprep.mubr.f32.mxu0 0.0
        %2813 = vmatmul.mubr.f32.gmra.mrb[0].mxu0 %v2725
        %v2814 = vpop.f32.mrb[0].mxu0
        %v2815 = vadd.f32 0.0, %v2814
        %v2816 = vpop.f32.mrb[0].mxu0
        %2817 = vmatprep.mubr.f32.mxu0 0.0
        %2818 = vmatmul.mubr.f32.gmra.mrb[0].mxu0 %v2728
        %v2819 = vpop.f32.mrb[0].mxu0
        %v2820 = vadd.f32 0.0, %v2819
        %v2821 = vpop.f32.mrb[0].mxu0
        %2822 = vmatprep.mubr.f32.mxu0 0.0
        %2823 = vmatmul.mubr.f32.gmra.mrb[0].mxu0 %v2731
        %v2824 = vpop.f32.mrb[0].mxu0
        %v2825 = vadd.f32 0.0, %v2824
        %v2826 = vpop.f32.mrb[0].mxu0
        %2827 = vmatprep.mubr.f32.mxu0 0.0
        %2828 = vmatmul.mubr.f32.gmra.mrb[0].mxu0 %v2734
        %v2829 = vpop.f32.mrb[0].mxu0
        %v2830 = vadd.f32 0.0, %v2829
        %v2831 = vpop.f32.mrb[0].mxu0
        %2832 = vmatprep.mubr.f32.mxu0 0.0
        %2833 = vmatmul.mubr.f32.gmra.mrb[0].mxu0 %v2737
        %v2834 = vpop.f32.mrb[0].mxu0
        %v2835 = vadd.f32 0.0, %v2834
        %v2836 = vpop.f32.mrb[0].mxu0
        %2837 = vmatprep.mubr.f32.mxu0 0.0
        %2838 = vmatmul.mubr.f32.gmra.mrb[0].mxu0 %v2740
        %v2839 = vpop.f32.mrb[0].mxu0
        %v2840 = vadd.f32 0.0, %v2839
        %v2841 = vpop.f32.mrb[0].mxu0
        %2842 = vmatprep.mubr.f32.mxu0 0.0
        %2843 = vmatmul.mubr.f32.gmra.mrb[0].mxu0 %v2743
        %v2844 = vpop.f32.mrb[0].mxu0
        %v2845 = vadd.f32 0.0, %v2844
        %v2846 = vpop.f32.mrb[0].mxu0
        %2847 = vmatprep.mubr.f32.mxu0 0.0
        %2848 = vmatmul.mubr.f32.gmra.mrb[0].mxu0 %v2746
        %v2849 = vpop.f32.mrb[0].mxu0
        %v2850 = vadd.f32 0.0, %v2849
        %v2851 = vpop.f32.mrb[0].mxu0
        %2852 = vdwg.mxu0
        %v2854 = vsel %vm467, %v2706, 0
        %v2857 = vsel %vm467, %v2707, 0
        %v2860 = vsel %vm467, %v2708, 0
        %v2863 = vsel %vm467, %v2709, 0
        %v2866 = vsel %vm467, %v2710, 0
        %v2869 = vsel %vm467, %v2711, 0
        %v2872 = vsel %vm467, %v2712, 0
        %v2875 = vsel %vm467, %v2713, 0
        %2877 = vmatprep.subr.mxu0 0.0
        %2878 = vmatpush1.msra.mxu0 %v2714
        %2879 = vmatprep.subr.mxu0 0.0
        %2880 = vmatpush1.msra.mxu0 0.0
        %2881 = vmatprep.subr.mxu0 0.0
        %2882 = vmatpush1.msra.mxu0 0.0
        %2883 = vmatprep.subr.mxu0 0.0
        %2884 = vmatpush1.msra.mxu0 0.0
        %2885 = vmatprep.subr.mxu0 0.0
        %2886 = vmatpush1.msra.mxu0 0.0
        %2887 = vmatprep.subr.mxu0 0.0
        %2888 = vmatpush1.msra.mxu0 0.0
        %2889 = vmatprep.subr.mxu0 0.0
        %2890 = vmatpush1.msra.mxu0 0.0
        %2891 = vmatprep.subr.mxu0 0.0
        %2892 = vmatpush1.msra.mxu0 0.0
        %2893 = vmatprep.subr.mxu0 0.0
        %2894 = vmatpush1.msra.mxu0 0.0
        %2895 = vmatprep.subr.mxu0 0.0
        %2896 = vmatpush1.msra.mxu0 0.0
        %2897 = vmatprep.subr.mxu0 0.0
        %2898 = vmatpush1.msra.mxu0 0.0
        %2899 = vmatprep.subr.mxu0 0.0
        %2900 = vmatpush1.msra.mxu0 0.0
        %2901 = vmatprep.subr.mxu0 0.0
        %2902 = vmatpush1.msra.mxu0 0.0
        %2903 = vmatprep.subr.mxu0 0.0
        %2904 = vmatpush1.msra.mxu0 0.0
        %2905 = vmatprep.subr.mxu0 0.0
        %2906 = vmatpush1.msra.mxu0 0.0
        %2907 = vmatprep.subr.mxu0 0.0
        %2908 = vmatpush1.msra.mxu0 0.0
        %2909 = vmatprep.subr.mxu0 0.0
        %2910 = vmatpush1.msra.mxu0 0.0
        %2911 = vmatprep.subr.mxu0 0.0
        %2912 = vmatpush1.msra.mxu0 0.0
        %2913 = vmatprep.subr.mxu0 0.0
        %2914 = vmatpush1.msra.mxu0 0.0
        %2915 = vmatprep.subr.mxu0 0.0
        %2916 = vmatpush1.msra.mxu0 0.0
        %2917 = vmatprep.subr.mxu0 0.0
        %2918 = vmatpush1.msra.mxu0 0.0
        %2919 = vmatprep.subr.mxu0 0.0
        %2920 = vmatpush1.msra.mxu0 0.0
        %2921 = vmatprep.subr.mxu0 0.0
        %2922 = vmatpush1.msra.mxu0 0.0
        %2923 = vmatprep.subr.mxu0 0.0
        %2924 = vmatpush1.msra.mxu0 0.0
        %2925 = vmatprep.subr.mxu0 0.0
        %2926 = vmatpush1.msra.mxu0 0.0
        %2927 = vmatprep.subr.mxu0 0.0
        %2928 = vmatpush1.msra.mxu0 0.0
        %2929 = vmatprep.subr.mxu0 0.0
        %2930 = vmatpush1.msra.mxu0 0.0
        %2931 = vmatprep.subr.mxu0 0.0
        %2932 = vmatpush1.msra.mxu0 0.0
        %2933 = vmatprep.subr.mxu0 0.0
        %2934 = vmatpush1.msra.mxu0 0.0
        %2935 = vmatprep.subr.mxu0 0.0
        %2936 = vmatpush1.msra.mxu0 0.0
        %2937 = vmatprep.subr.mxu0 0.0
        %2938 = vmatpush1.msra.mxu0 0.0
        %2939 = vmatprep.subr.mxu0 0.0
        %2940 = vmatpush1.msra.mxu0 0.0
        %2941 = vmatprep.mubr.f32.mxu0 0.0
        %2942 = vmatmul.mubr.f32.gmra.mrb[0].mxu0 %v2854
        %v2943 = vpop.f32.mrb[0].mxu0
        %v2944 = vadd.f32 %v2815, %v2943
        %v2945 = vpop.f32.mrb[0].mxu0
        %2946 = vmatprep.mubr.f32.mxu0 0.0
        %2947 = vmatmul.mubr.f32.gmra.mrb[0].mxu0 %v2857
        %v2948 = vpop.f32.mrb[0].mxu0
        %v2949 = vadd.f32 %v2820, %v2948
        %v2950 = vpop.f32.mrb[0].mxu0
        %2951 = vmatprep.mubr.f32.mxu0 0.0
        %2952 = vmatmul.mubr.f32.gmra.mrb[0].mxu0 %v2860
        %v2953 = vpop.f32.mrb[0].mxu0
        %v2954 = vadd.f32 %v2825, %v2953
        %v2955 = vpop.f32.mrb[0].mxu0
        %2956 = vmatprep.mubr.f32.mxu0 0.0
        %2957 = vmatmul.mubr.f32.gmra.mrb[0].mxu0 %v2863
        %v2958 = vpop.f32.mrb[0].mxu0
        %v2959 = vadd.f32 %v2830, %v2958
        %v2960 = vpop.f32.mrb[0].mxu0
        %2961 = vmatprep.mubr.f32.mxu0 0.0
        %2962 = vmatmul.mubr.f32.gmra.mrb[0].mxu0 %v2866
        %v2963 = vpop.f32.mrb[0].mxu0
        %v2964 = vadd.f32 %v2835, %v2963
        %v2965 = vpop.f32.mrb[0].mxu0
        %2966 = vmatprep.mubr.f32.mxu0 0.0
        %2967 = vmatmul.mubr.f32.gmra.mrb[0].mxu0 %v2869
        %v2968 = vpop.f32.mrb[0].mxu0
        %v2969 = vadd.f32 %v2840, %v2968
        %v2970 = vpop.f32.mrb[0].mxu0
        %2971 = vmatprep.mubr.f32.mxu0 0.0
        %2972 = vmatmul.mubr.f32.gmra.mrb[0].mxu0 %v2872
        %v2973 = vpop.f32.mrb[0].mxu0
        %v2974 = vadd.f32 %v2845, %v2973
        %v2975 = vpop.f32.mrb[0].mxu0
        %2976 = vmatprep.mubr.f32.mxu0 0.0
        %2977 = vmatmul.mubr.f32.gmra.mrb[0].mxu0 %v2875
        %v2978 = vpop.f32.mrb[0].mxu0
        %v2979 = vadd.f32 %v2850, %v2978
        %v2980 = vpop.f32.mrb[0].mxu0
        %2981 = vdwg.mxu0
        %v2982 = vld [vmem:[%s1032 + $0x2] sm:$0xff]
        %v2983 = vld [vmem:[%s1032 + $0xa] sm:$0xff]
        %v2984 = vld [vmem:[%s1032 + $0x12] sm:$0xff]
        %v2985 = vld [vmem:[%s1032 + $0x1a] sm:$0xff]
        %v2986 = vld [vmem:[%s1032 + $0x22] sm:$0xff]
        %v2987 = vld [vmem:[%s1032 + $0x2a] sm:$0xff]
        %v2988 = vld [vmem:[%s1032 + $0x32] sm:$0xff]
        %v2989 = vld [vmem:[%s1032 + $0x3a] sm:$0xff]
        %2991 = vset.pattern.permute.xlu0 0
        %2992 = vperm.xlu0 %2991, %v459
        %v2993 = vpop.permute.xlu0 %2992
        %2996 = vset.pattern.permute.xlu0 0
        %2997 = vperm.xlu0 %2996, %v460
        %v2998 = vpop.permute.xlu0 %2997
        %3001 = vset.pattern.permute.xlu0 0
        %3002 = vperm.xlu0 %3001, %v461
        %v3003 = vpop.permute.xlu0 %3002
        %3006 = vset.pattern.permute.xlu0 0
        %3007 = vperm.xlu0 %3006, %v462
        %v3008 = vpop.permute.xlu0 %3007
        %3011 = vset.pattern.permute.xlu0 0
        %3012 = vperm.xlu0 %3011, %v463
        %v3013 = vpop.permute.xlu0 %3012
        %3016 = vset.pattern.permute.xlu0 0
        %3017 = vperm.xlu0 %3016, %v464
        %v3018 = vpop.permute.xlu0 %3017
        %3021 = vset.pattern.permute.xlu0 0
        %3022 = vperm.xlu0 %3021, %v465
        %v3023 = vpop.permute.xlu0 %3022
        %3026 = vset.pattern.permute.xlu0 0
        %3027 = vperm.xlu0 %3026, %v466
        %v3028 = vpop.permute.xlu0 %3027
        %v3030 = vmul.f32 %v2982, %v2993
        %v3031 = vmul.f32 %v2983, %v2998
        %v3032 = vmul.f32 %v2984, %v3003
        %v3033 = vmul.f32 %v2985, %v3008
        %v3034 = vmul.f32 %v2986, %v3013
        %v3035 = vmul.f32 %v2987, %v3018
        %v3036 = vmul.f32 %v2988, %v3023
        %v3037 = vmul.f32 %v2989, %v3028
        %v3038 = vld [vmem:[%s1539] sm:$0xff]
        %v3040 = vsel %vm467, %v3030, 0
        %v3043 = vsel %vm467, %v3031, 0
        %v3046 = vsel %vm467, %v3032, 0
        %v3049 = vsel %vm467, %v3033, 0
        %v3052 = vsel %vm467, %v3034, 0
        %v3055 = vsel %vm467, %v3035, 0
        %v3058 = vsel %vm467, %v3036, 0
        %v3061 = vsel %vm467, %v3037, 0
        %3063 = vmatprep.subr.mxu0 0.0
        %3064 = vmatpush1.msra.mxu0 %v3038
        %3065 = vmatprep.subr.mxu0 0.0
        %3066 = vmatpush1.msra.mxu0 0.0
        %3067 = vmatprep.subr.mxu0 0.0
        %3068 = vmatpush1.msra.mxu0 0.0
        %3069 = vmatprep.subr.mxu0 0.0
        %3070 = vmatpush1.msra.mxu0 0.0
        %3071 = vmatprep.subr.mxu0 0.0
        %3072 = vmatpush1.msra.mxu0 0.0
        %3073 = vmatprep.subr.mxu0 0.0
        %3074 = vmatpush1.msra.mxu0 0.0
        %3075 = vmatprep.subr.mxu0 0.0
        %3076 = vmatpush1.msra.mxu0 0.0
        %3077 = vmatprep.subr.mxu0 0.0
        %3078 = vmatpush1.msra.mxu0 0.0
        %3079 = vmatprep.subr.mxu0 0.0
        %3080 = vmatpush1.msra.mxu0 0.0
        %3081 = vmatprep.subr.mxu0 0.0
        %3082 = vmatpush1.msra.mxu0 0.0
        %3083 = vmatprep.subr.mxu0 0.0
        %3084 = vmatpush1.msra.mxu0 0.0
        %3085 = vmatprep.subr.mxu0 0.0
        %3086 = vmatpush1.msra.mxu0 0.0
        %3087 = vmatprep.subr.mxu0 0.0
        %3088 = vmatpush1.msra.mxu0 0.0
        %3089 = vmatprep.subr.mxu0 0.0
        %3090 = vmatpush1.msra.mxu0 0.0
        %3091 = vmatprep.subr.mxu0 0.0
        %3092 = vmatpush1.msra.mxu0 0.0
        %3093 = vmatprep.subr.mxu0 0.0
        %3094 = vmatpush1.msra.mxu0 0.0
        %3095 = vmatprep.subr.mxu0 0.0
        %3096 = vmatpush1.msra.mxu0 0.0
        %3097 = vmatprep.subr.mxu0 0.0
        %3098 = vmatpush1.msra.mxu0 0.0
        %3099 = vmatprep.subr.mxu0 0.0
        %3100 = vmatpush1.msra.mxu0 0.0
        %3101 = vmatprep.subr.mxu0 0.0
        %3102 = vmatpush1.msra.mxu0 0.0
        %3103 = vmatprep.subr.mxu0 0.0
        %3104 = vmatpush1.msra.mxu0 0.0
        %3105 = vmatprep.subr.mxu0 0.0
        %3106 = vmatpush1.msra.mxu0 0.0
        %3107 = vmatprep.subr.mxu0 0.0
        %3108 = vmatpush1.msra.mxu0 0.0
        %3109 = vmatprep.subr.mxu0 0.0
        %3110 = vmatpush1.msra.mxu0 0.0
        %3111 = vmatprep.subr.mxu0 0.0
        %3112 = vmatpush1.msra.mxu0 0.0
        %3113 = vmatprep.subr.mxu0 0.0
        %3114 = vmatpush1.msra.mxu0 0.0
        %3115 = vmatprep.subr.mxu0 0.0
        %3116 = vmatpush1.msra.mxu0 0.0
        %3117 = vmatprep.subr.mxu0 0.0
        %3118 = vmatpush1.msra.mxu0 0.0
        %3119 = vmatprep.subr.mxu0 0.0
        %3120 = vmatpush1.msra.mxu0 0.0
        %3121 = vmatprep.subr.mxu0 0.0
        %3122 = vmatpush1.msra.mxu0 0.0
        %3123 = vmatprep.subr.mxu0 0.0
        %3124 = vmatpush1.msra.mxu0 0.0
        %3125 = vmatprep.subr.mxu0 0.0
        %3126 = vmatpush1.msra.mxu0 0.0
        %3127 = vmatprep.mubr.f32.mxu0 0.0
        %3128 = vmatmul.mubr.f32.gmra.mrb[0].mxu0 %v3040
        %v3129 = vpop.f32.mrb[0].mxu0
        %v3130 = vadd.f32 0.0, %v3129
        %v3131 = vpop.f32.mrb[0].mxu0
        %3132 = vmatprep.mubr.f32.mxu0 0.0
        %3133 = vmatmul.mubr.f32.gmra.mrb[0].mxu0 %v3043
        %v3134 = vpop.f32.mrb[0].mxu0
        %v3135 = vadd.f32 0.0, %v3134
        %v3136 = vpop.f32.mrb[0].mxu0
        %3137 = vmatprep.mubr.f32.mxu0 0.0
        %3138 = vmatmul.mubr.f32.gmra.mrb[0].mxu0 %v3046
        %v3139 = vpop.f32.mrb[0].mxu0
        %v3140 = vadd.f32 0.0, %v3139
        %v3141 = vpop.f32.mrb[0].mxu0
        %3142 = vmatprep.mubr.f32.mxu0 0.0
        %3143 = vmatmul.mubr.f32.gmra.mrb[0].mxu0 %v3049
        %v3144 = vpop.f32.mrb[0].mxu0
        %v3145 = vadd.f32 0.0, %v3144
        %v3146 = vpop.f32.mrb[0].mxu0
        %3147 = vmatprep.mubr.f32.mxu0 0.0
        %3148 = vmatmul.mubr.f32.gmra.mrb[0].mxu0 %v3052
        %v3149 = vpop.f32.mrb[0].mxu0
        %v3150 = vadd.f32 0.0, %v3149
        %v3151 = vpop.f32.mrb[0].mxu0
        %3152 = vmatprep.mubr.f32.mxu0 0.0
        %3153 = vmatmul.mubr.f32.gmra.mrb[0].mxu0 %v3055
        %v3154 = vpop.f32.mrb[0].mxu0
        %v3155 = vadd.f32 0.0, %v3154
        %v3156 = vpop.f32.mrb[0].mxu0
        %3157 = vmatprep.mubr.f32.mxu0 0.0
        %3158 = vmatmul.mubr.f32.gmra.mrb[0].mxu0 %v3058
        %v3159 = vpop.f32.mrb[0].mxu0
        %v3160 = vadd.f32 0.0, %v3159
        %v3161 = vpop.f32.mrb[0].mxu0
        %3162 = vmatprep.mubr.f32.mxu0 0.0
        %3163 = vmatmul.mubr.f32.gmra.mrb[0].mxu0 %v3061
        %v3164 = vpop.f32.mrb[0].mxu0
        %v3165 = vadd.f32 0.0, %v3164
        %v3166 = vpop.f32.mrb[0].mxu0
        %3167 = vdwg.mxu0
        %v3168 = vadd.f32 %v2944, %v3130
        %v3169 = vadd.f32 %v2949, %v3135
        %v3170 = vadd.f32 %v2954, %v3140
        %v3171 = vadd.f32 %v2959, %v3145
        %v3172 = vadd.f32 %v2964, %v3150
        %v3173 = vadd.f32 %v2969, %v3155
        %v3174 = vadd.f32 %v2974, %v3160
        %v3175 = vadd.f32 %v2979, %v3165
        %v3176 = vld [vmem:[#allocation2 + $0x9] sm:$0xff]
        %v3177 = vld [vmem:[#allocation2 + $0x11] sm:$0xff]
        %v3178 = vld [vmem:[#allocation2 + $0x19] sm:$0xff]
        %v3179 = vld [vmem:[#allocation2 + $0x21] sm:$0xff]
        %v3180 = vld [vmem:[#allocation2 + $0x29] sm:$0xff]
        %v3181 = vld [vmem:[#allocation2 + $0x31] sm:$0xff]
        %v3182 = vld [vmem:[#allocation2 + $0x39] sm:$0xff]
        %v3183 = vld [vmem:[#allocation2 + $0x41] sm:$0xff]
        %v3184 = vld [vmem:[%s1694] sm:$0xff]
        %v3186 = vsel %vm467, %v3176, 0
        %v3189 = vsel %vm467, %v3177, 0
        %v3192 = vsel %vm467, %v3178, 0
        %v3195 = vsel %vm467, %v3179, 0
        %v3198 = vsel %vm467, %v3180, 0
        %v3201 = vsel %vm467, %v3181, 0
        %v3204 = vsel %vm467, %v3182, 0
        %v3207 = vsel %vm467, %v3183, 0
        %3209 = vmatprep.subr.mxu0 0.0
        %3210 = vmatpush1.msra.mxu0 %v3184
        %3211 = vmatprep.subr.mxu0 0.0
        %3212 = vmatpush1.msra.mxu0 0.0
        %3213 = vmatprep.subr.mxu0 0.0
        %3214 = vmatpush1.msra.mxu0 0.0
        %3215 = vmatprep.subr.mxu0 0.0
        %3216 = vmatpush1.msra.mxu0 0.0
        %3217 = vmatprep.subr.mxu0 0.0
        %3218 = vmatpush1.msra.mxu0 0.0
        %3219 = vmatprep.subr.mxu0 0.0
        %3220 = vmatpush1.msra.mxu0 0.0
        %3221 = vmatprep.subr.mxu0 0.0
        %3222 = vmatpush1.msra.mxu0 0.0
        %3223 = vmatprep.subr.mxu0 0.0
        %3224 = vmatpush1.msra.mxu0 0.0
        %3225 = vmatprep.subr.mxu0 0.0
        %3226 = vmatpush1.msra.mxu0 0.0
        %3227 = vmatprep.subr.mxu0 0.0
        %3228 = vmatpush1.msra.mxu0 0.0
        %3229 = vmatprep.subr.mxu0 0.0
        %3230 = vmatpush1.msra.mxu0 0.0
        %3231 = vmatprep.subr.mxu0 0.0
        %3232 = vmatpush1.msra.mxu0 0.0
        %3233 = vmatprep.subr.mxu0 0.0
        %3234 = vmatpush1.msra.mxu0 0.0
        %3235 = vmatprep.subr.mxu0 0.0
        %3236 = vmatpush1.msra.mxu0 0.0
        %3237 = vmatprep.subr.mxu0 0.0
        %3238 = vmatpush1.msra.mxu0 0.0
        %3239 = vmatprep.subr.mxu0 0.0
        %3240 = vmatpush1.msra.mxu0 0.0
        %3241 = vmatprep.subr.mxu0 0.0
        %3242 = vmatpush1.msra.mxu0 0.0
        %3243 = vmatprep.subr.mxu0 0.0
        %3244 = vmatpush1.msra.mxu0 0.0
        %3245 = vmatprep.subr.mxu0 0.0
        %3246 = vmatpush1.msra.mxu0 0.0
        %3247 = vmatprep.subr.mxu0 0.0
        %3248 = vmatpush1.msra.mxu0 0.0
        %3249 = vmatprep.subr.mxu0 0.0
        %3250 = vmatpush1.msra.mxu0 0.0
        %3251 = vmatprep.subr.mxu0 0.0
        %3252 = vmatpush1.msra.mxu0 0.0
        %3253 = vmatprep.subr.mxu0 0.0
        %3254 = vmatpush1.msra.mxu0 0.0
        %3255 = vmatprep.subr.mxu0 0.0
        %3256 = vmatpush1.msra.mxu0 0.0
        %3257 = vmatprep.subr.mxu0 0.0
        %3258 = vmatpush1.msra.mxu0 0.0
        %3259 = vmatprep.subr.mxu0 0.0
        %3260 = vmatpush1.msra.mxu0 0.0
        %3261 = vmatprep.subr.mxu0 0.0
        %3262 = vmatpush1.msra.mxu0 0.0
        %3263 = vmatprep.subr.mxu0 0.0
        %3264 = vmatpush1.msra.mxu0 0.0
        %3265 = vmatprep.subr.mxu0 0.0
        %3266 = vmatpush1.msra.mxu0 0.0
        %3267 = vmatprep.subr.mxu0 0.0
        %3268 = vmatpush1.msra.mxu0 0.0
        %3269 = vmatprep.subr.mxu0 0.0
        %3270 = vmatpush1.msra.mxu0 0.0
        %3271 = vmatprep.subr.mxu0 0.0
        %3272 = vmatpush1.msra.mxu0 0.0
        %3273 = vmatprep.mubr.f32.mxu0 0.0
        %3274 = vmatmul.mubr.f32.gmra.mrb[0].mxu0 %v3186
        %v3275 = vpop.f32.mrb[0].mxu0
        %v3276 = vadd.f32 0.0, %v3275
        %v3277 = vpop.f32.mrb[0].mxu0
        %3278 = vmatprep.mubr.f32.mxu0 0.0
        %3279 = vmatmul.mubr.f32.gmra.mrb[0].mxu0 %v3189
        %v3280 = vpop.f32.mrb[0].mxu0
        %v3281 = vadd.f32 0.0, %v3280
        %v3282 = vpop.f32.mrb[0].mxu0
        %3283 = vmatprep.mubr.f32.mxu0 0.0
        %3284 = vmatmul.mubr.f32.gmra.mrb[0].mxu0 %v3192
        %v3285 = vpop.f32.mrb[0].mxu0
        %v3286 = vadd.f32 0.0, %v3285
        %v3287 = vpop.f32.mrb[0].mxu0
        %3288 = vmatprep.mubr.f32.mxu0 0.0
        %3289 = vmatmul.mubr.f32.gmra.mrb[0].mxu0 %v3195
        %v3290 = vpop.f32.mrb[0].mxu0
        %v3291 = vadd.f32 0.0, %v3290
        %v3292 = vpop.f32.mrb[0].mxu0
        %3293 = vmatprep.mubr.f32.mxu0 0.0
        %3294 = vmatmul.mubr.f32.gmra.mrb[0].mxu0 %v3198
        %v3295 = vpop.f32.mrb[0].mxu0
        %v3296 = vadd.f32 0.0, %v3295
        %v3297 = vpop.f32.mrb[0].mxu0
        %3298 = vmatprep.mubr.f32.mxu0 0.0
        %3299 = vmatmul.mubr.f32.gmra.mrb[0].mxu0 %v3201
        %v3300 = vpop.f32.mrb[0].mxu0
        %v3301 = vadd.f32 0.0, %v3300
        %v3302 = vpop.f32.mrb[0].mxu0
        %3303 = vmatprep.mubr.f32.mxu0 0.0
        %3304 = vmatmul.mubr.f32.gmra.mrb[0].mxu0 %v3204
        %v3305 = vpop.f32.mrb[0].mxu0
        %v3306 = vadd.f32 0.0, %v3305
        %v3307 = vpop.f32.mrb[0].mxu0
        %3308 = vmatprep.mubr.f32.mxu0 0.0
        %3309 = vmatmul.mubr.f32.gmra.mrb[0].mxu0 %v3207
        %v3310 = vpop.f32.mrb[0].mxu0
        %v3311 = vadd.f32 0.0, %v3310
        %v3312 = vpop.f32.mrb[0].mxu0
        %3313 = vdwg.mxu0
        %v3314 = vadd.f32 %v3168, %v3276
        %v3315 = vadd.f32 %v3169, %v3281
        %v3316 = vadd.f32 %v3170, %v3286
        %v3317 = vadd.f32 %v3171, %v3291
        %v3318 = vadd.f32 %v3172, %v3296
        %v3319 = vadd.f32 %v3173, %v3301
        %v3320 = vadd.f32 %v3174, %v3306
        %v3321 = vadd.f32 %v3175, %v3311
        %v3322 = vld [vmem:[%s867 + $0x9] sm:$0xff]
        %v3323 = vld [vmem:[%s867 + $0x11] sm:$0xff]
        %v3324 = vld [vmem:[%s867 + $0x19] sm:$0xff]
        %v3325 = vld [vmem:[%s867 + $0x21] sm:$0xff]
        %v3326 = vld [vmem:[%s867 + $0x29] sm:$0xff]
        %v3327 = vld [vmem:[%s867 + $0x31] sm:$0xff]
        %v3328 = vld [vmem:[%s867 + $0x39] sm:$0xff]
        %v3329 = vld [vmem:[%s867 + $0x41] sm:$0xff]
        %v3330 = vld [vmem:[%s1841] sm:$0xff]
        %v3332 = vsel %vm467, %v3322, 0
        %v3335 = vsel %vm467, %v3323, 0
        %v3338 = vsel %vm467, %v3324, 0
        %v3341 = vsel %vm467, %v3325, 0
        %v3344 = vsel %vm467, %v3326, 0
        %v3347 = vsel %vm467, %v3327, 0
        %v3350 = vsel %vm467, %v3328, 0
        %v3353 = vsel %vm467, %v3329, 0
        %3355 = vmatprep.subr.mxu0 0.0
        %3356 = vmatpush1.msra.mxu0 %v3330
        %3357 = vmatprep.subr.mxu0 0.0
        %3358 = vmatpush1.msra.mxu0 0.0
        %3359 = vmatprep.subr.mxu0 0.0
        %3360 = vmatpush1.msra.mxu0 0.0
        %3361 = vmatprep.subr.mxu0 0.0
        %3362 = vmatpush1.msra.mxu0 0.0
        %3363 = vmatprep.subr.mxu0 0.0
        %3364 = vmatpush1.msra.mxu0 0.0
        %3365 = vmatprep.subr.mxu0 0.0
        %3366 = vmatpush1.msra.mxu0 0.0
        %3367 = vmatprep.subr.mxu0 0.0
        %3368 = vmatpush1.msra.mxu0 0.0
        %3369 = vmatprep.subr.mxu0 0.0
        %3370 = vmatpush1.msra.mxu0 0.0
        %3371 = vmatprep.subr.mxu0 0.0
        %3372 = vmatpush1.msra.mxu0 0.0
        %3373 = vmatprep.subr.mxu0 0.0
        %3374 = vmatpush1.msra.mxu0 0.0
        %3375 = vmatprep.subr.mxu0 0.0
        %3376 = vmatpush1.msra.mxu0 0.0
        %3377 = vmatprep.subr.mxu0 0.0
        %3378 = vmatpush1.msra.mxu0 0.0
        %3379 = vmatprep.subr.mxu0 0.0
        %3380 = vmatpush1.msra.mxu0 0.0
        %3381 = vmatprep.subr.mxu0 0.0
        %3382 = vmatpush1.msra.mxu0 0.0
        %3383 = vmatprep.subr.mxu0 0.0
        %3384 = vmatpush1.msra.mxu0 0.0
        %3385 = vmatprep.subr.mxu0 0.0
        %3386 = vmatpush1.msra.mxu0 0.0
        %3387 = vmatprep.subr.mxu0 0.0
        %3388 = vmatpush1.msra.mxu0 0.0
        %3389 = vmatprep.subr.mxu0 0.0
        %3390 = vmatpush1.msra.mxu0 0.0
        %3391 = vmatprep.subr.mxu0 0.0
        %3392 = vmatpush1.msra.mxu0 0.0
        %3393 = vmatprep.subr.mxu0 0.0
        %3394 = vmatpush1.msra.mxu0 0.0
        %3395 = vmatprep.subr.mxu0 0.0
        %3396 = vmatpush1.msra.mxu0 0.0
        %3397 = vmatprep.subr.mxu0 0.0
        %3398 = vmatpush1.msra.mxu0 0.0
        %3399 = vmatprep.subr.mxu0 0.0
        %3400 = vmatpush1.msra.mxu0 0.0
        %3401 = vmatprep.subr.mxu0 0.0
        %3402 = vmatpush1.msra.mxu0 0.0
        %3403 = vmatprep.subr.mxu0 0.0
        %3404 = vmatpush1.msra.mxu0 0.0
        %3405 = vmatprep.subr.mxu0 0.0
        %3406 = vmatpush1.msra.mxu0 0.0
        %3407 = vmatprep.subr.mxu0 0.0
        %3408 = vmatpush1.msra.mxu0 0.0
        %3409 = vmatprep.subr.mxu0 0.0
        %3410 = vmatpush1.msra.mxu0 0.0
        %3411 = vmatprep.subr.mxu0 0.0
        %3412 = vmatpush1.msra.mxu0 0.0
        %3413 = vmatprep.subr.mxu0 0.0
        %3414 = vmatpush1.msra.mxu0 0.0
        %3415 = vmatprep.subr.mxu0 0.0
        %3416 = vmatpush1.msra.mxu0 0.0
        %3417 = vmatprep.subr.mxu0 0.0
        %3418 = vmatpush1.msra.mxu0 0.0
        %3419 = vmatprep.mubr.f32.mxu0 0.0
        %3420 = vmatmul.mubr.f32.gmra.mrb[0].mxu0 %v3332
        %v3421 = vpop.f32.mrb[0].mxu0
        %v3422 = vadd.f32 0.0, %v3421
        %v3423 = vpop.f32.mrb[0].mxu0
        %3424 = vmatprep.mubr.f32.mxu0 0.0
        %3425 = vmatmul.mubr.f32.gmra.mrb[0].mxu0 %v3335
        %v3426 = vpop.f32.mrb[0].mxu0
        %v3427 = vadd.f32 0.0, %v3426
        %v3428 = vpop.f32.mrb[0].mxu0
        %3429 = vmatprep.mubr.f32.mxu0 0.0
        %3430 = vmatmul.mubr.f32.gmra.mrb[0].mxu0 %v3338
        %v3431 = vpop.f32.mrb[0].mxu0
        %v3432 = vadd.f32 0.0, %v3431
        %v3433 = vpop.f32.mrb[0].mxu0
        %3434 = vmatprep.mubr.f32.mxu0 0.0
        %3435 = vmatmul.mubr.f32.gmra.mrb[0].mxu0 %v3341
        %v3436 = vpop.f32.mrb[0].mxu0
        %v3437 = vadd.f32 0.0, %v3436
        %v3438 = vpop.f32.mrb[0].mxu0
        %3439 = vmatprep.mubr.f32.mxu0 0.0
        %3440 = vmatmul.mubr.f32.gmra.mrb[0].mxu0 %v3344
        %v3441 = vpop.f32.mrb[0].mxu0
        %v3442 = vadd.f32 0.0, %v3441
        %v3443 = vpop.f32.mrb[0].mxu0
        %3444 = vmatprep.mubr.f32.mxu0 0.0
        %3445 = vmatmul.mubr.f32.gmra.mrb[0].mxu0 %v3347
        %v3446 = vpop.f32.mrb[0].mxu0
        %v3447 = vadd.f32 0.0, %v3446
        %v3448 = vpop.f32.mrb[0].mxu0
        %3449 = vmatprep.mubr.f32.mxu0 0.0
        %3450 = vmatmul.mubr.f32.gmra.mrb[0].mxu0 %v3350
        %v3451 = vpop.f32.mrb[0].mxu0
        %v3452 = vadd.f32 0.0, %v3451
        %v3453 = vpop.f32.mrb[0].mxu0
        %3454 = vmatprep.mubr.f32.mxu0 0.0
        %3455 = vmatmul.mubr.f32.gmra.mrb[0].mxu0 %v3353
        %v3456 = vpop.f32.mrb[0].mxu0
        %v3457 = vadd.f32 0.0, %v3456
        %v3458 = vpop.f32.mrb[0].mxu0
        %3459 = vdwg.mxu0
        %v3460 = vadd.f32 %v3314, %v3422
        %v3461 = vadd.f32 %v3315, %v3427
        %v3462 = vadd.f32 %v3316, %v3432
        %v3463 = vadd.f32 %v3317, %v3437
        %v3464 = vadd.f32 %v3318, %v3442
        %v3465 = vadd.f32 %v3319, %v3447
        %v3466 = vadd.f32 %v3320, %v3452
        %v3467 = vadd.f32 %v3321, %v3457
        %v3468 = vld [vmem:[#allocation2 + $0xa] sm:$0xff]
        %v3469 = vld [vmem:[#allocation2 + $0x12] sm:$0xff]
        %v3470 = vld [vmem:[#allocation2 + $0x1a] sm:$0xff]
        %v3471 = vld [vmem:[#allocation2 + $0x22] sm:$0xff]
        %v3472 = vld [vmem:[#allocation2 + $0x2a] sm:$0xff]
        %v3473 = vld [vmem:[#allocation2 + $0x32] sm:$0xff]
        %v3474 = vld [vmem:[#allocation2 + $0x3a] sm:$0xff]
        %v3475 = vld [vmem:[#allocation2 + $0x42] sm:$0xff]
        %v3476 = vmul.f32 %v3468, %v2993
        %v3477 = vmul.f32 %v3469, %v2998
        %v3478 = vmul.f32 %v3470, %v3003
        %v3479 = vmul.f32 %v3471, %v3008
        %v3480 = vmul.f32 %v3472, %v3013
        %v3481 = vmul.f32 %v3473, %v3018
        %v3482 = vmul.f32 %v3474, %v3023
        %v3483 = vmul.f32 %v3475, %v3028
        %v3484 = vld [vmem:[%s1988] sm:$0xff]
        %v3486 = vsel %vm467, %v3476, 0
        %v3489 = vsel %vm467, %v3477, 0
        %v3492 = vsel %vm467, %v3478, 0
        %v3495 = vsel %vm467, %v3479, 0
        %v3498 = vsel %vm467, %v3480, 0
        %v3501 = vsel %vm467, %v3481, 0
        %v3504 = vsel %vm467, %v3482, 0
        %v3507 = vsel %vm467, %v3483, 0
        %3509 = vmatprep.subr.mxu0 0.0
        %3510 = vmatpush1.msra.mxu0 %v3484
        %3511 = vmatprep.subr.mxu0 0.0
        %3512 = vmatpush1.msra.mxu0 0.0
        %3513 = vmatprep.subr.mxu0 0.0
        %3514 = vmatpush1.msra.mxu0 0.0
        %3515 = vmatprep.subr.mxu0 0.0
        %3516 = vmatpush1.msra.mxu0 0.0
        %3517 = vmatprep.subr.mxu0 0.0
        %3518 = vmatpush1.msra.mxu0 0.0
        %3519 = vmatprep.subr.mxu0 0.0
        %3520 = vmatpush1.msra.mxu0 0.0
        %3521 = vmatprep.subr.mxu0 0.0
        %3522 = vmatpush1.msra.mxu0 0.0
        %3523 = vmatprep.subr.mxu0 0.0
        %3524 = vmatpush1.msra.mxu0 0.0
        %3525 = vmatprep.subr.mxu0 0.0
        %3526 = vmatpush1.msra.mxu0 0.0
        %3527 = vmatprep.subr.mxu0 0.0
        %3528 = vmatpush1.msra.mxu0 0.0
        %3529 = vmatprep.subr.mxu0 0.0
        %3530 = vmatpush1.msra.mxu0 0.0
        %3531 = vmatprep.subr.mxu0 0.0
        %3532 = vmatpush1.msra.mxu0 0.0
        %3533 = vmatprep.subr.mxu0 0.0
        %3534 = vmatpush1.msra.mxu0 0.0
        %3535 = vmatprep.subr.mxu0 0.0
        %3536 = vmatpush1.msra.mxu0 0.0
        %3537 = vmatprep.subr.mxu0 0.0
        %3538 = vmatpush1.msra.mxu0 0.0
        %3539 = vmatprep.subr.mxu0 0.0
        %3540 = vmatpush1.msra.mxu0 0.0
        %3541 = vmatprep.subr.mxu0 0.0
        %3542 = vmatpush1.msra.mxu0 0.0
        %3543 = vmatprep.subr.mxu0 0.0
        %3544 = vmatpush1.msra.mxu0 0.0
        %3545 = vmatprep.subr.mxu0 0.0
        %3546 = vmatpush1.msra.mxu0 0.0
        %3547 = vmatprep.subr.mxu0 0.0
        %3548 = vmatpush1.msra.mxu0 0.0
        %3549 = vmatprep.subr.mxu0 0.0
        %3550 = vmatpush1.msra.mxu0 0.0
        %3551 = vmatprep.subr.mxu0 0.0
        %3552 = vmatpush1.msra.mxu0 0.0
        %3553 = vmatprep.subr.mxu0 0.0
        %3554 = vmatpush1.msra.mxu0 0.0
        %3555 = vmatprep.subr.mxu0 0.0
        %3556 = vmatpush1.msra.mxu0 0.0
        %3557 = vmatprep.subr.mxu0 0.0
        %3558 = vmatpush1.msra.mxu0 0.0
        %3559 = vmatprep.subr.mxu0 0.0
        %3560 = vmatpush1.msra.mxu0 0.0
        %3561 = vmatprep.subr.mxu0 0.0
        %3562 = vmatpush1.msra.mxu0 0.0
        %3563 = vmatprep.subr.mxu0 0.0
        %3564 = vmatpush1.msra.mxu0 0.0
        %3565 = vmatprep.subr.mxu0 0.0
        %3566 = vmatpush1.msra.mxu0 0.0
        %3567 = vmatprep.subr.mxu0 0.0
        %3568 = vmatpush1.msra.mxu0 0.0
        %3569 = vmatprep.subr.mxu0 0.0
        %3570 = vmatpush1.msra.mxu0 0.0
        %3571 = vmatprep.subr.mxu0 0.0
        %3572 = vmatpush1.msra.mxu0 0.0
        %3573 = vmatprep.mubr.f32.mxu0 0.0
        %3574 = vmatmul.mubr.f32.gmra.mrb[0].mxu0 %v3486
        %v3575 = vpop.f32.mrb[0].mxu0
        %v3576 = vadd.f32 0.0, %v3575
        %v3577 = vpop.f32.mrb[0].mxu0
        %3578 = vmatprep.mubr.f32.mxu0 0.0
        %3579 = vmatmul.mubr.f32.gmra.mrb[0].mxu0 %v3489
        %v3580 = vpop.f32.mrb[0].mxu0
        %v3581 = vadd.f32 0.0, %v3580
        %v3582 = vpop.f32.mrb[0].mxu0
        %3583 = vmatprep.mubr.f32.mxu0 0.0
        %3584 = vmatmul.mubr.f32.gmra.mrb[0].mxu0 %v3492
        %v3585 = vpop.f32.mrb[0].mxu0
        %v3586 = vadd.f32 0.0, %v3585
        %v3587 = vpop.f32.mrb[0].mxu0
        %3588 = vmatprep.mubr.f32.mxu0 0.0
        %3589 = vmatmul.mubr.f32.gmra.mrb[0].mxu0 %v3495
        %v3590 = vpop.f32.mrb[0].mxu0
        %v3591 = vadd.f32 0.0, %v3590
        %v3592 = vpop.f32.mrb[0].mxu0
        %3593 = vmatprep.mubr.f32.mxu0 0.0
        %3594 = vmatmul.mubr.f32.gmra.mrb[0].mxu0 %v3498
        %v3595 = vpop.f32.mrb[0].mxu0
        %v3596 = vadd.f32 0.0, %v3595
        %v3597 = vpop.f32.mrb[0].mxu0
        %3598 = vmatprep.mubr.f32.mxu0 0.0
        %3599 = vmatmul.mubr.f32.gmra.mrb[0].mxu0 %v3501
        %v3600 = vpop.f32.mrb[0].mxu0
        %v3601 = vadd.f32 0.0, %v3600
        %v3602 = vpop.f32.mrb[0].mxu0
        %3603 = vmatprep.mubr.f32.mxu0 0.0
        %3604 = vmatmul.mubr.f32.gmra.mrb[0].mxu0 %v3504
        %v3605 = vpop.f32.mrb[0].mxu0
        %v3606 = vadd.f32 0.0, %v3605
        %v3607 = vpop.f32.mrb[0].mxu0
        %3608 = vmatprep.mubr.f32.mxu0 0.0
        %3609 = vmatmul.mubr.f32.gmra.mrb[0].mxu0 %v3507
        %v3610 = vpop.f32.mrb[0].mxu0
        %v3611 = vadd.f32 0.0, %v3610
        %v3612 = vpop.f32.mrb[0].mxu0
        %3613 = vdwg.mxu0
        %v3614 = vadd.f32 %v3460, %v3576
        %v3615 = vadd.f32 %v3461, %v3581
        %v3616 = vadd.f32 %v3462, %v3586
        %v3617 = vadd.f32 %v3463, %v3591
        %v3618 = vadd.f32 %v3464, %v3596
        %v3619 = vadd.f32 %v3465, %v3601
        %v3620 = vadd.f32 %v3466, %v3606
        %v3621 = vadd.f32 %v3467, %v3611
        %v3622 = vld [vmem:[%s1032 + $0x9] sm:$0xff]
        %v3623 = vld [vmem:[%s1032 + $0x11] sm:$0xff]
        %v3624 = vld [vmem:[%s1032 + $0x19] sm:$0xff]
        %v3625 = vld [vmem:[%s1032 + $0x21] sm:$0xff]
        %v3626 = vld [vmem:[%s1032 + $0x29] sm:$0xff]
        %v3627 = vld [vmem:[%s1032 + $0x31] sm:$0xff]
        %v3628 = vld [vmem:[%s1032 + $0x39] sm:$0xff]
        %v3629 = vld [vmem:[%s1032 + $0x41] sm:$0xff]
        %v3630 = vld [vmem:[%s2143] sm:$0xff]
        %v3632 = vsel %vm467, %v3622, 0
        %v3635 = vsel %vm467, %v3623, 0
        %v3638 = vsel %vm467, %v3624, 0
        %v3641 = vsel %vm467, %v3625, 0
        %v3644 = vsel %vm467, %v3626, 0
        %v3647 = vsel %vm467, %v3627, 0
        %v3650 = vsel %vm467, %v3628, 0
        %v3653 = vsel %vm467, %v3629, 0
        %3655 = vmatprep.subr.mxu0 0.0
        %3656 = vmatpush1.msra.mxu0 %v3630
        %3657 = vmatprep.subr.mxu0 0.0
        %3658 = vmatpush1.msra.mxu0 0.0
        %3659 = vmatprep.subr.mxu0 0.0
        %3660 = vmatpush1.msra.mxu0 0.0
        %3661 = vmatprep.subr.mxu0 0.0
        %3662 = vmatpush1.msra.mxu0 0.0
        %3663 = vmatprep.subr.mxu0 0.0
        %3664 = vmatpush1.msra.mxu0 0.0
        %3665 = vmatprep.subr.mxu0 0.0
        %3666 = vmatpush1.msra.mxu0 0.0
        %3667 = vmatprep.subr.mxu0 0.0
        %3668 = vmatpush1.msra.mxu0 0.0
        %3669 = vmatprep.subr.mxu0 0.0
        %3670 = vmatpush1.msra.mxu0 0.0
        %3671 = vmatprep.subr.mxu0 0.0
        %3672 = vmatpush1.msra.mxu0 0.0
        %3673 = vmatprep.subr.mxu0 0.0
        %3674 = vmatpush1.msra.mxu0 0.0
        %3675 = vmatprep.subr.mxu0 0.0
        %3676 = vmatpush1.msra.mxu0 0.0
        %3677 = vmatprep.subr.mxu0 0.0
        %3678 = vmatpush1.msra.mxu0 0.0
        %3679 = vmatprep.subr.mxu0 0.0
        %3680 = vmatpush1.msra.mxu0 0.0
        %3681 = vmatprep.subr.mxu0 0.0
        %3682 = vmatpush1.msra.mxu0 0.0
        %3683 = vmatprep.subr.mxu0 0.0
        %3684 = vmatpush1.msra.mxu0 0.0
        %3685 = vmatprep.subr.mxu0 0.0
        %3686 = vmatpush1.msra.mxu0 0.0
        %3687 = vmatprep.subr.mxu0 0.0
        %3688 = vmatpush1.msra.mxu0 0.0
        %3689 = vmatprep.subr.mxu0 0.0
        %3690 = vmatpush1.msra.mxu0 0.0
        %3691 = vmatprep.subr.mxu0 0.0
        %3692 = vmatpush1.msra.mxu0 0.0
        %3693 = vmatprep.subr.mxu0 0.0
        %3694 = vmatpush1.msra.mxu0 0.0
        %3695 = vmatprep.subr.mxu0 0.0
        %3696 = vmatpush1.msra.mxu0 0.0
        %3697 = vmatprep.subr.mxu0 0.0
        %3698 = vmatpush1.msra.mxu0 0.0
        %3699 = vmatprep.subr.mxu0 0.0
        %3700 = vmatpush1.msra.mxu0 0.0
        %3701 = vmatprep.subr.mxu0 0.0
        %3702 = vmatpush1.msra.mxu0 0.0
        %3703 = vmatprep.subr.mxu0 0.0
        %3704 = vmatpush1.msra.mxu0 0.0
        %3705 = vmatprep.subr.mxu0 0.0
        %3706 = vmatpush1.msra.mxu0 0.0
        %3707 = vmatprep.subr.mxu0 0.0
        %3708 = vmatpush1.msra.mxu0 0.0
        %3709 = vmatprep.subr.mxu0 0.0
        %3710 = vmatpush1.msra.mxu0 0.0
        %3711 = vmatprep.subr.mxu0 0.0
        %3712 = vmatpush1.msra.mxu0 0.0
        %3713 = vmatprep.subr.mxu0 0.0
        %3714 = vmatpush1.msra.mxu0 0.0
        %3715 = vmatprep.subr.mxu0 0.0
        %3716 = vmatpush1.msra.mxu0 0.0
        %3717 = vmatprep.subr.mxu0 0.0
        %3718 = vmatpush1.msra.mxu0 0.0
        %3719 = vmatprep.mubr.f32.mxu0 0.0
        %3720 = vmatmul.mubr.f32.gmra.mrb[0].mxu0 %v3632
        %v3721 = vpop.f32.mrb[0].mxu0
        %v3722 = vadd.f32 0.0, %v3721
        %v3723 = vpop.f32.mrb[0].mxu0
        %3724 = vmatprep.mubr.f32.mxu0 0.0
        %3725 = vmatmul.mubr.f32.gmra.mrb[0].mxu0 %v3635
        %v3726 = vpop.f32.mrb[0].mxu0
        %v3727 = vadd.f32 0.0, %v3726
        %v3728 = vpop.f32.mrb[0].mxu0
        %3729 = vmatprep.mubr.f32.mxu0 0.0
        %3730 = vmatmul.mubr.f32.gmra.mrb[0].mxu0 %v3638
        %v3731 = vpop.f32.mrb[0].mxu0
        %v3732 = vadd.f32 0.0, %v3731
        %v3733 = vpop.f32.mrb[0].mxu0
        %3734 = vmatprep.mubr.f32.mxu0 0.0
        %3735 = vmatmul.mubr.f32.gmra.mrb[0].mxu0 %v3641
        %v3736 = vpop.f32.mrb[0].mxu0
        %v3737 = vadd.f32 0.0, %v3736
        %v3738 = vpop.f32.mrb[0].mxu0
        %3739 = vmatprep.mubr.f32.mxu0 0.0
        %3740 = vmatmul.mubr.f32.gmra.mrb[0].mxu0 %v3644
        %v3741 = vpop.f32.mrb[0].mxu0
        %v3742 = vadd.f32 0.0, %v3741
        %v3743 = vpop.f32.mrb[0].mxu0
        %3744 = vmatprep.mubr.f32.mxu0 0.0
        %3745 = vmatmul.mubr.f32.gmra.mrb[0].mxu0 %v3647
        %v3746 = vpop.f32.mrb[0].mxu0
        %v3747 = vadd.f32 0.0, %v3746
        %v3748 = vpop.f32.mrb[0].mxu0
        %3749 = vmatprep.mubr.f32.mxu0 0.0
        %3750 = vmatmul.mubr.f32.gmra.mrb[0].mxu0 %v3650
        %v3751 = vpop.f32.mrb[0].mxu0
        %v3752 = vadd.f32 0.0, %v3751
        %v3753 = vpop.f32.mrb[0].mxu0
        %3754 = vmatprep.mubr.f32.mxu0 0.0
        %3755 = vmatmul.mubr.f32.gmra.mrb[0].mxu0 %v3653
        %v3756 = vpop.f32.mrb[0].mxu0
        %v3757 = vadd.f32 0.0, %v3756
        %v3758 = vpop.f32.mrb[0].mxu0
        %3759 = vdwg.mxu0
        %v3760 = vadd.f32 %v3614, %v3722
        %v3761 = vadd.f32 %v3615, %v3727
        %v3762 = vadd.f32 %v3616, %v3732
        %v3763 = vadd.f32 %v3617, %v3737
        %v3764 = vadd.f32 %v3618, %v3742
        %v3765 = vadd.f32 %v3619, %v3747
        %v3766 = vadd.f32 %v3620, %v3752
        %v3767 = vadd.f32 %v3621, %v3757
        %v3768 = vld [vmem:[%s1197 + $0x9] sm:$0xff]
        %v3769 = vld [vmem:[%s1197 + $0x11] sm:$0xff]
        %v3770 = vld [vmem:[%s1197 + $0x19] sm:$0xff]
        %v3771 = vld [vmem:[%s1197 + $0x21] sm:$0xff]
        %v3772 = vld [vmem:[%s1197 + $0x29] sm:$0xff]
        %v3773 = vld [vmem:[%s1197 + $0x31] sm:$0xff]
        %v3774 = vld [vmem:[%s1197 + $0x39] sm:$0xff]
        %v3775 = vld [vmem:[%s1197 + $0x41] sm:$0xff]
        %v3776 = vld [vmem:[%s2290] sm:$0xff]
        %v3778 = vsel %vm467, %v3768, 0
        %v3781 = vsel %vm467, %v3769, 0
        %v3784 = vsel %vm467, %v3770, 0
        %v3787 = vsel %vm467, %v3771, 0
        %v3790 = vsel %vm467, %v3772, 0
        %v3793 = vsel %vm467, %v3773, 0
        %v3796 = vsel %vm467, %v3774, 0
        %v3799 = vsel %vm467, %v3775, 0
        %3801 = vmatprep.subr.mxu0 0.0
        %3802 = vmatpush1.msra.mxu0 %v3776
        %3803 = vmatprep.subr.mxu0 0.0
        %3804 = vmatpush1.msra.mxu0 0.0
        %3805 = vmatprep.subr.mxu0 0.0
        %3806 = vmatpush1.msra.mxu0 0.0
        %3807 = vmatprep.subr.mxu0 0.0
        %3808 = vmatpush1.msra.mxu0 0.0
        %3809 = vmatprep.subr.mxu0 0.0
        %3810 = vmatpush1.msra.mxu0 0.0
        %3811 = vmatprep.subr.mxu0 0.0
        %3812 = vmatpush1.msra.mxu0 0.0
        %3813 = vmatprep.subr.mxu0 0.0
        %3814 = vmatpush1.msra.mxu0 0.0
        %3815 = vmatprep.subr.mxu0 0.0
        %3816 = vmatpush1.msra.mxu0 0.0
        %3817 = vmatprep.subr.mxu0 0.0
        %3818 = vmatpush1.msra.mxu0 0.0
        %3819 = vmatprep.subr.mxu0 0.0
        %3820 = vmatpush1.msra.mxu0 0.0
        %3821 = vmatprep.subr.mxu0 0.0
        %3822 = vmatpush1.msra.mxu0 0.0
        %3823 = vmatprep.subr.mxu0 0.0
        %3824 = vmatpush1.msra.mxu0 0.0
        %3825 = vmatprep.subr.mxu0 0.0
        %3826 = vmatpush1.msra.mxu0 0.0
        %3827 = vmatprep.subr.mxu0 0.0
        %3828 = vmatpush1.msra.mxu0 0.0
        %3829 = vmatprep.subr.mxu0 0.0
        %3830 = vmatpush1.msra.mxu0 0.0
        %3831 = vmatprep.subr.mxu0 0.0
        %3832 = vmatpush1.msra.mxu0 0.0
        %3833 = vmatprep.subr.mxu0 0.0
        %3834 = vmatpush1.msra.mxu0 0.0
        %3835 = vmatprep.subr.mxu0 0.0
        %3836 = vmatpush1.msra.mxu0 0.0
        %3837 = vmatprep.subr.mxu0 0.0
        %3838 = vmatpush1.msra.mxu0 0.0
        %3839 = vmatprep.subr.mxu0 0.0
        %3840 = vmatpush1.msra.mxu0 0.0
        %3841 = vmatprep.subr.mxu0 0.0
        %3842 = vmatpush1.msra.mxu0 0.0
        %3843 = vmatprep.subr.mxu0 0.0
        %3844 = vmatpush1.msra.mxu0 0.0
        %3845 = vmatprep.subr.mxu0 0.0
        %3846 = vmatpush1.msra.mxu0 0.0
        %3847 = vmatprep.subr.mxu0 0.0
        %3848 = vmatpush1.msra.mxu0 0.0
        %3849 = vmatprep.subr.mxu0 0.0
        %3850 = vmatpush1.msra.mxu0 0.0
        %3851 = vmatprep.subr.mxu0 0.0
        %3852 = vmatpush1.msra.mxu0 0.0
        %3853 = vmatprep.subr.mxu0 0.0
        %3854 = vmatpush1.msra.mxu0 0.0
        %3855 = vmatprep.subr.mxu0 0.0
        %3856 = vmatpush1.msra.mxu0 0.0
        %3857 = vmatprep.subr.mxu0 0.0
        %3858 = vmatpush1.msra.mxu0 0.0
        %3859 = vmatprep.subr.mxu0 0.0
        %3860 = vmatpush1.msra.mxu0 0.0
        %3861 = vmatprep.subr.mxu0 0.0
        %3862 = vmatpush1.msra.mxu0 0.0
        %3863 = vmatprep.subr.mxu0 0.0
        %3864 = vmatpush1.msra.mxu0 0.0
        %3865 = vmatprep.mubr.f32.mxu0 0.0
        %3866 = vmatmul.mubr.f32.gmra.mrb[0].mxu0 %v3778
        %v3867 = vpop.f32.mrb[0].mxu0
        %v3868 = vadd.f32 0.0, %v3867
        %v3869 = vpop.f32.mrb[0].mxu0
        %3870 = vmatprep.mubr.f32.mxu0 0.0
        %3871 = vmatmul.mubr.f32.gmra.mrb[0].mxu0 %v3781
        %v3872 = vpop.f32.mrb[0].mxu0
        %v3873 = vadd.f32 0.0, %v3872
        %v3874 = vpop.f32.mrb[0].mxu0
        %3875 = vmatprep.mubr.f32.mxu0 0.0
        %3876 = vmatmul.mubr.f32.gmra.mrb[0].mxu0 %v3784
        %v3877 = vpop.f32.mrb[0].mxu0
        %v3878 = vadd.f32 0.0, %v3877
        %v3879 = vpop.f32.mrb[0].mxu0
        %3880 = vmatprep.mubr.f32.mxu0 0.0
        %3881 = vmatmul.mubr.f32.gmra.mrb[0].mxu0 %v3787
        %v3882 = vpop.f32.mrb[0].mxu0
        %v3883 = vadd.f32 0.0, %v3882
        %v3884 = vpop.f32.mrb[0].mxu0
        %3885 = vmatprep.mubr.f32.mxu0 0.0
        %3886 = vmatmul.mubr.f32.gmra.mrb[0].mxu0 %v3790
        %v3887 = vpop.f32.mrb[0].mxu0
        %v3888 = vadd.f32 0.0, %v3887
        %v3889 = vpop.f32.mrb[0].mxu0
        %3890 = vmatprep.mubr.f32.mxu0 0.0
        %3891 = vmatmul.mubr.f32.gmra.mrb[0].mxu0 %v3793
        %v3892 = vpop.f32.mrb[0].mxu0
        %v3893 = vadd.f32 0.0, %v3892
        %v3894 = vpop.f32.mrb[0].mxu0
        %3895 = vmatprep.mubr.f32.mxu0 0.0
        %3896 = vmatmul.mubr.f32.gmra.mrb[0].mxu0 %v3796
        %v3897 = vpop.f32.mrb[0].mxu0
        %v3898 = vadd.f32 0.0, %v3897
        %v3899 = vpop.f32.mrb[0].mxu0
        %3900 = vmatprep.mubr.f32.mxu0 0.0
        %3901 = vmatmul.mubr.f32.gmra.mrb[0].mxu0 %v3799
        %v3902 = vpop.f32.mrb[0].mxu0
        %v3903 = vadd.f32 0.0, %v3902
        %v3904 = vpop.f32.mrb[0].mxu0
        %3905 = vdwg.mxu0
        %v3906 = vadd.f32 %v3760, %v3868
        %v3907 = vadd.f32 %v3761, %v3873
        %v3908 = vadd.f32 %v3762, %v3878
        %v3909 = vadd.f32 %v3763, %v3883
        %v3910 = vadd.f32 %v3764, %v3888
        %v3911 = vadd.f32 %v3765, %v3893
        %v3912 = vadd.f32 %v3766, %v3898
        %v3913 = vadd.f32 %v3767, %v3903
        %v3914 = vld [vmem:[%s1032 + $0xa] sm:$0xff]
        %v3915 = vld [vmem:[%s1032 + $0x12] sm:$0xff]
        %v3916 = vld [vmem:[%s1032 + $0x1a] sm:$0xff]
        %v3917 = vld [vmem:[%s1032 + $0x22] sm:$0xff]
        %v3918 = vld [vmem:[%s1032 + $0x2a] sm:$0xff]
        %v3919 = vld [vmem:[%s1032 + $0x32] sm:$0xff]
        %v3920 = vld [vmem:[%s1032 + $0x3a] sm:$0xff]
        %v3921 = vld [vmem:[%s1032 + $0x42] sm:$0xff]
        %v3922 = vmul.f32 %v3914, %v2993
        %v3923 = vmul.f32 %v3915, %v2998
        %v3924 = vmul.f32 %v3916, %v3003
        %v3925 = vmul.f32 %v3917, %v3008
        %v3926 = vmul.f32 %v3918, %v3013
        %v3927 = vmul.f32 %v3919, %v3018
        %v3928 = vmul.f32 %v3920, %v3023
        %v3929 = vmul.f32 %v3921, %v3028
        %v3930 = vld [vmem:[%s2437] sm:$0xff]
        %v3932 = vsel %vm467, %v3922, 0
        %v3935 = vsel %vm467, %v3923, 0
        %v3938 = vsel %vm467, %v3924, 0
        %v3941 = vsel %vm467, %v3925, 0
        %v3944 = vsel %vm467, %v3926, 0
        %v3947 = vsel %vm467, %v3927, 0
        %v3950 = vsel %vm467, %v3928, 0
        %v3953 = vsel %vm467, %v3929, 0
        %3955 = vmatprep.subr.mxu0 0.0
        %3956 = vmatpush1.msra.mxu0 %v3930
        %3957 = vmatprep.subr.mxu0 0.0
        %3958 = vmatpush1.msra.mxu0 0.0
        %3959 = vmatprep.subr.mxu0 0.0
        %3960 = vmatpush1.msra.mxu0 0.0
        %3961 = vmatprep.subr.mxu0 0.0
        %3962 = vmatpush1.msra.mxu0 0.0
        %3963 = vmatprep.subr.mxu0 0.0
        %3964 = vmatpush1.msra.mxu0 0.0
        %3965 = vmatprep.subr.mxu0 0.0
        %3966 = vmatpush1.msra.mxu0 0.0
        %3967 = vmatprep.subr.mxu0 0.0
        %3968 = vmatpush1.msra.mxu0 0.0
        %3969 = vmatprep.subr.mxu0 0.0
        %3970 = vmatpush1.msra.mxu0 0.0
        %3971 = vmatprep.subr.mxu0 0.0
        %3972 = vmatpush1.msra.mxu0 0.0
        %3973 = vmatprep.subr.mxu0 0.0
        %3974 = vmatpush1.msra.mxu0 0.0
        %3975 = vmatprep.subr.mxu0 0.0
        %3976 = vmatpush1.msra.mxu0 0.0
        %3977 = vmatprep.subr.mxu0 0.0
        %3978 = vmatpush1.msra.mxu0 0.0
        %3979 = vmatprep.subr.mxu0 0.0
        %3980 = vmatpush1.msra.mxu0 0.0
        %3981 = vmatprep.subr.mxu0 0.0
        %3982 = vmatpush1.msra.mxu0 0.0
        %3983 = vmatprep.subr.mxu0 0.0
        %3984 = vmatpush1.msra.mxu0 0.0
        %3985 = vmatprep.subr.mxu0 0.0
        %3986 = vmatpush1.msra.mxu0 0.0
        %3987 = vmatprep.subr.mxu0 0.0
        %3988 = vmatpush1.msra.mxu0 0.0
        %3989 = vmatprep.subr.mxu0 0.0
        %3990 = vmatpush1.msra.mxu0 0.0
        %3991 = vmatprep.subr.mxu0 0.0
        %3992 = vmatpush1.msra.mxu0 0.0
        %3993 = vmatprep.subr.mxu0 0.0
        %3994 = vmatpush1.msra.mxu0 0.0
        %3995 = vmatprep.subr.mxu0 0.0
        %3996 = vmatpush1.msra.mxu0 0.0
        %3997 = vmatprep.subr.mxu0 0.0
        %3998 = vmatpush1.msra.mxu0 0.0
        %3999 = vmatprep.subr.mxu0 0.0
        %4000 = vmatpush1.msra.mxu0 0.0
        %4001 = vmatprep.subr.mxu0 0.0
        %4002 = vmatpush1.msra.mxu0 0.0
        %4003 = vmatprep.subr.mxu0 0.0
        %4004 = vmatpush1.msra.mxu0 0.0
        %4005 = vmatprep.subr.mxu0 0.0
        %4006 = vmatpush1.msra.mxu0 0.0
        %4007 = vmatprep.subr.mxu0 0.0
        %4008 = vmatpush1.msra.mxu0 0.0
        %4009 = vmatprep.subr.mxu0 0.0
        %4010 = vmatpush1.msra.mxu0 0.0
        %4011 = vmatprep.subr.mxu0 0.0
        %4012 = vmatpush1.msra.mxu0 0.0
        %4013 = vmatprep.subr.mxu0 0.0
        %4014 = vmatpush1.msra.mxu0 0.0
        %4015 = vmatprep.subr.mxu0 0.0
        %4016 = vmatpush1.msra.mxu0 0.0
        %4017 = vmatprep.subr.mxu0 0.0
        %4018 = vmatpush1.msra.mxu0 0.0
        %4019 = vmatprep.mubr.f32.mxu0 0.0
        %4020 = vmatmul.mubr.f32.gmra.mrb[0].mxu0 %v3932
        %v4021 = vpop.f32.mrb[0].mxu0
        %v4022 = vadd.f32 0.0, %v4021
        %v4023 = vpop.f32.mrb[0].mxu0
        %4024 = vmatprep.mubr.f32.mxu0 0.0
        %4025 = vmatmul.mubr.f32.gmra.mrb[0].mxu0 %v3935
        %v4026 = vpop.f32.mrb[0].mxu0
        %v4027 = vadd.f32 0.0, %v4026
        %v4028 = vpop.f32.mrb[0].mxu0
        %4029 = vmatprep.mubr.f32.mxu0 0.0
        %4030 = vmatmul.mubr.f32.gmra.mrb[0].mxu0 %v3938
        %v4031 = vpop.f32.mrb[0].mxu0
        %v4032 = vadd.f32 0.0, %v4031
        %v4033 = vpop.f32.mrb[0].mxu0
        %4034 = vmatprep.mubr.f32.mxu0 0.0
        %4035 = vmatmul.mubr.f32.gmra.mrb[0].mxu0 %v3941
        %v4036 = vpop.f32.mrb[0].mxu0
        %v4037 = vadd.f32 0.0, %v4036
        %v4038 = vpop.f32.mrb[0].mxu0
        %4039 = vmatprep.mubr.f32.mxu0 0.0
        %4040 = vmatmul.mubr.f32.gmra.mrb[0].mxu0 %v3944
        %v4041 = vpop.f32.mrb[0].mxu0
        %v4042 = vadd.f32 0.0, %v4041
        %v4043 = vpop.f32.mrb[0].mxu0
        %4044 = vmatprep.mubr.f32.mxu0 0.0
        %4045 = vmatmul.mubr.f32.gmra.mrb[0].mxu0 %v3947
        %v4046 = vpop.f32.mrb[0].mxu0
        %v4047 = vadd.f32 0.0, %v4046
        %v4048 = vpop.f32.mrb[0].mxu0
        %4049 = vmatprep.mubr.f32.mxu0 0.0
        %4050 = vmatmul.mubr.f32.gmra.mrb[0].mxu0 %v3950
        %v4051 = vpop.f32.mrb[0].mxu0
        %v4052 = vadd.f32 0.0, %v4051
        %v4053 = vpop.f32.mrb[0].mxu0
        %4054 = vmatprep.mubr.f32.mxu0 0.0
        %4055 = vmatmul.mubr.f32.gmra.mrb[0].mxu0 %v3953
        %v4056 = vpop.f32.mrb[0].mxu0
        %v4057 = vadd.f32 0.0, %v4056
        %v4058 = vpop.f32.mrb[0].mxu0
        %4059 = vdwg.mxu0
        %v4060 = vadd.f32 %v3906, %v4022
        %v4061 = vadd.f32 %v3907, %v4027
        %v4062 = vadd.f32 %v3908, %v4032
        %v4063 = vadd.f32 %v3909, %v4037
        %v4064 = vadd.f32 %v3910, %v4042
        %v4065 = vadd.f32 %v3911, %v4047
        %v4066 = vadd.f32 %v3912, %v4052
        %v4067 = vadd.f32 %v3913, %v4057
        %vm4068 = vcmp.gt.f32.partialorder %v3322, 0.0
        %vm4069 = vcmp.gt.f32.partialorder %v3323, 0.0
        %vm4070 = vcmp.gt.f32.partialorder %v3324, 0.0
        %vm4071 = vcmp.gt.f32.partialorder %v3325, 0.0
        %vm4072 = vcmp.gt.f32.partialorder %v3326, 0.0
        %vm4073 = vcmp.gt.f32.partialorder %v3327, 0.0
        %vm4074 = vcmp.gt.f32.partialorder %v3328, 0.0
        %vm4075 = vcmp.gt.f32.partialorder %v3329, 0.0
        %v4076 = vmul.f32 %v3322, 5.0
        %v4077 = vmul.f32 %v3323, 5.0
        %v4078 = vmul.f32 %v3324, 5.0
        %v4079 = vmul.f32 %v3325, 5.0
        %v4080 = vmul.f32 %v3326, 5.0
        %v4081 = vmul.f32 %v3327, 5.0
        %v4082 = vmul.f32 %v3328, 5.0
        %v4083 = vmul.f32 %v3329, 5.0
        %v4084 = vsel %vm4068, %v3322, %v4076
        %v4085 = vsel %vm4069, %v3323, %v4077
        %v4086 = vsel %vm4070, %v3324, %v4078
        %v4087 = vsel %vm4071, %v3325, %v4079
        %v4088 = vsel %vm4072, %v3326, %v4080
        %v4089 = vsel %vm4073, %v3327, %v4081
        %v4090 = vsel %vm4074, %v3328, %v4082
        %v4091 = vsel %vm4075, %v3329, %v4083
        %v4092 = vadd.f32 %v4060, %v2604
        %v4093 = vadd.f32 %v4061, %v2604
        %v4094 = vadd.f32 %v4062, %v2604
        %v4095 = vadd.f32 %v4063, %v2604
        %v4096 = vadd.f32 %v4064, %v2604
        %v4097 = vadd.f32 %v4065, %v2604
        %v4098 = vadd.f32 %v4066, %v2604
        %v4099 = vadd.f32 %v4067, %v2604
        %v4100 = vadd.f32 %v4092, %v4084
        %v4101 = vadd.f32 %v4093, %v4085
        %v4102 = vadd.f32 %v4094, %v4086
        %v4103 = vadd.f32 %v4095, %v4087
        %v4104 = vadd.f32 %v4096, %v4088
        %v4105 = vadd.f32 %v4097, %v4089
        %v4106 = vadd.f32 %v4098, %v4090
        %v4107 = vadd.f32 %v4099, %v4091
        %vm4108 = vcmp.gt.f32.partialorder %v4100, 0.0
        %vm4109 = vcmp.gt.f32.partialorder %v4101, 0.0
        %vm4110 = vcmp.gt.f32.partialorder %v4102, 0.0
        %vm4111 = vcmp.gt.f32.partialorder %v4103, 0.0
        %vm4112 = vcmp.gt.f32.partialorder %v4104, 0.0
        %vm4113 = vcmp.gt.f32.partialorder %v4105, 0.0
        %vm4114 = vcmp.gt.f32.partialorder %v4106, 0.0
        %vm4115 = vcmp.gt.f32.partialorder %v4107, 0.0
        %v4116 = vmul.f32 %v4100, 0.2
        %v4117 = vmul.f32 %v4101, 0.2
        %v4118 = vmul.f32 %v4102, 0.2
        %v4119 = vmul.f32 %v4103, 0.2
        %v4120 = vmul.f32 %v4104, 0.2
        %v4121 = vmul.f32 %v4105, 0.2
        %v4122 = vmul.f32 %v4106, 0.2
        %v4123 = vmul.f32 %v4107, 0.2
        %v4124 = vsel %vm4108, %v4100, %v4116
        %v4125 = vsel %vm4109, %v4101, %v4117
        %v4126 = vsel %vm4110, %v4102, %v4118
        %v4127 = vsel %vm4111, %v4103, %v4119
        %v4128 = vsel %vm4112, %v4104, %v4120
        %v4129 = vsel %vm4113, %v4105, %v4121
        %v4130 = vsel %vm4114, %v4106, %v4122
        %v4131 = vsel %vm4115, %v4107, %v4123
        %s4132 = scalar_lea.vmem %s439, 64
        %4133 = vst.msk [vmem:[%s4132] sm:$0xff] %vm467, %v4124
        %4134 = vst.msk [vmem:[%s4132 + $0x8] sm:$0xff] %vm467, %v4125
        %4135 = vst.msk [vmem:[%s4132 + $0x10] sm:$0xff] %vm467, %v4126
        %4136 = vst.msk [vmem:[%s4132 + $0x18] sm:$0xff] %vm467, %v4127
        %4137 = vst.msk [vmem:[%s4132 + $0x20] sm:$0xff] %vm467, %v4128
        %4138 = vst.msk [vmem:[%s4132 + $0x28] sm:$0xff] %vm467, %v4129
        %4139 = vst.msk [vmem:[%s4132 + $0x30] sm:$0xff] %vm467, %v4130
        %4140 = vst.msk [vmem:[%s4132 + $0x38] sm:$0xff] %vm467, %v4131
        %v4141 = vsel %vm467, %v4124, 0.0
        %v4142 = vsel %vm467, %v4125, 0.0
        %v4143 = vadd.f32 %v4141, %v4142
        %v4144 = vsel %vm467, %v4126, 0.0
        %v4145 = vadd.f32 %v4143, %v4144
        %v4146 = vsel %vm467, %v4127, 0.0
        %v4147 = vadd.f32 %v4145, %v4146
        %v4148 = vsel %vm467, %v4128, 0.0
        %v4149 = vadd.f32 %v4147, %v4148
        %v4150 = vsel %vm467, %v4129, 0.0
        %v4151 = vadd.f32 %v4149, %v4150
        %v4152 = vsel %vm467, %v4130, 0.0
        %v4153 = vadd.f32 %v4151, %v4152
        %v4154 = vsel %vm467, %v4131, 0.0
        %v4155 = vadd.f32 %v4153, %v4154
        %v4156 = vrot.slane %v4155, 4
        %v4157 = vadd.f32 %v4155, %v4156
        %v4158 = vrot.slane %v4157, 2
        %v4159 = vadd.f32 %v4157, %v4158
        %v4160 = vrot.slane %v4159, 1
        %v4161 = vadd.f32 %v4159, %v4160
        %v4162 = vadd.f32 %v2675, %v4161
        %v4163 = vmul.f32 %v4124, %v4124
        %v4164 = vmul.f32 %v4125, %v4125
        %v4165 = vmul.f32 %v4126, %v4126
        %v4166 = vmul.f32 %v4127, %v4127
        %v4167 = vmul.f32 %v4128, %v4128
        %v4168 = vmul.f32 %v4129, %v4129
        %v4169 = vmul.f32 %v4130, %v4130
        %v4170 = vmul.f32 %v4131, %v4131
        %v4171 = vsel %vm467, %v4163, 0.0
        %v4172 = vsel %vm467, %v4164, 0.0
        %v4173 = vadd.f32 %v4171, %v4172
        %v4174 = vsel %vm467, %v4165, 0.0
        %v4175 = vadd.f32 %v4173, %v4174
        %v4176 = vsel %vm467, %v4166, 0.0
        %v4177 = vadd.f32 %v4175, %v4176
        %v4178 = vsel %vm467, %v4167, 0.0
        %v4179 = vadd.f32 %v4177, %v4178
        %v4180 = vsel %vm467, %v4168, 0.0
        %v4181 = vadd.f32 %v4179, %v4180
        %v4182 = vsel %vm467, %v4169, 0.0
        %v4183 = vadd.f32 %v4181, %v4182
        %v4184 = vsel %vm467, %v4170, 0.0
        %v4185 = vadd.f32 %v4183, %v4184
        %v4186 = vrot.slane %v4185, 4
        %v4187 = vadd.f32 %v4185, %v4186
        %v4188 = vrot.slane %v4187, 2
        %v4189 = vadd.f32 %v4187, %v4188
        %v4190 = vrot.slane %v4189, 1
        %v4191 = vadd.f32 %v4189, %v4190
        %v4192 = vadd.f32 %v2705, %v4191
        %v4193 = vld [vmem:[%s867 + $0x8] sm:$0xff]
        %v4194 = vld [vmem:[%s867 + $0x10] sm:$0xff]
        %v4195 = vld [vmem:[%s867 + $0x18] sm:$0xff]
        %v4196 = vld [vmem:[%s867 + $0x20] sm:$0xff]
        %v4197 = vld [vmem:[%s867 + $0x28] sm:$0xff]
        %v4198 = vld [vmem:[%s867 + $0x30] sm:$0xff]
        %v4199 = vld [vmem:[%s867 + $0x38] sm:$0xff]
        %v4200 = vld [vmem:[%s867 + $0x40] sm:$0xff]
        %v4201 = vmul.f32 %v4193, %v1217
        %v4202 = vmul.f32 %v4194, %v1222
        %v4203 = vmul.f32 %v4195, %v1227
        %v4204 = vmul.f32 %v4196, %v1232
        %v4205 = vmul.f32 %v4197, %v1237
        %v4206 = vmul.f32 %v4198, %v1242
        %v4207 = vmul.f32 %v4199, %v1247
        %v4208 = vmul.f32 %v4200, %v1252
        %v4209 = vld [vmem:[%s5] sm:$0xff]
        %v4210 = vld [vmem:[#allocation2 + $0x9] sm:$0xff]
        %v4211 = vld [vmem:[#allocation2 + $0x11] sm:$0xff]
        %v4212 = vld [vmem:[#allocation2 + $0x19] sm:$0xff]
        %v4213 = vld [vmem:[#allocation2 + $0x21] sm:$0xff]
        %v4214 = vld [vmem:[#allocation2 + $0x29] sm:$0xff]
        %v4215 = vld [vmem:[#allocation2 + $0x31] sm:$0xff]
        %v4216 = vld [vmem:[#allocation2 + $0x39] sm:$0xff]
        %v4217 = vld [vmem:[#allocation2 + $0x41] sm:$0xff]
        %v4218 = vld [vmem:[%s1271] sm:$0xff]
        %v4220 = vsel %vm467, %v4210, 0
        %v4223 = vsel %vm467, %v4211, 0
        %v4226 = vsel %vm467, %v4212, 0
        %v4229 = vsel %vm467, %v4213, 0
        %v4232 = vsel %vm467, %v4214, 0
        %v4235 = vsel %vm467, %v4215, 0
        %v4238 = vsel %vm467, %v4216, 0
        %v4241 = vsel %vm467, %v4217, 0
        %4243 = vmatprep.subr.mxu0 0.0
        %4244 = vmatpush1.msra.mxu0 %v4218
        %4245 = vmatprep.subr.mxu0 0.0
        %4246 = vmatpush1.msra.mxu0 0.0
        %4247 = vmatprep.subr.mxu0 0.0
        %4248 = vmatpush1.msra.mxu0 0.0
        %4249 = vmatprep.subr.mxu0 0.0
        %4250 = vmatpush1.msra.mxu0 0.0
        %4251 = vmatprep.subr.mxu0 0.0
        %4252 = vmatpush1.msra.mxu0 0.0
        %4253 = vmatprep.subr.mxu0 0.0
        %4254 = vmatpush1.msra.mxu0 0.0
        %4255 = vmatprep.subr.mxu0 0.0
        %4256 = vmatpush1.msra.mxu0 0.0
        %4257 = vmatprep.subr.mxu0 0.0
        %4258 = vmatpush1.msra.mxu0 0.0
        %4259 = vmatprep.subr.mxu0 0.0
        %4260 = vmatpush1.msra.mxu0 0.0
        %4261 = vmatprep.subr.mxu0 0.0
        %4262 = vmatpush1.msra.mxu0 0.0
        %4263 = vmatprep.subr.mxu0 0.0
        %4264 = vmatpush1.msra.mxu0 0.0
        %4265 = vmatprep.subr.mxu0 0.0
        %4266 = vmatpush1.msra.mxu0 0.0
        %4267 = vmatprep.subr.mxu0 0.0
        %4268 = vmatpush1.msra.mxu0 0.0
        %4269 = vmatprep.subr.mxu0 0.0
        %4270 = vmatpush1.msra.mxu0 0.0
        %4271 = vmatprep.subr.mxu0 0.0
        %4272 = vmatpush1.msra.mxu0 0.0
        %4273 = vmatprep.subr.mxu0 0.0
        %4274 = vmatpush1.msra.mxu0 0.0
        %4275 = vmatprep.subr.mxu0 0.0
        %4276 = vmatpush1.msra.mxu0 0.0
        %4277 = vmatprep.subr.mxu0 0.0
        %4278 = vmatpush1.msra.mxu0 0.0
        %4279 = vmatprep.subr.mxu0 0.0
        %4280 = vmatpush1.msra.mxu0 0.0
        %4281 = vmatprep.subr.mxu0 0.0
        %4282 = vmatpush1.msra.mxu0 0.0
        %4283 = vmatprep.subr.mxu0 0.0
        %4284 = vmatpush1.msra.mxu0 0.0
        %4285 = vmatprep.subr.mxu0 0.0
        %4286 = vmatpush1.msra.mxu0 0.0
        %4287 = vmatprep.subr.mxu0 0.0
        %4288 = vmatpush1.msra.mxu0 0.0
        %4289 = vmatprep.subr.mxu0 0.0
        %4290 = vmatpush1.msra.mxu0 0.0
        %4291 = vmatprep.subr.mxu0 0.0
        %4292 = vmatpush1.msra.mxu0 0.0
        %4293 = vmatprep.subr.mxu0 0.0
        %4294 = vmatpush1.msra.mxu0 0.0
        %4295 = vmatprep.subr.mxu0 0.0
        %4296 = vmatpush1.msra.mxu0 0.0
        %4297 = vmatprep.subr.mxu0 0.0
        %4298 = vmatpush1.msra.mxu0 0.0
        %4299 = vmatprep.subr.mxu0 0.0
        %4300 = vmatpush1.msra.mxu0 0.0
        %4301 = vmatprep.subr.mxu0 0.0
        %4302 = vmatpush1.msra.mxu0 0.0
        %4303 = vmatprep.subr.mxu0 0.0
        %4304 = vmatpush1.msra.mxu0 0.0
        %4305 = vmatprep.subr.mxu0 0.0
        %4306 = vmatpush1.msra.mxu0 0.0
        %4307 = vmatprep.mubr.f32.mxu0 0.0
        %4308 = vmatmul.mubr.f32.gmra.mrb[0].mxu0 %v4220
        %v4309 = vpop.f32.mrb[0].mxu0
        %v4310 = vadd.f32 0.0, %v4309
        %v4311 = vpop.f32.mrb[0].mxu0
        %4312 = vmatprep.mubr.f32.mxu0 0.0
        %4313 = vmatmul.mubr.f32.gmra.mrb[0].mxu0 %v4223
        %v4314 = vpop.f32.mrb[0].mxu0
        %v4315 = vadd.f32 0.0, %v4314
        %v4316 = vpop.f32.mrb[0].mxu0
        %4317 = vmatprep.mubr.f32.mxu0 0.0
        %4318 = vmatmul.mubr.f32.gmra.mrb[0].mxu0 %v4226
        %v4319 = vpop.f32.mrb[0].mxu0
        %v4320 = vadd.f32 0.0, %v4319
        %v4321 = vpop.f32.mrb[0].mxu0
        %4322 = vmatprep.mubr.f32.mxu0 0.0
        %4323 = vmatmul.mubr.f32.gmra.mrb[0].mxu0 %v4229
        %v4324 = vpop.f32.mrb[0].mxu0
        %v4325 = vadd.f32 0.0, %v4324
        %v4326 = vpop.f32.mrb[0].mxu0
        %4327 = vmatprep.mubr.f32.mxu0 0.0
        %4328 = vmatmul.mubr.f32.gmra.mrb[0].mxu0 %v4232
        %v4329 = vpop.f32.mrb[0].mxu0
        %v4330 = vadd.f32 0.0, %v4329
        %v4331 = vpop.f32.mrb[0].mxu0
        %4332 = vmatprep.mubr.f32.mxu0 0.0
        %4333 = vmatmul.mubr.f32.gmra.mrb[0].mxu0 %v4235
        %v4334 = vpop.f32.mrb[0].mxu0
        %v4335 = vadd.f32 0.0, %v4334
        %v4336 = vpop.f32.mrb[0].mxu0
        %4337 = vmatprep.mubr.f32.mxu0 0.0
        %4338 = vmatmul.mubr.f32.gmra.mrb[0].mxu0 %v4238
        %v4339 = vpop.f32.mrb[0].mxu0
        %v4340 = vadd.f32 0.0, %v4339
        %v4341 = vpop.f32.mrb[0].mxu0
        %4342 = vmatprep.mubr.f32.mxu0 0.0
        %4343 = vmatmul.mubr.f32.gmra.mrb[0].mxu0 %v4241
        %v4344 = vpop.f32.mrb[0].mxu0
        %v4345 = vadd.f32 0.0, %v4344
        %v4346 = vpop.f32.mrb[0].mxu0
        %4347 = vdwg.mxu0
        %v4349 = vsel %vm467, %v4201, 0
        %v4352 = vsel %vm467, %v4202, 0
        %v4355 = vsel %vm467, %v4203, 0
        %v4358 = vsel %vm467, %v4204, 0
        %v4361 = vsel %vm467, %v4205, 0
        %v4364 = vsel %vm467, %v4206, 0
        %v4367 = vsel %vm467, %v4207, 0
        %v4370 = vsel %vm467, %v4208, 0
        %4372 = vmatprep.subr.mxu0 0.0
        %4373 = vmatpush1.msra.mxu0 %v4209
        %4374 = vmatprep.subr.mxu0 0.0
        %4375 = vmatpush1.msra.mxu0 0.0
        %4376 = vmatprep.subr.mxu0 0.0
        %4377 = vmatpush1.msra.mxu0 0.0
        %4378 = vmatprep.subr.mxu0 0.0
        %4379 = vmatpush1.msra.mxu0 0.0
        %4380 = vmatprep.subr.mxu0 0.0
        %4381 = vmatpush1.msra.mxu0 0.0
        %4382 = vmatprep.subr.mxu0 0.0
        %4383 = vmatpush1.msra.mxu0 0.0
        %4384 = vmatprep.subr.mxu0 0.0
        %4385 = vmatpush1.msra.mxu0 0.0
        %4386 = vmatprep.subr.mxu0 0.0
        %4387 = vmatpush1.msra.mxu0 0.0
        %4388 = vmatprep.subr.mxu0 0.0
        %4389 = vmatpush1.msra.mxu0 0.0
        %4390 = vmatprep.subr.mxu0 0.0
        %4391 = vmatpush1.msra.mxu0 0.0
        %4392 = vmatprep.subr.mxu0 0.0
        %4393 = vmatpush1.msra.mxu0 0.0
        %4394 = vmatprep.subr.mxu0 0.0
        %4395 = vmatpush1.msra.mxu0 0.0
        %4396 = vmatprep.subr.mxu0 0.0
        %4397 = vmatpush1.msra.mxu0 0.0
        %4398 = vmatprep.subr.mxu0 0.0
        %4399 = vmatpush1.msra.mxu0 0.0
        %4400 = vmatprep.subr.mxu0 0.0
        %4401 = vmatpush1.msra.mxu0 0.0
        %4402 = vmatprep.subr.mxu0 0.0
        %4403 = vmatpush1.msra.mxu0 0.0
        %4404 = vmatprep.subr.mxu0 0.0
        %4405 = vmatpush1.msra.mxu0 0.0
        %4406 = vmatprep.subr.mxu0 0.0
        %4407 = vmatpush1.msra.mxu0 0.0
        %4408 = vmatprep.subr.mxu0 0.0
        %4409 = vmatpush1.msra.mxu0 0.0
        %4410 = vmatprep.subr.mxu0 0.0
        %4411 = vmatpush1.msra.mxu0 0.0
        %4412 = vmatprep.subr.mxu0 0.0
        %4413 = vmatpush1.msra.mxu0 0.0
        %4414 = vmatprep.subr.mxu0 0.0
        %4415 = vmatpush1.msra.mxu0 0.0
        %4416 = vmatprep.subr.mxu0 0.0
        %4417 = vmatpush1.msra.mxu0 0.0
        %4418 = vmatprep.subr.mxu0 0.0
        %4419 = vmatpush1.msra.mxu0 0.0
        %4420 = vmatprep.subr.mxu0 0.0
        %4421 = vmatpush1.msra.mxu0 0.0
        %4422 = vmatprep.subr.mxu0 0.0
        %4423 = vmatpush1.msra.mxu0 0.0
        %4424 = vmatprep.subr.mxu0 0.0
        %4425 = vmatpush1.msra.mxu0 0.0
        %4426 = vmatprep.subr.mxu0 0.0
        %4427 = vmatpush1.msra.mxu0 0.0
        %4428 = vmatprep.subr.mxu0 0.0
        %4429 = vmatpush1.msra.mxu0 0.0
        %4430 = vmatprep.subr.mxu0 0.0
        %4431 = vmatpush1.msra.mxu0 0.0
        %4432 = vmatprep.subr.mxu0 0.0
        %4433 = vmatpush1.msra.mxu0 0.0
        %4434 = vmatprep.subr.mxu0 0.0
        %4435 = vmatpush1.msra.mxu0 0.0
        %4436 = vmatprep.mubr.f32.mxu0 0.0
        %4437 = vmatmul.mubr.f32.gmra.mrb[0].mxu0 %v4349
        %v4438 = vpop.f32.mrb[0].mxu0
        %v4439 = vadd.f32 %v4310, %v4438
        %v4440 = vpop.f32.mrb[0].mxu0
        %4441 = vmatprep.mubr.f32.mxu0 0.0
        %4442 = vmatmul.mubr.f32.gmra.mrb[0].mxu0 %v4352
        %v4443 = vpop.f32.mrb[0].mxu0
        %v4444 = vadd.f32 %v4315, %v4443
        %v4445 = vpop.f32.mrb[0].mxu0
        %4446 = vmatprep.mubr.f32.mxu0 0.0
        %4447 = vmatmul.mubr.f32.gmra.mrb[0].mxu0 %v4355
        %v4448 = vpop.f32.mrb[0].mxu0
        %v4449 = vadd.f32 %v4320, %v4448
        %v4450 = vpop.f32.mrb[0].mxu0
        %4451 = vmatprep.mubr.f32.mxu0 0.0
        %4452 = vmatmul.mubr.f32.gmra.mrb[0].mxu0 %v4358
        %v4453 = vpop.f32.mrb[0].mxu0
        %v4454 = vadd.f32 %v4325, %v4453
        %v4455 = vpop.f32.mrb[0].mxu0
        %4456 = vmatprep.mubr.f32.mxu0 0.0
        %4457 = vmatmul.mubr.f32.gmra.mrb[0].mxu0 %v4361
        %v4458 = vpop.f32.mrb[0].mxu0
        %v4459 = vadd.f32 %v4330, %v4458
        %v4460 = vpop.f32.mrb[0].mxu0
        %4461 = vmatprep.mubr.f32.mxu0 0.0
        %4462 = vmatmul.mubr.f32.gmra.mrb[0].mxu0 %v4364
        %v4463 = vpop.f32.mrb[0].mxu0
        %v4464 = vadd.f32 %v4335, %v4463
        %v4465 = vpop.f32.mrb[0].mxu0
        %4466 = vmatprep.mubr.f32.mxu0 0.0
        %4467 = vmatmul.mubr.f32.gmra.mrb[0].mxu0 %v4367
        %v4468 = vpop.f32.mrb[0].mxu0
        %v4469 = vadd.f32 %v4340, %v4468
        %v4470 = vpop.f32.mrb[0].mxu0
        %4471 = vmatprep.mubr.f32.mxu0 0.0
        %4472 = vmatmul.mubr.f32.gmra.mrb[0].mxu0 %v4370
        %v4473 = vpop.f32.mrb[0].mxu0
        %v4474 = vadd.f32 %v4345, %v4473
        %v4475 = vpop.f32.mrb[0].mxu0
        %4476 = vdwg.mxu0
        %v4477 = vld [vmem:[%s867 + $0x9] sm:$0xff]
        %v4478 = vld [vmem:[%s867 + $0x11] sm:$0xff]
        %v4479 = vld [vmem:[%s867 + $0x19] sm:$0xff]
        %v4480 = vld [vmem:[%s867 + $0x21] sm:$0xff]
        %v4481 = vld [vmem:[%s867 + $0x29] sm:$0xff]
        %v4482 = vld [vmem:[%s867 + $0x31] sm:$0xff]
        %v4483 = vld [vmem:[%s867 + $0x39] sm:$0xff]
        %v4484 = vld [vmem:[%s867 + $0x41] sm:$0xff]
        %v4485 = vld [vmem:[%s1539] sm:$0xff]
        %v4487 = vsel %vm467, %v4477, 0
        %v4490 = vsel %vm467, %v4478, 0
        %v4493 = vsel %vm467, %v4479, 0
        %v4496 = vsel %vm467, %v4480, 0
        %v4499 = vsel %vm467, %v4481, 0
        %v4502 = vsel %vm467, %v4482, 0
        %v4505 = vsel %vm467, %v4483, 0
        %v4508 = vsel %vm467, %v4484, 0
        %4510 = vmatprep.subr.mxu0 0.0
        %4511 = vmatpush1.msra.mxu0 %v4485
        %4512 = vmatprep.subr.mxu0 0.0
        %4513 = vmatpush1.msra.mxu0 0.0
        %4514 = vmatprep.subr.mxu0 0.0
        %4515 = vmatpush1.msra.mxu0 0.0
        %4516 = vmatprep.subr.mxu0 0.0
        %4517 = vmatpush1.msra.mxu0 0.0
        %4518 = vmatprep.subr.mxu0 0.0
        %4519 = vmatpush1.msra.mxu0 0.0
        %4520 = vmatprep.subr.mxu0 0.0
        %4521 = vmatpush1.msra.mxu0 0.0
        %4522 = vmatprep.subr.mxu0 0.0
        %4523 = vmatpush1.msra.mxu0 0.0
        %4524 = vmatprep.subr.mxu0 0.0
        %4525 = vmatpush1.msra.mxu0 0.0
        %4526 = vmatprep.subr.mxu0 0.0
        %4527 = vmatpush1.msra.mxu0 0.0
        %4528 = vmatprep.subr.mxu0 0.0
        %4529 = vmatpush1.msra.mxu0 0.0
        %4530 = vmatprep.subr.mxu0 0.0
        %4531 = vmatpush1.msra.mxu0 0.0
        %4532 = vmatprep.subr.mxu0 0.0
        %4533 = vmatpush1.msra.mxu0 0.0
        %4534 = vmatprep.subr.mxu0 0.0
        %4535 = vmatpush1.msra.mxu0 0.0
        %4536 = vmatprep.subr.mxu0 0.0
        %4537 = vmatpush1.msra.mxu0 0.0
        %4538 = vmatprep.subr.mxu0 0.0
        %4539 = vmatpush1.msra.mxu0 0.0
        %4540 = vmatprep.subr.mxu0 0.0
        %4541 = vmatpush1.msra.mxu0 0.0
        %4542 = vmatprep.subr.mxu0 0.0
        %4543 = vmatpush1.msra.mxu0 0.0
        %4544 = vmatprep.subr.mxu0 0.0
        %4545 = vmatpush1.msra.mxu0 0.0
        %4546 = vmatprep.subr.mxu0 0.0
        %4547 = vmatpush1.msra.mxu0 0.0
        %4548 = vmatprep.subr.mxu0 0.0
        %4549 = vmatpush1.msra.mxu0 0.0
        %4550 = vmatprep.subr.mxu0 0.0
        %4551 = vmatpush1.msra.mxu0 0.0
        %4552 = vmatprep.subr.mxu0 0.0
        %4553 = vmatpush1.msra.mxu0 0.0
        %4554 = vmatprep.subr.mxu0 0.0
        %4555 = vmatpush1.msra.mxu0 0.0
        %4556 = vmatprep.subr.mxu0 0.0
        %4557 = vmatpush1.msra.mxu0 0.0
        %4558 = vmatprep.subr.mxu0 0.0
        %4559 = vmatpush1.msra.mxu0 0.0
        %4560 = vmatprep.subr.mxu0 0.0
        %4561 = vmatpush1.msra.mxu0 0.0
        %4562 = vmatprep.subr.mxu0 0.0
        %4563 = vmatpush1.msra.mxu0 0.0
        %4564 = vmatprep.subr.mxu0 0.0
        %4565 = vmatpush1.msra.mxu0 0.0
        %4566 = vmatprep.subr.mxu0 0.0
        %4567 = vmatpush1.msra.mxu0 0.0
        %4568 = vmatprep.subr.mxu0 0.0
        %4569 = vmatpush1.msra.mxu0 0.0
        %4570 = vmatprep.subr.mxu0 0.0
        %4571 = vmatpush1.msra.mxu0 0.0
        %4572 = vmatprep.subr.mxu0 0.0
        %4573 = vmatpush1.msra.mxu0 0.0
        %4574 = vmatprep.mubr.f32.mxu0 0.0
        %4575 = vmatmul.mubr.f32.gmra.mrb[0].mxu0 %v4487
        %v4576 = vpop.f32.mrb[0].mxu0
        %v4577 = vadd.f32 0.0, %v4576
        %v4578 = vpop.f32.mrb[0].mxu0
        %4579 = vmatprep.mubr.f32.mxu0 0.0
        %4580 = vmatmul.mubr.f32.gmra.mrb[0].mxu0 %v4490
        %v4581 = vpop.f32.mrb[0].mxu0
        %v4582 = vadd.f32 0.0, %v4581
        %v4583 = vpop.f32.mrb[0].mxu0
        %4584 = vmatprep.mubr.f32.mxu0 0.0
        %4585 = vmatmul.mubr.f32.gmra.mrb[0].mxu0 %v4493
        %v4586 = vpop.f32.mrb[0].mxu0
        %v4587 = vadd.f32 0.0, %v4586
        %v4588 = vpop.f32.mrb[0].mxu0
        %4589 = vmatprep.mubr.f32.mxu0 0.0
        %4590 = vmatmul.mubr.f32.gmra.mrb[0].mxu0 %v4496
        %v4591 = vpop.f32.mrb[0].mxu0
        %v4592 = vadd.f32 0.0, %v4591
        %v4593 = vpop.f32.mrb[0].mxu0
        %4594 = vmatprep.mubr.f32.mxu0 0.0
        %4595 = vmatmul.mubr.f32.gmra.mrb[0].mxu0 %v4499
        %v4596 = vpop.f32.mrb[0].mxu0
        %v4597 = vadd.f32 0.0, %v4596
        %v4598 = vpop.f32.mrb[0].mxu0
        %4599 = vmatprep.mubr.f32.mxu0 0.0
        %4600 = vmatmul.mubr.f32.gmra.mrb[0].mxu0 %v4502
        %v4601 = vpop.f32.mrb[0].mxu0
        %v4602 = vadd.f32 0.0, %v4601
        %v4603 = vpop.f32.mrb[0].mxu0
        %4604 = vmatprep.mubr.f32.mxu0 0.0
        %4605 = vmatmul.mubr.f32.gmra.mrb[0].mxu0 %v4505
        %v4606 = vpop.f32.mrb[0].mxu0
        %v4607 = vadd.f32 0.0, %v4606
        %v4608 = vpop.f32.mrb[0].mxu0
        %4609 = vmatprep.mubr.f32.mxu0 0.0
        %4610 = vmatmul.mubr.f32.gmra.mrb[0].mxu0 %v4508
        %v4611 = vpop.f32.mrb[0].mxu0
        %v4612 = vadd.f32 0.0, %v4611
        %v4613 = vpop.f32.mrb[0].mxu0
        %4614 = vdwg.mxu0
        %v4615 = vadd.f32 %v4439, %v4577
        %v4616 = vadd.f32 %v4444, %v4582
        %v4617 = vadd.f32 %v4449, %v4587
        %v4618 = vadd.f32 %v4454, %v4592
        %v4619 = vadd.f32 %v4459, %v4597
        %v4620 = vadd.f32 %v4464, %v4602
        %v4621 = vadd.f32 %v4469, %v4607
        %v4622 = vadd.f32 %v4474, %v4612
        %v4623 = vld [vmem:[%s1197 + $0x8] sm:$0xff]
        %v4624 = vld [vmem:[%s1197 + $0x10] sm:$0xff]
        %v4625 = vld [vmem:[%s1197 + $0x18] sm:$0xff]
        %v4626 = vld [vmem:[%s1197 + $0x20] sm:$0xff]
        %v4627 = vld [vmem:[%s1197 + $0x28] sm:$0xff]
        %v4628 = vld [vmem:[%s1197 + $0x30] sm:$0xff]
        %v4629 = vld [vmem:[%s1197 + $0x38] sm:$0xff]
        %v4630 = vld [vmem:[%s1197 + $0x40] sm:$0xff]
        %v4631 = vmul.f32 %v4623, %v1217
        %v4632 = vmul.f32 %v4624, %v1222
        %v4633 = vmul.f32 %v4625, %v1227
        %v4634 = vmul.f32 %v4626, %v1232
        %v4635 = vmul.f32 %v4627, %v1237
        %v4636 = vmul.f32 %v4628, %v1242
        %v4637 = vmul.f32 %v4629, %v1247
        %v4638 = vmul.f32 %v4630, %v1252
        %v4639 = vld [vmem:[%s1694] sm:$0xff]
        %v4641 = vsel %vm467, %v4631, 0
        %v4644 = vsel %vm467, %v4632, 0
        %v4647 = vsel %vm467, %v4633, 0
        %v4650 = vsel %vm467, %v4634, 0
        %v4653 = vsel %vm467, %v4635, 0
        %v4656 = vsel %vm467, %v4636, 0
        %v4659 = vsel %vm467, %v4637, 0
        %v4662 = vsel %vm467, %v4638, 0
        %4664 = vmatprep.subr.mxu0 0.0
        %4665 = vmatpush1.msra.mxu0 %v4639
        %4666 = vmatprep.subr.mxu0 0.0
        %4667 = vmatpush1.msra.mxu0 0.0
        %4668 = vmatprep.subr.mxu0 0.0
        %4669 = vmatpush1.msra.mxu0 0.0
        %4670 = vmatprep.subr.mxu0 0.0
        %4671 = vmatpush1.msra.mxu0 0.0
        %4672 = vmatprep.subr.mxu0 0.0
        %4673 = vmatpush1.msra.mxu0 0.0
        %4674 = vmatprep.subr.mxu0 0.0
        %4675 = vmatpush1.msra.mxu0 0.0
        %4676 = vmatprep.subr.mxu0 0.0
        %4677 = vmatpush1.msra.mxu0 0.0
        %4678 = vmatprep.subr.mxu0 0.0
        %4679 = vmatpush1.msra.mxu0 0.0
        %4680 = vmatprep.subr.mxu0 0.0
        %4681 = vmatpush1.msra.mxu0 0.0
        %4682 = vmatprep.subr.mxu0 0.0
        %4683 = vmatpush1.msra.mxu0 0.0
        %4684 = vmatprep.subr.mxu0 0.0
        %4685 = vmatpush1.msra.mxu0 0.0
        %4686 = vmatprep.subr.mxu0 0.0
        %4687 = vmatpush1.msra.mxu0 0.0
        %4688 = vmatprep.subr.mxu0 0.0
        %4689 = vmatpush1.msra.mxu0 0.0
        %4690 = vmatprep.subr.mxu0 0.0
        %4691 = vmatpush1.msra.mxu0 0.0
        %4692 = vmatprep.subr.mxu0 0.0
        %4693 = vmatpush1.msra.mxu0 0.0
        %4694 = vmatprep.subr.mxu0 0.0
        %4695 = vmatpush1.msra.mxu0 0.0
        %4696 = vmatprep.subr.mxu0 0.0
        %4697 = vmatpush1.msra.mxu0 0.0
        %4698 = vmatprep.subr.mxu0 0.0
        %4699 = vmatpush1.msra.mxu0 0.0
        %4700 = vmatprep.subr.mxu0 0.0
        %4701 = vmatpush1.msra.mxu0 0.0
        %4702 = vmatprep.subr.mxu0 0.0
        %4703 = vmatpush1.msra.mxu0 0.0
        %4704 = vmatprep.subr.mxu0 0.0
        %4705 = vmatpush1.msra.mxu0 0.0
        %4706 = vmatprep.subr.mxu0 0.0
        %4707 = vmatpush1.msra.mxu0 0.0
        %4708 = vmatprep.subr.mxu0 0.0
        %4709 = vmatpush1.msra.mxu0 0.0
        %4710 = vmatprep.subr.mxu0 0.0
        %4711 = vmatpush1.msra.mxu0 0.0
        %4712 = vmatprep.subr.mxu0 0.0
        %4713 = vmatpush1.msra.mxu0 0.0
        %4714 = vmatprep.subr.mxu0 0.0
        %4715 = vmatpush1.msra.mxu0 0.0
        %4716 = vmatprep.subr.mxu0 0.0
        %4717 = vmatpush1.msra.mxu0 0.0
        %4718 = vmatprep.subr.mxu0 0.0
        %4719 = vmatpush1.msra.mxu0 0.0
        %4720 = vmatprep.subr.mxu0 0.0
        %4721 = vmatpush1.msra.mxu0 0.0
        %4722 = vmatprep.subr.mxu0 0.0
        %4723 = vmatpush1.msra.mxu0 0.0
        %4724 = vmatprep.subr.mxu0 0.0
        %4725 = vmatpush1.msra.mxu0 0.0
        %4726 = vmatprep.subr.mxu0 0.0
        %4727 = vmatpush1.msra.mxu0 0.0
        %4728 = vmatprep.mubr.f32.mxu0 0.0
        %4729 = vmatmul.mubr.f32.gmra.mrb[0].mxu0 %v4641
        %v4730 = vpop.f32.mrb[0].mxu0
        %v4731 = vadd.f32 0.0, %v4730
        %v4732 = vpop.f32.mrb[0].mxu0
        %4733 = vmatprep.mubr.f32.mxu0 0.0
        %4734 = vmatmul.mubr.f32.gmra.mrb[0].mxu0 %v4644
        %v4735 = vpop.f32.mrb[0].mxu0
        %v4736 = vadd.f32 0.0, %v4735
        %v4737 = vpop.f32.mrb[0].mxu0
        %4738 = vmatprep.mubr.f32.mxu0 0.0
        %4739 = vmatmul.mubr.f32.gmra.mrb[0].mxu0 %v4647
        %v4740 = vpop.f32.mrb[0].mxu0
        %v4741 = vadd.f32 0.0, %v4740
        %v4742 = vpop.f32.mrb[0].mxu0
        %4743 = vmatprep.mubr.f32.mxu0 0.0
        %4744 = vmatmul.mubr.f32.gmra.mrb[0].mxu0 %v4650
        %v4745 = vpop.f32.mrb[0].mxu0
        %v4746 = vadd.f32 0.0, %v4745
        %v4747 = vpop.f32.mrb[0].mxu0
        %4748 = vmatprep.mubr.f32.mxu0 0.0
        %4749 = vmatmul.mubr.f32.gmra.mrb[0].mxu0 %v4653
        %v4750 = vpop.f32.mrb[0].mxu0
        %v4751 = vadd.f32 0.0, %v4750
        %v4752 = vpop.f32.mrb[0].mxu0
        %4753 = vmatprep.mubr.f32.mxu0 0.0
        %4754 = vmatmul.mubr.f32.gmra.mrb[0].mxu0 %v4656
        %v4755 = vpop.f32.mrb[0].mxu0
        %v4756 = vadd.f32 0.0, %v4755
        %v4757 = vpop.f32.mrb[0].mxu0
        %4758 = vmatprep.mubr.f32.mxu0 0.0
        %4759 = vmatmul.mubr.f32.gmra.mrb[0].mxu0 %v4659
        %v4760 = vpop.f32.mrb[0].mxu0
        %v4761 = vadd.f32 0.0, %v4760
        %v4762 = vpop.f32.mrb[0].mxu0
        %4763 = vmatprep.mubr.f32.mxu0 0.0
        %4764 = vmatmul.mubr.f32.gmra.mrb[0].mxu0 %v4662
        %v4765 = vpop.f32.mrb[0].mxu0
        %v4766 = vadd.f32 0.0, %v4765
        %v4767 = vpop.f32.mrb[0].mxu0
        %4768 = vdwg.mxu0
        %v4769 = vadd.f32 %v4615, %v4731
        %v4770 = vadd.f32 %v4616, %v4736
        %v4771 = vadd.f32 %v4617, %v4741
        %v4772 = vadd.f32 %v4618, %v4746
        %v4773 = vadd.f32 %v4619, %v4751
        %v4774 = vadd.f32 %v4620, %v4756
        %v4775 = vadd.f32 %v4621, %v4761
        %v4776 = vadd.f32 %v4622, %v4766
        %v4777 = vld [vmem:[%s1032 + $0x9] sm:$0xff]
        %v4778 = vld [vmem:[%s1032 + $0x11] sm:$0xff]
        %v4779 = vld [vmem:[%s1032 + $0x19] sm:$0xff]
        %v4780 = vld [vmem:[%s1032 + $0x21] sm:$0xff]
        %v4781 = vld [vmem:[%s1032 + $0x29] sm:$0xff]
        %v4782 = vld [vmem:[%s1032 + $0x31] sm:$0xff]
        %v4783 = vld [vmem:[%s1032 + $0x39] sm:$0xff]
        %v4784 = vld [vmem:[%s1032 + $0x41] sm:$0xff]
        %v4785 = vld [vmem:[%s1841] sm:$0xff]
        %v4787 = vsel %vm467, %v4777, 0
        %v4790 = vsel %vm467, %v4778, 0
        %v4793 = vsel %vm467, %v4779, 0
        %v4796 = vsel %vm467, %v4780, 0
        %v4799 = vsel %vm467, %v4781, 0
        %v4802 = vsel %vm467, %v4782, 0
        %v4805 = vsel %vm467, %v4783, 0
        %v4808 = vsel %vm467, %v4784, 0
        %4810 = vmatprep.subr.mxu0 0.0
        %4811 = vmatpush1.msra.mxu0 %v4785
        %4812 = vmatprep.subr.mxu0 0.0
        %4813 = vmatpush1.msra.mxu0 0.0
        %4814 = vmatprep.subr.mxu0 0.0
        %4815 = vmatpush1.msra.mxu0 0.0
        %4816 = vmatprep.subr.mxu0 0.0
        %4817 = vmatpush1.msra.mxu0 0.0
        %4818 = vmatprep.subr.mxu0 0.0
        %4819 = vmatpush1.msra.mxu0 0.0
        %4820 = vmatprep.subr.mxu0 0.0
        %4821 = vmatpush1.msra.mxu0 0.0
        %4822 = vmatprep.subr.mxu0 0.0
        %4823 = vmatpush1.msra.mxu0 0.0
        %4824 = vmatprep.subr.mxu0 0.0
        %4825 = vmatpush1.msra.mxu0 0.0
        %4826 = vmatprep.subr.mxu0 0.0
        %4827 = vmatpush1.msra.mxu0 0.0
        %4828 = vmatprep.subr.mxu0 0.0
        %4829 = vmatpush1.msra.mxu0 0.0
        %4830 = vmatprep.subr.mxu0 0.0
        %4831 = vmatpush1.msra.mxu0 0.0
        %4832 = vmatprep.subr.mxu0 0.0
        %4833 = vmatpush1.msra.mxu0 0.0
        %4834 = vmatprep.subr.mxu0 0.0
        %4835 = vmatpush1.msra.mxu0 0.0
        %4836 = vmatprep.subr.mxu0 0.0
        %4837 = vmatpush1.msra.mxu0 0.0
        %4838 = vmatprep.subr.mxu0 0.0
        %4839 = vmatpush1.msra.mxu0 0.0
        %4840 = vmatprep.subr.mxu0 0.0
        %4841 = vmatpush1.msra.mxu0 0.0
        %4842 = vmatprep.subr.mxu0 0.0
        %4843 = vmatpush1.msra.mxu0 0.0
        %4844 = vmatprep.subr.mxu0 0.0
        %4845 = vmatpush1.msra.mxu0 0.0
        %4846 = vmatprep.subr.mxu0 0.0
        %4847 = vmatpush1.msra.mxu0 0.0
        %4848 = vmatprep.subr.mxu0 0.0
        %4849 = vmatpush1.msra.mxu0 0.0
        %4850 = vmatprep.subr.mxu0 0.0
        %4851 = vmatpush1.msra.mxu0 0.0
        %4852 = vmatprep.subr.mxu0 0.0
        %4853 = vmatpush1.msra.mxu0 0.0
        %4854 = vmatprep.subr.mxu0 0.0
        %4855 = vmatpush1.msra.mxu0 0.0
        %4856 = vmatprep.subr.mxu0 0.0
        %4857 = vmatpush1.msra.mxu0 0.0
        %4858 = vmatprep.subr.mxu0 0.0
        %4859 = vmatpush1.msra.mxu0 0.0
        %4860 = vmatprep.subr.mxu0 0.0
        %4861 = vmatpush1.msra.mxu0 0.0
        %4862 = vmatprep.subr.mxu0 0.0
        %4863 = vmatpush1.msra.mxu0 0.0
        %4864 = vmatprep.subr.mxu0 0.0
        %4865 = vmatpush1.msra.mxu0 0.0
        %4866 = vmatprep.subr.mxu0 0.0
        %4867 = vmatpush1.msra.mxu0 0.0
        %4868 = vmatprep.subr.mxu0 0.0
        %4869 = vmatpush1.msra.mxu0 0.0
        %4870 = vmatprep.subr.mxu0 0.0
        %4871 = vmatpush1.msra.mxu0 0.0
        %4872 = vmatprep.subr.mxu0 0.0
        %4873 = vmatpush1.msra.mxu0 0.0
        %4874 = vmatprep.mubr.f32.mxu0 0.0
        %4875 = vmatmul.mubr.f32.gmra.mrb[0].mxu0 %v4787
        %v4876 = vpop.f32.mrb[0].mxu0
        %v4877 = vadd.f32 0.0, %v4876
        %v4878 = vpop.f32.mrb[0].mxu0
        %4879 = vmatprep.mubr.f32.mxu0 0.0
        %4880 = vmatmul.mubr.f32.gmra.mrb[0].mxu0 %v4790
        %v4881 = vpop.f32.mrb[0].mxu0
        %v4882 = vadd.f32 0.0, %v4881
        %v4883 = vpop.f32.mrb[0].mxu0
        %4884 = vmatprep.mubr.f32.mxu0 0.0
        %4885 = vmatmul.mubr.f32.gmra.mrb[0].mxu0 %v4793
        %v4886 = vpop.f32.mrb[0].mxu0
        %v4887 = vadd.f32 0.0, %v4886
        %v4888 = vpop.f32.mrb[0].mxu0
        %4889 = vmatprep.mubr.f32.mxu0 0.0
        %4890 = vmatmul.mubr.f32.gmra.mrb[0].mxu0 %v4796
        %v4891 = vpop.f32.mrb[0].mxu0
        %v4892 = vadd.f32 0.0, %v4891
        %v4893 = vpop.f32.mrb[0].mxu0
        %4894 = vmatprep.mubr.f32.mxu0 0.0
        %4895 = vmatmul.mubr.f32.gmra.mrb[0].mxu0 %v4799
        %v4896 = vpop.f32.mrb[0].mxu0
        %v4897 = vadd.f32 0.0, %v4896
        %v4898 = vpop.f32.mrb[0].mxu0
        %4899 = vmatprep.mubr.f32.mxu0 0.0
        %4900 = vmatmul.mubr.f32.gmra.mrb[0].mxu0 %v4802
        %v4901 = vpop.f32.mrb[0].mxu0
        %v4902 = vadd.f32 0.0, %v4901
        %v4903 = vpop.f32.mrb[0].mxu0
        %4904 = vmatprep.mubr.f32.mxu0 0.0
        %4905 = vmatmul.mubr.f32.gmra.mrb[0].mxu0 %v4805
        %v4906 = vpop.f32.mrb[0].mxu0
        %v4907 = vadd.f32 0.0, %v4906
        %v4908 = vpop.f32.mrb[0].mxu0
        %4909 = vmatprep.mubr.f32.mxu0 0.0
        %4910 = vmatmul.mubr.f32.gmra.mrb[0].mxu0 %v4808
        %v4911 = vpop.f32.mrb[0].mxu0
        %v4912 = vadd.f32 0.0, %v4911
        %v4913 = vpop.f32.mrb[0].mxu0
        %4914 = vdwg.mxu0
        %v4915 = vadd.f32 %v4769, %v4877
        %v4916 = vadd.f32 %v4770, %v4882
        %v4917 = vadd.f32 %v4771, %v4887
        %v4918 = vadd.f32 %v4772, %v4892
        %v4919 = vadd.f32 %v4773, %v4897
        %v4920 = vadd.f32 %v4774, %v4902
        %v4921 = vadd.f32 %v4775, %v4907
        %v4922 = vadd.f32 %v4776, %v4912
        %v4923 = vld [vmem:[%s1197 + $0x9] sm:$0xff]
        %v4924 = vld [vmem:[%s1197 + $0x11] sm:$0xff]
        %v4925 = vld [vmem:[%s1197 + $0x19] sm:$0xff]
        %v4926 = vld [vmem:[%s1197 + $0x21] sm:$0xff]
        %v4927 = vld [vmem:[%s1197 + $0x29] sm:$0xff]
        %v4928 = vld [vmem:[%s1197 + $0x31] sm:$0xff]
        %v4929 = vld [vmem:[%s1197 + $0x39] sm:$0xff]
        %v4930 = vld [vmem:[%s1197 + $0x41] sm:$0xff]
        %v4931 = vld [vmem:[%s1988] sm:$0xff]
        %v4933 = vsel %vm467, %v4923, 0
        %v4936 = vsel %vm467, %v4924, 0
        %v4939 = vsel %vm467, %v4925, 0
        %v4942 = vsel %vm467, %v4926, 0
        %v4945 = vsel %vm467, %v4927, 0
        %v4948 = vsel %vm467, %v4928, 0
        %v4951 = vsel %vm467, %v4929, 0
        %v4954 = vsel %vm467, %v4930, 0
        %4956 = vmatprep.subr.mxu0 0.0
        %4957 = vmatpush1.msra.mxu0 %v4931
        %4958 = vmatprep.subr.mxu0 0.0
        %4959 = vmatpush1.msra.mxu0 0.0
        %4960 = vmatprep.subr.mxu0 0.0
        %4961 = vmatpush1.msra.mxu0 0.0
        %4962 = vmatprep.subr.mxu0 0.0
        %4963 = vmatpush1.msra.mxu0 0.0
        %4964 = vmatprep.subr.mxu0 0.0
        %4965 = vmatpush1.msra.mxu0 0.0
        %4966 = vmatprep.subr.mxu0 0.0
        %4967 = vmatpush1.msra.mxu0 0.0
        %4968 = vmatprep.subr.mxu0 0.0
        %4969 = vmatpush1.msra.mxu0 0.0
        %4970 = vmatprep.subr.mxu0 0.0
        %4971 = vmatpush1.msra.mxu0 0.0
        %4972 = vmatprep.subr.mxu0 0.0
        %4973 = vmatpush1.msra.mxu0 0.0
        %4974 = vmatprep.subr.mxu0 0.0
        %4975 = vmatpush1.msra.mxu0 0.0
        %4976 = vmatprep.subr.mxu0 0.0
        %4977 = vmatpush1.msra.mxu0 0.0
        %4978 = vmatprep.subr.mxu0 0.0
        %4979 = vmatpush1.msra.mxu0 0.0
        %4980 = vmatprep.subr.mxu0 0.0
        %4981 = vmatpush1.msra.mxu0 0.0
        %4982 = vmatprep.subr.mxu0 0.0
        %4983 = vmatpush1.msra.mxu0 0.0
        %4984 = vmatprep.subr.mxu0 0.0
        %4985 = vmatpush1.msra.mxu0 0.0
        %4986 = vmatprep.subr.mxu0 0.0
        %4987 = vmatpush1.msra.mxu0 0.0
        %4988 = vmatprep.subr.mxu0 0.0
        %4989 = vmatpush1.msra.mxu0 0.0
        %4990 = vmatprep.subr.mxu0 0.0
        %4991 = vmatpush1.msra.mxu0 0.0
        %4992 = vmatprep.subr.mxu0 0.0
        %4993 = vmatpush1.msra.mxu0 0.0
        %4994 = vmatprep.subr.mxu0 0.0
        %4995 = vmatpush1.msra.mxu0 0.0
        %4996 = vmatprep.subr.mxu0 0.0
        %4997 = vmatpush1.msra.mxu0 0.0
        %4998 = vmatprep.subr.mxu0 0.0
        %4999 = vmatpush1.msra.mxu0 0.0
        %5000 = vmatprep.subr.mxu0 0.0
        %5001 = vmatpush1.msra.mxu0 0.0
        %5002 = vmatprep.subr.mxu0 0.0
        %5003 = vmatpush1.msra.mxu0 0.0
        %5004 = vmatprep.subr.mxu0 0.0
        %5005 = vmatpush1.msra.mxu0 0.0
        %5006 = vmatprep.subr.mxu0 0.0
        %5007 = vmatpush1.msra.mxu0 0.0
        %5008 = vmatprep.subr.mxu0 0.0
        %5009 = vmatpush1.msra.mxu0 0.0
        %5010 = vmatprep.subr.mxu0 0.0
        %5011 = vmatpush1.msra.mxu0 0.0
        %5012 = vmatprep.subr.mxu0 0.0
        %5013 = vmatpush1.msra.mxu0 0.0
        %5014 = vmatprep.subr.mxu0 0.0
        %5015 = vmatpush1.msra.mxu0 0.0
        %5016 = vmatprep.subr.mxu0 0.0
        %5017 = vmatpush1.msra.mxu0 0.0
        %5018 = vmatprep.subr.mxu0 0.0
        %5019 = vmatpush1.msra.mxu0 0.0
        %5020 = vmatprep.mubr.f32.mxu0 0.0
        %5021 = vmatmul.mubr.f32.gmra.mrb[0].mxu0 %v4933
        %v5022 = vpop.f32.mrb[0].mxu0
        %v5023 = vadd.f32 0.0, %v5022
        %v5024 = vpop.f32.mrb[0].mxu0
        %5025 = vmatprep.mubr.f32.mxu0 0.0
        %5026 = vmatmul.mubr.f32.gmra.mrb[0].mxu0 %v4936
        %v5027 = vpop.f32.mrb[0].mxu0
        %v5028 = vadd.f32 0.0, %v5027
        %v5029 = vpop.f32.mrb[0].mxu0
        %5030 = vmatprep.mubr.f32.mxu0 0.0
        %5031 = vmatmul.mubr.f32.gmra.mrb[0].mxu0 %v4939
        %v5032 = vpop.f32.mrb[0].mxu0
        %v5033 = vadd.f32 0.0, %v5032
        %v5034 = vpop.f32.mrb[0].mxu0
        %5035 = vmatprep.mubr.f32.mxu0 0.0
        %5036 = vmatmul.mubr.f32.gmra.mrb[0].mxu0 %v4942
        %v5037 = vpop.f32.mrb[0].mxu0
        %v5038 = vadd.f32 0.0, %v5037
        %v5039 = vpop.f32.mrb[0].mxu0
        %5040 = vmatprep.mubr.f32.mxu0 0.0
        %5041 = vmatmul.mubr.f32.gmra.mrb[0].mxu0 %v4945
        %v5042 = vpop.f32.mrb[0].mxu0
        %v5043 = vadd.f32 0.0, %v5042
        %v5044 = vpop.f32.mrb[0].mxu0
        %5045 = vmatprep.mubr.f32.mxu0 0.0
        %5046 = vmatmul.mubr.f32.gmra.mrb[0].mxu0 %v4948
        %v5047 = vpop.f32.mrb[0].mxu0
        %v5048 = vadd.f32 0.0, %v5047
        %v5049 = vpop.f32.mrb[0].mxu0
        %5050 = vmatprep.mubr.f32.mxu0 0.0
        %5051 = vmatmul.mubr.f32.gmra.mrb[0].mxu0 %v4951
        %v5052 = vpop.f32.mrb[0].mxu0
        %v5053 = vadd.f32 0.0, %v5052
        %v5054 = vpop.f32.mrb[0].mxu0
        %5055 = vmatprep.mubr.f32.mxu0 0.0
        %5056 = vmatmul.mubr.f32.gmra.mrb[0].mxu0 %v4954
        %v5057 = vpop.f32.mrb[0].mxu0
        %v5058 = vadd.f32 0.0, %v5057
        %v5059 = vpop.f32.mrb[0].mxu0
        %5060 = vdwg.mxu0
        %v5061 = vadd.f32 %v4915, %v5023
        %v5062 = vadd.f32 %v4916, %v5028
        %v5063 = vadd.f32 %v4917, %v5033
        %v5064 = vadd.f32 %v4918, %v5038
        %v5065 = vadd.f32 %v4919, %v5043
        %v5066 = vadd.f32 %v4920, %v5048
        %v5067 = vadd.f32 %v4921, %v5053
        %v5068 = vadd.f32 %v4922, %v5058
        %v5069 = vld [vmem:[%s867 + $0x10] sm:$0xff]
        %v5070 = vld [vmem:[%s867 + $0x18] sm:$0xff]
        %v5071 = vld [vmem:[%s867 + $0x20] sm:$0xff]
        %v5072 = vld [vmem:[%s867 + $0x28] sm:$0xff]
        %v5073 = vld [vmem:[%s867 + $0x30] sm:$0xff]
        %v5074 = vld [vmem:[%s867 + $0x38] sm:$0xff]
        %v5075 = vld [vmem:[%s867 + $0x40] sm:$0xff]
        %v5076 = vld [vmem:[%s867 + $0x48] sm:$0xff]
        %v5077 = vmul.f32 %v5069, %v1217
        %v5078 = vmul.f32 %v5070, %v1222
        %v5079 = vmul.f32 %v5071, %v1227
        %v5080 = vmul.f32 %v5072, %v1232
        %v5081 = vmul.f32 %v5073, %v1237
        %v5082 = vmul.f32 %v5074, %v1242
        %v5083 = vmul.f32 %v5075, %v1247
        %v5084 = vmul.f32 %v5076, %v1252
        %v5085 = vld [vmem:[%s2143] sm:$0xff]
        %v5087 = vsel %vm467, %v5077, 0
        %v5090 = vsel %vm467, %v5078, 0
        %v5093 = vsel %vm467, %v5079, 0
        %v5096 = vsel %vm467, %v5080, 0
        %v5099 = vsel %vm467, %v5081, 0
        %v5102 = vsel %vm467, %v5082, 0
        %v5105 = vsel %vm467, %v5083, 0
        %v5108 = vsel %vm467, %v5084, 0
        %5110 = vmatprep.subr.mxu0 0.0
        %5111 = vmatpush1.msra.mxu0 %v5085
        %5112 = vmatprep.subr.mxu0 0.0
        %5113 = vmatpush1.msra.mxu0 0.0
        %5114 = vmatprep.subr.mxu0 0.0
        %5115 = vmatpush1.msra.mxu0 0.0
        %5116 = vmatprep.subr.mxu0 0.0
        %5117 = vmatpush1.msra.mxu0 0.0
        %5118 = vmatprep.subr.mxu0 0.0
        %5119 = vmatpush1.msra.mxu0 0.0
        %5120 = vmatprep.subr.mxu0 0.0
        %5121 = vmatpush1.msra.mxu0 0.0
        %5122 = vmatprep.subr.mxu0 0.0
        %5123 = vmatpush1.msra.mxu0 0.0
        %5124 = vmatprep.subr.mxu0 0.0
        %5125 = vmatpush1.msra.mxu0 0.0
        %5126 = vmatprep.subr.mxu0 0.0
        %5127 = vmatpush1.msra.mxu0 0.0
        %5128 = vmatprep.subr.mxu0 0.0
        %5129 = vmatpush1.msra.mxu0 0.0
        %5130 = vmatprep.subr.mxu0 0.0
        %5131 = vmatpush1.msra.mxu0 0.0
        %5132 = vmatprep.subr.mxu0 0.0
        %5133 = vmatpush1.msra.mxu0 0.0
        %5134 = vmatprep.subr.mxu0 0.0
        %5135 = vmatpush1.msra.mxu0 0.0
        %5136 = vmatprep.subr.mxu0 0.0
        %5137 = vmatpush1.msra.mxu0 0.0
        %5138 = vmatprep.subr.mxu0 0.0
        %5139 = vmatpush1.msra.mxu0 0.0
        %5140 = vmatprep.subr.mxu0 0.0
        %5141 = vmatpush1.msra.mxu0 0.0
        %5142 = vmatprep.subr.mxu0 0.0
        %5143 = vmatpush1.msra.mxu0 0.0
        %5144 = vmatprep.subr.mxu0 0.0
        %5145 = vmatpush1.msra.mxu0 0.0
        %5146 = vmatprep.subr.mxu0 0.0
        %5147 = vmatpush1.msra.mxu0 0.0
        %5148 = vmatprep.subr.mxu0 0.0
        %5149 = vmatpush1.msra.mxu0 0.0
        %5150 = vmatprep.subr.mxu0 0.0
        %5151 = vmatpush1.msra.mxu0 0.0
        %5152 = vmatprep.subr.mxu0 0.0
        %5153 = vmatpush1.msra.mxu0 0.0
        %5154 = vmatprep.subr.mxu0 0.0
        %5155 = vmatpush1.msra.mxu0 0.0
        %5156 = vmatprep.subr.mxu0 0.0
        %5157 = vmatpush1.msra.mxu0 0.0
        %5158 = vmatprep.subr.mxu0 0.0
        %5159 = vmatpush1.msra.mxu0 0.0
        %5160 = vmatprep.subr.mxu0 0.0
        %5161 = vmatpush1.msra.mxu0 0.0
        %5162 = vmatprep.subr.mxu0 0.0
        %5163 = vmatpush1.msra.mxu0 0.0
        %5164 = vmatprep.subr.mxu0 0.0
        %5165 = vmatpush1.msra.mxu0 0.0
        %5166 = vmatprep.subr.mxu0 0.0
        %5167 = vmatpush1.msra.mxu0 0.0
        %5168 = vmatprep.subr.mxu0 0.0
        %5169 = vmatpush1.msra.mxu0 0.0
        %5170 = vmatprep.subr.mxu0 0.0
        %5171 = vmatpush1.msra.mxu0 0.0
        %5172 = vmatprep.subr.mxu0 0.0
        %5173 = vmatpush1.msra.mxu0 0.0
        %5174 = vmatprep.mubr.f32.mxu0 0.0
        %5175 = vmatmul.mubr.f32.gmra.mrb[0].mxu0 %v5087
        %v5176 = vpop.f32.mrb[0].mxu0
        %v5177 = vadd.f32 0.0, %v5176
        %v5178 = vpop.f32.mrb[0].mxu0
        %5179 = vmatprep.mubr.f32.mxu0 0.0
        %5180 = vmatmul.mubr.f32.gmra.mrb[0].mxu0 %v5090
        %v5181 = vpop.f32.mrb[0].mxu0
        %v5182 = vadd.f32 0.0, %v5181
        %v5183 = vpop.f32.mrb[0].mxu0
        %5184 = vmatprep.mubr.f32.mxu0 0.0
        %5185 = vmatmul.mubr.f32.gmra.mrb[0].mxu0 %v5093
        %v5186 = vpop.f32.mrb[0].mxu0
        %v5187 = vadd.f32 0.0, %v5186
        %v5188 = vpop.f32.mrb[0].mxu0
        %5189 = vmatprep.mubr.f32.mxu0 0.0
        %5190 = vmatmul.mubr.f32.gmra.mrb[0].mxu0 %v5096
        %v5191 = vpop.f32.mrb[0].mxu0
        %v5192 = vadd.f32 0.0, %v5191
        %v5193 = vpop.f32.mrb[0].mxu0
        %5194 = vmatprep.mubr.f32.mxu0 0.0
        %5195 = vmatmul.mubr.f32.gmra.mrb[0].mxu0 %v5099
        %v5196 = vpop.f32.mrb[0].mxu0
        %v5197 = vadd.f32 0.0, %v5196
        %v5198 = vpop.f32.mrb[0].mxu0
        %5199 = vmatprep.mubr.f32.mxu0 0.0
        %5200 = vmatmul.mubr.f32.gmra.mrb[0].mxu0 %v5102
        %v5201 = vpop.f32.mrb[0].mxu0
        %v5202 = vadd.f32 0.0, %v5201
        %v5203 = vpop.f32.mrb[0].mxu0
        %5204 = vmatprep.mubr.f32.mxu0 0.0
        %5205 = vmatmul.mubr.f32.gmra.mrb[0].mxu0 %v5105
        %v5206 = vpop.f32.mrb[0].mxu0
        %v5207 = vadd.f32 0.0, %v5206
        %v5208 = vpop.f32.mrb[0].mxu0
        %5209 = vmatprep.mubr.f32.mxu0 0.0
        %5210 = vmatmul.mubr.f32.gmra.mrb[0].mxu0 %v5108
        %v5211 = vpop.f32.mrb[0].mxu0
        %v5212 = vadd.f32 0.0, %v5211
        %v5213 = vpop.f32.mrb[0].mxu0
        %5214 = vdwg.mxu0
        %v5215 = vadd.f32 %v5061, %v5177
        %v5216 = vadd.f32 %v5062, %v5182
        %v5217 = vadd.f32 %v5063, %v5187
        %v5218 = vadd.f32 %v5064, %v5192
        %v5219 = vadd.f32 %v5065, %v5197
        %v5220 = vadd.f32 %v5066, %v5202
        %v5221 = vadd.f32 %v5067, %v5207
        %v5222 = vadd.f32 %v5068, %v5212
        %v5223 = vld [vmem:[#allocation2 + $0x11] sm:$0xff]
        %v5224 = vld [vmem:[#allocation2 + $0x19] sm:$0xff]
        %v5225 = vld [vmem:[#allocation2 + $0x21] sm:$0xff]
        %v5226 = vld [vmem:[#allocation2 + $0x29] sm:$0xff]
        %v5227 = vld [vmem:[#allocation2 + $0x31] sm:$0xff]
        %v5228 = vld [vmem:[#allocation2 + $0x39] sm:$0xff]
        %v5229 = vld [vmem:[#allocation2 + $0x41] sm:$0xff]
        %v5230 = vld [vmem:[#allocation2 + $0x49] sm:$0xff]
        %v5231 = vld [vmem:[%s2290] sm:$0xff]
        %v5233 = vsel %vm467, %v5223, 0
        %v5236 = vsel %vm467, %v5224, 0
        %v5239 = vsel %vm467, %v5225, 0
        %v5242 = vsel %vm467, %v5226, 0
        %v5245 = vsel %vm467, %v5227, 0
        %v5248 = vsel %vm467, %v5228, 0
        %v5251 = vsel %vm467, %v5229, 0
        %v5254 = vsel %vm467, %v5230, 0
        %5256 = vmatprep.subr.mxu0 0.0
        %5257 = vmatpush1.msra.mxu0 %v5231
        %5258 = vmatprep.subr.mxu0 0.0
        %5259 = vmatpush1.msra.mxu0 0.0
        %5260 = vmatprep.subr.mxu0 0.0
        %5261 = vmatpush1.msra.mxu0 0.0
        %5262 = vmatprep.subr.mxu0 0.0
        %5263 = vmatpush1.msra.mxu0 0.0
        %5264 = vmatprep.subr.mxu0 0.0
        %5265 = vmatpush1.msra.mxu0 0.0
        %5266 = vmatprep.subr.mxu0 0.0
        %5267 = vmatpush1.msra.mxu0 0.0
        %5268 = vmatprep.subr.mxu0 0.0
        %5269 = vmatpush1.msra.mxu0 0.0
        %5270 = vmatprep.subr.mxu0 0.0
        %5271 = vmatpush1.msra.mxu0 0.0
        %5272 = vmatprep.subr.mxu0 0.0
        %5273 = vmatpush1.msra.mxu0 0.0
        %5274 = vmatprep.subr.mxu0 0.0
        %5275 = vmatpush1.msra.mxu0 0.0
        %5276 = vmatprep.subr.mxu0 0.0
        %5277 = vmatpush1.msra.mxu0 0.0
        %5278 = vmatprep.subr.mxu0 0.0
        %5279 = vmatpush1.msra.mxu0 0.0
        %5280 = vmatprep.subr.mxu0 0.0
        %5281 = vmatpush1.msra.mxu0 0.0
        %5282 = vmatprep.subr.mxu0 0.0
        %5283 = vmatpush1.msra.mxu0 0.0
        %5284 = vmatprep.subr.mxu0 0.0
        %5285 = vmatpush1.msra.mxu0 0.0
        %5286 = vmatprep.subr.mxu0 0.0
        %5287 = vmatpush1.msra.mxu0 0.0
        %5288 = vmatprep.subr.mxu0 0.0
        %5289 = vmatpush1.msra.mxu0 0.0
        %5290 = vmatprep.subr.mxu0 0.0
        %5291 = vmatpush1.msra.mxu0 0.0
        %5292 = vmatprep.subr.mxu0 0.0
        %5293 = vmatpush1.msra.mxu0 0.0
        %5294 = vmatprep.subr.mxu0 0.0
        %5295 = vmatpush1.msra.mxu0 0.0
        %5296 = vmatprep.subr.mxu0 0.0
        %5297 = vmatpush1.msra.mxu0 0.0
        %5298 = vmatprep.subr.mxu0 0.0
        %5299 = vmatpush1.msra.mxu0 0.0
        %5300 = vmatprep.subr.mxu0 0.0
        %5301 = vmatpush1.msra.mxu0 0.0
        %5302 = vmatprep.subr.mxu0 0.0
        %5303 = vmatpush1.msra.mxu0 0.0
        %5304 = vmatprep.subr.mxu0 0.0
        %5305 = vmatpush1.msra.mxu0 0.0
        %5306 = vmatprep.subr.mxu0 0.0
        %5307 = vmatpush1.msra.mxu0 0.0
        %5308 = vmatprep.subr.mxu0 0.0
        %5309 = vmatpush1.msra.mxu0 0.0
        %5310 = vmatprep.subr.mxu0 0.0
        %5311 = vmatpush1.msra.mxu0 0.0
        %5312 = vmatprep.subr.mxu0 0.0
        %5313 = vmatpush1.msra.mxu0 0.0
        %5314 = vmatprep.subr.mxu0 0.0
        %5315 = vmatpush1.msra.mxu0 0.0
        %5316 = vmatprep.subr.mxu0 0.0
        %5317 = vmatpush1.msra.mxu0 0.0
        %5318 = vmatprep.subr.mxu0 0.0
        %5319 = vmatpush1.msra.mxu0 0.0
        %5320 = vmatprep.mubr.f32.mxu0 0.0
        %5321 = vmatmul.mubr.f32.gmra.mrb[0].mxu0 %v5233
        %v5322 = vpop.f32.mrb[0].mxu0
        %v5323 = vadd.f32 0.0, %v5322
        %v5324 = vpop.f32.mrb[0].mxu0
        %5325 = vmatprep.mubr.f32.mxu0 0.0
        %5326 = vmatmul.mubr.f32.gmra.mrb[0].mxu0 %v5236
        %v5327 = vpop.f32.mrb[0].mxu0
        %v5328 = vadd.f32 0.0, %v5327
        %v5329 = vpop.f32.mrb[0].mxu0
        %5330 = vmatprep.mubr.f32.mxu0 0.0
        %5331 = vmatmul.mubr.f32.gmra.mrb[0].mxu0 %v5239
        %v5332 = vpop.f32.mrb[0].mxu0
        %v5333 = vadd.f32 0.0, %v5332
        %v5334 = vpop.f32.mrb[0].mxu0
        %5335 = vmatprep.mubr.f32.mxu0 0.0
        %5336 = vmatmul.mubr.f32.gmra.mrb[0].mxu0 %v5242
        %v5337 = vpop.f32.mrb[0].mxu0
        %v5338 = vadd.f32 0.0, %v5337
        %v5339 = vpop.f32.mrb[0].mxu0
        %5340 = vmatprep.mubr.f32.mxu0 0.0
        %5341 = vmatmul.mubr.f32.gmra.mrb[0].mxu0 %v5245
        %v5342 = vpop.f32.mrb[0].mxu0
        %v5343 = vadd.f32 0.0, %v5342
        %v5344 = vpop.f32.mrb[0].mxu0
        %5345 = vmatprep.mubr.f32.mxu0 0.0
        %5346 = vmatmul.mubr.f32.gmra.mrb[0].mxu0 %v5248
        %v5347 = vpop.f32.mrb[0].mxu0
        %v5348 = vadd.f32 0.0, %v5347
        %v5349 = vpop.f32.mrb[0].mxu0
        %5350 = vmatprep.mubr.f32.mxu0 0.0
        %5351 = vmatmul.mubr.f32.gmra.mrb[0].mxu0 %v5251
        %v5352 = vpop.f32.mrb[0].mxu0
        %v5353 = vadd.f32 0.0, %v5352
        %v5354 = vpop.f32.mrb[0].mxu0
        %5355 = vmatprep.mubr.f32.mxu0 0.0
        %5356 = vmatmul.mubr.f32.gmra.mrb[0].mxu0 %v5254
        %v5357 = vpop.f32.mrb[0].mxu0
        %v5358 = vadd.f32 0.0, %v5357
        %v5359 = vpop.f32.mrb[0].mxu0
        %5360 = vdwg.mxu0
        %v5361 = vadd.f32 %v5215, %v5323
        %v5362 = vadd.f32 %v5216, %v5328
        %v5363 = vadd.f32 %v5217, %v5333
        %v5364 = vadd.f32 %v5218, %v5338
        %v5365 = vadd.f32 %v5219, %v5343
        %v5366 = vadd.f32 %v5220, %v5348
        %v5367 = vadd.f32 %v5221, %v5353
        %v5368 = vadd.f32 %v5222, %v5358
        %v5369 = vld [vmem:[%s867 + $0x11] sm:$0xff]
        %v5370 = vld [vmem:[%s867 + $0x19] sm:$0xff]
        %v5371 = vld [vmem:[%s867 + $0x21] sm:$0xff]
        %v5372 = vld [vmem:[%s867 + $0x29] sm:$0xff]
        %v5373 = vld [vmem:[%s867 + $0x31] sm:$0xff]
        %v5374 = vld [vmem:[%s867 + $0x39] sm:$0xff]
        %v5375 = vld [vmem:[%s867 + $0x41] sm:$0xff]
        %v5376 = vld [vmem:[%s867 + $0x49] sm:$0xff]
        %v5377 = vld [vmem:[%s2437] sm:$0xff]
        %v5379 = vsel %vm467, %v5369, 0
        %v5382 = vsel %vm467, %v5370, 0
        %v5385 = vsel %vm467, %v5371, 0
        %v5388 = vsel %vm467, %v5372, 0
        %v5391 = vsel %vm467, %v5373, 0
        %v5394 = vsel %vm467, %v5374, 0
        %v5397 = vsel %vm467, %v5375, 0
        %v5400 = vsel %vm467, %v5376, 0
        %5402 = vmatprep.subr.mxu0 0.0
        %5403 = vmatpush1.msra.mxu0 %v5377
        %5404 = vmatprep.subr.mxu0 0.0
        %5405 = vmatpush1.msra.mxu0 0.0
        %5406 = vmatprep.subr.mxu0 0.0
        %5407 = vmatpush1.msra.mxu0 0.0
        %5408 = vmatprep.subr.mxu0 0.0
        %5409 = vmatpush1.msra.mxu0 0.0
        %5410 = vmatprep.subr.mxu0 0.0
        %5411 = vmatpush1.msra.mxu0 0.0
        %5412 = vmatprep.subr.mxu0 0.0
        %5413 = vmatpush1.msra.mxu0 0.0
        %5414 = vmatprep.subr.mxu0 0.0
        %5415 = vmatpush1.msra.mxu0 0.0
        %5416 = vmatprep.subr.mxu0 0.0
        %5417 = vmatpush1.msra.mxu0 0.0
        %5418 = vmatprep.subr.mxu0 0.0
        %5419 = vmatpush1.msra.mxu0 0.0
        %5420 = vmatprep.subr.mxu0 0.0
        %5421 = vmatpush1.msra.mxu0 0.0
        %5422 = vmatprep.subr.mxu0 0.0
        %5423 = vmatpush1.msra.mxu0 0.0
        %5424 = vmatprep.subr.mxu0 0.0
        %5425 = vmatpush1.msra.mxu0 0.0
        %5426 = vmatprep.subr.mxu0 0.0
        %5427 = vmatpush1.msra.mxu0 0.0
        %5428 = vmatprep.subr.mxu0 0.0
        %5429 = vmatpush1.msra.mxu0 0.0
        %5430 = vmatprep.subr.mxu0 0.0
        %5431 = vmatpush1.msra.mxu0 0.0
        %5432 = vmatprep.subr.mxu0 0.0
        %5433 = vmatpush1.msra.mxu0 0.0
        %5434 = vmatprep.subr.mxu0 0.0
        %5435 = vmatpush1.msra.mxu0 0.0
        %5436 = vmatprep.subr.mxu0 0.0
        %5437 = vmatpush1.msra.mxu0 0.0
        %5438 = vmatprep.subr.mxu0 0.0
        %5439 = vmatpush1.msra.mxu0 0.0
        %5440 = vmatprep.subr.mxu0 0.0
        %5441 = vmatpush1.msra.mxu0 0.0
        %5442 = vmatprep.subr.mxu0 0.0
        %5443 = vmatpush1.msra.mxu0 0.0
        %5444 = vmatprep.subr.mxu0 0.0
        %5445 = vmatpush1.msra.mxu0 0.0
        %5446 = vmatprep.subr.mxu0 0.0
        %5447 = vmatpush1.msra.mxu0 0.0
        %5448 = vmatprep.subr.mxu0 0.0
        %5449 = vmatpush1.msra.mxu0 0.0
        %5450 = vmatprep.subr.mxu0 0.0
        %5451 = vmatpush1.msra.mxu0 0.0
        %5452 = vmatprep.subr.mxu0 0.0
        %5453 = vmatpush1.msra.mxu0 0.0
        %5454 = vmatprep.subr.mxu0 0.0
        %5455 = vmatpush1.msra.mxu0 0.0
        %5456 = vmatprep.subr.mxu0 0.0
        %5457 = vmatpush1.msra.mxu0 0.0
        %5458 = vmatprep.subr.mxu0 0.0
        %5459 = vmatpush1.msra.mxu0 0.0
        %5460 = vmatprep.subr.mxu0 0.0
        %5461 = vmatpush1.msra.mxu0 0.0
        %5462 = vmatprep.subr.mxu0 0.0
        %5463 = vmatpush1.msra.mxu0 0.0
        %5464 = vmatprep.subr.mxu0 0.0
        %5465 = vmatpush1.msra.mxu0 0.0
        %5466 = vmatprep.mubr.f32.mxu0 0.0
        %5467 = vmatmul.mubr.f32.gmra.mrb[0].mxu0 %v5379
        %v5468 = vpop.f32.mrb[0].mxu0
        %v5469 = vadd.f32 0.0, %v5468
        %v5470 = vpop.f32.mrb[0].mxu0
        %5471 = vmatprep.mubr.f32.mxu0 0.0
        %5472 = vmatmul.mubr.f32.gmra.mrb[0].mxu0 %v5382
        %v5473 = vpop.f32.mrb[0].mxu0
        %v5474 = vadd.f32 0.0, %v5473
        %v5475 = vpop.f32.mrb[0].mxu0
        %5476 = vmatprep.mubr.f32.mxu0 0.0
        %5477 = vmatmul.mubr.f32.gmra.mrb[0].mxu0 %v5385
        %v5478 = vpop.f32.mrb[0].mxu0
        %v5479 = vadd.f32 0.0, %v5478
        %v5480 = vpop.f32.mrb[0].mxu0
        %5481 = vmatprep.mubr.f32.mxu0 0.0
        %5482 = vmatmul.mubr.f32.gmra.mrb[0].mxu0 %v5388
        %v5483 = vpop.f32.mrb[0].mxu0
        %v5484 = vadd.f32 0.0, %v5483
        %v5485 = vpop.f32.mrb[0].mxu0
        %5486 = vmatprep.mubr.f32.mxu0 0.0
        %5487 = vmatmul.mubr.f32.gmra.mrb[0].mxu0 %v5391
        %v5488 = vpop.f32.mrb[0].mxu0
        %v5489 = vadd.f32 0.0, %v5488
        %v5490 = vpop.f32.mrb[0].mxu0
        %5491 = vmatprep.mubr.f32.mxu0 0.0
        %5492 = vmatmul.mubr.f32.gmra.mrb[0].mxu0 %v5394
        %v5493 = vpop.f32.mrb[0].mxu0
        %v5494 = vadd.f32 0.0, %v5493
        %v5495 = vpop.f32.mrb[0].mxu0
        %5496 = vmatprep.mubr.f32.mxu0 0.0
        %5497 = vmatmul.mubr.f32.gmra.mrb[0].mxu0 %v5397
        %v5498 = vpop.f32.mrb[0].mxu0
        %v5499 = vadd.f32 0.0, %v5498
        %v5500 = vpop.f32.mrb[0].mxu0
        %5501 = vmatprep.mubr.f32.mxu0 0.0
        %5502 = vmatmul.mubr.f32.gmra.mrb[0].mxu0 %v5400
        %v5503 = vpop.f32.mrb[0].mxu0
        %v5504 = vadd.f32 0.0, %v5503
        %v5505 = vpop.f32.mrb[0].mxu0
        %5506 = vdwg.mxu0
        %v5507 = vadd.f32 %v5361, %v5469
        %v5508 = vadd.f32 %v5362, %v5474
        %v5509 = vadd.f32 %v5363, %v5479
        %v5510 = vadd.f32 %v5364, %v5484
        %v5511 = vadd.f32 %v5365, %v5489
        %v5512 = vadd.f32 %v5366, %v5494
        %v5513 = vadd.f32 %v5367, %v5499
        %v5514 = vadd.f32 %v5368, %v5504
        %vm5515 = vcmp.gt.f32.partialorder %v4777, 0.0
        %vm5516 = vcmp.gt.f32.partialorder %v4778, 0.0
        %vm5517 = vcmp.gt.f32.partialorder %v4779, 0.0
        %vm5518 = vcmp.gt.f32.partialorder %v4780, 0.0
        %vm5519 = vcmp.gt.f32.partialorder %v4781, 0.0
        %vm5520 = vcmp.gt.f32.partialorder %v4782, 0.0
        %vm5521 = vcmp.gt.f32.partialorder %v4783, 0.0
        %vm5522 = vcmp.gt.f32.partialorder %v4784, 0.0
        %v5523 = vmul.f32 %v4777, 5.0
        %v5524 = vmul.f32 %v4778, 5.0
        %v5525 = vmul.f32 %v4779, 5.0
        %v5526 = vmul.f32 %v4780, 5.0
        %v5527 = vmul.f32 %v4781, 5.0
        %v5528 = vmul.f32 %v4782, 5.0
        %v5529 = vmul.f32 %v4783, 5.0
        %v5530 = vmul.f32 %v4784, 5.0
        %v5531 = vsel %vm5515, %v4777, %v5523
        %v5532 = vsel %vm5516, %v4778, %v5524
        %v5533 = vsel %vm5517, %v4779, %v5525
        %v5534 = vsel %vm5518, %v4780, %v5526
        %v5535 = vsel %vm5519, %v4781, %v5527
        %v5536 = vsel %vm5520, %v4782, %v5528
        %v5537 = vsel %vm5521, %v4783, %v5529
        %v5538 = vsel %vm5522, %v4784, %v5530
        %v5539 = vadd.f32 %v5507, %v2604
        %v5540 = vadd.f32 %v5508, %v2604
        %v5541 = vadd.f32 %v5509, %v2604
        %v5542 = vadd.f32 %v5510, %v2604
        %v5543 = vadd.f32 %v5511, %v2604
        %v5544 = vadd.f32 %v5512, %v2604
        %v5545 = vadd.f32 %v5513, %v2604
        %v5546 = vadd.f32 %v5514, %v2604
        %v5547 = vadd.f32 %v5539, %v5531
        %v5548 = vadd.f32 %v5540, %v5532
        %v5549 = vadd.f32 %v5541, %v5533
        %v5550 = vadd.f32 %v5542, %v5534
        %v5551 = vadd.f32 %v5543, %v5535
        %v5552 = vadd.f32 %v5544, %v5536
        %v5553 = vadd.f32 %v5545, %v5537
        %v5554 = vadd.f32 %v5546, %v5538
        %vm5555 = vcmp.gt.f32.partialorder %v5547, 0.0
        %vm5556 = vcmp.gt.f32.partialorder %v5548, 0.0
        %vm5557 = vcmp.gt.f32.partialorder %v5549, 0.0
        %vm5558 = vcmp.gt.f32.partialorder %v5550, 0.0
        %vm5559 = vcmp.gt.f32.partialorder %v5551, 0.0
        %vm5560 = vcmp.gt.f32.partialorder %v5552, 0.0
        %vm5561 = vcmp.gt.f32.partialorder %v5553, 0.0
        %vm5562 = vcmp.gt.f32.partialorder %v5554, 0.0
        %v5563 = vmul.f32 %v5547, 0.2
        %v5564 = vmul.f32 %v5548, 0.2
        %v5565 = vmul.f32 %v5549, 0.2
        %v5566 = vmul.f32 %v5550, 0.2
        %v5567 = vmul.f32 %v5551, 0.2
        %v5568 = vmul.f32 %v5552, 0.2
        %v5569 = vmul.f32 %v5553, 0.2
        %v5570 = vmul.f32 %v5554, 0.2
        %v5571 = vsel %vm5555, %v5547, %v5563
        %v5572 = vsel %vm5556, %v5548, %v5564
        %v5573 = vsel %vm5557, %v5549, %v5565
        %v5574 = vsel %vm5558, %v5550, %v5566
        %v5575 = vsel %vm5559, %v5551, %v5567
        %v5576 = vsel %vm5560, %v5552, %v5568
        %v5577 = vsel %vm5561, %v5553, %v5569
        %v5578 = vsel %vm5562, %v5554, %v5570
        %s5579 = scalar_lea.vmem %s439, 128
        %5580 = vst.msk [vmem:[%s5579] sm:$0xff] %vm467, %v5571
        %5581 = vst.msk [vmem:[%s5579 + $0x8] sm:$0xff] %vm467, %v5572
        %5582 = vst.msk [vmem:[%s5579 + $0x10] sm:$0xff] %vm467, %v5573
        %5583 = vst.msk [vmem:[%s5579 + $0x18] sm:$0xff] %vm467, %v5574
        %5584 = vst.msk [vmem:[%s5579 + $0x20] sm:$0xff] %vm467, %v5575
        %5585 = vst.msk [vmem:[%s5579 + $0x28] sm:$0xff] %vm467, %v5576
        %5586 = vst.msk [vmem:[%s5579 + $0x30] sm:$0xff] %vm467, %v5577
        %5587 = vst.msk [vmem:[%s5579 + $0x38] sm:$0xff] %vm467, %v5578
        %v5588 = vsel %vm467, %v5571, 0.0
        %v5589 = vsel %vm467, %v5572, 0.0
        %v5590 = vadd.f32 %v5588, %v5589
        %v5591 = vsel %vm467, %v5573, 0.0
        %v5592 = vadd.f32 %v5590, %v5591
        %v5593 = vsel %vm467, %v5574, 0.0
        %v5594 = vadd.f32 %v5592, %v5593
        %v5595 = vsel %vm467, %v5575, 0.0
        %v5596 = vadd.f32 %v5594, %v5595
        %v5597 = vsel %vm467, %v5576, 0.0
        %v5598 = vadd.f32 %v5596, %v5597
        %v5599 = vsel %vm467, %v5577, 0.0
        %v5600 = vadd.f32 %v5598, %v5599
        %v5601 = vsel %vm467, %v5578, 0.0
        %v5602 = vadd.f32 %v5600, %v5601
        %v5603 = vrot.slane %v5602, 4
        %v5604 = vadd.f32 %v5602, %v5603
        %v5605 = vrot.slane %v5604, 2
        %v5606 = vadd.f32 %v5604, %v5605
        %v5607 = vrot.slane %v5606, 1
        %v5608 = vadd.f32 %v5606, %v5607
        %v5609 = vadd.f32 %v4162, %v5608
        %v5610 = vmul.f32 %v5571, %v5571
        %v5611 = vmul.f32 %v5572, %v5572
        %v5612 = vmul.f32 %v5573, %v5573
        %v5613 = vmul.f32 %v5574, %v5574
        %v5614 = vmul.f32 %v5575, %v5575
        %v5615 = vmul.f32 %v5576, %v5576
        %v5616 = vmul.f32 %v5577, %v5577
        %v5617 = vmul.f32 %v5578, %v5578
        %v5618 = vsel %vm467, %v5610, 0.0
        %v5619 = vsel %vm467, %v5611, 0.0
        %v5620 = vadd.f32 %v5618, %v5619
        %v5621 = vsel %vm467, %v5612, 0.0
        %v5622 = vadd.f32 %v5620, %v5621
        %v5623 = vsel %vm467, %v5613, 0.0
        %v5624 = vadd.f32 %v5622, %v5623
        %v5625 = vsel %vm467, %v5614, 0.0
        %v5626 = vadd.f32 %v5624, %v5625
        %v5627 = vsel %vm467, %v5615, 0.0
        %v5628 = vadd.f32 %v5626, %v5627
        %v5629 = vsel %vm467, %v5616, 0.0
        %v5630 = vadd.f32 %v5628, %v5629
        %v5631 = vsel %vm467, %v5617, 0.0
        %v5632 = vadd.f32 %v5630, %v5631
        %v5633 = vrot.slane %v5632, 4
        %v5634 = vadd.f32 %v5632, %v5633
        %v5635 = vrot.slane %v5634, 2
        %v5636 = vadd.f32 %v5634, %v5635
        %v5637 = vrot.slane %v5636, 1
        %v5638 = vadd.f32 %v5636, %v5637
        %v5639 = vadd.f32 %v4192, %v5638
        %v5640 = vld [vmem:[#allocation2 + $0x9] sm:$0xff]
        %v5641 = vld [vmem:[#allocation2 + $0x11] sm:$0xff]
        %v5642 = vld [vmem:[#allocation2 + $0x19] sm:$0xff]
        %v5643 = vld [vmem:[#allocation2 + $0x21] sm:$0xff]
        %v5644 = vld [vmem:[#allocation2 + $0x29] sm:$0xff]
        %v5645 = vld [vmem:[#allocation2 + $0x31] sm:$0xff]
        %v5646 = vld [vmem:[#allocation2 + $0x39] sm:$0xff]
        %v5647 = vld [vmem:[#allocation2 + $0x41] sm:$0xff]
        %v5648 = vld [vmem:[%s5] sm:$0xff]
        %v5649 = vld [vmem:[%s867 + $0x9] sm:$0xff]
        %v5650 = vld [vmem:[%s867 + $0x11] sm:$0xff]
        %v5651 = vld [vmem:[%s867 + $0x19] sm:$0xff]
        %v5652 = vld [vmem:[%s867 + $0x21] sm:$0xff]
        %v5653 = vld [vmem:[%s867 + $0x29] sm:$0xff]
        %v5654 = vld [vmem:[%s867 + $0x31] sm:$0xff]
        %v5655 = vld [vmem:[%s867 + $0x39] sm:$0xff]
        %v5656 = vld [vmem:[%s867 + $0x41] sm:$0xff]
        %v5657 = vld [vmem:[%s1271] sm:$0xff]
        %v5659 = vsel %vm467, %v5649, 0
        %v5662 = vsel %vm467, %v5650, 0
        %v5665 = vsel %vm467, %v5651, 0
        %v5668 = vsel %vm467, %v5652, 0
        %v5671 = vsel %vm467, %v5653, 0
        %v5674 = vsel %vm467, %v5654, 0
        %v5677 = vsel %vm467, %v5655, 0
        %v5680 = vsel %vm467, %v5656, 0
        %5682 = vmatprep.subr.mxu0 0.0
        %5683 = vmatpush1.msra.mxu0 %v5657
        %5684 = vmatprep.subr.mxu0 0.0
        %5685 = vmatpush1.msra.mxu0 0.0
        %5686 = vmatprep.subr.mxu0 0.0
        %5687 = vmatpush1.msra.mxu0 0.0
        %5688 = vmatprep.subr.mxu0 0.0
        %5689 = vmatpush1.msra.mxu0 0.0
        %5690 = vmatprep.subr.mxu0 0.0
        %5691 = vmatpush1.msra.mxu0 0.0
        %5692 = vmatprep.subr.mxu0 0.0
        %5693 = vmatpush1.msra.mxu0 0.0
        %5694 = vmatprep.subr.mxu0 0.0
        %5695 = vmatpush1.msra.mxu0 0.0
        %5696 = vmatprep.subr.mxu0 0.0
        %5697 = vmatpush1.msra.mxu0 0.0
        %5698 = vmatprep.subr.mxu0 0.0
        %5699 = vmatpush1.msra.mxu0 0.0
        %5700 = vmatprep.subr.mxu0 0.0
        %5701 = vmatpush1.msra.mxu0 0.0
        %5702 = vmatprep.subr.mxu0 0.0
        %5703 = vmatpush1.msra.mxu0 0.0
        %5704 = vmatprep.subr.mxu0 0.0
        %5705 = vmatpush1.msra.mxu0 0.0
        %5706 = vmatprep.subr.mxu0 0.0
        %5707 = vmatpush1.msra.mxu0 0.0
        %5708 = vmatprep.subr.mxu0 0.0
        %5709 = vmatpush1.msra.mxu0 0.0
        %5710 = vmatprep.subr.mxu0 0.0
        %5711 = vmatpush1.msra.mxu0 0.0
        %5712 = vmatprep.subr.mxu0 0.0
        %5713 = vmatpush1.msra.mxu0 0.0
        %5714 = vmatprep.subr.mxu0 0.0
        %5715 = vmatpush1.msra.mxu0 0.0
        %5716 = vmatprep.subr.mxu0 0.0
        %5717 = vmatpush1.msra.mxu0 0.0
        %5718 = vmatprep.subr.mxu0 0.0
        %5719 = vmatpush1.msra.mxu0 0.0
        %5720 = vmatprep.subr.mxu0 0.0
        %5721 = vmatpush1.msra.mxu0 0.0
        %5722 = vmatprep.subr.mxu0 0.0
        %5723 = vmatpush1.msra.mxu0 0.0
        %5724 = vmatprep.subr.mxu0 0.0
        %5725 = vmatpush1.msra.mxu0 0.0
        %5726 = vmatprep.subr.mxu0 0.0
        %5727 = vmatpush1.msra.mxu0 0.0
        %5728 = vmatprep.subr.mxu0 0.0
        %5729 = vmatpush1.msra.mxu0 0.0
        %5730 = vmatprep.subr.mxu0 0.0
        %5731 = vmatpush1.msra.mxu0 0.0
        %5732 = vmatprep.subr.mxu0 0.0
        %5733 = vmatpush1.msra.mxu0 0.0
        %5734 = vmatprep.subr.mxu0 0.0
        %5735 = vmatpush1.msra.mxu0 0.0
        %5736 = vmatprep.subr.mxu0 0.0
        %5737 = vmatpush1.msra.mxu0 0.0
        %5738 = vmatprep.subr.mxu0 0.0
        %5739 = vmatpush1.msra.mxu0 0.0
        %5740 = vmatprep.subr.mxu0 0.0
        %5741 = vmatpush1.msra.mxu0 0.0
        %5742 = vmatprep.subr.mxu0 0.0
        %5743 = vmatpush1.msra.mxu0 0.0
        %5744 = vmatprep.subr.mxu0 0.0
        %5745 = vmatpush1.msra.mxu0 0.0
        %5746 = vmatprep.mubr.f32.mxu0 0.0
        %5747 = vmatmul.mubr.f32.gmra.mrb[0].mxu0 %v5659
        %v5748 = vpop.f32.mrb[0].mxu0
        %v5749 = vadd.f32 0.0, %v5748
        %v5750 = vpop.f32.mrb[0].mxu0
        %5751 = vmatprep.mubr.f32.mxu0 0.0
        %5752 = vmatmul.mubr.f32.gmra.mrb[0].mxu0 %v5662
        %v5753 = vpop.f32.mrb[0].mxu0
        %v5754 = vadd.f32 0.0, %v5753
        %v5755 = vpop.f32.mrb[0].mxu0
        %5756 = vmatprep.mubr.f32.mxu0 0.0
        %5757 = vmatmul.mubr.f32.gmra.mrb[0].mxu0 %v5665
        %v5758 = vpop.f32.mrb[0].mxu0
        %v5759 = vadd.f32 0.0, %v5758
        %v5760 = vpop.f32.mrb[0].mxu0
        %5761 = vmatprep.mubr.f32.mxu0 0.0
        %5762 = vmatmul.mubr.f32.gmra.mrb[0].mxu0 %v5668
        %v5763 = vpop.f32.mrb[0].mxu0
        %v5764 = vadd.f32 0.0, %v5763
        %v5765 = vpop.f32.mrb[0].mxu0
        %5766 = vmatprep.mubr.f32.mxu0 0.0
        %5767 = vmatmul.mubr.f32.gmra.mrb[0].mxu0 %v5671
        %v5768 = vpop.f32.mrb[0].mxu0
        %v5769 = vadd.f32 0.0, %v5768
        %v5770 = vpop.f32.mrb[0].mxu0
        %5771 = vmatprep.mubr.f32.mxu0 0.0
        %5772 = vmatmul.mubr.f32.gmra.mrb[0].mxu0 %v5674
        %v5773 = vpop.f32.mrb[0].mxu0
        %v5774 = vadd.f32 0.0, %v5773
        %v5775 = vpop.f32.mrb[0].mxu0
        %5776 = vmatprep.mubr.f32.mxu0 0.0
        %5777 = vmatmul.mubr.f32.gmra.mrb[0].mxu0 %v5677
        %v5778 = vpop.f32.mrb[0].mxu0
        %v5779 = vadd.f32 0.0, %v5778
        %v5780 = vpop.f32.mrb[0].mxu0
        %5781 = vmatprep.mubr.f32.mxu0 0.0
        %5782 = vmatmul.mubr.f32.gmra.mrb[0].mxu0 %v5680
        %v5783 = vpop.f32.mrb[0].mxu0
        %v5784 = vadd.f32 0.0, %v5783
        %v5785 = vpop.f32.mrb[0].mxu0
        %5786 = vdwg.mxu0
        %v5788 = vsel %vm467, %v5640, 0
        %v5791 = vsel %vm467, %v5641, 0
        %v5794 = vsel %vm467, %v5642, 0
        %v5797 = vsel %vm467, %v5643, 0
        %v5800 = vsel %vm467, %v5644, 0
        %v5803 = vsel %vm467, %v5645, 0
        %v5806 = vsel %vm467, %v5646, 0
        %v5809 = vsel %vm467, %v5647, 0
        %5811 = vmatprep.subr.mxu0 0.0
        %5812 = vmatpush1.msra.mxu0 %v5648
        %5813 = vmatprep.subr.mxu0 0.0
        %5814 = vmatpush1.msra.mxu0 0.0
        %5815 = vmatprep.subr.mxu0 0.0
        %5816 = vmatpush1.msra.mxu0 0.0
        %5817 = vmatprep.subr.mxu0 0.0
        %5818 = vmatpush1.msra.mxu0 0.0
        %5819 = vmatprep.subr.mxu0 0.0
        %5820 = vmatpush1.msra.mxu0 0.0
        %5821 = vmatprep.subr.mxu0 0.0
        %5822 = vmatpush1.msra.mxu0 0.0
        %5823 = vmatprep.subr.mxu0 0.0
        %5824 = vmatpush1.msra.mxu0 0.0
        %5825 = vmatprep.subr.mxu0 0.0
        %5826 = vmatpush1.msra.mxu0 0.0
        %5827 = vmatprep.subr.mxu0 0.0
        %5828 = vmatpush1.msra.mxu0 0.0
        %5829 = vmatprep.subr.mxu0 0.0
        %5830 = vmatpush1.msra.mxu0 0.0
        %5831 = vmatprep.subr.mxu0 0.0
        %5832 = vmatpush1.msra.mxu0 0.0
        %5833 = vmatprep.subr.mxu0 0.0
        %5834 = vmatpush1.msra.mxu0 0.0
        %5835 = vmatprep.subr.mxu0 0.0
        %5836 = vmatpush1.msra.mxu0 0.0
        %5837 = vmatprep.subr.mxu0 0.0
        %5838 = vmatpush1.msra.mxu0 0.0
        %5839 = vmatprep.subr.mxu0 0.0
        %5840 = vmatpush1.msra.mxu0 0.0
        %5841 = vmatprep.subr.mxu0 0.0
        %5842 = vmatpush1.msra.mxu0 0.0
        %5843 = vmatprep.subr.mxu0 0.0
        %5844 = vmatpush1.msra.mxu0 0.0
        %5845 = vmatprep.subr.mxu0 0.0
        %5846 = vmatpush1.msra.mxu0 0.0
        %5847 = vmatprep.subr.mxu0 0.0
        %5848 = vmatpush1.msra.mxu0 0.0
        %5849 = vmatprep.subr.mxu0 0.0
        %5850 = vmatpush1.msra.mxu0 0.0
        %5851 = vmatprep.subr.mxu0 0.0
        %5852 = vmatpush1.msra.mxu0 0.0
        %5853 = vmatprep.subr.mxu0 0.0
        %5854 = vmatpush1.msra.mxu0 0.0
        %5855 = vmatprep.subr.mxu0 0.0
        %5856 = vmatpush1.msra.mxu0 0.0
        %5857 = vmatprep.subr.mxu0 0.0
        %5858 = vmatpush1.msra.mxu0 0.0
        %5859 = vmatprep.subr.mxu0 0.0
        %5860 = vmatpush1.msra.mxu0 0.0
        %5861 = vmatprep.subr.mxu0 0.0
        %5862 = vmatpush1.msra.mxu0 0.0
        %5863 = vmatprep.subr.mxu0 0.0
        %5864 = vmatpush1.msra.mxu0 0.0
        %5865 = vmatprep.subr.mxu0 0.0
        %5866 = vmatpush1.msra.mxu0 0.0
        %5867 = vmatprep.subr.mxu0 0.0
        %5868 = vmatpush1.msra.mxu0 0.0
        %5869 = vmatprep.subr.mxu0 0.0
        %5870 = vmatpush1.msra.mxu0 0.0
        %5871 = vmatprep.subr.mxu0 0.0
        %5872 = vmatpush1.msra.mxu0 0.0
        %5873 = vmatprep.subr.mxu0 0.0
        %5874 = vmatpush1.msra.mxu0 0.0
        %5875 = vmatprep.mubr.f32.mxu0 0.0
        %5876 = vmatmul.mubr.f32.gmra.mrb[0].mxu0 %v5788
        %v5877 = vpop.f32.mrb[0].mxu0
        %v5878 = vadd.f32 %v5749, %v5877
        %v5879 = vpop.f32.mrb[0].mxu0
        %5880 = vmatprep.mubr.f32.mxu0 0.0
        %5881 = vmatmul.mubr.f32.gmra.mrb[0].mxu0 %v5791
        %v5882 = vpop.f32.mrb[0].mxu0
        %v5883 = vadd.f32 %v5754, %v5882
        %v5884 = vpop.f32.mrb[0].mxu0
        %5885 = vmatprep.mubr.f32.mxu0 0.0
        %5886 = vmatmul.mubr.f32.gmra.mrb[0].mxu0 %v5794
        %v5887 = vpop.f32.mrb[0].mxu0
        %v5888 = vadd.f32 %v5759, %v5887
        %v5889 = vpop.f32.mrb[0].mxu0
        %5890 = vmatprep.mubr.f32.mxu0 0.0
        %5891 = vmatmul.mubr.f32.gmra.mrb[0].mxu0 %v5797
        %v5892 = vpop.f32.mrb[0].mxu0
        %v5893 = vadd.f32 %v5764, %v5892
        %v5894 = vpop.f32.mrb[0].mxu0
        %5895 = vmatprep.mubr.f32.mxu0 0.0
        %5896 = vmatmul.mubr.f32.gmra.mrb[0].mxu0 %v5800
        %v5897 = vpop.f32.mrb[0].mxu0
        %v5898 = vadd.f32 %v5769, %v5897
        %v5899 = vpop.f32.mrb[0].mxu0
        %5900 = vmatprep.mubr.f32.mxu0 0.0
        %5901 = vmatmul.mubr.f32.gmra.mrb[0].mxu0 %v5803
        %v5902 = vpop.f32.mrb[0].mxu0
        %v5903 = vadd.f32 %v5774, %v5902
        %v5904 = vpop.f32.mrb[0].mxu0
        %5905 = vmatprep.mubr.f32.mxu0 0.0
        %5906 = vmatmul.mubr.f32.gmra.mrb[0].mxu0 %v5806
        %v5907 = vpop.f32.mrb[0].mxu0
        %v5908 = vadd.f32 %v5779, %v5907
        %v5909 = vpop.f32.mrb[0].mxu0
        %5910 = vmatprep.mubr.f32.mxu0 0.0
        %5911 = vmatmul.mubr.f32.gmra.mrb[0].mxu0 %v5809
        %v5912 = vpop.f32.mrb[0].mxu0
        %v5913 = vadd.f32 %v5784, %v5912
        %v5914 = vpop.f32.mrb[0].mxu0
        %5915 = vdwg.mxu0
        %v5916 = vld [vmem:[#allocation2 + $0xa] sm:$0xff]
        %v5917 = vld [vmem:[#allocation2 + $0x12] sm:$0xff]
        %v5918 = vld [vmem:[#allocation2 + $0x1a] sm:$0xff]
        %v5919 = vld [vmem:[#allocation2 + $0x22] sm:$0xff]
        %v5920 = vld [vmem:[#allocation2 + $0x2a] sm:$0xff]
        %v5921 = vld [vmem:[#allocation2 + $0x32] sm:$0xff]
        %v5922 = vld [vmem:[#allocation2 + $0x3a] sm:$0xff]
        %v5923 = vld [vmem:[#allocation2 + $0x42] sm:$0xff]
        %v5924 = vmul.f32 %v5916, %v2993
        %v5925 = vmul.f32 %v5917, %v2998
        %v5926 = vmul.f32 %v5918, %v3003
        %v5927 = vmul.f32 %v5919, %v3008
        %v5928 = vmul.f32 %v5920, %v3013
        %v5929 = vmul.f32 %v5921, %v3018
        %v5930 = vmul.f32 %v5922, %v3023
        %v5931 = vmul.f32 %v5923, %v3028
        %v5932 = vld [vmem:[%s1539] sm:$0xff]
        %v5934 = vsel %vm467, %v5924, 0
        %v5937 = vsel %vm467, %v5925, 0
        %v5940 = vsel %vm467, %v5926, 0
        %v5943 = vsel %vm467, %v5927, 0
        %v5946 = vsel %vm467, %v5928, 0
        %v5949 = vsel %vm467, %v5929, 0
        %v5952 = vsel %vm467, %v5930, 0
        %v5955 = vsel %vm467, %v5931, 0
        %5957 = vmatprep.subr.mxu0 0.0
        %5958 = vmatpush1.msra.mxu0 %v5932
        %5959 = vmatprep.subr.mxu0 0.0
        %5960 = vmatpush1.msra.mxu0 0.0
        %5961 = vmatprep.subr.mxu0 0.0
        %5962 = vmatpush1.msra.mxu0 0.0
        %5963 = vmatprep.subr.mxu0 0.0
        %5964 = vmatpush1.msra.mxu0 0.0
        %5965 = vmatprep.subr.mxu0 0.0
        %5966 = vmatpush1.msra.mxu0 0.0
        %5967 = vmatprep.subr.mxu0 0.0
        %5968 = vmatpush1.msra.mxu0 0.0
        %5969 = vmatprep.subr.mxu0 0.0
        %5970 = vmatpush1.msra.mxu0 0.0
        %5971 = vmatprep.subr.mxu0 0.0
        %5972 = vmatpush1.msra.mxu0 0.0
        %5973 = vmatprep.subr.mxu0 0.0
        %5974 = vmatpush1.msra.mxu0 0.0
        %5975 = vmatprep.subr.mxu0 0.0
        %5976 = vmatpush1.msra.mxu0 0.0
        %5977 = vmatprep.subr.mxu0 0.0
        %5978 = vmatpush1.msra.mxu0 0.0
        %5979 = vmatprep.subr.mxu0 0.0
        %5980 = vmatpush1.msra.mxu0 0.0
        %5981 = vmatprep.subr.mxu0 0.0
        %5982 = vmatpush1.msra.mxu0 0.0
        %5983 = vmatprep.subr.mxu0 0.0
        %5984 = vmatpush1.msra.mxu0 0.0
        %5985 = vmatprep.subr.mxu0 0.0
        %5986 = vmatpush1.msra.mxu0 0.0
        %5987 = vmatprep.subr.mxu0 0.0
        %5988 = vmatpush1.msra.mxu0 0.0
        %5989 = vmatprep.subr.mxu0 0.0
        %5990 = vmatpush1.msra.mxu0 0.0
        %5991 = vmatprep.subr.mxu0 0.0
        %5992 = vmatpush1.msra.mxu0 0.0
        %5993 = vmatprep.subr.mxu0 0.0
        %5994 = vmatpush1.msra.mxu0 0.0
        %5995 = vmatprep.subr.mxu0 0.0
        %5996 = vmatpush1.msra.mxu0 0.0
        %5997 = vmatprep.subr.mxu0 0.0
        %5998 = vmatpush1.msra.mxu0 0.0
        %5999 = vmatprep.subr.mxu0 0.0
        %6000 = vmatpush1.msra.mxu0 0.0
        %6001 = vmatprep.subr.mxu0 0.0
        %6002 = vmatpush1.msra.mxu0 0.0
        %6003 = vmatprep.subr.mxu0 0.0
        %6004 = vmatpush1.msra.mxu0 0.0
        %6005 = vmatprep.subr.mxu0 0.0
        %6006 = vmatpush1.msra.mxu0 0.0
        %6007 = vmatprep.subr.mxu0 0.0
        %6008 = vmatpush1.msra.mxu0 0.0
        %6009 = vmatprep.subr.mxu0 0.0
        %6010 = vmatpush1.msra.mxu0 0.0
        %6011 = vmatprep.subr.mxu0 0.0
        %6012 = vmatpush1.msra.mxu0 0.0
        %6013 = vmatprep.subr.mxu0 0.0
        %6014 = vmatpush1.msra.mxu0 0.0
        %6015 = vmatprep.subr.mxu0 0.0
        %6016 = vmatpush1.msra.mxu0 0.0
        %6017 = vmatprep.subr.mxu0 0.0
        %6018 = vmatpush1.msra.mxu0 0.0
        %6019 = vmatprep.subr.mxu0 0.0
        %6020 = vmatpush1.msra.mxu0 0.0
        %6021 = vmatprep.mubr.f32.mxu0 0.0
        %6022 = vmatmul.mubr.f32.gmra.mrb[0].mxu0 %v5934
        %v6023 = vpop.f32.mrb[0].mxu0
        %v6024 = vadd.f32 0.0, %v6023
        %v6025 = vpop.f32.mrb[0].mxu0
        %6026 = vmatprep.mubr.f32.mxu0 0.0
        %6027 = vmatmul.mubr.f32.gmra.mrb[0].mxu0 %v5937
        %v6028 = vpop.f32.mrb[0].mxu0
        %v6029 = vadd.f32 0.0, %v6028
        %v6030 = vpop.f32.mrb[0].mxu0
        %6031 = vmatprep.mubr.f32.mxu0 0.0
        %6032 = vmatmul.mubr.f32.gmra.mrb[0].mxu0 %v5940
        %v6033 = vpop.f32.mrb[0].mxu0
        %v6034 = vadd.f32 0.0, %v6033
        %v6035 = vpop.f32.mrb[0].mxu0
        %6036 = vmatprep.mubr.f32.mxu0 0.0
        %6037 = vmatmul.mubr.f32.gmra.mrb[0].mxu0 %v5943
        %v6038 = vpop.f32.mrb[0].mxu0
        %v6039 = vadd.f32 0.0, %v6038
        %v6040 = vpop.f32.mrb[0].mxu0
        %6041 = vmatprep.mubr.f32.mxu0 0.0
        %6042 = vmatmul.mubr.f32.gmra.mrb[0].mxu0 %v5946
        %v6043 = vpop.f32.mrb[0].mxu0
        %v6044 = vadd.f32 0.0, %v6043
        %v6045 = vpop.f32.mrb[0].mxu0
        %6046 = vmatprep.mubr.f32.mxu0 0.0
        %6047 = vmatmul.mubr.f32.gmra.mrb[0].mxu0 %v5949
        %v6048 = vpop.f32.mrb[0].mxu0
        %v6049 = vadd.f32 0.0, %v6048
        %v6050 = vpop.f32.mrb[0].mxu0
        %6051 = vmatprep.mubr.f32.mxu0 0.0
        %6052 = vmatmul.mubr.f32.gmra.mrb[0].mxu0 %v5952
        %v6053 = vpop.f32.mrb[0].mxu0
        %v6054 = vadd.f32 0.0, %v6053
        %v6055 = vpop.f32.mrb[0].mxu0
        %6056 = vmatprep.mubr.f32.mxu0 0.0
        %6057 = vmatmul.mubr.f32.gmra.mrb[0].mxu0 %v5955
        %v6058 = vpop.f32.mrb[0].mxu0
        %v6059 = vadd.f32 0.0, %v6058
        %v6060 = vpop.f32.mrb[0].mxu0
        %6061 = vdwg.mxu0
        %v6062 = vadd.f32 %v5878, %v6024
        %v6063 = vadd.f32 %v5883, %v6029
        %v6064 = vadd.f32 %v5888, %v6034
        %v6065 = vadd.f32 %v5893, %v6039
        %v6066 = vadd.f32 %v5898, %v6044
        %v6067 = vadd.f32 %v5903, %v6049
        %v6068 = vadd.f32 %v5908, %v6054
        %v6069 = vadd.f32 %v5913, %v6059
        %v6070 = vld [vmem:[%s1032 + $0x9] sm:$0xff]
        %v6071 = vld [vmem:[%s1032 + $0x11] sm:$0xff]
        %v6072 = vld [vmem:[%s1032 + $0x19] sm:$0xff]
        %v6073 = vld [vmem:[%s1032 + $0x21] sm:$0xff]
        %v6074 = vld [vmem:[%s1032 + $0x29] sm:$0xff]
        %v6075 = vld [vmem:[%s1032 + $0x31] sm:$0xff]
        %v6076 = vld [vmem:[%s1032 + $0x39] sm:$0xff]
        %v6077 = vld [vmem:[%s1032 + $0x41] sm:$0xff]
        %v6078 = vld [vmem:[%s1694] sm:$0xff]
        %v6080 = vsel %vm467, %v6070, 0
        %v6083 = vsel %vm467, %v6071, 0
        %v6086 = vsel %vm467, %v6072, 0
        %v6089 = vsel %vm467, %v6073, 0
        %v6092 = vsel %vm467, %v6074, 0
        %v6095 = vsel %vm467, %v6075, 0
        %v6098 = vsel %vm467, %v6076, 0
        %v6101 = vsel %vm467, %v6077, 0
        %6103 = vmatprep.subr.mxu0 0.0
        %6104 = vmatpush1.msra.mxu0 %v6078
        %6105 = vmatprep.subr.mxu0 0.0
        %6106 = vmatpush1.msra.mxu0 0.0
        %6107 = vmatprep.subr.mxu0 0.0
        %6108 = vmatpush1.msra.mxu0 0.0
        %6109 = vmatprep.subr.mxu0 0.0
        %6110 = vmatpush1.msra.mxu0 0.0
        %6111 = vmatprep.subr.mxu0 0.0
        %6112 = vmatpush1.msra.mxu0 0.0
        %6113 = vmatprep.subr.mxu0 0.0
        %6114 = vmatpush1.msra.mxu0 0.0
        %6115 = vmatprep.subr.mxu0 0.0
        %6116 = vmatpush1.msra.mxu0 0.0
        %6117 = vmatprep.subr.mxu0 0.0
        %6118 = vmatpush1.msra.mxu0 0.0
        %6119 = vmatprep.subr.mxu0 0.0
        %6120 = vmatpush1.msra.mxu0 0.0
        %6121 = vmatprep.subr.mxu0 0.0
        %6122 = vmatpush1.msra.mxu0 0.0
        %6123 = vmatprep.subr.mxu0 0.0
        %6124 = vmatpush1.msra.mxu0 0.0
        %6125 = vmatprep.subr.mxu0 0.0
        %6126 = vmatpush1.msra.mxu0 0.0
        %6127 = vmatprep.subr.mxu0 0.0
        %6128 = vmatpush1.msra.mxu0 0.0
        %6129 = vmatprep.subr.mxu0 0.0
        %6130 = vmatpush1.msra.mxu0 0.0
        %6131 = vmatprep.subr.mxu0 0.0
        %6132 = vmatpush1.msra.mxu0 0.0
        %6133 = vmatprep.subr.mxu0 0.0
        %6134 = vmatpush1.msra.mxu0 0.0
        %6135 = vmatprep.subr.mxu0 0.0
        %6136 = vmatpush1.msra.mxu0 0.0
        %6137 = vmatprep.subr.mxu0 0.0
        %6138 = vmatpush1.msra.mxu0 0.0
        %6139 = vmatprep.subr.mxu0 0.0
        %6140 = vmatpush1.msra.mxu0 0.0
        %6141 = vmatprep.subr.mxu0 0.0
        %6142 = vmatpush1.msra.mxu0 0.0
        %6143 = vmatprep.subr.mxu0 0.0
        %6144 = vmatpush1.msra.mxu0 0.0
        %6145 = vmatprep.subr.mxu0 0.0
        %6146 = vmatpush1.msra.mxu0 0.0
        %6147 = vmatprep.subr.mxu0 0.0
        %6148 = vmatpush1.msra.mxu0 0.0
        %6149 = vmatprep.subr.mxu0 0.0
        %6150 = vmatpush1.msra.mxu0 0.0
        %6151 = vmatprep.subr.mxu0 0.0
        %6152 = vmatpush1.msra.mxu0 0.0
        %6153 = vmatprep.subr.mxu0 0.0
        %6154 = vmatpush1.msra.mxu0 0.0
        %6155 = vmatprep.subr.mxu0 0.0
        %6156 = vmatpush1.msra.mxu0 0.0
        %6157 = vmatprep.subr.mxu0 0.0
        %6158 = vmatpush1.msra.mxu0 0.0
        %6159 = vmatprep.subr.mxu0 0.0
        %6160 = vmatpush1.msra.mxu0 0.0
        %6161 = vmatprep.subr.mxu0 0.0
        %6162 = vmatpush1.msra.mxu0 0.0
        %6163 = vmatprep.subr.mxu0 0.0
        %6164 = vmatpush1.msra.mxu0 0.0
        %6165 = vmatprep.subr.mxu0 0.0
        %6166 = vmatpush1.msra.mxu0 0.0
        %6167 = vmatprep.mubr.f32.mxu0 0.0
        %6168 = vmatmul.mubr.f32.gmra.mrb[0].mxu0 %v6080
        %v6169 = vpop.f32.mrb[0].mxu0
        %v6170 = vadd.f32 0.0, %v6169
        %v6171 = vpop.f32.mrb[0].mxu0
        %6172 = vmatprep.mubr.f32.mxu0 0.0
        %6173 = vmatmul.mubr.f32.gmra.mrb[0].mxu0 %v6083
        %v6174 = vpop.f32.mrb[0].mxu0
        %v6175 = vadd.f32 0.0, %v6174
        %v6176 = vpop.f32.mrb[0].mxu0
        %6177 = vmatprep.mubr.f32.mxu0 0.0
        %6178 = vmatmul.mubr.f32.gmra.mrb[0].mxu0 %v6086
        %v6179 = vpop.f32.mrb[0].mxu0
        %v6180 = vadd.f32 0.0, %v6179
        %v6181 = vpop.f32.mrb[0].mxu0
        %6182 = vmatprep.mubr.f32.mxu0 0.0
        %6183 = vmatmul.mubr.f32.gmra.mrb[0].mxu0 %v6089
        %v6184 = vpop.f32.mrb[0].mxu0
        %v6185 = vadd.f32 0.0, %v6184
        %v6186 = vpop.f32.mrb[0].mxu0
        %6187 = vmatprep.mubr.f32.mxu0 0.0
        %6188 = vmatmul.mubr.f32.gmra.mrb[0].mxu0 %v6092
        %v6189 = vpop.f32.mrb[0].mxu0
        %v6190 = vadd.f32 0.0, %v6189
        %v6191 = vpop.f32.mrb[0].mxu0
        %6192 = vmatprep.mubr.f32.mxu0 0.0
        %6193 = vmatmul.mubr.f32.gmra.mrb[0].mxu0 %v6095
        %v6194 = vpop.f32.mrb[0].mxu0
        %v6195 = vadd.f32 0.0, %v6194
        %v6196 = vpop.f32.mrb[0].mxu0
        %6197 = vmatprep.mubr.f32.mxu0 0.0
        %6198 = vmatmul.mubr.f32.gmra.mrb[0].mxu0 %v6098
        %v6199 = vpop.f32.mrb[0].mxu0
        %v6200 = vadd.f32 0.0, %v6199
        %v6201 = vpop.f32.mrb[0].mxu0
        %6202 = vmatprep.mubr.f32.mxu0 0.0
        %6203 = vmatmul.mubr.f32.gmra.mrb[0].mxu0 %v6101
        %v6204 = vpop.f32.mrb[0].mxu0
        %v6205 = vadd.f32 0.0, %v6204
        %v6206 = vpop.f32.mrb[0].mxu0
        %6207 = vdwg.mxu0
        %v6208 = vadd.f32 %v6062, %v6170
        %v6209 = vadd.f32 %v6063, %v6175
        %v6210 = vadd.f32 %v6064, %v6180
        %v6211 = vadd.f32 %v6065, %v6185
        %v6212 = vadd.f32 %v6066, %v6190
        %v6213 = vadd.f32 %v6067, %v6195
        %v6214 = vadd.f32 %v6068, %v6200
        %v6215 = vadd.f32 %v6069, %v6205
        %v6216 = vld [vmem:[%s1197 + $0x9] sm:$0xff]
        %v6217 = vld [vmem:[%s1197 + $0x11] sm:$0xff]
        %v6218 = vld [vmem:[%s1197 + $0x19] sm:$0xff]
        %v6219 = vld [vmem:[%s1197 + $0x21] sm:$0xff]
        %v6220 = vld [vmem:[%s1197 + $0x29] sm:$0xff]
        %v6221 = vld [vmem:[%s1197 + $0x31] sm:$0xff]
        %v6222 = vld [vmem:[%s1197 + $0x39] sm:$0xff]
        %v6223 = vld [vmem:[%s1197 + $0x41] sm:$0xff]
        %v6224 = vld [vmem:[%s1841] sm:$0xff]
        %v6226 = vsel %vm467, %v6216, 0
        %v6229 = vsel %vm467, %v6217, 0
        %v6232 = vsel %vm467, %v6218, 0
        %v6235 = vsel %vm467, %v6219, 0
        %v6238 = vsel %vm467, %v6220, 0
        %v6241 = vsel %vm467, %v6221, 0
        %v6244 = vsel %vm467, %v6222, 0
        %v6247 = vsel %vm467, %v6223, 0
        %6249 = vmatprep.subr.mxu0 0.0
        %6250 = vmatpush1.msra.mxu0 %v6224
        %6251 = vmatprep.subr.mxu0 0.0
        %6252 = vmatpush1.msra.mxu0 0.0
        %6253 = vmatprep.subr.mxu0 0.0
        %6254 = vmatpush1.msra.mxu0 0.0
        %6255 = vmatprep.subr.mxu0 0.0
        %6256 = vmatpush1.msra.mxu0 0.0
        %6257 = vmatprep.subr.mxu0 0.0
        %6258 = vmatpush1.msra.mxu0 0.0
        %6259 = vmatprep.subr.mxu0 0.0
        %6260 = vmatpush1.msra.mxu0 0.0
        %6261 = vmatprep.subr.mxu0 0.0
        %6262 = vmatpush1.msra.mxu0 0.0
        %6263 = vmatprep.subr.mxu0 0.0
        %6264 = vmatpush1.msra.mxu0 0.0
        %6265 = vmatprep.subr.mxu0 0.0
        %6266 = vmatpush1.msra.mxu0 0.0
        %6267 = vmatprep.subr.mxu0 0.0
        %6268 = vmatpush1.msra.mxu0 0.0
        %6269 = vmatprep.subr.mxu0 0.0
        %6270 = vmatpush1.msra.mxu0 0.0
        %6271 = vmatprep.subr.mxu0 0.0
        %6272 = vmatpush1.msra.mxu0 0.0
        %6273 = vmatprep.subr.mxu0 0.0
        %6274 = vmatpush1.msra.mxu0 0.0
        %6275 = vmatprep.subr.mxu0 0.0
        %6276 = vmatpush1.msra.mxu0 0.0
        %6277 = vmatprep.subr.mxu0 0.0
        %6278 = vmatpush1.msra.mxu0 0.0
        %6279 = vmatprep.subr.mxu0 0.0
        %6280 = vmatpush1.msra.mxu0 0.0
        %6281 = vmatprep.subr.mxu0 0.0
        %6282 = vmatpush1.msra.mxu0 0.0
        %6283 = vmatprep.subr.mxu0 0.0
        %6284 = vmatpush1.msra.mxu0 0.0
        %6285 = vmatprep.subr.mxu0 0.0
        %6286 = vmatpush1.msra.mxu0 0.0
        %6287 = vmatprep.subr.mxu0 0.0
        %6288 = vmatpush1.msra.mxu0 0.0
        %6289 = vmatprep.subr.mxu0 0.0
        %6290 = vmatpush1.msra.mxu0 0.0
        %6291 = vmatprep.subr.mxu0 0.0
        %6292 = vmatpush1.msra.mxu0 0.0
        %6293 = vmatprep.subr.mxu0 0.0
        %6294 = vmatpush1.msra.mxu0 0.0
        %6295 = vmatprep.subr.mxu0 0.0
        %6296 = vmatpush1.msra.mxu0 0.0
        %6297 = vmatprep.subr.mxu0 0.0
        %6298 = vmatpush1.msra.mxu0 0.0
        %6299 = vmatprep.subr.mxu0 0.0
        %6300 = vmatpush1.msra.mxu0 0.0
        %6301 = vmatprep.subr.mxu0 0.0
        %6302 = vmatpush1.msra.mxu0 0.0
        %6303 = vmatprep.subr.mxu0 0.0
        %6304 = vmatpush1.msra.mxu0 0.0
        %6305 = vmatprep.subr.mxu0 0.0
        %6306 = vmatpush1.msra.mxu0 0.0
        %6307 = vmatprep.subr.mxu0 0.0
        %6308 = vmatpush1.msra.mxu0 0.0
        %6309 = vmatprep.subr.mxu0 0.0
        %6310 = vmatpush1.msra.mxu0 0.0
        %6311 = vmatprep.subr.mxu0 0.0
        %6312 = vmatpush1.msra.mxu0 0.0
        %6313 = vmatprep.mubr.f32.mxu0 0.0
        %6314 = vmatmul.mubr.f32.gmra.mrb[0].mxu0 %v6226
        %v6315 = vpop.f32.mrb[0].mxu0
        %v6316 = vadd.f32 0.0, %v6315
        %v6317 = vpop.f32.mrb[0].mxu0
        %6318 = vmatprep.mubr.f32.mxu0 0.0
        %6319 = vmatmul.mubr.f32.gmra.mrb[0].mxu0 %v6229
        %v6320 = vpop.f32.mrb[0].mxu0
        %v6321 = vadd.f32 0.0, %v6320
        %v6322 = vpop.f32.mrb[0].mxu0
        %6323 = vmatprep.mubr.f32.mxu0 0.0
        %6324 = vmatmul.mubr.f32.gmra.mrb[0].mxu0 %v6232
        %v6325 = vpop.f32.mrb[0].mxu0
        %v6326 = vadd.f32 0.0, %v6325
        %v6327 = vpop.f32.mrb[0].mxu0
        %6328 = vmatprep.mubr.f32.mxu0 0.0
        %6329 = vmatmul.mubr.f32.gmra.mrb[0].mxu0 %v6235
        %v6330 = vpop.f32.mrb[0].mxu0
        %v6331 = vadd.f32 0.0, %v6330
        %v6332 = vpop.f32.mrb[0].mxu0
        %6333 = vmatprep.mubr.f32.mxu0 0.0
        %6334 = vmatmul.mubr.f32.gmra.mrb[0].mxu0 %v6238
        %v6335 = vpop.f32.mrb[0].mxu0
        %v6336 = vadd.f32 0.0, %v6335
        %v6337 = vpop.f32.mrb[0].mxu0
        %6338 = vmatprep.mubr.f32.mxu0 0.0
        %6339 = vmatmul.mubr.f32.gmra.mrb[0].mxu0 %v6241
        %v6340 = vpop.f32.mrb[0].mxu0
        %v6341 = vadd.f32 0.0, %v6340
        %v6342 = vpop.f32.mrb[0].mxu0
        %6343 = vmatprep.mubr.f32.mxu0 0.0
        %6344 = vmatmul.mubr.f32.gmra.mrb[0].mxu0 %v6244
        %v6345 = vpop.f32.mrb[0].mxu0
        %v6346 = vadd.f32 0.0, %v6345
        %v6347 = vpop.f32.mrb[0].mxu0
        %6348 = vmatprep.mubr.f32.mxu0 0.0
        %6349 = vmatmul.mubr.f32.gmra.mrb[0].mxu0 %v6247
        %v6350 = vpop.f32.mrb[0].mxu0
        %v6351 = vadd.f32 0.0, %v6350
        %v6352 = vpop.f32.mrb[0].mxu0
        %6353 = vdwg.mxu0
        %v6354 = vadd.f32 %v6208, %v6316
        %v6355 = vadd.f32 %v6209, %v6321
        %v6356 = vadd.f32 %v6210, %v6326
        %v6357 = vadd.f32 %v6211, %v6331
        %v6358 = vadd.f32 %v6212, %v6336
        %v6359 = vadd.f32 %v6213, %v6341
        %v6360 = vadd.f32 %v6214, %v6346
        %v6361 = vadd.f32 %v6215, %v6351
        %v6362 = vld [vmem:[%s1032 + $0xa] sm:$0xff]
        %v6363 = vld [vmem:[%s1032 + $0x12] sm:$0xff]
        %v6364 = vld [vmem:[%s1032 + $0x1a] sm:$0xff]
        %v6365 = vld [vmem:[%s1032 + $0x22] sm:$0xff]
        %v6366 = vld [vmem:[%s1032 + $0x2a] sm:$0xff]
        %v6367 = vld [vmem:[%s1032 + $0x32] sm:$0xff]
        %v6368 = vld [vmem:[%s1032 + $0x3a] sm:$0xff]
        %v6369 = vld [vmem:[%s1032 + $0x42] sm:$0xff]
        %v6370 = vmul.f32 %v6362, %v2993
        %v6371 = vmul.f32 %v6363, %v2998
        %v6372 = vmul.f32 %v6364, %v3003
        %v6373 = vmul.f32 %v6365, %v3008
        %v6374 = vmul.f32 %v6366, %v3013
        %v6375 = vmul.f32 %v6367, %v3018
        %v6376 = vmul.f32 %v6368, %v3023
        %v6377 = vmul.f32 %v6369, %v3028
        %v6378 = vld [vmem:[%s1988] sm:$0xff]
        %v6380 = vsel %vm467, %v6370, 0
        %v6383 = vsel %vm467, %v6371, 0
        %v6386 = vsel %vm467, %v6372, 0
        %v6389 = vsel %vm467, %v6373, 0
        %v6392 = vsel %vm467, %v6374, 0
        %v6395 = vsel %vm467, %v6375, 0
        %v6398 = vsel %vm467, %v6376, 0
        %v6401 = vsel %vm467, %v6377, 0
        %6403 = vmatprep.subr.mxu0 0.0
        %6404 = vmatpush1.msra.mxu0 %v6378
        %6405 = vmatprep.subr.mxu0 0.0
        %6406 = vmatpush1.msra.mxu0 0.0
        %6407 = vmatprep.subr.mxu0 0.0
        %6408 = vmatpush1.msra.mxu0 0.0
        %6409 = vmatprep.subr.mxu0 0.0
        %6410 = vmatpush1.msra.mxu0 0.0
        %6411 = vmatprep.subr.mxu0 0.0
        %6412 = vmatpush1.msra.mxu0 0.0
        %6413 = vmatprep.subr.mxu0 0.0
        %6414 = vmatpush1.msra.mxu0 0.0
        %6415 = vmatprep.subr.mxu0 0.0
        %6416 = vmatpush1.msra.mxu0 0.0
        %6417 = vmatprep.subr.mxu0 0.0
        %6418 = vmatpush1.msra.mxu0 0.0
        %6419 = vmatprep.subr.mxu0 0.0
        %6420 = vmatpush1.msra.mxu0 0.0
        %6421 = vmatprep.subr.mxu0 0.0
        %6422 = vmatpush1.msra.mxu0 0.0
        %6423 = vmatprep.subr.mxu0 0.0
        %6424 = vmatpush1.msra.mxu0 0.0
        %6425 = vmatprep.subr.mxu0 0.0
        %6426 = vmatpush1.msra.mxu0 0.0
        %6427 = vmatprep.subr.mxu0 0.0
        %6428 = vmatpush1.msra.mxu0 0.0
        %6429 = vmatprep.subr.mxu0 0.0
        %6430 = vmatpush1.msra.mxu0 0.0
        %6431 = vmatprep.subr.mxu0 0.0
        %6432 = vmatpush1.msra.mxu0 0.0
        %6433 = vmatprep.subr.mxu0 0.0
        %6434 = vmatpush1.msra.mxu0 0.0
        %6435 = vmatprep.subr.mxu0 0.0
        %6436 = vmatpush1.msra.mxu0 0.0
        %6437 = vmatprep.subr.mxu0 0.0
        %6438 = vmatpush1.msra.mxu0 0.0
        %6439 = vmatprep.subr.mxu0 0.0
        %6440 = vmatpush1.msra.mxu0 0.0
        %6441 = vmatprep.subr.mxu0 0.0
        %6442 = vmatpush1.msra.mxu0 0.0
        %6443 = vmatprep.subr.mxu0 0.0
        %6444 = vmatpush1.msra.mxu0 0.0
        %6445 = vmatprep.subr.mxu0 0.0
        %6446 = vmatpush1.msra.mxu0 0.0
        %6447 = vmatprep.subr.mxu0 0.0
        %6448 = vmatpush1.msra.mxu0 0.0
        %6449 = vmatprep.subr.mxu0 0.0
        %6450 = vmatpush1.msra.mxu0 0.0
        %6451 = vmatprep.subr.mxu0 0.0
        %6452 = vmatpush1.msra.mxu0 0.0
        %6453 = vmatprep.subr.mxu0 0.0
        %6454 = vmatpush1.msra.mxu0 0.0
        %6455 = vmatprep.subr.mxu0 0.0
        %6456 = vmatpush1.msra.mxu0 0.0
        %6457 = vmatprep.subr.mxu0 0.0
        %6458 = vmatpush1.msra.mxu0 0.0
        %6459 = vmatprep.subr.mxu0 0.0
        %6460 = vmatpush1.msra.mxu0 0.0
        %6461 = vmatprep.subr.mxu0 0.0
        %6462 = vmatpush1.msra.mxu0 0.0
        %6463 = vmatprep.subr.mxu0 0.0
        %6464 = vmatpush1.msra.mxu0 0.0
        %6465 = vmatprep.subr.mxu0 0.0
        %6466 = vmatpush1.msra.mxu0 0.0
        %6467 = vmatprep.mubr.f32.mxu0 0.0
        %6468 = vmatmul.mubr.f32.gmra.mrb[0].mxu0 %v6380
        %v6469 = vpop.f32.mrb[0].mxu0
        %v6470 = vadd.f32 0.0, %v6469
        %v6471 = vpop.f32.mrb[0].mxu0
        %6472 = vmatprep.mubr.f32.mxu0 0.0
        %6473 = vmatmul.mubr.f32.gmra.mrb[0].mxu0 %v6383
        %v6474 = vpop.f32.mrb[0].mxu0
        %v6475 = vadd.f32 0.0, %v6474
        %v6476 = vpop.f32.mrb[0].mxu0
        %6477 = vmatprep.mubr.f32.mxu0 0.0
        %6478 = vmatmul.mubr.f32.gmra.mrb[0].mxu0 %v6386
        %v6479 = vpop.f32.mrb[0].mxu0
        %v6480 = vadd.f32 0.0, %v6479
        %v6481 = vpop.f32.mrb[0].mxu0
        %6482 = vmatprep.mubr.f32.mxu0 0.0
        %6483 = vmatmul.mubr.f32.gmra.mrb[0].mxu0 %v6389
        %v6484 = vpop.f32.mrb[0].mxu0
        %v6485 = vadd.f32 0.0, %v6484
        %v6486 = vpop.f32.mrb[0].mxu0
        %6487 = vmatprep.mubr.f32.mxu0 0.0
        %6488 = vmatmul.mubr.f32.gmra.mrb[0].mxu0 %v6392
        %v6489 = vpop.f32.mrb[0].mxu0
        %v6490 = vadd.f32 0.0, %v6489
        %v6491 = vpop.f32.mrb[0].mxu0
        %6492 = vmatprep.mubr.f32.mxu0 0.0
        %6493 = vmatmul.mubr.f32.gmra.mrb[0].mxu0 %v6395
        %v6494 = vpop.f32.mrb[0].mxu0
        %v6495 = vadd.f32 0.0, %v6494
        %v6496 = vpop.f32.mrb[0].mxu0
        %6497 = vmatprep.mubr.f32.mxu0 0.0
        %6498 = vmatmul.mubr.f32.gmra.mrb[0].mxu0 %v6398
        %v6499 = vpop.f32.mrb[0].mxu0
        %v6500 = vadd.f32 0.0, %v6499
        %v6501 = vpop.f32.mrb[0].mxu0
        %6502 = vmatprep.mubr.f32.mxu0 0.0
        %6503 = vmatmul.mubr.f32.gmra.mrb[0].mxu0 %v6401
        %v6504 = vpop.f32.mrb[0].mxu0
        %v6505 = vadd.f32 0.0, %v6504
        %v6506 = vpop.f32.mrb[0].mxu0
        %6507 = vdwg.mxu0
        %v6508 = vadd.f32 %v6354, %v6470
        %v6509 = vadd.f32 %v6355, %v6475
        %v6510 = vadd.f32 %v6356, %v6480
        %v6511 = vadd.f32 %v6357, %v6485
        %v6512 = vadd.f32 %v6358, %v6490
        %v6513 = vadd.f32 %v6359, %v6495
        %v6514 = vadd.f32 %v6360, %v6500
        %v6515 = vadd.f32 %v6361, %v6505
        %v6516 = vld [vmem:[#allocation2 + $0x11] sm:$0xff]
        %v6517 = vld [vmem:[#allocation2 + $0x19] sm:$0xff]
        %v6518 = vld [vmem:[#allocation2 + $0x21] sm:$0xff]
        %v6519 = vld [vmem:[#allocation2 + $0x29] sm:$0xff]
        %v6520 = vld [vmem:[#allocation2 + $0x31] sm:$0xff]
        %v6521 = vld [vmem:[#allocation2 + $0x39] sm:$0xff]
        %v6522 = vld [vmem:[#allocation2 + $0x41] sm:$0xff]
        %v6523 = vld [vmem:[#allocation2 + $0x49] sm:$0xff]
        %v6524 = vld [vmem:[%s2143] sm:$0xff]
        %v6526 = vsel %vm467, %v6516, 0
        %v6529 = vsel %vm467, %v6517, 0
        %v6532 = vsel %vm467, %v6518, 0
        %v6535 = vsel %vm467, %v6519, 0
        %v6538 = vsel %vm467, %v6520, 0
        %v6541 = vsel %vm467, %v6521, 0
        %v6544 = vsel %vm467, %v6522, 0
        %v6547 = vsel %vm467, %v6523, 0
        %6549 = vmatprep.subr.mxu0 0.0
        %6550 = vmatpush1.msra.mxu0 %v6524
        %6551 = vmatprep.subr.mxu0 0.0
        %6552 = vmatpush1.msra.mxu0 0.0
        %6553 = vmatprep.subr.mxu0 0.0
        %6554 = vmatpush1.msra.mxu0 0.0
        %6555 = vmatprep.subr.mxu0 0.0
        %6556 = vmatpush1.msra.mxu0 0.0
        %6557 = vmatprep.subr.mxu0 0.0
        %6558 = vmatpush1.msra.mxu0 0.0
        %6559 = vmatprep.subr.mxu0 0.0
        %6560 = vmatpush1.msra.mxu0 0.0
        %6561 = vmatprep.subr.mxu0 0.0
        %6562 = vmatpush1.msra.mxu0 0.0
        %6563 = vmatprep.subr.mxu0 0.0
        %6564 = vmatpush1.msra.mxu0 0.0
        %6565 = vmatprep.subr.mxu0 0.0
        %6566 = vmatpush1.msra.mxu0 0.0
        %6567 = vmatprep.subr.mxu0 0.0
        %6568 = vmatpush1.msra.mxu0 0.0
        %6569 = vmatprep.subr.mxu0 0.0
        %6570 = vmatpush1.msra.mxu0 0.0
        %6571 = vmatprep.subr.mxu0 0.0
        %6572 = vmatpush1.msra.mxu0 0.0
        %6573 = vmatprep.subr.mxu0 0.0
        %6574 = vmatpush1.msra.mxu0 0.0
        %6575 = vmatprep.subr.mxu0 0.0
        %6576 = vmatpush1.msra.mxu0 0.0
        %6577 = vmatprep.subr.mxu0 0.0
        %6578 = vmatpush1.msra.mxu0 0.0
        %6579 = vmatprep.subr.mxu0 0.0
        %6580 = vmatpush1.msra.mxu0 0.0
        %6581 = vmatprep.subr.mxu0 0.0
        %6582 = vmatpush1.msra.mxu0 0.0
        %6583 = vmatprep.subr.mxu0 0.0
        %6584 = vmatpush1.msra.mxu0 0.0
        %6585 = vmatprep.subr.mxu0 0.0
        %6586 = vmatpush1.msra.mxu0 0.0
        %6587 = vmatprep.subr.mxu0 0.0
        %6588 = vmatpush1.msra.mxu0 0.0
        %6589 = vmatprep.subr.mxu0 0.0
        %6590 = vmatpush1.msra.mxu0 0.0
        %6591 = vmatprep.subr.mxu0 0.0
        %6592 = vmatpush1.msra.mxu0 0.0
        %6593 = vmatprep.subr.mxu0 0.0
        %6594 = vmatpush1.msra.mxu0 0.0
        %6595 = vmatprep.subr.mxu0 0.0
        %6596 = vmatpush1.msra.mxu0 0.0
        %6597 = vmatprep.subr.mxu0 0.0
        %6598 = vmatpush1.msra.mxu0 0.0
        %6599 = vmatprep.subr.mxu0 0.0
        %6600 = vmatpush1.msra.mxu0 0.0
        %6601 = vmatprep.subr.mxu0 0.0
        %6602 = vmatpush1.msra.mxu0 0.0
        %6603 = vmatprep.subr.mxu0 0.0
        %6604 = vmatpush1.msra.mxu0 0.0
        %6605 = vmatprep.subr.mxu0 0.0
        %6606 = vmatpush1.msra.mxu0 0.0
        %6607 = vmatprep.subr.mxu0 0.0
        %6608 = vmatpush1.msra.mxu0 0.0
        %6609 = vmatprep.subr.mxu0 0.0
        %6610 = vmatpush1.msra.mxu0 0.0
        %6611 = vmatprep.subr.mxu0 0.0
        %6612 = vmatpush1.msra.mxu0 0.0
        %6613 = vmatprep.mubr.f32.mxu0 0.0
        %6614 = vmatmul.mubr.f32.gmra.mrb[0].mxu0 %v6526
        %v6615 = vpop.f32.mrb[0].mxu0
        %v6616 = vadd.f32 0.0, %v6615
        %v6617 = vpop.f32.mrb[0].mxu0
        %6618 = vmatprep.mubr.f32.mxu0 0.0
        %6619 = vmatmul.mubr.f32.gmra.mrb[0].mxu0 %v6529
        %v6620 = vpop.f32.mrb[0].mxu0
        %v6621 = vadd.f32 0.0, %v6620
        %v6622 = vpop.f32.mrb[0].mxu0
        %6623 = vmatprep.mubr.f32.mxu0 0.0
        %6624 = vmatmul.mubr.f32.gmra.mrb[0].mxu0 %v6532
        %v6625 = vpop.f32.mrb[0].mxu0
        %v6626 = vadd.f32 0.0, %v6625
        %v6627 = vpop.f32.mrb[0].mxu0
        %6628 = vmatprep.mubr.f32.mxu0 0.0
        %6629 = vmatmul.mubr.f32.gmra.mrb[0].mxu0 %v6535
        %v6630 = vpop.f32.mrb[0].mxu0
        %v6631 = vadd.f32 0.0, %v6630
        %v6632 = vpop.f32.mrb[0].mxu0
        %6633 = vmatprep.mubr.f32.mxu0 0.0
        %6634 = vmatmul.mubr.f32.gmra.mrb[0].mxu0 %v6538
        %v6635 = vpop.f32.mrb[0].mxu0
        %v6636 = vadd.f32 0.0, %v6635
        %v6637 = vpop.f32.mrb[0].mxu0
        %6638 = vmatprep.mubr.f32.mxu0 0.0
        %6639 = vmatmul.mubr.f32.gmra.mrb[0].mxu0 %v6541
        %v6640 = vpop.f32.mrb[0].mxu0
        %v6641 = vadd.f32 0.0, %v6640
        %v6642 = vpop.f32.mrb[0].mxu0
        %6643 = vmatprep.mubr.f32.mxu0 0.0
        %6644 = vmatmul.mubr.f32.gmra.mrb[0].mxu0 %v6544
        %v6645 = vpop.f32.mrb[0].mxu0
        %v6646 = vadd.f32 0.0, %v6645
        %v6647 = vpop.f32.mrb[0].mxu0
        %6648 = vmatprep.mubr.f32.mxu0 0.0
        %6649 = vmatmul.mubr.f32.gmra.mrb[0].mxu0 %v6547
        %v6650 = vpop.f32.mrb[0].mxu0
        %v6651 = vadd.f32 0.0, %v6650
        %v6652 = vpop.f32.mrb[0].mxu0
        %6653 = vdwg.mxu0
        %v6654 = vadd.f32 %v6508, %v6616
        %v6655 = vadd.f32 %v6509, %v6621
        %v6656 = vadd.f32 %v6510, %v6626
        %v6657 = vadd.f32 %v6511, %v6631
        %v6658 = vadd.f32 %v6512, %v6636
        %v6659 = vadd.f32 %v6513, %v6641
        %v6660 = vadd.f32 %v6514, %v6646
        %v6661 = vadd.f32 %v6515, %v6651
        %v6662 = vld [vmem:[%s867 + $0x11] sm:$0xff]
        %v6663 = vld [vmem:[%s867 + $0x19] sm:$0xff]
        %v6664 = vld [vmem:[%s867 + $0x21] sm:$0xff]
        %v6665 = vld [vmem:[%s867 + $0x29] sm:$0xff]
        %v6666 = vld [vmem:[%s867 + $0x31] sm:$0xff]
        %v6667 = vld [vmem:[%s867 + $0x39] sm:$0xff]
        %v6668 = vld [vmem:[%s867 + $0x41] sm:$0xff]
        %v6669 = vld [vmem:[%s867 + $0x49] sm:$0xff]
        %v6670 = vld [vmem:[%s2290] sm:$0xff]
        %v6672 = vsel %vm467, %v6662, 0
        %v6675 = vsel %vm467, %v6663, 0
        %v6678 = vsel %vm467, %v6664, 0
        %v6681 = vsel %vm467, %v6665, 0
        %v6684 = vsel %vm467, %v6666, 0
        %v6687 = vsel %vm467, %v6667, 0
        %v6690 = vsel %vm467, %v6668, 0
        %v6693 = vsel %vm467, %v6669, 0
        %6695 = vmatprep.subr.mxu0 0.0
        %6696 = vmatpush1.msra.mxu0 %v6670
        %6697 = vmatprep.subr.mxu0 0.0
        %6698 = vmatpush1.msra.mxu0 0.0
        %6699 = vmatprep.subr.mxu0 0.0
        %6700 = vmatpush1.msra.mxu0 0.0
        %6701 = vmatprep.subr.mxu0 0.0
        %6702 = vmatpush1.msra.mxu0 0.0
        %6703 = vmatprep.subr.mxu0 0.0
        %6704 = vmatpush1.msra.mxu0 0.0
        %6705 = vmatprep.subr.mxu0 0.0
        %6706 = vmatpush1.msra.mxu0 0.0
        %6707 = vmatprep.subr.mxu0 0.0
        %6708 = vmatpush1.msra.mxu0 0.0
        %6709 = vmatprep.subr.mxu0 0.0
        %6710 = vmatpush1.msra.mxu0 0.0
        %6711 = vmatprep.subr.mxu0 0.0
        %6712 = vmatpush1.msra.mxu0 0.0
        %6713 = vmatprep.subr.mxu0 0.0
        %6714 = vmatpush1.msra.mxu0 0.0
        %6715 = vmatprep.subr.mxu0 0.0
        %6716 = vmatpush1.msra.mxu0 0.0
        %6717 = vmatprep.subr.mxu0 0.0
        %6718 = vmatpush1.msra.mxu0 0.0
        %6719 = vmatprep.subr.mxu0 0.0
        %6720 = vmatpush1.msra.mxu0 0.0
        %6721 = vmatprep.subr.mxu0 0.0
        %6722 = vmatpush1.msra.mxu0 0.0
        %6723 = vmatprep.subr.mxu0 0.0
        %6724 = vmatpush1.msra.mxu0 0.0
        %6725 = vmatprep.subr.mxu0 0.0
        %6726 = vmatpush1.msra.mxu0 0.0
        %6727 = vmatprep.subr.mxu0 0.0
        %6728 = vmatpush1.msra.mxu0 0.0
        %6729 = vmatprep.subr.mxu0 0.0
        %6730 = vmatpush1.msra.mxu0 0.0
        %6731 = vmatprep.subr.mxu0 0.0
        %6732 = vmatpush1.msra.mxu0 0.0
        %6733 = vmatprep.subr.mxu0 0.0
        %6734 = vmatpush1.msra.mxu0 0.0
        %6735 = vmatprep.subr.mxu0 0.0
        %6736 = vmatpush1.msra.mxu0 0.0
        %6737 = vmatprep.subr.mxu0 0.0
        %6738 = vmatpush1.msra.mxu0 0.0
        %6739 = vmatprep.subr.mxu0 0.0
        %6740 = vmatpush1.msra.mxu0 0.0
        %6741 = vmatprep.subr.mxu0 0.0
        %6742 = vmatpush1.msra.mxu0 0.0
        %6743 = vmatprep.subr.mxu0 0.0
        %6744 = vmatpush1.msra.mxu0 0.0
        %6745 = vmatprep.subr.mxu0 0.0
        %6746 = vmatpush1.msra.mxu0 0.0
        %6747 = vmatprep.subr.mxu0 0.0
        %6748 = vmatpush1.msra.mxu0 0.0
        %6749 = vmatprep.subr.mxu0 0.0
        %6750 = vmatpush1.msra.mxu0 0.0
        %6751 = vmatprep.subr.mxu0 0.0
        %6752 = vmatpush1.msra.mxu0 0.0
        %6753 = vmatprep.subr.mxu0 0.0
        %6754 = vmatpush1.msra.mxu0 0.0
        %6755 = vmatprep.subr.mxu0 0.0
        %6756 = vmatpush1.msra.mxu0 0.0
        %6757 = vmatprep.subr.mxu0 0.0
        %6758 = vmatpush1.msra.mxu0 0.0
        %6759 = vmatprep.mubr.f32.mxu0 0.0
        %6760 = vmatmul.mubr.f32.gmra.mrb[0].mxu0 %v6672
        %v6761 = vpop.f32.mrb[0].mxu0
        %v6762 = vadd.f32 0.0, %v6761
        %v6763 = vpop.f32.mrb[0].mxu0
        %6764 = vmatprep.mubr.f32.mxu0 0.0
        %6765 = vmatmul.mubr.f32.gmra.mrb[0].mxu0 %v6675
        %v6766 = vpop.f32.mrb[0].mxu0
        %v6767 = vadd.f32 0.0, %v6766
        %v6768 = vpop.f32.mrb[0].mxu0
        %6769 = vmatprep.mubr.f32.mxu0 0.0
        %6770 = vmatmul.mubr.f32.gmra.mrb[0].mxu0 %v6678
        %v6771 = vpop.f32.mrb[0].mxu0
        %v6772 = vadd.f32 0.0, %v6771
        %v6773 = vpop.f32.mrb[0].mxu0
        %6774 = vmatprep.mubr.f32.mxu0 0.0
        %6775 = vmatmul.mubr.f32.gmra.mrb[0].mxu0 %v6681
        %v6776 = vpop.f32.mrb[0].mxu0
        %v6777 = vadd.f32 0.0, %v6776
        %v6778 = vpop.f32.mrb[0].mxu0
        %6779 = vmatprep.mubr.f32.mxu0 0.0
        %6780 = vmatmul.mubr.f32.gmra.mrb[0].mxu0 %v6684
        %v6781 = vpop.f32.mrb[0].mxu0
        %v6782 = vadd.f32 0.0, %v6781
        %v6783 = vpop.f32.mrb[0].mxu0
        %6784 = vmatprep.mubr.f32.mxu0 0.0
        %6785 = vmatmul.mubr.f32.gmra.mrb[0].mxu0 %v6687
        %v6786 = vpop.f32.mrb[0].mxu0
        %v6787 = vadd.f32 0.0, %v6786
        %v6788 = vpop.f32.mrb[0].mxu0
        %6789 = vmatprep.mubr.f32.mxu0 0.0
        %6790 = vmatmul.mubr.f32.gmra.mrb[0].mxu0 %v6690
        %v6791 = vpop.f32.mrb[0].mxu0
        %v6792 = vadd.f32 0.0, %v6791
        %v6793 = vpop.f32.mrb[0].mxu0
        %6794 = vmatprep.mubr.f32.mxu0 0.0
        %6795 = vmatmul.mubr.f32.gmra.mrb[0].mxu0 %v6693
        %v6796 = vpop.f32.mrb[0].mxu0
        %v6797 = vadd.f32 0.0, %v6796
        %v6798 = vpop.f32.mrb[0].mxu0
        %6799 = vdwg.mxu0
        %v6800 = vadd.f32 %v6654, %v6762
        %v6801 = vadd.f32 %v6655, %v6767
        %v6802 = vadd.f32 %v6656, %v6772
        %v6803 = vadd.f32 %v6657, %v6777
        %v6804 = vadd.f32 %v6658, %v6782
        %v6805 = vadd.f32 %v6659, %v6787
        %v6806 = vadd.f32 %v6660, %v6792
        %v6807 = vadd.f32 %v6661, %v6797
        %v6808 = vld [vmem:[#allocation2 + $0x12] sm:$0xff]
        %v6809 = vld [vmem:[#allocation2 + $0x1a] sm:$0xff]
        %v6810 = vld [vmem:[#allocation2 + $0x22] sm:$0xff]
        %v6811 = vld [vmem:[#allocation2 + $0x2a] sm:$0xff]
        %v6812 = vld [vmem:[#allocation2 + $0x32] sm:$0xff]
        %v6813 = vld [vmem:[#allocation2 + $0x3a] sm:$0xff]
        %v6814 = vld [vmem:[#allocation2 + $0x42] sm:$0xff]
        %v6815 = vld [vmem:[#allocation2 + $0x4a] sm:$0xff]
        %v6816 = vmul.f32 %v6808, %v2993
        %v6817 = vmul.f32 %v6809, %v2998
        %v6818 = vmul.f32 %v6810, %v3003
        %v6819 = vmul.f32 %v6811, %v3008
        %v6820 = vmul.f32 %v6812, %v3013
        %v6821 = vmul.f32 %v6813, %v3018
        %v6822 = vmul.f32 %v6814, %v3023
        %v6823 = vmul.f32 %v6815, %v3028
        %v6824 = vld [vmem:[%s2437] sm:$0xff]
        %v6826 = vsel %vm467, %v6816, 0
        %v6829 = vsel %vm467, %v6817, 0
        %v6832 = vsel %vm467, %v6818, 0
        %v6835 = vsel %vm467, %v6819, 0
        %v6838 = vsel %vm467, %v6820, 0
        %v6841 = vsel %vm467, %v6821, 0
        %v6844 = vsel %vm467, %v6822, 0
        %v6847 = vsel %vm467, %v6823, 0
        %6849 = vmatprep.subr.mxu0 0.0
        %6850 = vmatpush1.msra.mxu0 %v6824
        %6851 = vmatprep.subr.mxu0 0.0
        %6852 = vmatpush1.msra.mxu0 0.0
        %6853 = vmatprep.subr.mxu0 0.0
        %6854 = vmatpush1.msra.mxu0 0.0
        %6855 = vmatprep.subr.mxu0 0.0
        %6856 = vmatpush1.msra.mxu0 0.0
        %6857 = vmatprep.subr.mxu0 0.0
        %6858 = vmatpush1.msra.mxu0 0.0
        %6859 = vmatprep.subr.mxu0 0.0
        %6860 = vmatpush1.msra.mxu0 0.0
        %6861 = vmatprep.subr.mxu0 0.0
        %6862 = vmatpush1.msra.mxu0 0.0
        %6863 = vmatprep.subr.mxu0 0.0
        %6864 = vmatpush1.msra.mxu0 0.0
        %6865 = vmatprep.subr.mxu0 0.0
        %6866 = vmatpush1.msra.mxu0 0.0
        %6867 = vmatprep.subr.mxu0 0.0
        %6868 = vmatpush1.msra.mxu0 0.0
        %6869 = vmatprep.subr.mxu0 0.0
        %6870 = vmatpush1.msra.mxu0 0.0
        %6871 = vmatprep.subr.mxu0 0.0
        %6872 = vmatpush1.msra.mxu0 0.0
        %6873 = vmatprep.subr.mxu0 0.0
        %6874 = vmatpush1.msra.mxu0 0.0
        %6875 = vmatprep.subr.mxu0 0.0
        %6876 = vmatpush1.msra.mxu0 0.0
        %6877 = vmatprep.subr.mxu0 0.0
        %6878 = vmatpush1.msra.mxu0 0.0
        %6879 = vmatprep.subr.mxu0 0.0
        %6880 = vmatpush1.msra.mxu0 0.0
        %6881 = vmatprep.subr.mxu0 0.0
        %6882 = vmatpush1.msra.mxu0 0.0
        %6883 = vmatprep.subr.mxu0 0.0
        %6884 = vmatpush1.msra.mxu0 0.0
        %6885 = vmatprep.subr.mxu0 0.0
        %6886 = vmatpush1.msra.mxu0 0.0
        %6887 = vmatprep.subr.mxu0 0.0
        %6888 = vmatpush1.msra.mxu0 0.0
        %6889 = vmatprep.subr.mxu0 0.0
        %6890 = vmatpush1.msra.mxu0 0.0
        %6891 = vmatprep.subr.mxu0 0.0
        %6892 = vmatpush1.msra.mxu0 0.0
        %6893 = vmatprep.subr.mxu0 0.0
        %6894 = vmatpush1.msra.mxu0 0.0
        %6895 = vmatprep.subr.mxu0 0.0
        %6896 = vmatpush1.msra.mxu0 0.0
        %6897 = vmatprep.subr.mxu0 0.0
        %6898 = vmatpush1.msra.mxu0 0.0
        %6899 = vmatprep.subr.mxu0 0.0
        %6900 = vmatpush1.msra.mxu0 0.0
        %6901 = vmatprep.subr.mxu0 0.0
        %6902 = vmatpush1.msra.mxu0 0.0
        %6903 = vmatprep.subr.mxu0 0.0
        %6904 = vmatpush1.msra.mxu0 0.0
        %6905 = vmatprep.subr.mxu0 0.0
        %6906 = vmatpush1.msra.mxu0 0.0
        %6907 = vmatprep.subr.mxu0 0.0
        %6908 = vmatpush1.msra.mxu0 0.0
        %6909 = vmatprep.subr.mxu0 0.0
        %6910 = vmatpush1.msra.mxu0 0.0
        %6911 = vmatprep.subr.mxu0 0.0
        %6912 = vmatpush1.msra.mxu0 0.0
        %6913 = vmatprep.mubr.f32.mxu0 0.0
        %6914 = vmatmul.mubr.f32.gmra.mrb[0].mxu0 %v6826
        %v6915 = vpop.f32.mrb[0].mxu0
        %v6916 = vadd.f32 0.0, %v6915
        %v6917 = vpop.f32.mrb[0].mxu0
        %6918 = vmatprep.mubr.f32.mxu0 0.0
        %6919 = vmatmul.mubr.f32.gmra.mrb[0].mxu0 %v6829
        %v6920 = vpop.f32.mrb[0].mxu0
        %v6921 = vadd.f32 0.0, %v6920
        %v6922 = vpop.f32.mrb[0].mxu0
        %6923 = vmatprep.mubr.f32.mxu0 0.0
        %6924 = vmatmul.mubr.f32.gmra.mrb[0].mxu0 %v6832
        %v6925 = vpop.f32.mrb[0].mxu0
        %v6926 = vadd.f32 0.0, %v6925
        %v6927 = vpop.f32.mrb[0].mxu0
        %6928 = vmatprep.mubr.f32.mxu0 0.0
        %6929 = vmatmul.mubr.f32.gmra.mrb[0].mxu0 %v6835
        %v6930 = vpop.f32.mrb[0].mxu0
        %v6931 = vadd.f32 0.0, %v6930
        %v6932 = vpop.f32.mrb[0].mxu0
        %6933 = vmatprep.mubr.f32.mxu0 0.0
        %6934 = vmatmul.mubr.f32.gmra.mrb[0].mxu0 %v6838
        %v6935 = vpop.f32.mrb[0].mxu0
        %v6936 = vadd.f32 0.0, %v6935
        %v6937 = vpop.f32.mrb[0].mxu0
        %6938 = vmatprep.mubr.f32.mxu0 0.0
        %6939 = vmatmul.mubr.f32.gmra.mrb[0].mxu0 %v6841
        %v6940 = vpop.f32.mrb[0].mxu0
        %v6941 = vadd.f32 0.0, %v6940
        %v6942 = vpop.f32.mrb[0].mxu0
        %6943 = vmatprep.mubr.f32.mxu0 0.0
        %6944 = vmatmul.mubr.f32.gmra.mrb[0].mxu0 %v6844
        %v6945 = vpop.f32.mrb[0].mxu0
        %v6946 = vadd.f32 0.0, %v6945
        %v6947 = vpop.f32.mrb[0].mxu0
        %6948 = vmatprep.mubr.f32.mxu0 0.0
        %6949 = vmatmul.mubr.f32.gmra.mrb[0].mxu0 %v6847
        %v6950 = vpop.f32.mrb[0].mxu0
        %v6951 = vadd.f32 0.0, %v6950
        %v6952 = vpop.f32.mrb[0].mxu0
        %6953 = vdwg.mxu0
        %v6954 = vadd.f32 %v6800, %v6916
        %v6955 = vadd.f32 %v6801, %v6921
        %v6956 = vadd.f32 %v6802, %v6926
        %v6957 = vadd.f32 %v6803, %v6931
        %v6958 = vadd.f32 %v6804, %v6936
        %v6959 = vadd.f32 %v6805, %v6941
        %v6960 = vadd.f32 %v6806, %v6946
        %v6961 = vadd.f32 %v6807, %v6951
        %vm6962 = vcmp.gt.f32.partialorder %v6216, 0.0
        %vm6963 = vcmp.gt.f32.partialorder %v6217, 0.0
        %vm6964 = vcmp.gt.f32.partialorder %v6218, 0.0
        %vm6965 = vcmp.gt.f32.partialorder %v6219, 0.0
        %vm6966 = vcmp.gt.f32.partialorder %v6220, 0.0
        %vm6967 = vcmp.gt.f32.partialorder %v6221, 0.0
        %vm6968 = vcmp.gt.f32.partialorder %v6222, 0.0
        %vm6969 = vcmp.gt.f32.partialorder %v6223, 0.0
        %v6970 = vmul.f32 %v6216, 5.0
        %v6971 = vmul.f32 %v6217, 5.0
        %v6972 = vmul.f32 %v6218, 5.0
        %v6973 = vmul.f32 %v6219, 5.0
        %v6974 = vmul.f32 %v6220, 5.0
        %v6975 = vmul.f32 %v6221, 5.0
        %v6976 = vmul.f32 %v6222, 5.0
        %v6977 = vmul.f32 %v6223, 5.0
        %v6978 = vsel %vm6962, %v6216, %v6970
        %v6979 = vsel %vm6963, %v6217, %v6971
        %v6980 = vsel %vm6964, %v6218, %v6972
        %v6981 = vsel %vm6965, %v6219, %v6973
        %v6982 = vsel %vm6966, %v6220, %v6974
        %v6983 = vsel %vm6967, %v6221, %v6975
        %v6984 = vsel %vm6968, %v6222, %v6976
        %v6985 = vsel %vm6969, %v6223, %v6977
        %v6986 = vadd.f32 %v6954, %v2604
        %v6987 = vadd.f32 %v6955, %v2604
        %v6988 = vadd.f32 %v6956, %v2604
        %v6989 = vadd.f32 %v6957, %v2604
        %v6990 = vadd.f32 %v6958, %v2604
        %v6991 = vadd.f32 %v6959, %v2604
        %v6992 = vadd.f32 %v6960, %v2604
        %v6993 = vadd.f32 %v6961, %v2604
        %v6994 = vadd.f32 %v6986, %v6978
        %v6995 = vadd.f32 %v6987, %v6979
        %v6996 = vadd.f32 %v6988, %v6980
        %v6997 = vadd.f32 %v6989, %v6981
        %v6998 = vadd.f32 %v6990, %v6982
        %v6999 = vadd.f32 %v6991, %v6983
        %v7000 = vadd.f32 %v6992, %v6984
        %v7001 = vadd.f32 %v6993, %v6985
        %vm7002 = vcmp.gt.f32.partialorder %v6994, 0.0
        %vm7003 = vcmp.gt.f32.partialorder %v6995, 0.0
        %vm7004 = vcmp.gt.f32.partialorder %v6996, 0.0
        %vm7005 = vcmp.gt.f32.partialorder %v6997, 0.0
        %vm7006 = vcmp.gt.f32.partialorder %v6998, 0.0
        %vm7007 = vcmp.gt.f32.partialorder %v6999, 0.0
        %vm7008 = vcmp.gt.f32.partialorder %v7000, 0.0
        %vm7009 = vcmp.gt.f32.partialorder %v7001, 0.0
        %v7010 = vmul.f32 %v6994, 0.2
        %v7011 = vmul.f32 %v6995, 0.2
        %v7012 = vmul.f32 %v6996, 0.2
        %v7013 = vmul.f32 %v6997, 0.2
        %v7014 = vmul.f32 %v6998, 0.2
        %v7015 = vmul.f32 %v6999, 0.2
        %v7016 = vmul.f32 %v7000, 0.2
        %v7017 = vmul.f32 %v7001, 0.2
        %v7018 = vsel %vm7002, %v6994, %v7010
        %v7019 = vsel %vm7003, %v6995, %v7011
        %v7020 = vsel %vm7004, %v6996, %v7012
        %v7021 = vsel %vm7005, %v6997, %v7013
        %v7022 = vsel %vm7006, %v6998, %v7014
        %v7023 = vsel %vm7007, %v6999, %v7015
        %v7024 = vsel %vm7008, %v7000, %v7016
        %v7025 = vsel %vm7009, %v7001, %v7017
        %s7026 = scalar_lea.vmem %s439, 192
        %7027 = vst.msk [vmem:[%s7026] sm:$0xff] %vm467, %v7018
        %7028 = vst.msk [vmem:[%s7026 + $0x8] sm:$0xff] %vm467, %v7019
        %7029 = vst.msk [vmem:[%s7026 + $0x10] sm:$0xff] %vm467, %v7020
        %7030 = vst.msk [vmem:[%s7026 + $0x18] sm:$0xff] %vm467, %v7021
        %7031 = vst.msk [vmem:[%s7026 + $0x20] sm:$0xff] %vm467, %v7022
        %7032 = vst.msk [vmem:[%s7026 + $0x28] sm:$0xff] %vm467, %v7023
        %7033 = vst.msk [vmem:[%s7026 + $0x30] sm:$0xff] %vm467, %v7024
        %7034 = vst.msk [vmem:[%s7026 + $0x38] sm:$0xff] %vm467, %v7025
        %v7035 = vsel %vm467, %v7018, 0.0
        %v7036 = vsel %vm467, %v7019, 0.0
        %v7037 = vadd.f32 %v7035, %v7036
        %v7038 = vsel %vm467, %v7020, 0.0
        %v7039 = vadd.f32 %v7037, %v7038
        %v7040 = vsel %vm467, %v7021, 0.0
        %v7041 = vadd.f32 %v7039, %v7040
        %v7042 = vsel %vm467, %v7022, 0.0
        %v7043 = vadd.f32 %v7041, %v7042
        %v7044 = vsel %vm467, %v7023, 0.0
        %v7045 = vadd.f32 %v7043, %v7044
        %v7046 = vsel %vm467, %v7024, 0.0
        %v7047 = vadd.f32 %v7045, %v7046
        %v7048 = vsel %vm467, %v7025, 0.0
        %v7049 = vadd.f32 %v7047, %v7048
        %v7050 = vrot.slane %v7049, 4
        %v7051 = vadd.f32 %v7049, %v7050
        %v7052 = vrot.slane %v7051, 2
        %v7053 = vadd.f32 %v7051, %v7052
        %v7054 = vrot.slane %v7053, 1
        %v7055 = vadd.f32 %v7053, %v7054
        %v7056 = vadd.f32 %v5609, %v7055
        %v7057 = vmul.f32 %v7018, %v7018
        %v7058 = vmul.f32 %v7019, %v7019
        %v7059 = vmul.f32 %v7020, %v7020
        %v7060 = vmul.f32 %v7021, %v7021
        %v7061 = vmul.f32 %v7022, %v7022
        %v7062 = vmul.f32 %v7023, %v7023
        %v7063 = vmul.f32 %v7024, %v7024
        %v7064 = vmul.f32 %v7025, %v7025
        %v7065 = vsel %vm467, %v7057, 0.0
        %v7066 = vsel %vm467, %v7058, 0.0
        %v7067 = vadd.f32 %v7065, %v7066
        %v7068 = vsel %vm467, %v7059, 0.0
        %v7069 = vadd.f32 %v7067, %v7068
        %v7070 = vsel %vm467, %v7060, 0.0
        %v7071 = vadd.f32 %v7069, %v7070
        %v7072 = vsel %vm467, %v7061, 0.0
        %v7073 = vadd.f32 %v7071, %v7072
        %v7074 = vsel %vm467, %v7062, 0.0
        %v7075 = vadd.f32 %v7073, %v7074
        %v7076 = vsel %vm467, %v7063, 0.0
        %v7077 = vadd.f32 %v7075, %v7076
        %v7078 = vsel %vm467, %v7064, 0.0
        %v7079 = vadd.f32 %v7077, %v7078
        %v7080 = vrot.slane %v7079, 4
        %v7081 = vadd.f32 %v7079, %v7080
        %v7082 = vrot.slane %v7081, 2
        %v7083 = vadd.f32 %v7081, %v7082
        %v7084 = vrot.slane %v7083, 1
        %v7085 = vadd.f32 %v7083, %v7084
        %v7086 = vadd.f32 %v5639, %v7085
        %vm7087 = vcmask 57344
        %7088 = vst.msk [vmem:[%s415] sm:$0x1] %vm7087, %v7056
        %7089 = vst.msk [vmem:[%s421] sm:$0x1] %vm7087, %v7086
        %p7090 = scmp.lt.s32.totalorder %s29, 1
        %s7091 = scalar_select %p7090, %s29, 1
        %s7092 = smul.addr %s7091, 32
        %s7093 = smul.addr %s7092, 8
        %s7094 = scalar_lea.vmem %s9, %s7093
        %s7095 = sand.u32 %s267, 1
        %s7096 = scalar_lea.sflag [#allocation4], %s7095
        %s7097 = sand.u32 %s267, 1
        %s7098 = scalar_lea.vmem [#allocation3], %s7097
        %s7099 = sand.u32 %s293, 1
        %s7100 = scalar_lea.sflag [#allocation6], %s7099
        %s7101 = sand.u32 %s293, 1
        %s7102 = scalar_lea.vmem [#allocation5], %s7101
        // Predicated region
        $region57: #{tpu_custom_call.1} parent=55 // pred_check
          %p7103 = pneg %p251
        $region58: #{tpu_custom_call.1} parent=55 // pred_check_branch
          %7105 = sbr.rel (%p7103) target = $region60
        $region59: #{tpu_custom_call.1} parent=55 // pred_region
          _
        $region60: #{tpu_custom_call.1} parent=55 // pred_fallthru
          _
        // Predicated region
        $region61: #{tpu_custom_call.1} parent=55 // pred_check
          %p7106 = pneg %p277
        $region62: #{tpu_custom_call.1} parent=55 // pred_check_branch
          %7108 = sbr.rel (%p7106) target = $region64
        $region63: #{tpu_custom_call.1} parent=55 // pred_region
          %s7110 = ssub.s32 16, 16
          %7111 = vsyncadd %s7096, %s7110
          %s7112 = smul.addr %s29, 16
          %s7113 = scalar_lea.hbm %s10, %s7112
          %s7115 = sshll.u32 %s7098, 4
          %s7116 = int_to_ptr.vmem [resolvable:$true] %s7115
          %7118 = dma.vmem_to_hbm [thread:$0]  %s7116, 16, %s7113, %s7096
        $region64: #{tpu_custom_call.1} parent=55 // pred_fallthru
          _
        // Predicated region
        $region65: #{tpu_custom_call.1} parent=55 // pred_check
          %p7119 = pneg %p303
        $region66: #{tpu_custom_call.1} parent=55 // pred_check_branch
          %7121 = sbr.rel (%p7119) target = $region68
        $region67: #{tpu_custom_call.1} parent=55 // pred_region
          %s7123 = ssub.s32 16, 16
          %7124 = vsyncadd %s7100, %s7123
          %s7125 = smul.addr %s29, 16
          %s7126 = scalar_lea.hbm %s11, %s7125
          %s7128 = sshll.u32 %s7102, 4
          %s7129 = int_to_ptr.vmem [resolvable:$true] %s7128
          %7131 = dma.vmem_to_hbm [thread:$0]  %s7129, 16, %s7126, %s7100
        $region68: #{tpu_custom_call.1} parent=55 // pred_fallthru
          _
      $region56: #{tpu_custom_call.1} parent=5 // pred_fallthru
        _
      %p7132 = scmp.le.s32.totalorder 2, %s24
      // Predicated region
      $region69: #{tpu_custom_call.1} parent=5 // pred_check
        %p7133 = pneg %p7132
      $region70: #{tpu_custom_call.1} parent=5 // pred_check_branch
        %7135 = sbr.rel (%p7133) target = $region72
      $region71: #{tpu_custom_call.1} parent=5 // pred_region
        %s7136 = ssub.s32 %s24, 2
        // Predicated region
        $region73: #{tpu_custom_call.1} parent=71 // pred_check
          %p7137 = pneg %p257
        $region74: #{tpu_custom_call.1} parent=71 // pred_check_branch
          %7139 = sbr.rel (%p7137) target = $region76
        $region75: #{tpu_custom_call.1} parent=71 // pred_region
          %p7140 = scmp.lt.s32.totalorder %s30, 1
          %s7141 = scalar_select %p7140, %s30, 1
          %s7142 = smul.addr %s7141, 32
          %s7143 = smul.addr %s7142, 8
          %s7144 = scalar_lea.vmem %s9, %s7143
        $region76: #{tpu_custom_call.1} parent=71 // pred_fallthru
          _
        // Predicated region
        $region77: #{tpu_custom_call.1} parent=71 // pred_check
          %p7145 = pneg %p283
        $region78: #{tpu_custom_call.1} parent=71 // pred_check_branch
          %7147 = sbr.rel (%p7145) target = $region80
        $region79: #{tpu_custom_call.1} parent=71 // pred_region
          %s7148 = sand.u32 %s268, 1
          %s7149 = scalar_lea.sflag [#allocation4], %s7148
          %s7150 = sand.u32 %s268, 1
          %s7151 = scalar_lea.vmem [#allocation3], %s7150
          %7152 = dma.done %s7149, 16
        $region80: #{tpu_custom_call.1} parent=71 // pred_fallthru
          _
        // Predicated region
        $region81: #{tpu_custom_call.1} parent=71 // pred_check
          %p7153 = pneg %p309
        $region82: #{tpu_custom_call.1} parent=71 // pred_check_branch
          %7155 = sbr.rel (%p7153) target = $region84
        $region83: #{tpu_custom_call.1} parent=71 // pred_region
          %s7156 = sand.u32 %s294, 1
          %s7157 = scalar_lea.sflag [#allocation6], %s7156
          %s7158 = sand.u32 %s294, 1
          %s7159 = scalar_lea.vmem [#allocation5], %s7158
          %7160 = dma.done %s7157, 16
        $region84: #{tpu_custom_call.1} parent=71 // pred_fallthru
          _
      $region72: #{tpu_custom_call.1} parent=5 // pred_fallthru
        _
    $region6: #{tpu_custom_call.1} parent=1 // loop_footer
      %s28 = sadd.s32 1, %s24
    $region7: #{tpu_custom_call.1} parent=1 // loop_footer_branch
      %23 = sbr.rel target = $region3
    $region8: #{tpu_custom_call.1} parent=1 // loop_exit
      _
    %7161 = vsyncpa [#allocation4], 1
    %s7162 = scalar_lea.sflag [#allocation4], 1
    %7163 = vsyncpa %s7162, 1
    %7164 = vsyncpa [#allocation6], 1
    %s7165 = scalar_lea.sflag [#allocation6], 1
    %7166 = vsyncpa %s7165, 1

</llo_original>
